<compile_context>
chip_gen: v6e
topology: v6e:2x2x1
jax: 0.10.0
libtpu: 0.0.40
codegen_flags: <defaults>
</compile_context>

<pallas_src>
import numpy as np
import jax
import jax.numpy as jnp
from jax.experimental import pallas as pl
from jax.experimental.pallas import tpu as pltpu

NEG_SLOPE = 0.01   # LeakyReLU negative_slope (nonlin_kwargs default)
BN_EPS = 1e-5      # BatchNorm eps (norm_op_kwargs default)

PADL = 128         # left lane pad of the xpad scratch (activation data starts at this lane)
XPAD_LANES = 512   # 128 pad | 256 data | 128 pad

# Fixed parameter ordering shared by the host wrapper and the kernel.
PARAM_KEYS = (
    'l0c0_w', 'l0c0_b', 'l0c1_w', 'l0c1_b',
    'l1c0_w', 'l1c0_b', 'l1c1_w', 'l1c1_b',
    'l2c0_w', 'l2c0_b', 'l2c1_w', 'l2c1_b',
    'tu0_w', 'l3c0_w', 'l3c0_b', 'l3c1_w', 'l3c1_b', 'seg0_w', 'seg0_b',
    'tu1_w', 'l4c0_w', 'l4c0_b', 'l4c1_w', 'l4c1_b', 'seg1_w', 'seg1_b',
)


def _log2(v):
    l = int(v).bit_length() - 1
    assert (1 << l) == v, f"{v} must be a power of two"
    return l


# ------------------------------ in-kernel helpers ------------------------------

def _conv3x3(xpad_ref, slab_ref, xs, w_ref, b_ref, H, W, stride2=False):
    """3x3 'same' conv (+ folded BN/bias + LeakyReLU) on channel-major activations.

    xs:      list of (C_k, H*W) f32 values (channel-concat order: [upsampled, skip]).
    w_ref:   (Cout, 9*c_slab) bf16 weights, column = tap*c_slab + channel, tap = dy*3+dx.
    b_ref:   (Cout, 1) f32 folded bias.
    stride2: if True, subsample the output to (H/2, W/2) with an in-kernel-generated 0/1
             bf16 selection matrix (selection commutes with bias/LeakyReLU).
    Returns (Cout, H*W) or (Cout, H*W/4) f32.
    """
    HW = H * W
    logW = _log2(W)
    ctot = sum(int(x.shape[0]) for x in xs)
    c_slab = ((ctot + 7) // 8) * 8          # slab rows per tap (sublane aligned)
    K = 9 * c_slab

    # per-lane (flattened pixel) row/col indices for the boundary masks
    pidx = jax.lax.broadcasted_iota(jnp.int32, (1, HW), 1)
    hh = pidx >> logW
    ww = pidx & (W - 1)

    if c_slab != ctot:                      # only the very first conv (Cin=4 -> 8)
        slab_ref[0:K, 0:HW] = jnp.zeros((K, HW), jnp.float32)

    row0 = 0
    for x in xs:
        Ck = int(x.shape[0])
        xpad_ref[0:Ck, PADL:PADL + HW] = x
        for dy in range(3):
            for dx in range(3):
                off = (dy - 1) * W + (dx - 1)
                win = xpad_ref[0:Ck, PADL + off:PADL + off + HW]
                # zero out every tap position that falls outside the image (the masks
                # also cover the row-wrap of the flattened layout and any stale lanes
                # that the shifted window read may touch in the pad regions).
                conds = []
                if dy == 0:
                    conds.append(hh > 0)
                if dy == 2:
                    conds.append(hh < H - 1)
                if dx == 0:
                    conds.append(ww > 0)
                if dx == 2:
                    conds.append(ww < W - 1)
                if conds:
                    valid = conds[0]
                    for c in conds[1:]:
                        valid = jnp.logical_and(valid, c)
                    win = jnp.where(valid, win, 0.0)
                r = (dy * 3 + dx) * c_slab + row0
                slab_ref[r:r + Ck, 0:HW] = win
        row0 += Ck

    # single fused matmul over all 9 taps: (Cout, 9*Cin) x (9*Cin, HW)
    acc = jnp.dot(w_ref[...], slab_ref[0:K, 0:HW].astype(jnp.bfloat16),
                  preferred_element_type=jnp.float32)

    if stride2:
        Wo = W // 2
        HWo = (H // 2) * Wo
        logWo = _log2(Wo)
        pi = jax.lax.broadcasted_iota(jnp.int32, (HW, HWo), 0)
        oi = jax.lax.broadcasted_iota(jnp.int32, (HW, HWo), 1)
        tgt = (oi >> logWo) * (2 * W) + (oi & (Wo - 1)) * 2
        sel = jnp.where(pi == tgt, 1.0, 0.0).astype(jnp.bfloat16)   # exact 0/1 in bf16
        acc = jnp.dot(acc.astype(jnp.bfloat16), sel,
                      preferred_element_type=jnp.float32)           # (Cout, HWo)

    y = acc + b_ref[...]
    return jnp.where(y >= 0.0, y, NEG_SLOPE * y)


def _tconv2x2(x, w_ref, Hi, Wi):
    """ConvTranspose2d(k=2, s=2, bias=False) on a channel-major activation.
    x: (Cin, Hi*Wi) f32; w_ref: (4, Cout, Cin) bf16 with tap index a*2+b.
    Pixel shuffle implemented with in-kernel-generated 0/1 bf16 scatter matrices."""
    HWi = Hi * Wi
    Wo = 2 * Wi
    HWo = 4 * HWi
    logWi = _log2(Wi)
    xb = x.astype(jnp.bfloat16)
    j = jax.lax.broadcasted_iota(jnp.int32, (HWi, HWo), 0)
    o = jax.lax.broadcasted_iota(jnp.int32, (HWi, HWo), 1)
    hi = j >> logWi
    wi = j & (Wi - 1)
    out = None
    for a in range(2):
        for b in range(2):
            tgt = (2 * hi + a) * Wo + 2 * wi + b
            scat = jnp.where(o == tgt, 1.0, 0.0).astype(jnp.bfloat16)  # (HWi, HWo)
            y = jnp.dot(w_ref[a * 2 + b], xb,
                        preferred_element_type=jnp.float32)            # (Cout, HWi)
            z = jnp.dot(y.astype(jnp.bfloat16), scat,
                        preferred_element_type=jnp.float32)            # (Cout, HWo)
            out = z if out is None else out + z
    return out


def _seg1x1(x, w_ref, b_ref):
    """1x1 segmentation head, emitted lane-dense as (num_classes, H*W)."""
    return jnp.dot(w_ref[...], x.astype(jnp.bfloat16),
                   preferred_element_type=jnp.float32) + b_ref[...]


# ---------------------------------- kernel ----------------------------------

def _nas_unet_kernel(*refs):
    n_params = len(PARAM_KEYS)
    x_ref = refs[0]
    p = dict(zip(PARAM_KEYS, refs[1:1 + n_params]))
    out_full_ref = refs[1 + n_params]
    out_half_ref = refs[2 + n_params]
    xpad_ref = refs[3 + n_params]      # (32, 512) f32 lane-padded activation buffer
    slab_ref = refs[4 + n_params]      # (288, 256) f32 im2col slab

    # Hygiene: initialize the pad strips the first conv's shifted window reads touch
    # (the tap masks already discard those lanes, this just avoids uninitialized reads).
    xpad_ref[0:32, PADL - 32:PADL] = jnp.zeros((32, 32), jnp.float32)
    xpad_ref[0:32, PADL + 256:PADL + 256 + 32] = jnp.zeros((32, 32), jnp.float32)

    x = x_ref[0]                                                     # (4, 256) channel-major

    # layer 0 (down, 16x16): 4 -> 8 -> 8
    x = _conv3x3(xpad_ref, slab_ref, [x], p['l0c0_w'], p['l0c0_b'], 16, 16)
    x = _conv3x3(xpad_ref, slab_ref, [x], p['l0c1_w'], p['l0c1_b'], 16, 16)
    skip0 = x                                                        # (8, 256)

    # layer 1 (down, -> 8x8): 8 -> 16 (stride 2) -> 16
    x = _conv3x3(xpad_ref, slab_ref, [x], p['l1c0_w'], p['l1c0_b'], 16, 16, stride2=True)
    x = _conv3x3(xpad_ref, slab_ref, [x], p['l1c1_w'], p['l1c1_b'], 8, 8)
    skip1 = x                                                        # (16, 64)

    # layer 2 (down, -> 4x4): 16 -> 32 (stride 2) -> 32
    x = _conv3x3(xpad_ref, slab_ref, [x], p['l2c0_w'], p['l2c0_b'], 8, 8, stride2=True)
    x = _conv3x3(xpad_ref, slab_ref, [x], p['l2c1_w'], p['l2c1_b'], 4, 4)   # (32, 16)

    # layer 3 (up, -> 8x8): tconv 32 -> 16, concat skip1, 32 -> 16 -> 16, seg head
    x = _tconv2x2(x, p['tu0_w'], 4, 4)                               # (16, 64)
    x = _conv3x3(xpad_ref, slab_ref, [x, skip1], p['l3c0_w'], p['l3c0_b'], 8, 8)
    x = _conv3x3(xpad_ref, slab_ref, [x], p['l3c1_w'], p['l3c1_b'], 8, 8)
    out_half_ref[0] = _seg1x1(x, p['seg0_w'], p['seg0_b'])           # (3, 64)

    # layer 4 (up, -> 16x16): tconv 16 -> 8, concat skip0, 16 -> 8 -> 8, seg head
    x = _tconv2x2(x, p['tu1_w'], 8, 8)                               # (8, 256)
    x = _conv3x3(xpad_ref, slab_ref, [x, skip0], p['l4c0_w'], p['l4c0_b'], 16, 16)
    x = _conv3x3(xpad_ref, slab_ref, [x], p['l4c1_w'], p['l4c1_b'], 16, 16)
    out_full_ref[0] = _seg1x1(x, p['seg1_w'], p['seg1_b'])           # (3, 256)


# ------------------------------ host-side wrapper ------------------------------

def _const_spec(a):
    zero_idx = (0,) * a.ndim
    return pl.BlockSpec(a.shape, lambda n, _z=zero_idx: _z)


def nas_unet_forward(x_nchw, kparams):
    """x_nchw: (N, 4, 16, 16) f32 -> (full-res seg 16x16, deep-supervision seg 8x8), NCHW."""
    N = x_nchw.shape[0]
    nc = kparams['seg1_w'].shape[0]
    x = x_nchw.reshape(N, 4, 256)            # channel-major flat spatial; no transpose needed
    flat = [kparams[k] for k in PARAM_KEYS]
    out_full, out_half = pl.pallas_call(
        _nas_unet_kernel,
        out_shape=(jax.ShapeDtypeStruct((N, nc, 256), jnp.float32),
                   jax.ShapeDtypeStruct((N, nc, 64), jnp.float32)),
        grid=(N,),
        in_specs=[pl.BlockSpec((1, 4, 256), lambda n: (n, 0, 0))] +
                 [_const_spec(a) for a in flat],
        out_specs=(pl.BlockSpec((1, nc, 256), lambda n: (n, 0, 0)),
                   pl.BlockSpec((1, nc, 64), lambda n: (n, 0, 0))),
        scratch_shapes=[pltpu.VMEM((32, XPAD_LANES), jnp.float32),
                        pltpu.VMEM((288, 256), jnp.float32)],
        compiler_params=pltpu.CompilerParams(dimension_semantics=("parallel",)),
    )(x, *flat)
    # lane-dense kernel outputs -> plain reshapes, no host-side transposes
    return out_full.reshape(N, nc, 16, 16), out_half.reshape(N, nc, 8, 8)


# ------------------------- network topology & parameters -------------------------

def build_network(input_channels, base_num_features, depth, skip_connects,
                  feat_mul=2, max_num_features=512):
    """Replicates NAS_UNet.__init__ topology construction."""
    net = {0: dict(input=input_channels, output=base_num_features,
                   skip_from=[], skip_to=[], scaling='down')}
    output_features = base_num_features
    for i in range(1, len(depth)):
        same_level = [j for j in range(i - 2, -1, -1) if depth[j] == depth[i]]
        skip_from = same_level[:skip_connects[i]] if skip_connects[i] in (1, 2) else []
        skip_mult = 1 + skip_connects[i]
        if depth[i] - depth[i - 1] == 1:
            input_features = output_features
            output_features = min(int(np.round(input_features * feat_mul)), max_num_features)
            input_features = input_features * skip_mult
            scaling = 'down'
        elif depth[i] - depth[i - 1] == 0:
            input_features = output_features * skip_mult
            scaling = 'non'
        else:
            input_features = output_features
            output_features = int(np.round(input_features / feat_mul))
            input_features = output_features * skip_mult
            scaling = 'up'
        net[i] = dict(input=input_features, output=output_features,
                      skip_from=skip_from, skip_to=[], scaling=scaling)
        for s in skip_from:
            net[s]['skip_to'].append(i)
    return net


def _fold_conv(key, ci, co):
    """Conv2d(3x3, bias) + eval-mode BatchNorm2d folded into a single (w, b)."""
    k1, k2, k3, k4, k5, k6 = jax.random.split(key, 6)
    w = jax.random.normal(k1, (3, 3, ci, co), jnp.float32) / np.sqrt(9.0 * ci)
    b = 0.01 * jax.random.normal(k2, (co,), jnp.float32)
    gamma = 1.0 + 0.1 * jax.random.normal(k3, (co,), jnp.float32)
    beta = 0.1 * jax.random.normal(k4, (co,), jnp.float32)
    mean = 0.1 * jax.random.normal(k5, (co,), jnp.float32)
    var = 1.0 + 0.1 * jax.random.uniform(k6, (co,), jnp.float32)
    scale = gamma / jnp.sqrt(var + BN_EPS)
    return dict(w=w * scale, b=(b - mean) * scale + beta)


def init_params(net, key, num_classes):
    """Deterministic synthetic parameters with the shapes the PyTorch module would have."""
    raw = {}
    up_idx = 0
    for l in range(len(net)):
        ci, co = net[l]['input'], net[l]['output']
        convs = []
        for (a, b) in ((ci, co), (co, co)):                 # num_conv_per_stage = 2
            key, sub = jax.random.split(key)
            convs.append(_fold_conv(sub, a, b))
        raw[f'l{l}'] = convs
        if net[l]['scaling'] == 'up':
            key, k1, k2, k3 = jax.random.split(key, 4)
            c_prev = net[l - 1]['output']
            raw[f'tu{up_idx}'] = (jax.random.normal(k1, (c_prev, 2, 2, co), jnp.float32)
                                  / np.sqrt(c_prev))
            raw[f'seg{up_idx}'] = dict(
                w=jax.random.normal(k2, (co, num_classes), jnp.float32) / np.sqrt(co),
                b=0.01 * jax.random.normal(k3, (num_classes,), jnp.float32))
            up_idx += 1
    # NOTE: the module also builds a final seg head that its forward never uses when 'up'
    # layers exist (this instance has two), so it is not materialized here.
    return raw


def _kw(w, cin_slab=None):
    """(3,3,ci,co) HWIO conv weight -> (co, 9*cin_slab) bf16, column = tap*cin_slab + ci."""
    ci, co = int(w.shape[2]), int(w.shape[3])
    if cin_slab is None:
        cin_slab = ci
    wt = jnp.transpose(jnp.asarray(w, jnp.float32), (3, 0, 1, 2)).reshape(co, 9, ci)
    if cin_slab != ci:
        wt = jnp.concatenate([wt, jnp.zeros((co, 9, cin_slab - ci), jnp.float32)], axis=2)
    return wt.reshape(co, 9 * cin_slab).astype(jnp.bfloat16)


def _kb(b):    # (co,) -> (co, 1) f32
    return jnp.asarray(b, jnp.float32).reshape(-1, 1)


def _ktu(w):   # (ci,2,2,co) -> (4, co, ci) bf16 (tap = a*2+b)
    ci, _, _, co = w.shape
    return (jnp.transpose(jnp.asarray(w, jnp.float32), (1, 2, 3, 0))
            .reshape(4, co, ci).astype(jnp.bfloat16))


def pack_kernel_params(raw):
    kp = {}
    for l in range(5):
        for c in (0, 1):
            w = raw[f'l{l}'][c]['w']
            ci = int(w.shape[2])
            ci_slab = ((ci + 7) // 8) * 8            # pad Cin=4 of the first conv to 8
            kp[f'l{l}c{c}_w'] = _kw(w, ci_slab)
            kp[f'l{l}c{c}_b'] = _kb(raw[f'l{l}'][c]['b'])
    for u in (0, 1):
        kp[f'tu{u}_w'] = _ktu(raw[f'tu{u}'])
        kp[f'seg{u}_w'] = jnp.asarray(raw[f'seg{u}']['w'], jnp.float32).T.astype(jnp.bfloat16)
        kp[f'seg{u}_b'] = _kb(raw[f'seg{u}']['b'])
    return kp


# ------------------------- plain-JAX reference (for validation) -------------------------

def _ref_conv(x, w, b, stride=1):
    y = jax.lax.conv_general_dilated(
        x.astype(jnp.bfloat16), jnp.asarray(w, jnp.float32).astype(jnp.bfloat16),
        window_strides=(stride, stride), padding=((1, 1), (1, 1)),
        dimension_numbers=('NHWC', 'HWIO', 'NHWC'),
        preferred_element_type=jnp.float32)
    y = y + b
    return jnp.where(y >= 0.0, y, NEG_SLOPE * y)


def _ref_tconv(x, w):
    N, H, W, _ = x.shape
    co = w.shape[-1]
    y = jnp.einsum('nhwc,cabk->nhawbk', x.astype(jnp.bfloat16),
                   jnp.asarray(w).astype(jnp.bfloat16),
                   preferred_element_type=jnp.float32)
    return y.reshape(N, 2 * H, 2 * W, co)


def _ref_seg(x, w, b):
    return jnp.einsum('nhwc,ck->nhwk', x.astype(jnp.bfloat16),
                      jnp.asarray(w).astype(jnp.bfloat16),
                      preferred_element_type=jnp.float32) + b


def reference_forward(x_nchw, raw):
    """Plain-XLA eval-mode forward mirroring the kernel's bf16 matmul operands."""
    x = jnp.transpose(x_nchw, (0, 2, 3, 1))
    x = _ref_conv(x, raw['l0'][0]['w'], raw['l0'][0]['b'])
    x = _ref_conv(x, raw['l0'][1]['w'], raw['l0'][1]['b'])
    skip0 = x
    x = _ref_conv(x, raw['l1'][0]['w'], raw['l1'][0]['b'], stride=2)
    x = _ref_conv(x, raw['l1'][1]['w'], raw['l1'][1]['b'])
    skip1 = x
    x = _ref_conv(x, raw['l2'][0]['w'], raw['l2'][0]['b'], stride=2)
    x = _ref_conv(x, raw['l2'][1]['w'], raw['l2'][1]['b'])
    x = _ref_tconv(x, raw['tu0'])
    x = jnp.concatenate([x, skip1], axis=-1)
    x = _ref_conv(x, raw['l3'][0]['w'], raw['l3'][0]['b'])
    x = _ref_conv(x, raw['l3'][1]['w'], raw['l3'][1]['b'])
    seg_half = _ref_seg(x, raw['seg0']['w'], raw['seg0']['b'])
    x = _ref_tconv(x, raw['tu1'])
    x = jnp.concatenate([x, skip0], axis=-1)
    x = _ref_conv(x, raw['l4'][0]['w'], raw['l4'][0]['b'])
    x = _ref_conv(x, raw['l4'][1]['w'], raw['l4'][1]['b'])
    seg_full = _ref_seg(x, raw['seg1']['w'], raw['seg1']['b'])
    return (jnp.transpose(seg_full, (0, 3, 1, 2)),
            jnp.transpose(seg_half, (0, 3, 1, 2)))


# ----------------------------------- main ------------------------------------

if __name__ == "__main__":
    depth = [0, 1, 2, 1, 0]
    skip_connects = [0, 0, 0, 1, 1]
    num_classes = 3
    net = build_network(input_channels=4, base_num_features=8,
                        depth=depth, skip_connects=skip_connects)

    key = jax.random.PRNGKey(0)
    kx, kp_key = jax.random.split(key)
    raw = init_params(net, kp_key, num_classes=num_classes)
    kparams = pack_kernel_params(raw)

    x = jax.random.normal(kx, (2, 4, 16, 16), jnp.float32)   # NCHW, like the PyTorch module

    fwd = jax.jit(nas_unet_forward)
    outs = jax.block_until_ready(fwd(x, kparams))

    # (full-res head, deep-supervision head at 1/2 resolution), both NCHW.
    assert outs[0].shape == (2, num_classes, 16, 16), outs[0].shape
    assert outs[1].shape == (2, num_classes, 8, 8), outs[1].shape
    assert all(bool(jnp.isfinite(o).all()) for o in outs)

    # Cross-check against a plain-JAX (XLA) reference that uses the same bf16 matmul operands.
    ref = jax.jit(reference_forward)(x, raw)
    for got, want in zip(outs, ref):
        np.testing.assert_allclose(np.asarray(got), np.asarray(want), rtol=5e-2, atol=5e-2)

    # TODO(synk): training-mode Dropout2d(p=0.5) / BatchNorm batch statistics are not modeled
    # (eval-mode semantics implemented: dropout = identity, BN folded into the convs).
    print("KERNEL_OK")
</pallas_src>

<mosaic_0001>
module attributes {stable_mosaic.version = 11 : i64} {
  func.func @_nas_unet_kernel(%arg0: i32, %arg1: memref<1x4x256xf32, #tpu.memory_space<vmem>>, %arg2: memref<8x72xbf16, #tpu.memory_space<vmem>>, %arg3: memref<8x1xf32, #tpu.memory_space<vmem>>, %arg4: memref<8x72xbf16, #tpu.memory_space<vmem>>, %arg5: memref<8x1xf32, #tpu.memory_space<vmem>>, %arg6: memref<16x72xbf16, #tpu.memory_space<vmem>>, %arg7: memref<16x1xf32, #tpu.memory_space<vmem>>, %arg8: memref<16x144xbf16, #tpu.memory_space<vmem>>, %arg9: memref<16x1xf32, #tpu.memory_space<vmem>>, %arg10: memref<32x144xbf16, #tpu.memory_space<vmem>>, %arg11: memref<32x1xf32, #tpu.memory_space<vmem>>, %arg12: memref<32x288xbf16, #tpu.memory_space<vmem>>, %arg13: memref<32x1xf32, #tpu.memory_space<vmem>>, %arg14: memref<4x16x32xbf16, #tpu.memory_space<vmem>>, %arg15: memref<16x288xbf16, #tpu.memory_space<vmem>>, %arg16: memref<16x1xf32, #tpu.memory_space<vmem>>, %arg17: memref<16x144xbf16, #tpu.memory_space<vmem>>, %arg18: memref<16x1xf32, #tpu.memory_space<vmem>>, %arg19: memref<3x16xbf16, #tpu.memory_space<vmem>>, %arg20: memref<3x1xf32, #tpu.memory_space<vmem>>, %arg21: memref<4x8x16xbf16, #tpu.memory_space<vmem>>, %arg22: memref<8x144xbf16, #tpu.memory_space<vmem>>, %arg23: memref<8x1xf32, #tpu.memory_space<vmem>>, %arg24: memref<8x72xbf16, #tpu.memory_space<vmem>>, %arg25: memref<8x1xf32, #tpu.memory_space<vmem>>, %arg26: memref<3x8xbf16, #tpu.memory_space<vmem>>, %arg27: memref<3x1xf32, #tpu.memory_space<vmem>>, %arg28: memref<1x3x256xf32, #tpu.memory_space<vmem>>, %arg29: memref<1x3x64xf32, #tpu.memory_space<vmem>>, %arg30: memref<32x512xf32, #tpu.memory_space<vmem>>, %arg31: memref<288x256xf32, #tpu.memory_space<vmem>>) attributes {dimension_semantics = [#tpu.dimension_semantics<parallel>], iteration_bounds = array<i64: 2>, scalar_prefetch = 0 : i64, scratch_operands = 2 : i64, tpu.core_type = #tpu.core_type<tc>, window_params = [{transform_indices = @transform_0, window_bounds = array<i64: 1, 4, 256>}, {pipeline_mode = #tpu.pipeline_mode<synchronous>, transform_indices = @transform_1, window_bounds = array<i64: 8, 72>}, {pipeline_mode = #tpu.pipeline_mode<synchronous>, transform_indices = @transform_2, window_bounds = array<i64: 8, 1>}, {pipeline_mode = #tpu.pipeline_mode<synchronous>, transform_indices = @transform_3, window_bounds = array<i64: 8, 72>}, {pipeline_mode = #tpu.pipeline_mode<synchronous>, transform_indices = @transform_4, window_bounds = array<i64: 8, 1>}, {pipeline_mode = #tpu.pipeline_mode<synchronous>, transform_indices = @transform_5, window_bounds = array<i64: 16, 72>}, {pipeline_mode = #tpu.pipeline_mode<synchronous>, transform_indices = @transform_6, window_bounds = array<i64: 16, 1>}, {pipeline_mode = #tpu.pipeline_mode<synchronous>, transform_indices = @transform_7, window_bounds = array<i64: 16, 144>}, {pipeline_mode = #tpu.pipeline_mode<synchronous>, transform_indices = @transform_8, window_bounds = array<i64: 16, 1>}, {pipeline_mode = #tpu.pipeline_mode<synchronous>, transform_indices = @transform_9, window_bounds = array<i64: 32, 144>}, {pipeline_mode = #tpu.pipeline_mode<synchronous>, transform_indices = @transform_10, window_bounds = array<i64: 32, 1>}, {pipeline_mode = #tpu.pipeline_mode<synchronous>, transform_indices = @transform_11, window_bounds = array<i64: 32, 288>}, {pipeline_mode = #tpu.pipeline_mode<synchronous>, transform_indices = @transform_12, window_bounds = array<i64: 32, 1>}, {pipeline_mode = #tpu.pipeline_mode<synchronous>, transform_indices = @transform_13, window_bounds = array<i64: 4, 16, 32>}, {pipeline_mode = #tpu.pipeline_mode<synchronous>, transform_indices = @transform_14, window_bounds = array<i64: 16, 288>}, {pipeline_mode = #tpu.pipeline_mode<synchronous>, transform_indices = @transform_15, window_bounds = array<i64: 16, 1>}, {pipeline_mode = #tpu.pipeline_mode<synchronous>, transform_indices = @transform_16, window_bounds = array<i64: 16, 144>}, {pipeline_mode = #tpu.pipeline_mode<synchronous>, transform_indices = @transform_17, window_bounds = array<i64: 16, 1>}, {pipeline_mode = #tpu.pipeline_mode<synchronous>, transform_indices = @transform_18, window_bounds = array<i64: 3, 16>}, {pipeline_mode = #tpu.pipeline_mode<synchronous>, transform_indices = @transform_19, window_bounds = array<i64: 3, 1>}, {pipeline_mode = #tpu.pipeline_mode<synchronous>, transform_indices = @transform_20, window_bounds = array<i64: 4, 8, 16>}, {pipeline_mode = #tpu.pipeline_mode<synchronous>, transform_indices = @transform_21, window_bounds = array<i64: 8, 144>}, {pipeline_mode = #tpu.pipeline_mode<synchronous>, transform_indices = @transform_22, window_bounds = array<i64: 8, 1>}, {pipeline_mode = #tpu.pipeline_mode<synchronous>, transform_indices = @transform_23, window_bounds = array<i64: 8, 72>}, {pipeline_mode = #tpu.pipeline_mode<synchronous>, transform_indices = @transform_24, window_bounds = array<i64: 8, 1>}, {pipeline_mode = #tpu.pipeline_mode<synchronous>, transform_indices = @transform_25, window_bounds = array<i64: 3, 8>}, {pipeline_mode = #tpu.pipeline_mode<synchronous>, transform_indices = @transform_26, window_bounds = array<i64: 3, 1>}, {transform_indices = @transform_27, window_bounds = array<i64: 1, 3, 256>}, {transform_indices = @transform_28, window_bounds = array<i64: 1, 3, 64>}]} {
    %cst = arith.constant 0.000000e+00 : f32
    %0 = vector.broadcast %cst : f32 to vector<32x32xf32>
    %c0 = arith.constant 0 : index
    %c96 = arith.constant 96 : index
    %1 = vector.load %arg30[%c0, %c96] : memref<32x512xf32, #tpu.memory_space<vmem>>, vector<32x32xf32>
    tpu.vector_store %arg30[%c0, %c96], %0 {strides = array<i32>} : memref<32x512xf32, #tpu.memory_space<vmem>>, vector<32x32xf32>,
    %cst_0 = arith.constant 0.000000e+00 : f32
    %2 = vector.broadcast %cst_0 : f32 to vector<32x32xf32>
    %c0_1 = arith.constant 0 : index
    %c384 = arith.constant 384 : index
    %3 = vector.load %arg30[%c0_1, %c384] : memref<32x512xf32, #tpu.memory_space<vmem>>, vector<32x32xf32>
    tpu.vector_store %arg30[%c0_1, %c384], %2 {strides = array<i32>} : memref<32x512xf32, #tpu.memory_space<vmem>>, vector<32x32xf32>,
    %c0_2 = arith.constant 0 : index
    %c0_3 = arith.constant 0 : index
    %c0_4 = arith.constant 0 : index
    %4 = vector.load %arg1[%c0_2, %c0_3, %c0_4] : memref<1x4x256xf32, #tpu.memory_space<vmem>>, vector<1x4x256xf32>
    %5 = vector.shape_cast %4 : vector<1x4x256xf32> to vector<4x256xf32>
    %6 = tpu.iota {dimensions = array<i32: 1>} : vector<1x256xi32>
    %c4_i32 = arith.constant 4 : i32
    %7 = vector.broadcast %c4_i32 : i32 to vector<1x256xi32>
    %8 = arith.shrsi %6, %7 : vector<1x256xi32>
    %c15_i32 = arith.constant 15 : i32
    %9 = vector.broadcast %c15_i32 : i32 to vector<1x256xi32>
    %10 = arith.andi %6, %9 : vector<1x256xi32>
    %cst_5 = arith.constant 0.000000e+00 : f32
    %11 = vector.broadcast %cst_5 : f32 to vector<72x256xf32>
    %c0_6 = arith.constant 0 : index
    %c0_7 = arith.constant 0 : index
    %12 = vector.load %arg31[%c0_6, %c0_7] : memref<288x256xf32, #tpu.memory_space<vmem>>, vector<72x256xf32>
    tpu.vector_store %arg31[%c0_6, %c0_7], %11 {strides = array<i32>} : memref<288x256xf32, #tpu.memory_space<vmem>>, vector<72x256xf32>,
    %c0_8 = arith.constant 0 : index
    %c128 = arith.constant 128 : index
    %13 = vector.load %arg30[%c0_8, %c128] : memref<32x512xf32, #tpu.memory_space<vmem>>, vector<4x256xf32>
    tpu.vector_store %arg30[%c0_8, %c128], %5 {strides = array<i32>} : memref<32x512xf32, #tpu.memory_space<vmem>>, vector<4x256xf32>,
    %c0_9 = arith.constant 0 : index
    %c111 = arith.constant 111 : index
    %14 = vector.load %arg30[%c0_9, %c111] : memref<32x512xf32, #tpu.memory_space<vmem>>, vector<4x256xf32>
    %c0_i32 = arith.constant 0 : i32
    %15 = vector.broadcast %c0_i32 : i32 to vector<1x256xi32>
    %16 = arith.cmpi sgt, %8, %15 : vector<1x256xi32>
    %c0_i32_10 = arith.constant 0 : i32
    %17 = vector.broadcast %c0_i32_10 : i32 to vector<1x256xi32>
    %18 = arith.cmpi sgt, %10, %17 : vector<1x256xi32>
    %19 = arith.andi %16, %18 : vector<1x256xi1>
    %cst_11 = arith.constant 0.000000e+00 : f32
    %20 = vector.shape_cast %19 : vector<1x256xi1> to vector<1x256xi1>
    %21 = vector.broadcast %20 : vector<1x256xi1> to vector<4x256xi1>
    %22 = vector.broadcast %cst_11 : f32 to vector<4x256xf32>
    %23 = arith.select %21, %14, %22 : vector<4x256xi1>, vector<4x256xf32>
    %c0_12 = arith.constant 0 : index
    %c0_13 = arith.constant 0 : index
    %24 = vector.load %arg31[%c0_12, %c0_13] : memref<288x256xf32, #tpu.memory_space<vmem>>, vector<4x256xf32>
    tpu.vector_store %arg31[%c0_12, %c0_13], %23 {strides = array<i32>} : memref<288x256xf32, #tpu.memory_space<vmem>>, vector<4x256xf32>,
    %c0_14 = arith.constant 0 : index
    %c112 = arith.constant 112 : index
    %25 = vector.load %arg30[%c0_14, %c112] : memref<32x512xf32, #tpu.memory_space<vmem>>, vector<4x256xf32>
    %c0_i32_15 = arith.constant 0 : i32
    %26 = vector.broadcast %c0_i32_15 : i32 to vector<1x256xi32>
    %27 = arith.cmpi sgt, %8, %26 : vector<1x256xi32>
    %cst_16 = arith.constant 0.000000e+00 : f32
    %28 = vector.shape_cast %27 : vector<1x256xi1> to vector<1x256xi1>
    %29 = vector.broadcast %28 : vector<1x256xi1> to vector<4x256xi1>
    %30 = vector.broadcast %cst_16 : f32 to vector<4x256xf32>
    %31 = arith.select %29, %25, %30 : vector<4x256xi1>, vector<4x256xf32>
    %c8 = arith.constant 8 : index
    %c0_17 = arith.constant 0 : index
    %32 = vector.load %arg31[%c8, %c0_17] : memref<288x256xf32, #tpu.memory_space<vmem>>, vector<4x256xf32>
    tpu.vector_store %arg31[%c8, %c0_17], %31 {strides = array<i32>} : memref<288x256xf32, #tpu.memory_space<vmem>>, vector<4x256xf32>,
    %c0_18 = arith.constant 0 : index
    %c113 = arith.constant 113 : index
    %33 = vector.load %arg30[%c0_18, %c113] : memref<32x512xf32, #tpu.memory_space<vmem>>, vector<4x256xf32>
    %c0_i32_19 = arith.constant 0 : i32
    %34 = vector.broadcast %c0_i32_19 : i32 to vector<1x256xi32>
    %35 = arith.cmpi sgt, %8, %34 : vector<1x256xi32>
    %c15_i32_20 = arith.constant 15 : i32
    %36 = vector.broadcast %c15_i32_20 : i32 to vector<1x256xi32>
    %37 = arith.cmpi slt, %10, %36 : vector<1x256xi32>
    %38 = arith.andi %35, %37 : vector<1x256xi1>
    %cst_21 = arith.constant 0.000000e+00 : f32
    %39 = vector.shape_cast %38 : vector<1x256xi1> to vector<1x256xi1>
    %40 = vector.broadcast %39 : vector<1x256xi1> to vector<4x256xi1>
    %41 = vector.broadcast %cst_21 : f32 to vector<4x256xf32>
    %42 = arith.select %40, %33, %41 : vector<4x256xi1>, vector<4x256xf32>
    %c16 = arith.constant 16 : index
    %c0_22 = arith.constant 0 : index
    %43 = vector.load %arg31[%c16, %c0_22] : memref<288x256xf32, #tpu.memory_space<vmem>>, vector<4x256xf32>
    tpu.vector_store %arg31[%c16, %c0_22], %42 {strides = array<i32>} : memref<288x256xf32, #tpu.memory_space<vmem>>, vector<4x256xf32>,
    %c0_23 = arith.constant 0 : index
    %c127 = arith.constant 127 : index
    %44 = vector.load %arg30[%c0_23, %c127] : memref<32x512xf32, #tpu.memory_space<vmem>>, vector<4x256xf32>
    %c0_i32_24 = arith.constant 0 : i32
    %45 = vector.broadcast %c0_i32_24 : i32 to vector<1x256xi32>
    %46 = arith.cmpi sgt, %10, %45 : vector<1x256xi32>
    %cst_25 = arith.constant 0.000000e+00 : f32
    %47 = vector.shape_cast %46 : vector<1x256xi1> to vector<1x256xi1>
    %48 = vector.broadcast %47 : vector<1x256xi1> to vector<4x256xi1>
    %49 = vector.broadcast %cst_25 : f32 to vector<4x256xf32>
    %50 = arith.select %48, %44, %49 : vector<4x256xi1>, vector<4x256xf32>
    %c24 = arith.constant 24 : index
    %c0_26 = arith.constant 0 : index
    %51 = vector.load %arg31[%c24, %c0_26] : memref<288x256xf32, #tpu.memory_space<vmem>>, vector<4x256xf32>
    tpu.vector_store %arg31[%c24, %c0_26], %50 {strides = array<i32>} : memref<288x256xf32, #tpu.memory_space<vmem>>, vector<4x256xf32>,
    %c0_27 = arith.constant 0 : index
    %c128_28 = arith.constant 128 : index
    %52 = vector.load %arg30[%c0_27, %c128_28] : memref<32x512xf32, #tpu.memory_space<vmem>>, vector<4x256xf32>
    %c32 = arith.constant 32 : index
    %c0_29 = arith.constant 0 : index
    %53 = vector.load %arg31[%c32, %c0_29] : memref<288x256xf32, #tpu.memory_space<vmem>>, vector<4x256xf32>
    tpu.vector_store %arg31[%c32, %c0_29], %52 {strides = array<i32>} : memref<288x256xf32, #tpu.memory_space<vmem>>, vector<4x256xf32>,
    %c0_30 = arith.constant 0 : index
    %c129 = arith.constant 129 : index
    %54 = vector.load %arg30[%c0_30, %c129] : memref<32x512xf32, #tpu.memory_space<vmem>>, vector<4x256xf32>
    %c15_i32_31 = arith.constant 15 : i32
    %55 = vector.broadcast %c15_i32_31 : i32 to vector<1x256xi32>
    %56 = arith.cmpi slt, %10, %55 : vector<1x256xi32>
    %cst_32 = arith.constant 0.000000e+00 : f32
    %57 = vector.shape_cast %56 : vector<1x256xi1> to vector<1x256xi1>
    %58 = vector.broadcast %57 : vector<1x256xi1> to vector<4x256xi1>
    %59 = vector.broadcast %cst_32 : f32 to vector<4x256xf32>
    %60 = arith.select %58, %54, %59 : vector<4x256xi1>, vector<4x256xf32>
    %c40 = arith.constant 40 : index
    %c0_33 = arith.constant 0 : index
    %61 = vector.load %arg31[%c40, %c0_33] : memref<288x256xf32, #tpu.memory_space<vmem>>, vector<4x256xf32>
    tpu.vector_store %arg31[%c40, %c0_33], %60 {strides = array<i32>} : memref<288x256xf32, #tpu.memory_space<vmem>>, vector<4x256xf32>,
    %c0_34 = arith.constant 0 : index
    %c143 = arith.constant 143 : index
    %62 = vector.load %arg30[%c0_34, %c143] : memref<32x512xf32, #tpu.memory_space<vmem>>, vector<4x256xf32>
    %c15_i32_35 = arith.constant 15 : i32
    %63 = vector.broadcast %c15_i32_35 : i32 to vector<1x256xi32>
    %64 = arith.cmpi slt, %8, %63 : vector<1x256xi32>
    %c0_i32_36 = arith.constant 0 : i32
    %65 = vector.broadcast %c0_i32_36 : i32 to vector<1x256xi32>
    %66 = arith.cmpi sgt, %10, %65 : vector<1x256xi32>
    %67 = arith.andi %64, %66 : vector<1x256xi1>
    %cst_37 = arith.constant 0.000000e+00 : f32
    %68 = vector.shape_cast %67 : vector<1x256xi1> to vector<1x256xi1>
    %69 = vector.broadcast %68 : vector<1x256xi1> to vector<4x256xi1>
    %70 = vector.broadcast %cst_37 : f32 to vector<4x256xf32>
    %71 = arith.select %69, %62, %70 : vector<4x256xi1>, vector<4x256xf32>
    %c48 = arith.constant 48 : index
    %c0_38 = arith.constant 0 : index
    %72 = vector.load %arg31[%c48, %c0_38] : memref<288x256xf32, #tpu.memory_space<vmem>>, vector<4x256xf32>
    tpu.vector_store %arg31[%c48, %c0_38], %71 {strides = array<i32>} : memref<288x256xf32, #tpu.memory_space<vmem>>, vector<4x256xf32>,
    %c0_39 = arith.constant 0 : index
    %c144 = arith.constant 144 : index
    %73 = vector.load %arg30[%c0_39, %c144] : memref<32x512xf32, #tpu.memory_space<vmem>>, vector<4x256xf32>
    %c15_i32_40 = arith.constant 15 : i32
    %74 = vector.broadcast %c15_i32_40 : i32 to vector<1x256xi32>
    %75 = arith.cmpi slt, %8, %74 : vector<1x256xi32>
    %cst_41 = arith.constant 0.000000e+00 : f32
    %76 = vector.shape_cast %75 : vector<1x256xi1> to vector<1x256xi1>
    %77 = vector.broadcast %76 : vector<1x256xi1> to vector<4x256xi1>
    %78 = vector.broadcast %cst_41 : f32 to vector<4x256xf32>
    %79 = arith.select %77, %73, %78 : vector<4x256xi1>, vector<4x256xf32>
    %c56 = arith.constant 56 : index
    %c0_42 = arith.constant 0 : index
    %80 = vector.load %arg31[%c56, %c0_42] : memref<288x256xf32, #tpu.memory_space<vmem>>, vector<4x256xf32>
    tpu.vector_store %arg31[%c56, %c0_42], %79 {strides = array<i32>} : memref<288x256xf32, #tpu.memory_space<vmem>>, vector<4x256xf32>,
    %c0_43 = arith.constant 0 : index
    %c145 = arith.constant 145 : index
    %81 = vector.load %arg30[%c0_43, %c145] : memref<32x512xf32, #tpu.memory_space<vmem>>, vector<4x256xf32>
    %c15_i32_44 = arith.constant 15 : i32
    %82 = vector.broadcast %c15_i32_44 : i32 to vector<1x256xi32>
    %83 = arith.cmpi slt, %8, %82 : vector<1x256xi32>
    %c15_i32_45 = arith.constant 15 : i32
    %84 = vector.broadcast %c15_i32_45 : i32 to vector<1x256xi32>
    %85 = arith.cmpi slt, %10, %84 : vector<1x256xi32>
    %86 = arith.andi %83, %85 : vector<1x256xi1>
    %cst_46 = arith.constant 0.000000e+00 : f32
    %87 = vector.shape_cast %86 : vector<1x256xi1> to vector<1x256xi1>
    %88 = vector.broadcast %87 : vector<1x256xi1> to vector<4x256xi1>
    %89 = vector.broadcast %cst_46 : f32 to vector<4x256xf32>
    %90 = arith.select %88, %81, %89 : vector<4x256xi1>, vector<4x256xf32>
    %c64 = arith.constant 64 : index
    %c0_47 = arith.constant 0 : index
    %91 = vector.load %arg31[%c64, %c0_47] : memref<288x256xf32, #tpu.memory_space<vmem>>, vector<4x256xf32>
    tpu.vector_store %arg31[%c64, %c0_47], %90 {strides = array<i32>} : memref<288x256xf32, #tpu.memory_space<vmem>>, vector<4x256xf32>,
    %c0_48 = arith.constant 0 : index
    %c0_49 = arith.constant 0 : index
    %92 = vector.load %arg2[%c0_48, %c0_49] : memref<8x72xbf16, #tpu.memory_space<vmem>>, vector<8x72xbf16>
    %c0_50 = arith.constant 0 : index
    %c0_51 = arith.constant 0 : index
    %93 = vector.load %arg31[%c0_50, %c0_51] : memref<288x256xf32, #tpu.memory_space<vmem>>, vector<72x256xf32>
    %94 = arith.truncf %93 : vector<72x256xf32> to vector<72x256xbf16>
    %cst_52 = arith.constant dense<0.000000e+00> : vector<8x256xf32>
    %95 = tpu.matmul %92, %94, %cst_52 {dimension_numbers = #tpu.dot_dimension_numbers<[1], [0], [0], [1], [0, 0, 1, 1], [], []>} : vector<8x72xbf16>, vector<72x256xbf16>, vector<8x256xf32> -> vector<8x256xf32>
    %c0_53 = arith.constant 0 : index
    %c0_54 = arith.constant 0 : index
    %96 = vector.load %arg3[%c0_53, %c0_54] : memref<8x1xf32, #tpu.memory_space<vmem>>, vector<8x1xf32>
    %97 = vector.broadcast %96 : vector<8x1xf32> to vector<8x256xf32>
    %98 = arith.addf %95, %97 : vector<8x256xf32>
    %cst_55 = arith.constant 0.000000e+00 : f32
    %99 = vector.broadcast %cst_55 : f32 to vector<8x256xf32>
    %100 = arith.cmpf oge, %98, %99 : vector<8x256xf32>
    %cst_56 = arith.constant 0.00999999977 : f32
    %101 = vector.broadcast %cst_56 : f32 to vector<8x256xf32>
    %102 = arith.mulf %101, %98 : vector<8x256xf32>
    %103 = arith.select %100, %98, %102 : vector<8x256xi1>, vector<8x256xf32>
    %104 = tpu.iota {dimensions = array<i32: 1>} : vector<1x256xi32>
    %c4_i32_57 = arith.constant 4 : i32
    %105 = vector.broadcast %c4_i32_57 : i32 to vector<1x256xi32>
    %106 = arith.shrsi %104, %105 : vector<1x256xi32>
    %c15_i32_58 = arith.constant 15 : i32
    %107 = vector.broadcast %c15_i32_58 : i32 to vector<1x256xi32>
    %108 = arith.andi %104, %107 : vector<1x256xi32>
    %c0_59 = arith.constant 0 : index
    %c128_60 = arith.constant 128 : index
    %109 = vector.load %arg30[%c0_59, %c128_60] : memref<32x512xf32, #tpu.memory_space<vmem>>, vector<8x256xf32>
    tpu.vector_store %arg30[%c0_59, %c128_60], %103 {strides = array<i32>} : memref<32x512xf32, #tpu.memory_space<vmem>>, vector<8x256xf32>,
    %c0_61 = arith.constant 0 : index
    %c111_62 = arith.constant 111 : index
    %110 = vector.load %arg30[%c0_61, %c111_62] : memref<32x512xf32, #tpu.memory_space<vmem>>, vector<8x256xf32>
    %c0_i32_63 = arith.constant 0 : i32
    %111 = vector.broadcast %c0_i32_63 : i32 to vector<1x256xi32>
    %112 = arith.cmpi sgt, %106, %111 : vector<1x256xi32>
    %c0_i32_64 = arith.constant 0 : i32
    %113 = vector.broadcast %c0_i32_64 : i32 to vector<1x256xi32>
    %114 = arith.cmpi sgt, %108, %113 : vector<1x256xi32>
    %115 = arith.andi %112, %114 : vector<1x256xi1>
    %cst_65 = arith.constant 0.000000e+00 : f32
    %116 = vector.shape_cast %115 : vector<1x256xi1> to vector<1x256xi1>
    %117 = vector.broadcast %116 : vector<1x256xi1> to vector<8x256xi1>
    %118 = vector.broadcast %cst_65 : f32 to vector<8x256xf32>
    %119 = arith.select %117, %110, %118 : vector<8x256xi1>, vector<8x256xf32>
    %c0_66 = arith.constant 0 : index
    %c0_67 = arith.constant 0 : index
    %120 = vector.load %arg31[%c0_66, %c0_67] : memref<288x256xf32, #tpu.memory_space<vmem>>, vector<8x256xf32>
    tpu.vector_store %arg31[%c0_66, %c0_67], %119 {strides = array<i32>} : memref<288x256xf32, #tpu.memory_space<vmem>>, vector<8x256xf32>,
    %c0_68 = arith.constant 0 : index
    %c112_69 = arith.constant 112 : index
    %121 = vector.load %arg30[%c0_68, %c112_69] : memref<32x512xf32, #tpu.memory_space<vmem>>, vector<8x256xf32>
    %c0_i32_70 = arith.constant 0 : i32
    %122 = vector.broadcast %c0_i32_70 : i32 to vector<1x256xi32>
    %123 = arith.cmpi sgt, %106, %122 : vector<1x256xi32>
    %cst_71 = arith.constant 0.000000e+00 : f32
    %124 = vector.shape_cast %123 : vector<1x256xi1> to vector<1x256xi1>
    %125 = vector.broadcast %124 : vector<1x256xi1> to vector<8x256xi1>
    %126 = vector.broadcast %cst_71 : f32 to vector<8x256xf32>
    %127 = arith.select %125, %121, %126 : vector<8x256xi1>, vector<8x256xf32>
    %c8_72 = arith.constant 8 : index
    %c0_73 = arith.constant 0 : index
    %128 = vector.load %arg31[%c8_72, %c0_73] : memref<288x256xf32, #tpu.memory_space<vmem>>, vector<8x256xf32>
    tpu.vector_store %arg31[%c8_72, %c0_73], %127 {strides = array<i32>} : memref<288x256xf32, #tpu.memory_space<vmem>>, vector<8x256xf32>,
    %c0_74 = arith.constant 0 : index
    %c113_75 = arith.constant 113 : index
    %129 = vector.load %arg30[%c0_74, %c113_75] : memref<32x512xf32, #tpu.memory_space<vmem>>, vector<8x256xf32>
    %c0_i32_76 = arith.constant 0 : i32
    %130 = vector.broadcast %c0_i32_76 : i32 to vector<1x256xi32>
    %131 = arith.cmpi sgt, %106, %130 : vector<1x256xi32>
    %c15_i32_77 = arith.constant 15 : i32
    %132 = vector.broadcast %c15_i32_77 : i32 to vector<1x256xi32>
    %133 = arith.cmpi slt, %108, %132 : vector<1x256xi32>
    %134 = arith.andi %131, %133 : vector<1x256xi1>
    %cst_78 = arith.constant 0.000000e+00 : f32
    %135 = vector.shape_cast %134 : vector<1x256xi1> to vector<1x256xi1>
    %136 = vector.broadcast %135 : vector<1x256xi1> to vector<8x256xi1>
    %137 = vector.broadcast %cst_78 : f32 to vector<8x256xf32>
    %138 = arith.select %136, %129, %137 : vector<8x256xi1>, vector<8x256xf32>
    %c16_79 = arith.constant 16 : index
    %c0_80 = arith.constant 0 : index
    %139 = vector.load %arg31[%c16_79, %c0_80] : memref<288x256xf32, #tpu.memory_space<vmem>>, vector<8x256xf32>
    tpu.vector_store %arg31[%c16_79, %c0_80], %138 {strides = array<i32>} : memref<288x256xf32, #tpu.memory_space<vmem>>, vector<8x256xf32>,
    %c0_81 = arith.constant 0 : index
    %c127_82 = arith.constant 127 : index
    %140 = vector.load %arg30[%c0_81, %c127_82] : memref<32x512xf32, #tpu.memory_space<vmem>>, vector<8x256xf32>
    %c0_i32_83 = arith.constant 0 : i32
    %141 = vector.broadcast %c0_i32_83 : i32 to vector<1x256xi32>
    %142 = arith.cmpi sgt, %108, %141 : vector<1x256xi32>
    %cst_84 = arith.constant 0.000000e+00 : f32
    %143 = vector.shape_cast %142 : vector<1x256xi1> to vector<1x256xi1>
    %144 = vector.broadcast %143 : vector<1x256xi1> to vector<8x256xi1>
    %145 = vector.broadcast %cst_84 : f32 to vector<8x256xf32>
    %146 = arith.select %144, %140, %145 : vector<8x256xi1>, vector<8x256xf32>
    %c24_85 = arith.constant 24 : index
    %c0_86 = arith.constant 0 : index
    %147 = vector.load %arg31[%c24_85, %c0_86] : memref<288x256xf32, #tpu.memory_space<vmem>>, vector<8x256xf32>
    tpu.vector_store %arg31[%c24_85, %c0_86], %146 {strides = array<i32>} : memref<288x256xf32, #tpu.memory_space<vmem>>, vector<8x256xf32>,
    %c0_87 = arith.constant 0 : index
    %c128_88 = arith.constant 128 : index
    %148 = vector.load %arg30[%c0_87, %c128_88] : memref<32x512xf32, #tpu.memory_space<vmem>>, vector<8x256xf32>
    %c32_89 = arith.constant 32 : index
    %c0_90 = arith.constant 0 : index
    %149 = vector.load %arg31[%c32_89, %c0_90] : memref<288x256xf32, #tpu.memory_space<vmem>>, vector<8x256xf32>
    tpu.vector_store %arg31[%c32_89, %c0_90], %148 {strides = array<i32>} : memref<288x256xf32, #tpu.memory_space<vmem>>, vector<8x256xf32>,
    %c0_91 = arith.constant 0 : index
    %c129_92 = arith.constant 129 : index
    %150 = vector.load %arg30[%c0_91, %c129_92] : memref<32x512xf32, #tpu.memory_space<vmem>>, vector<8x256xf32>
    %c15_i32_93 = arith.constant 15 : i32
    %151 = vector.broadcast %c15_i32_93 : i32 to vector<1x256xi32>
    %152 = arith.cmpi slt, %108, %151 : vector<1x256xi32>
    %cst_94 = arith.constant 0.000000e+00 : f32
    %153 = vector.shape_cast %152 : vector<1x256xi1> to vector<1x256xi1>
    %154 = vector.broadcast %153 : vector<1x256xi1> to vector<8x256xi1>
    %155 = vector.broadcast %cst_94 : f32 to vector<8x256xf32>
    %156 = arith.select %154, %150, %155 : vector<8x256xi1>, vector<8x256xf32>
    %c40_95 = arith.constant 40 : index
    %c0_96 = arith.constant 0 : index
    %157 = vector.load %arg31[%c40_95, %c0_96] : memref<288x256xf32, #tpu.memory_space<vmem>>, vector<8x256xf32>
    tpu.vector_store %arg31[%c40_95, %c0_96], %156 {strides = array<i32>} : memref<288x256xf32, #tpu.memory_space<vmem>>, vector<8x256xf32>,
    %c0_97 = arith.constant 0 : index
    %c143_98 = arith.constant 143 : index
    %158 = vector.load %arg30[%c0_97, %c143_98] : memref<32x512xf32, #tpu.memory_space<vmem>>, vector<8x256xf32>
    %c15_i32_99 = arith.constant 15 : i32
    %159 = vector.broadcast %c15_i32_99 : i32 to vector<1x256xi32>
    %160 = arith.cmpi slt, %106, %159 : vector<1x256xi32>
    %c0_i32_100 = arith.constant 0 : i32
    %161 = vector.broadcast %c0_i32_100 : i32 to vector<1x256xi32>
    %162 = arith.cmpi sgt, %108, %161 : vector<1x256xi32>
    %163 = arith.andi %160, %162 : vector<1x256xi1>
    %cst_101 = arith.constant 0.000000e+00 : f32
    %164 = vector.shape_cast %163 : vector<1x256xi1> to vector<1x256xi1>
    %165 = vector.broadcast %164 : vector<1x256xi1> to vector<8x256xi1>
    %166 = vector.broadcast %cst_101 : f32 to vector<8x256xf32>
    %167 = arith.select %165, %158, %166 : vector<8x256xi1>, vector<8x256xf32>
    %c48_102 = arith.constant 48 : index
    %c0_103 = arith.constant 0 : index
    %168 = vector.load %arg31[%c48_102, %c0_103] : memref<288x256xf32, #tpu.memory_space<vmem>>, vector<8x256xf32>
    tpu.vector_store %arg31[%c48_102, %c0_103], %167 {strides = array<i32>} : memref<288x256xf32, #tpu.memory_space<vmem>>, vector<8x256xf32>,
    %c0_104 = arith.constant 0 : index
    %c144_105 = arith.constant 144 : index
    %169 = vector.load %arg30[%c0_104, %c144_105] : memref<32x512xf32, #tpu.memory_space<vmem>>, vector<8x256xf32>
    %c15_i32_106 = arith.constant 15 : i32
    %170 = vector.broadcast %c15_i32_106 : i32 to vector<1x256xi32>
    %171 = arith.cmpi slt, %106, %170 : vector<1x256xi32>
    %cst_107 = arith.constant 0.000000e+00 : f32
    %172 = vector.shape_cast %171 : vector<1x256xi1> to vector<1x256xi1>
    %173 = vector.broadcast %172 : vector<1x256xi1> to vector<8x256xi1>
    %174 = vector.broadcast %cst_107 : f32 to vector<8x256xf32>
    %175 = arith.select %173, %169, %174 : vector<8x256xi1>, vector<8x256xf32>
    %c56_108 = arith.constant 56 : index
    %c0_109 = arith.constant 0 : index
    %176 = vector.load %arg31[%c56_108, %c0_109] : memref<288x256xf32, #tpu.memory_space<vmem>>, vector<8x256xf32>
    tpu.vector_store %arg31[%c56_108, %c0_109], %175 {strides = array<i32>} : memref<288x256xf32, #tpu.memory_space<vmem>>, vector<8x256xf32>,
    %c0_110 = arith.constant 0 : index
    %c145_111 = arith.constant 145 : index
    %177 = vector.load %arg30[%c0_110, %c145_111] : memref<32x512xf32, #tpu.memory_space<vmem>>, vector<8x256xf32>
    %c15_i32_112 = arith.constant 15 : i32
    %178 = vector.broadcast %c15_i32_112 : i32 to vector<1x256xi32>
    %179 = arith.cmpi slt, %106, %178 : vector<1x256xi32>
    %c15_i32_113 = arith.constant 15 : i32
    %180 = vector.broadcast %c15_i32_113 : i32 to vector<1x256xi32>
    %181 = arith.cmpi slt, %108, %180 : vector<1x256xi32>
    %182 = arith.andi %179, %181 : vector<1x256xi1>
    %cst_114 = arith.constant 0.000000e+00 : f32
    %183 = vector.shape_cast %182 : vector<1x256xi1> to vector<1x256xi1>
    %184 = vector.broadcast %183 : vector<1x256xi1> to vector<8x256xi1>
    %185 = vector.broadcast %cst_114 : f32 to vector<8x256xf32>
    %186 = arith.select %184, %177, %185 : vector<8x256xi1>, vector<8x256xf32>
    %c64_115 = arith.constant 64 : index
    %c0_116 = arith.constant 0 : index
    %187 = vector.load %arg31[%c64_115, %c0_116] : memref<288x256xf32, #tpu.memory_space<vmem>>, vector<8x256xf32>
    tpu.vector_store %arg31[%c64_115, %c0_116], %186 {strides = array<i32>} : memref<288x256xf32, #tpu.memory_space<vmem>>, vector<8x256xf32>,
    %c0_117 = arith.constant 0 : index
    %c0_118 = arith.constant 0 : index
    %188 = vector.load %arg4[%c0_117, %c0_118] : memref<8x72xbf16, #tpu.memory_space<vmem>>, vector<8x72xbf16>
    %c0_119 = arith.constant 0 : index
    %c0_120 = arith.constant 0 : index
    %189 = vector.load %arg31[%c0_119, %c0_120] : memref<288x256xf32, #tpu.memory_space<vmem>>, vector<72x256xf32>
    %190 = arith.truncf %189 : vector<72x256xf32> to vector<72x256xbf16>
    %cst_121 = arith.constant dense<0.000000e+00> : vector<8x256xf32>
    %191 = tpu.matmul %188, %190, %cst_121 {dimension_numbers = #tpu.dot_dimension_numbers<[1], [0], [0], [1], [0, 0, 1, 1], [], []>} : vector<8x72xbf16>, vector<72x256xbf16>, vector<8x256xf32> -> vector<8x256xf32>
    %c0_122 = arith.constant 0 : index
    %c0_123 = arith.constant 0 : index
    %192 = vector.load %arg5[%c0_122, %c0_123] : memref<8x1xf32, #tpu.memory_space<vmem>>, vector<8x1xf32>
    %193 = vector.broadcast %192 : vector<8x1xf32> to vector<8x256xf32>
    %194 = arith.addf %191, %193 : vector<8x256xf32>
    %cst_124 = arith.constant 0.000000e+00 : f32
    %195 = vector.broadcast %cst_124 : f32 to vector<8x256xf32>
    %196 = arith.cmpf oge, %194, %195 : vector<8x256xf32>
    %cst_125 = arith.constant 0.00999999977 : f32
    %197 = vector.broadcast %cst_125 : f32 to vector<8x256xf32>
    %198 = arith.mulf %197, %194 : vector<8x256xf32>
    %199 = arith.select %196, %194, %198 : vector<8x256xi1>, vector<8x256xf32>
    %200 = tpu.iota {dimensions = array<i32: 1>} : vector<1x256xi32>
    %c4_i32_126 = arith.constant 4 : i32
    %201 = vector.broadcast %c4_i32_126 : i32 to vector<1x256xi32>
    %202 = arith.shrsi %200, %201 : vector<1x256xi32>
    %c15_i32_127 = arith.constant 15 : i32
    %203 = vector.broadcast %c15_i32_127 : i32 to vector<1x256xi32>
    %204 = arith.andi %200, %203 : vector<1x256xi32>
    %c0_128 = arith.constant 0 : index
    %c128_129 = arith.constant 128 : index
    %205 = vector.load %arg30[%c0_128, %c128_129] : memref<32x512xf32, #tpu.memory_space<vmem>>, vector<8x256xf32>
    tpu.vector_store %arg30[%c0_128, %c128_129], %199 {strides = array<i32>} : memref<32x512xf32, #tpu.memory_space<vmem>>, vector<8x256xf32>,
    %c0_130 = arith.constant 0 : index
    %c111_131 = arith.constant 111 : index
    %206 = vector.load %arg30[%c0_130, %c111_131] : memref<32x512xf32, #tpu.memory_space<vmem>>, vector<8x256xf32>
    %c0_i32_132 = arith.constant 0 : i32
    %207 = vector.broadcast %c0_i32_132 : i32 to vector<1x256xi32>
    %208 = arith.cmpi sgt, %202, %207 : vector<1x256xi32>
    %c0_i32_133 = arith.constant 0 : i32
    %209 = vector.broadcast %c0_i32_133 : i32 to vector<1x256xi32>
    %210 = arith.cmpi sgt, %204, %209 : vector<1x256xi32>
    %211 = arith.andi %208, %210 : vector<1x256xi1>
    %cst_134 = arith.constant 0.000000e+00 : f32
    %212 = vector.shape_cast %211 : vector<1x256xi1> to vector<1x256xi1>
    %213 = vector.broadcast %212 : vector<1x256xi1> to vector<8x256xi1>
    %214 = vector.broadcast %cst_134 : f32 to vector<8x256xf32>
    %215 = arith.select %213, %206, %214 : vector<8x256xi1>, vector<8x256xf32>
    %c0_135 = arith.constant 0 : index
    %c0_136 = arith.constant 0 : index
    %216 = vector.load %arg31[%c0_135, %c0_136] : memref<288x256xf32, #tpu.memory_space<vmem>>, vector<8x256xf32>
    tpu.vector_store %arg31[%c0_135, %c0_136], %215 {strides = array<i32>} : memref<288x256xf32, #tpu.memory_space<vmem>>, vector<8x256xf32>,
    %c0_137 = arith.constant 0 : index
    %c112_138 = arith.constant 112 : index
    %217 = vector.load %arg30[%c0_137, %c112_138] : memref<32x512xf32, #tpu.memory_space<vmem>>, vector<8x256xf32>
    %c0_i32_139 = arith.constant 0 : i32
    %218 = vector.broadcast %c0_i32_139 : i32 to vector<1x256xi32>
    %219 = arith.cmpi sgt, %202, %218 : vector<1x256xi32>
    %cst_140 = arith.constant 0.000000e+00 : f32
    %220 = vector.shape_cast %219 : vector<1x256xi1> to vector<1x256xi1>
    %221 = vector.broadcast %220 : vector<1x256xi1> to vector<8x256xi1>
    %222 = vector.broadcast %cst_140 : f32 to vector<8x256xf32>
    %223 = arith.select %221, %217, %222 : vector<8x256xi1>, vector<8x256xf32>
    %c8_141 = arith.constant 8 : index
    %c0_142 = arith.constant 0 : index
    %224 = vector.load %arg31[%c8_141, %c0_142] : memref<288x256xf32, #tpu.memory_space<vmem>>, vector<8x256xf32>
    tpu.vector_store %arg31[%c8_141, %c0_142], %223 {strides = array<i32>} : memref<288x256xf32, #tpu.memory_space<vmem>>, vector<8x256xf32>,
    %c0_143 = arith.constant 0 : index
    %c113_144 = arith.constant 113 : index
    %225 = vector.load %arg30[%c0_143, %c113_144] : memref<32x512xf32, #tpu.memory_space<vmem>>, vector<8x256xf32>
    %c0_i32_145 = arith.constant 0 : i32
    %226 = vector.broadcast %c0_i32_145 : i32 to vector<1x256xi32>
    %227 = arith.cmpi sgt, %202, %226 : vector<1x256xi32>
    %c15_i32_146 = arith.constant 15 : i32
    %228 = vector.broadcast %c15_i32_146 : i32 to vector<1x256xi32>
    %229 = arith.cmpi slt, %204, %228 : vector<1x256xi32>
    %230 = arith.andi %227, %229 : vector<1x256xi1>
    %cst_147 = arith.constant 0.000000e+00 : f32
    %231 = vector.shape_cast %230 : vector<1x256xi1> to vector<1x256xi1>
    %232 = vector.broadcast %231 : vector<1x256xi1> to vector<8x256xi1>
    %233 = vector.broadcast %cst_147 : f32 to vector<8x256xf32>
    %234 = arith.select %232, %225, %233 : vector<8x256xi1>, vector<8x256xf32>
    %c16_148 = arith.constant 16 : index
    %c0_149 = arith.constant 0 : index
    %235 = vector.load %arg31[%c16_148, %c0_149] : memref<288x256xf32, #tpu.memory_space<vmem>>, vector<8x256xf32>
    tpu.vector_store %arg31[%c16_148, %c0_149], %234 {strides = array<i32>} : memref<288x256xf32, #tpu.memory_space<vmem>>, vector<8x256xf32>,
    %c0_150 = arith.constant 0 : index
    %c127_151 = arith.constant 127 : index
    %236 = vector.load %arg30[%c0_150, %c127_151] : memref<32x512xf32, #tpu.memory_space<vmem>>, vector<8x256xf32>
    %c0_i32_152 = arith.constant 0 : i32
    %237 = vector.broadcast %c0_i32_152 : i32 to vector<1x256xi32>
    %238 = arith.cmpi sgt, %204, %237 : vector<1x256xi32>
    %cst_153 = arith.constant 0.000000e+00 : f32
    %239 = vector.shape_cast %238 : vector<1x256xi1> to vector<1x256xi1>
    %240 = vector.broadcast %239 : vector<1x256xi1> to vector<8x256xi1>
    %241 = vector.broadcast %cst_153 : f32 to vector<8x256xf32>
    %242 = arith.select %240, %236, %241 : vector<8x256xi1>, vector<8x256xf32>
    %c24_154 = arith.constant 24 : index
    %c0_155 = arith.constant 0 : index
    %243 = vector.load %arg31[%c24_154, %c0_155] : memref<288x256xf32, #tpu.memory_space<vmem>>, vector<8x256xf32>
    tpu.vector_store %arg31[%c24_154, %c0_155], %242 {strides = array<i32>} : memref<288x256xf32, #tpu.memory_space<vmem>>, vector<8x256xf32>,
    %c0_156 = arith.constant 0 : index
    %c128_157 = arith.constant 128 : index
    %244 = vector.load %arg30[%c0_156, %c128_157] : memref<32x512xf32, #tpu.memory_space<vmem>>, vector<8x256xf32>
    %c32_158 = arith.constant 32 : index
    %c0_159 = arith.constant 0 : index
    %245 = vector.load %arg31[%c32_158, %c0_159] : memref<288x256xf32, #tpu.memory_space<vmem>>, vector<8x256xf32>
    tpu.vector_store %arg31[%c32_158, %c0_159], %244 {strides = array<i32>} : memref<288x256xf32, #tpu.memory_space<vmem>>, vector<8x256xf32>,
    %c0_160 = arith.constant 0 : index
    %c129_161 = arith.constant 129 : index
    %246 = vector.load %arg30[%c0_160, %c129_161] : memref<32x512xf32, #tpu.memory_space<vmem>>, vector<8x256xf32>
    %c15_i32_162 = arith.constant 15 : i32
    %247 = vector.broadcast %c15_i32_162 : i32 to vector<1x256xi32>
    %248 = arith.cmpi slt, %204, %247 : vector<1x256xi32>
    %cst_163 = arith.constant 0.000000e+00 : f32
    %249 = vector.shape_cast %248 : vector<1x256xi1> to vector<1x256xi1>
    %250 = vector.broadcast %249 : vector<1x256xi1> to vector<8x256xi1>
    %251 = vector.broadcast %cst_163 : f32 to vector<8x256xf32>
    %252 = arith.select %250, %246, %251 : vector<8x256xi1>, vector<8x256xf32>
    %c40_164 = arith.constant 40 : index
    %c0_165 = arith.constant 0 : index
    %253 = vector.load %arg31[%c40_164, %c0_165] : memref<288x256xf32, #tpu.memory_space<vmem>>, vector<8x256xf32>
    tpu.vector_store %arg31[%c40_164, %c0_165], %252 {strides = array<i32>} : memref<288x256xf32, #tpu.memory_space<vmem>>, vector<8x256xf32>,
    %c0_166 = arith.constant 0 : index
    %c143_167 = arith.constant 143 : index
    %254 = vector.load %arg30[%c0_166, %c143_167] : memref<32x512xf32, #tpu.memory_space<vmem>>, vector<8x256xf32>
    %c15_i32_168 = arith.constant 15 : i32
    %255 = vector.broadcast %c15_i32_168 : i32 to vector<1x256xi32>
    %256 = arith.cmpi slt, %202, %255 : vector<1x256xi32>
    %c0_i32_169 = arith.constant 0 : i32
    %257 = vector.broadcast %c0_i32_169 : i32 to vector<1x256xi32>
    %258 = arith.cmpi sgt, %204, %257 : vector<1x256xi32>
    %259 = arith.andi %256, %258 : vector<1x256xi1>
    %cst_170 = arith.constant 0.000000e+00 : f32
    %260 = vector.shape_cast %259 : vector<1x256xi1> to vector<1x256xi1>
    %261 = vector.broadcast %260 : vector<1x256xi1> to vector<8x256xi1>
    %262 = vector.broadcast %cst_170 : f32 to vector<8x256xf32>
    %263 = arith.select %261, %254, %262 : vector<8x256xi1>, vector<8x256xf32>
    %c48_171 = arith.constant 48 : index
    %c0_172 = arith.constant 0 : index
    %264 = vector.load %arg31[%c48_171, %c0_172] : memref<288x256xf32, #tpu.memory_space<vmem>>, vector<8x256xf32>
    tpu.vector_store %arg31[%c48_171, %c0_172], %263 {strides = array<i32>} : memref<288x256xf32, #tpu.memory_space<vmem>>, vector<8x256xf32>,
    %c0_173 = arith.constant 0 : index
    %c144_174 = arith.constant 144 : index
    %265 = vector.load %arg30[%c0_173, %c144_174] : memref<32x512xf32, #tpu.memory_space<vmem>>, vector<8x256xf32>
    %c15_i32_175 = arith.constant 15 : i32
    %266 = vector.broadcast %c15_i32_175 : i32 to vector<1x256xi32>
    %267 = arith.cmpi slt, %202, %266 : vector<1x256xi32>
    %cst_176 = arith.constant 0.000000e+00 : f32
    %268 = vector.shape_cast %267 : vector<1x256xi1> to vector<1x256xi1>
    %269 = vector.broadcast %268 : vector<1x256xi1> to vector<8x256xi1>
    %270 = vector.broadcast %cst_176 : f32 to vector<8x256xf32>
    %271 = arith.select %269, %265, %270 : vector<8x256xi1>, vector<8x256xf32>
    %c56_177 = arith.constant 56 : index
    %c0_178 = arith.constant 0 : index
    %272 = vector.load %arg31[%c56_177, %c0_178] : memref<288x256xf32, #tpu.memory_space<vmem>>, vector<8x256xf32>
    tpu.vector_store %arg31[%c56_177, %c0_178], %271 {strides = array<i32>} : memref<288x256xf32, #tpu.memory_space<vmem>>, vector<8x256xf32>,
    %c0_179 = arith.constant 0 : index
    %c145_180 = arith.constant 145 : index
    %273 = vector.load %arg30[%c0_179, %c145_180] : memref<32x512xf32, #tpu.memory_space<vmem>>, vector<8x256xf32>
    %c15_i32_181 = arith.constant 15 : i32
    %274 = vector.broadcast %c15_i32_181 : i32 to vector<1x256xi32>
    %275 = arith.cmpi slt, %202, %274 : vector<1x256xi32>
    %c15_i32_182 = arith.constant 15 : i32
    %276 = vector.broadcast %c15_i32_182 : i32 to vector<1x256xi32>
    %277 = arith.cmpi slt, %204, %276 : vector<1x256xi32>
    %278 = arith.andi %275, %277 : vector<1x256xi1>
    %cst_183 = arith.constant 0.000000e+00 : f32
    %279 = vector.shape_cast %278 : vector<1x256xi1> to vector<1x256xi1>
    %280 = vector.broadcast %279 : vector<1x256xi1> to vector<8x256xi1>
    %281 = vector.broadcast %cst_183 : f32 to vector<8x256xf32>
    %282 = arith.select %280, %273, %281 : vector<8x256xi1>, vector<8x256xf32>
    %c64_184 = arith.constant 64 : index
    %c0_185 = arith.constant 0 : index
    %283 = vector.load %arg31[%c64_184, %c0_185] : memref<288x256xf32, #tpu.memory_space<vmem>>, vector<8x256xf32>
    tpu.vector_store %arg31[%c64_184, %c0_185], %282 {strides = array<i32>} : memref<288x256xf32, #tpu.memory_space<vmem>>, vector<8x256xf32>,
    %c0_186 = arith.constant 0 : index
    %c0_187 = arith.constant 0 : index
    %284 = vector.load %arg6[%c0_186, %c0_187] : memref<16x72xbf16, #tpu.memory_space<vmem>>, vector<16x72xbf16>
    %c0_188 = arith.constant 0 : index
    %c0_189 = arith.constant 0 : index
    %285 = vector.load %arg31[%c0_188, %c0_189] : memref<288x256xf32, #tpu.memory_space<vmem>>, vector<72x256xf32>
    %286 = arith.truncf %285 : vector<72x256xf32> to vector<72x256xbf16>
    %cst_190 = arith.constant dense<0.000000e+00> : vector<16x256xf32>
    %287 = tpu.matmul %284, %286, %cst_190 {dimension_numbers = #tpu.dot_dimension_numbers<[1], [0], [0], [1], [0, 0, 1, 1], [], []>} : vector<16x72xbf16>, vector<72x256xbf16>, vector<16x256xf32> -> vector<16x256xf32>
    %288 = tpu.iota {dimensions = array<i32: 0>} : vector<256x64xi32>
    %289 = tpu.iota {dimensions = array<i32: 1>} : vector<256x64xi32>
    %c3_i32 = arith.constant 3 : i32
    %290 = vector.broadcast %c3_i32 : i32 to vector<256x64xi32>
    %291 = arith.shrsi %289, %290 : vector<256x64xi32>
    %c32_i32 = arith.constant 32 : i32
    %292 = vector.broadcast %c32_i32 : i32 to vector<256x64xi32>
    %293 = arith.muli %291, %292 : vector<256x64xi32>
    %c7_i32 = arith.constant 7 : i32
    %294 = vector.broadcast %c7_i32 : i32 to vector<256x64xi32>
    %295 = arith.andi %289, %294 : vector<256x64xi32>
    %c2_i32 = arith.constant 2 : i32
    %296 = vector.broadcast %c2_i32 : i32 to vector<256x64xi32>
    %297 = arith.muli %295, %296 : vector<256x64xi32>
    %298 = arith.addi %293, %297 : vector<256x64xi32>
    %299 = arith.cmpi eq, %288, %298 : vector<256x64xi32>
    %cst_191 = arith.constant 1.000000e+00 : f32
    %cst_192 = arith.constant 0.000000e+00 : f32
    %300 = vector.broadcast %cst_191 : f32 to vector<256x64xf32>
    %301 = vector.broadcast %cst_192 : f32 to vector<256x64xf32>
    %302 = arith.select %299, %300, %301 : vector<256x64xi1>, vector<256x64xf32>
    %303 = arith.truncf %302 : vector<256x64xf32> to vector<256x64xbf16>
    %304 = arith.truncf %287 : vector<16x256xf32> to vector<16x256xbf16>
    %cst_193 = arith.constant dense<0.000000e+00> : vector<16x64xf32>
    %305 = tpu.matmul %304, %303, %cst_193 {dimension_numbers = #tpu.dot_dimension_numbers<[1], [0], [0], [1], [0, 0, 1, 1], [], []>} : vector<16x256xbf16>, vector<256x64xbf16>, vector<16x64xf32> -> vector<16x64xf32>
    %c0_194 = arith.constant 0 : index
    %c0_195 = arith.constant 0 : index
    %306 = vector.load %arg7[%c0_194, %c0_195] : memref<16x1xf32, #tpu.memory_space<vmem>>, vector<16x1xf32>
    %307 = vector.broadcast %306 : vector<16x1xf32> to vector<16x64xf32>
    %308 = arith.addf %305, %307 : vector<16x64xf32>
    %cst_196 = arith.constant 0.000000e+00 : f32
    %309 = vector.broadcast %cst_196 : f32 to vector<16x64xf32>
    %310 = arith.cmpf oge, %308, %309 : vector<16x64xf32>
    %cst_197 = arith.constant 0.00999999977 : f32
    %311 = vector.broadcast %cst_197 : f32 to vector<16x64xf32>
    %312 = arith.mulf %311, %308 : vector<16x64xf32>
    %313 = arith.select %310, %308, %312 : vector<16x64xi1>, vector<16x64xf32>
    %314 = tpu.iota {dimensions = array<i32: 1>} : vector<1x64xi32>
    %c3_i32_198 = arith.constant 3 : i32
    %315 = vector.broadcast %c3_i32_198 : i32 to vector<1x64xi32>
    %316 = arith.shrsi %314, %315 : vector<1x64xi32>
    %c7_i32_199 = arith.constant 7 : i32
    %317 = vector.broadcast %c7_i32_199 : i32 to vector<1x64xi32>
    %318 = arith.andi %314, %317 : vector<1x64xi32>
    %c0_200 = arith.constant 0 : index
    %c128_201 = arith.constant 128 : index
    %319 = vector.load %arg30[%c0_200, %c128_201] : memref<32x512xf32, #tpu.memory_space<vmem>>, vector<16x64xf32>
    tpu.vector_store %arg30[%c0_200, %c128_201], %313 {strides = array<i32>} : memref<32x512xf32, #tpu.memory_space<vmem>>, vector<16x64xf32>,
    %c0_202 = arith.constant 0 : index
    %c119 = arith.constant 119 : index
    %320 = vector.load %arg30[%c0_202, %c119] : memref<32x512xf32, #tpu.memory_space<vmem>>, vector<16x64xf32>
    %c0_i32_203 = arith.constant 0 : i32
    %321 = vector.broadcast %c0_i32_203 : i32 to vector<1x64xi32>
    %322 = arith.cmpi sgt, %316, %321 : vector<1x64xi32>
    %c0_i32_204 = arith.constant 0 : i32
    %323 = vector.broadcast %c0_i32_204 : i32 to vector<1x64xi32>
    %324 = arith.cmpi sgt, %318, %323 : vector<1x64xi32>
    %325 = arith.andi %322, %324 : vector<1x64xi1>
    %cst_205 = arith.constant 0.000000e+00 : f32
    %326 = vector.shape_cast %325 : vector<1x64xi1> to vector<1x64xi1>
    %327 = vector.broadcast %326 : vector<1x64xi1> to vector<16x64xi1>
    %328 = vector.broadcast %cst_205 : f32 to vector<16x64xf32>
    %329 = arith.select %327, %320, %328 : vector<16x64xi1>, vector<16x64xf32>
    %c0_206 = arith.constant 0 : index
    %c0_207 = arith.constant 0 : index
    %330 = vector.load %arg31[%c0_206, %c0_207] : memref<288x256xf32, #tpu.memory_space<vmem>>, vector<16x64xf32>
    tpu.vector_store %arg31[%c0_206, %c0_207], %329 {strides = array<i32>} : memref<288x256xf32, #tpu.memory_space<vmem>>, vector<16x64xf32>,
    %c0_208 = arith.constant 0 : index
    %c120 = arith.constant 120 : index
    %331 = vector.load %arg30[%c0_208, %c120] : memref<32x512xf32, #tpu.memory_space<vmem>>, vector<16x64xf32>
    %c0_i32_209 = arith.constant 0 : i32
    %332 = vector.broadcast %c0_i32_209 : i32 to vector<1x64xi32>
    %333 = arith.cmpi sgt, %316, %332 : vector<1x64xi32>
    %cst_210 = arith.constant 0.000000e+00 : f32
    %334 = vector.shape_cast %333 : vector<1x64xi1> to vector<1x64xi1>
    %335 = vector.broadcast %334 : vector<1x64xi1> to vector<16x64xi1>
    %336 = vector.broadcast %cst_210 : f32 to vector<16x64xf32>
    %337 = arith.select %335, %331, %336 : vector<16x64xi1>, vector<16x64xf32>
    %c16_211 = arith.constant 16 : index
    %c0_212 = arith.constant 0 : index
    %338 = vector.load %arg31[%c16_211, %c0_212] : memref<288x256xf32, #tpu.memory_space<vmem>>, vector<16x64xf32>
    tpu.vector_store %arg31[%c16_211, %c0_212], %337 {strides = array<i32>} : memref<288x256xf32, #tpu.memory_space<vmem>>, vector<16x64xf32>,
    %c0_213 = arith.constant 0 : index
    %c121 = arith.constant 121 : index
    %339 = vector.load %arg30[%c0_213, %c121] : memref<32x512xf32, #tpu.memory_space<vmem>>, vector<16x64xf32>
    %c0_i32_214 = arith.constant 0 : i32
    %340 = vector.broadcast %c0_i32_214 : i32 to vector<1x64xi32>
    %341 = arith.cmpi sgt, %316, %340 : vector<1x64xi32>
    %c7_i32_215 = arith.constant 7 : i32
    %342 = vector.broadcast %c7_i32_215 : i32 to vector<1x64xi32>
    %343 = arith.cmpi slt, %318, %342 : vector<1x64xi32>
    %344 = arith.andi %341, %343 : vector<1x64xi1>
    %cst_216 = arith.constant 0.000000e+00 : f32
    %345 = vector.shape_cast %344 : vector<1x64xi1> to vector<1x64xi1>
    %346 = vector.broadcast %345 : vector<1x64xi1> to vector<16x64xi1>
    %347 = vector.broadcast %cst_216 : f32 to vector<16x64xf32>
    %348 = arith.select %346, %339, %347 : vector<16x64xi1>, vector<16x64xf32>
    %c32_217 = arith.constant 32 : index
    %c0_218 = arith.constant 0 : index
    %349 = vector.load %arg31[%c32_217, %c0_218] : memref<288x256xf32, #tpu.memory_space<vmem>>, vector<16x64xf32>
    tpu.vector_store %arg31[%c32_217, %c0_218], %348 {strides = array<i32>} : memref<288x256xf32, #tpu.memory_space<vmem>>, vector<16x64xf32>,
    %c0_219 = arith.constant 0 : index
    %c127_220 = arith.constant 127 : index
    %350 = vector.load %arg30[%c0_219, %c127_220] : memref<32x512xf32, #tpu.memory_space<vmem>>, vector<16x64xf32>
    %c0_i32_221 = arith.constant 0 : i32
    %351 = vector.broadcast %c0_i32_221 : i32 to vector<1x64xi32>
    %352 = arith.cmpi sgt, %318, %351 : vector<1x64xi32>
    %cst_222 = arith.constant 0.000000e+00 : f32
    %353 = vector.shape_cast %352 : vector<1x64xi1> to vector<1x64xi1>
    %354 = vector.broadcast %353 : vector<1x64xi1> to vector<16x64xi1>
    %355 = vector.broadcast %cst_222 : f32 to vector<16x64xf32>
    %356 = arith.select %354, %350, %355 : vector<16x64xi1>, vector<16x64xf32>
    %c48_223 = arith.constant 48 : index
    %c0_224 = arith.constant 0 : index
    %357 = vector.load %arg31[%c48_223, %c0_224] : memref<288x256xf32, #tpu.memory_space<vmem>>, vector<16x64xf32>
    tpu.vector_store %arg31[%c48_223, %c0_224], %356 {strides = array<i32>} : memref<288x256xf32, #tpu.memory_space<vmem>>, vector<16x64xf32>,
    %c0_225 = arith.constant 0 : index
    %c128_226 = arith.constant 128 : index
    %358 = vector.load %arg30[%c0_225, %c128_226] : memref<32x512xf32, #tpu.memory_space<vmem>>, vector<16x64xf32>
    %c64_227 = arith.constant 64 : index
    %c0_228 = arith.constant 0 : index
    %359 = vector.load %arg31[%c64_227, %c0_228] : memref<288x256xf32, #tpu.memory_space<vmem>>, vector<16x64xf32>
    tpu.vector_store %arg31[%c64_227, %c0_228], %358 {strides = array<i32>} : memref<288x256xf32, #tpu.memory_space<vmem>>, vector<16x64xf32>,
    %c0_229 = arith.constant 0 : index
    %c129_230 = arith.constant 129 : index
    %360 = vector.load %arg30[%c0_229, %c129_230] : memref<32x512xf32, #tpu.memory_space<vmem>>, vector<16x64xf32>
    %c7_i32_231 = arith.constant 7 : i32
    %361 = vector.broadcast %c7_i32_231 : i32 to vector<1x64xi32>
    %362 = arith.cmpi slt, %318, %361 : vector<1x64xi32>
    %cst_232 = arith.constant 0.000000e+00 : f32
    %363 = vector.shape_cast %362 : vector<1x64xi1> to vector<1x64xi1>
    %364 = vector.broadcast %363 : vector<1x64xi1> to vector<16x64xi1>
    %365 = vector.broadcast %cst_232 : f32 to vector<16x64xf32>
    %366 = arith.select %364, %360, %365 : vector<16x64xi1>, vector<16x64xf32>
    %c80 = arith.constant 80 : index
    %c0_233 = arith.constant 0 : index
    %367 = vector.load %arg31[%c80, %c0_233] : memref<288x256xf32, #tpu.memory_space<vmem>>, vector<16x64xf32>
    tpu.vector_store %arg31[%c80, %c0_233], %366 {strides = array<i32>} : memref<288x256xf32, #tpu.memory_space<vmem>>, vector<16x64xf32>,
    %c0_234 = arith.constant 0 : index
    %c135 = arith.constant 135 : index
    %368 = vector.load %arg30[%c0_234, %c135] : memref<32x512xf32, #tpu.memory_space<vmem>>, vector<16x64xf32>
    %c7_i32_235 = arith.constant 7 : i32
    %369 = vector.broadcast %c7_i32_235 : i32 to vector<1x64xi32>
    %370 = arith.cmpi slt, %316, %369 : vector<1x64xi32>
    %c0_i32_236 = arith.constant 0 : i32
    %371 = vector.broadcast %c0_i32_236 : i32 to vector<1x64xi32>
    %372 = arith.cmpi sgt, %318, %371 : vector<1x64xi32>
    %373 = arith.andi %370, %372 : vector<1x64xi1>
    %cst_237 = arith.constant 0.000000e+00 : f32
    %374 = vector.shape_cast %373 : vector<1x64xi1> to vector<1x64xi1>
    %375 = vector.broadcast %374 : vector<1x64xi1> to vector<16x64xi1>
    %376 = vector.broadcast %cst_237 : f32 to vector<16x64xf32>
    %377 = arith.select %375, %368, %376 : vector<16x64xi1>, vector<16x64xf32>
    %c96_238 = arith.constant 96 : index
    %c0_239 = arith.constant 0 : index
    %378 = vector.load %arg31[%c96_238, %c0_239] : memref<288x256xf32, #tpu.memory_space<vmem>>, vector<16x64xf32>
    tpu.vector_store %arg31[%c96_238, %c0_239], %377 {strides = array<i32>} : memref<288x256xf32, #tpu.memory_space<vmem>>, vector<16x64xf32>,
    %c0_240 = arith.constant 0 : index
    %c136 = arith.constant 136 : index
    %379 = vector.load %arg30[%c0_240, %c136] : memref<32x512xf32, #tpu.memory_space<vmem>>, vector<16x64xf32>
    %c7_i32_241 = arith.constant 7 : i32
    %380 = vector.broadcast %c7_i32_241 : i32 to vector<1x64xi32>
    %381 = arith.cmpi slt, %316, %380 : vector<1x64xi32>
    %cst_242 = arith.constant 0.000000e+00 : f32
    %382 = vector.shape_cast %381 : vector<1x64xi1> to vector<1x64xi1>
    %383 = vector.broadcast %382 : vector<1x64xi1> to vector<16x64xi1>
    %384 = vector.broadcast %cst_242 : f32 to vector<16x64xf32>
    %385 = arith.select %383, %379, %384 : vector<16x64xi1>, vector<16x64xf32>
    %c112_243 = arith.constant 112 : index
    %c0_244 = arith.constant 0 : index
    %386 = vector.load %arg31[%c112_243, %c0_244] : memref<288x256xf32, #tpu.memory_space<vmem>>, vector<16x64xf32>
    tpu.vector_store %arg31[%c112_243, %c0_244], %385 {strides = array<i32>} : memref<288x256xf32, #tpu.memory_space<vmem>>, vector<16x64xf32>,
    %c0_245 = arith.constant 0 : index
    %c137 = arith.constant 137 : index
    %387 = vector.load %arg30[%c0_245, %c137] : memref<32x512xf32, #tpu.memory_space<vmem>>, vector<16x64xf32>
    %c7_i32_246 = arith.constant 7 : i32
    %388 = vector.broadcast %c7_i32_246 : i32 to vector<1x64xi32>
    %389 = arith.cmpi slt, %316, %388 : vector<1x64xi32>
    %c7_i32_247 = arith.constant 7 : i32
    %390 = vector.broadcast %c7_i32_247 : i32 to vector<1x64xi32>
    %391 = arith.cmpi slt, %318, %390 : vector<1x64xi32>
    %392 = arith.andi %389, %391 : vector<1x64xi1>
    %cst_248 = arith.constant 0.000000e+00 : f32
    %393 = vector.shape_cast %392 : vector<1x64xi1> to vector<1x64xi1>
    %394 = vector.broadcast %393 : vector<1x64xi1> to vector<16x64xi1>
    %395 = vector.broadcast %cst_248 : f32 to vector<16x64xf32>
    %396 = arith.select %394, %387, %395 : vector<16x64xi1>, vector<16x64xf32>
    %c128_249 = arith.constant 128 : index
    %c0_250 = arith.constant 0 : index
    %397 = vector.load %arg31[%c128_249, %c0_250] : memref<288x256xf32, #tpu.memory_space<vmem>>, vector<16x64xf32>
    tpu.vector_store %arg31[%c128_249, %c0_250], %396 {strides = array<i32>} : memref<288x256xf32, #tpu.memory_space<vmem>>, vector<16x64xf32>,
    %c0_251 = arith.constant 0 : index
    %c0_252 = arith.constant 0 : index
    %398 = vector.load %arg8[%c0_251, %c0_252] : memref<16x144xbf16, #tpu.memory_space<vmem>>, vector<16x144xbf16>
    %c0_253 = arith.constant 0 : index
    %c0_254 = arith.constant 0 : index
    %399 = vector.load %arg31[%c0_253, %c0_254] : memref<288x256xf32, #tpu.memory_space<vmem>>, vector<144x64xf32>
    %400 = arith.truncf %399 : vector<144x64xf32> to vector<144x64xbf16>
    %cst_255 = arith.constant dense<0.000000e+00> : vector<16x64xf32>
    %401 = tpu.matmul %398, %400, %cst_255 {dimension_numbers = #tpu.dot_dimension_numbers<[1], [0], [0], [1], [0, 0, 1, 1], [], []>} : vector<16x144xbf16>, vector<144x64xbf16>, vector<16x64xf32> -> vector<16x64xf32>
    %c0_256 = arith.constant 0 : index
    %c0_257 = arith.constant 0 : index
    %402 = vector.load %arg9[%c0_256, %c0_257] : memref<16x1xf32, #tpu.memory_space<vmem>>, vector<16x1xf32>
    %403 = vector.broadcast %402 : vector<16x1xf32> to vector<16x64xf32>
    %404 = arith.addf %401, %403 : vector<16x64xf32>
    %cst_258 = arith.constant 0.000000e+00 : f32
    %405 = vector.broadcast %cst_258 : f32 to vector<16x64xf32>
    %406 = arith.cmpf oge, %404, %405 : vector<16x64xf32>
    %cst_259 = arith.constant 0.00999999977 : f32
    %407 = vector.broadcast %cst_259 : f32 to vector<16x64xf32>
    %408 = arith.mulf %407, %404 : vector<16x64xf32>
    %409 = arith.select %406, %404, %408 : vector<16x64xi1>, vector<16x64xf32>
    %410 = tpu.iota {dimensions = array<i32: 1>} : vector<1x64xi32>
    %c3_i32_260 = arith.constant 3 : i32
    %411 = vector.broadcast %c3_i32_260 : i32 to vector<1x64xi32>
    %412 = arith.shrsi %410, %411 : vector<1x64xi32>
    %c7_i32_261 = arith.constant 7 : i32
    %413 = vector.broadcast %c7_i32_261 : i32 to vector<1x64xi32>
    %414 = arith.andi %410, %413 : vector<1x64xi32>
    %c0_262 = arith.constant 0 : index
    %c128_263 = arith.constant 128 : index
    %415 = vector.load %arg30[%c0_262, %c128_263] : memref<32x512xf32, #tpu.memory_space<vmem>>, vector<16x64xf32>
    tpu.vector_store %arg30[%c0_262, %c128_263], %409 {strides = array<i32>} : memref<32x512xf32, #tpu.memory_space<vmem>>, vector<16x64xf32>,
    %c0_264 = arith.constant 0 : index
    %c119_265 = arith.constant 119 : index
    %416 = vector.load %arg30[%c0_264, %c119_265] : memref<32x512xf32, #tpu.memory_space<vmem>>, vector<16x64xf32>
    %c0_i32_266 = arith.constant 0 : i32
    %417 = vector.broadcast %c0_i32_266 : i32 to vector<1x64xi32>
    %418 = arith.cmpi sgt, %412, %417 : vector<1x64xi32>
    %c0_i32_267 = arith.constant 0 : i32
    %419 = vector.broadcast %c0_i32_267 : i32 to vector<1x64xi32>
    %420 = arith.cmpi sgt, %414, %419 : vector<1x64xi32>
    %421 = arith.andi %418, %420 : vector<1x64xi1>
    %cst_268 = arith.constant 0.000000e+00 : f32
    %422 = vector.shape_cast %421 : vector<1x64xi1> to vector<1x64xi1>
    %423 = vector.broadcast %422 : vector<1x64xi1> to vector<16x64xi1>
    %424 = vector.broadcast %cst_268 : f32 to vector<16x64xf32>
    %425 = arith.select %423, %416, %424 : vector<16x64xi1>, vector<16x64xf32>
    %c0_269 = arith.constant 0 : index
    %c0_270 = arith.constant 0 : index
    %426 = vector.load %arg31[%c0_269, %c0_270] : memref<288x256xf32, #tpu.memory_space<vmem>>, vector<16x64xf32>
    tpu.vector_store %arg31[%c0_269, %c0_270], %425 {strides = array<i32>} : memref<288x256xf32, #tpu.memory_space<vmem>>, vector<16x64xf32>,
    %c0_271 = arith.constant 0 : index
    %c120_272 = arith.constant 120 : index
    %427 = vector.load %arg30[%c0_271, %c120_272] : memref<32x512xf32, #tpu.memory_space<vmem>>, vector<16x64xf32>
    %c0_i32_273 = arith.constant 0 : i32
    %428 = vector.broadcast %c0_i32_273 : i32 to vector<1x64xi32>
    %429 = arith.cmpi sgt, %412, %428 : vector<1x64xi32>
    %cst_274 = arith.constant 0.000000e+00 : f32
    %430 = vector.shape_cast %429 : vector<1x64xi1> to vector<1x64xi1>
    %431 = vector.broadcast %430 : vector<1x64xi1> to vector<16x64xi1>
    %432 = vector.broadcast %cst_274 : f32 to vector<16x64xf32>
    %433 = arith.select %431, %427, %432 : vector<16x64xi1>, vector<16x64xf32>
    %c16_275 = arith.constant 16 : index
    %c0_276 = arith.constant 0 : index
    %434 = vector.load %arg31[%c16_275, %c0_276] : memref<288x256xf32, #tpu.memory_space<vmem>>, vector<16x64xf32>
    tpu.vector_store %arg31[%c16_275, %c0_276], %433 {strides = array<i32>} : memref<288x256xf32, #tpu.memory_space<vmem>>, vector<16x64xf32>,
    %c0_277 = arith.constant 0 : index
    %c121_278 = arith.constant 121 : index
    %435 = vector.load %arg30[%c0_277, %c121_278] : memref<32x512xf32, #tpu.memory_space<vmem>>, vector<16x64xf32>
    %c0_i32_279 = arith.constant 0 : i32
    %436 = vector.broadcast %c0_i32_279 : i32 to vector<1x64xi32>
    %437 = arith.cmpi sgt, %412, %436 : vector<1x64xi32>
    %c7_i32_280 = arith.constant 7 : i32
    %438 = vector.broadcast %c7_i32_280 : i32 to vector<1x64xi32>
    %439 = arith.cmpi slt, %414, %438 : vector<1x64xi32>
    %440 = arith.andi %437, %439 : vector<1x64xi1>
    %cst_281 = arith.constant 0.000000e+00 : f32
    %441 = vector.shape_cast %440 : vector<1x64xi1> to vector<1x64xi1>
    %442 = vector.broadcast %441 : vector<1x64xi1> to vector<16x64xi1>
    %443 = vector.broadcast %cst_281 : f32 to vector<16x64xf32>
    %444 = arith.select %442, %435, %443 : vector<16x64xi1>, vector<16x64xf32>
    %c32_282 = arith.constant 32 : index
    %c0_283 = arith.constant 0 : index
    %445 = vector.load %arg31[%c32_282, %c0_283] : memref<288x256xf32, #tpu.memory_space<vmem>>, vector<16x64xf32>
    tpu.vector_store %arg31[%c32_282, %c0_283], %444 {strides = array<i32>} : memref<288x256xf32, #tpu.memory_space<vmem>>, vector<16x64xf32>,
    %c0_284 = arith.constant 0 : index
    %c127_285 = arith.constant 127 : index
    %446 = vector.load %arg30[%c0_284, %c127_285] : memref<32x512xf32, #tpu.memory_space<vmem>>, vector<16x64xf32>
    %c0_i32_286 = arith.constant 0 : i32
    %447 = vector.broadcast %c0_i32_286 : i32 to vector<1x64xi32>
    %448 = arith.cmpi sgt, %414, %447 : vector<1x64xi32>
    %cst_287 = arith.constant 0.000000e+00 : f32
    %449 = vector.shape_cast %448 : vector<1x64xi1> to vector<1x64xi1>
    %450 = vector.broadcast %449 : vector<1x64xi1> to vector<16x64xi1>
    %451 = vector.broadcast %cst_287 : f32 to vector<16x64xf32>
    %452 = arith.select %450, %446, %451 : vector<16x64xi1>, vector<16x64xf32>
    %c48_288 = arith.constant 48 : index
    %c0_289 = arith.constant 0 : index
    %453 = vector.load %arg31[%c48_288, %c0_289] : memref<288x256xf32, #tpu.memory_space<vmem>>, vector<16x64xf32>
    tpu.vector_store %arg31[%c48_288, %c0_289], %452 {strides = array<i32>} : memref<288x256xf32, #tpu.memory_space<vmem>>, vector<16x64xf32>,
    %c0_290 = arith.constant 0 : index
    %c128_291 = arith.constant 128 : index
    %454 = vector.load %arg30[%c0_290, %c128_291] : memref<32x512xf32, #tpu.memory_space<vmem>>, vector<16x64xf32>
    %c64_292 = arith.constant 64 : index
    %c0_293 = arith.constant 0 : index
    %455 = vector.load %arg31[%c64_292, %c0_293] : memref<288x256xf32, #tpu.memory_space<vmem>>, vector<16x64xf32>
    tpu.vector_store %arg31[%c64_292, %c0_293], %454 {strides = array<i32>} : memref<288x256xf32, #tpu.memory_space<vmem>>, vector<16x64xf32>,
    %c0_294 = arith.constant 0 : index
    %c129_295 = arith.constant 129 : index
    %456 = vector.load %arg30[%c0_294, %c129_295] : memref<32x512xf32, #tpu.memory_space<vmem>>, vector<16x64xf32>
    %c7_i32_296 = arith.constant 7 : i32
    %457 = vector.broadcast %c7_i32_296 : i32 to vector<1x64xi32>
    %458 = arith.cmpi slt, %414, %457 : vector<1x64xi32>
    %cst_297 = arith.constant 0.000000e+00 : f32
    %459 = vector.shape_cast %458 : vector<1x64xi1> to vector<1x64xi1>
    %460 = vector.broadcast %459 : vector<1x64xi1> to vector<16x64xi1>
    %461 = vector.broadcast %cst_297 : f32 to vector<16x64xf32>
    %462 = arith.select %460, %456, %461 : vector<16x64xi1>, vector<16x64xf32>
    %c80_298 = arith.constant 80 : index
    %c0_299 = arith.constant 0 : index
    %463 = vector.load %arg31[%c80_298, %c0_299] : memref<288x256xf32, #tpu.memory_space<vmem>>, vector<16x64xf32>
    tpu.vector_store %arg31[%c80_298, %c0_299], %462 {strides = array<i32>} : memref<288x256xf32, #tpu.memory_space<vmem>>, vector<16x64xf32>,
    %c0_300 = arith.constant 0 : index
    %c135_301 = arith.constant 135 : index
    %464 = vector.load %arg30[%c0_300, %c135_301] : memref<32x512xf32, #tpu.memory_space<vmem>>, vector<16x64xf32>
    %c7_i32_302 = arith.constant 7 : i32
    %465 = vector.broadcast %c7_i32_302 : i32 to vector<1x64xi32>
    %466 = arith.cmpi slt, %412, %465 : vector<1x64xi32>
    %c0_i32_303 = arith.constant 0 : i32
    %467 = vector.broadcast %c0_i32_303 : i32 to vector<1x64xi32>
    %468 = arith.cmpi sgt, %414, %467 : vector<1x64xi32>
    %469 = arith.andi %466, %468 : vector<1x64xi1>
    %cst_304 = arith.constant 0.000000e+00 : f32
    %470 = vector.shape_cast %469 : vector<1x64xi1> to vector<1x64xi1>
    %471 = vector.broadcast %470 : vector<1x64xi1> to vector<16x64xi1>
    %472 = vector.broadcast %cst_304 : f32 to vector<16x64xf32>
    %473 = arith.select %471, %464, %472 : vector<16x64xi1>, vector<16x64xf32>
    %c96_305 = arith.constant 96 : index
    %c0_306 = arith.constant 0 : index
    %474 = vector.load %arg31[%c96_305, %c0_306] : memref<288x256xf32, #tpu.memory_space<vmem>>, vector<16x64xf32>
    tpu.vector_store %arg31[%c96_305, %c0_306], %473 {strides = array<i32>} : memref<288x256xf32, #tpu.memory_space<vmem>>, vector<16x64xf32>,
    %c0_307 = arith.constant 0 : index
    %c136_308 = arith.constant 136 : index
    %475 = vector.load %arg30[%c0_307, %c136_308] : memref<32x512xf32, #tpu.memory_space<vmem>>, vector<16x64xf32>
    %c7_i32_309 = arith.constant 7 : i32
    %476 = vector.broadcast %c7_i32_309 : i32 to vector<1x64xi32>
    %477 = arith.cmpi slt, %412, %476 : vector<1x64xi32>
    %cst_310 = arith.constant 0.000000e+00 : f32
    %478 = vector.shape_cast %477 : vector<1x64xi1> to vector<1x64xi1>
    %479 = vector.broadcast %478 : vector<1x64xi1> to vector<16x64xi1>
    %480 = vector.broadcast %cst_310 : f32 to vector<16x64xf32>
    %481 = arith.select %479, %475, %480 : vector<16x64xi1>, vector<16x64xf32>
    %c112_311 = arith.constant 112 : index
    %c0_312 = arith.constant 0 : index
    %482 = vector.load %arg31[%c112_311, %c0_312] : memref<288x256xf32, #tpu.memory_space<vmem>>, vector<16x64xf32>
    tpu.vector_store %arg31[%c112_311, %c0_312], %481 {strides = array<i32>} : memref<288x256xf32, #tpu.memory_space<vmem>>, vector<16x64xf32>,
    %c0_313 = arith.constant 0 : index
    %c137_314 = arith.constant 137 : index
    %483 = vector.load %arg30[%c0_313, %c137_314] : memref<32x512xf32, #tpu.memory_space<vmem>>, vector<16x64xf32>
    %c7_i32_315 = arith.constant 7 : i32
    %484 = vector.broadcast %c7_i32_315 : i32 to vector<1x64xi32>
    %485 = arith.cmpi slt, %412, %484 : vector<1x64xi32>
    %c7_i32_316 = arith.constant 7 : i32
    %486 = vector.broadcast %c7_i32_316 : i32 to vector<1x64xi32>
    %487 = arith.cmpi slt, %414, %486 : vector<1x64xi32>
    %488 = arith.andi %485, %487 : vector<1x64xi1>
    %cst_317 = arith.constant 0.000000e+00 : f32
    %489 = vector.shape_cast %488 : vector<1x64xi1> to vector<1x64xi1>
    %490 = vector.broadcast %489 : vector<1x64xi1> to vector<16x64xi1>
    %491 = vector.broadcast %cst_317 : f32 to vector<16x64xf32>
    %492 = arith.select %490, %483, %491 : vector<16x64xi1>, vector<16x64xf32>
    %c128_318 = arith.constant 128 : index
    %c0_319 = arith.constant 0 : index
    %493 = vector.load %arg31[%c128_318, %c0_319] : memref<288x256xf32, #tpu.memory_space<vmem>>, vector<16x64xf32>
    tpu.vector_store %arg31[%c128_318, %c0_319], %492 {strides = array<i32>} : memref<288x256xf32, #tpu.memory_space<vmem>>, vector<16x64xf32>,
    %c0_320 = arith.constant 0 : index
    %c0_321 = arith.constant 0 : index
    %494 = vector.load %arg10[%c0_320, %c0_321] : memref<32x144xbf16, #tpu.memory_space<vmem>>, vector<32x144xbf16>
    %c0_322 = arith.constant 0 : index
    %c0_323 = arith.constant 0 : index
    %495 = vector.load %arg31[%c0_322, %c0_323] : memref<288x256xf32, #tpu.memory_space<vmem>>, vector<144x64xf32>
    %496 = arith.truncf %495 : vector<144x64xf32> to vector<144x64xbf16>
    %cst_324 = arith.constant dense<0.000000e+00> : vector<32x64xf32>
    %497 = tpu.matmul %494, %496, %cst_324 {dimension_numbers = #tpu.dot_dimension_numbers<[1], [0], [0], [1], [0, 0, 1, 1], [], []>} : vector<32x144xbf16>, vector<144x64xbf16>, vector<32x64xf32> -> vector<32x64xf32>
    %498 = tpu.iota {dimensions = array<i32: 0>} : vector<64x16xi32>
    %499 = tpu.iota {dimensions = array<i32: 1>} : vector<64x16xi32>
    %c2_i32_325 = arith.constant 2 : i32
    %500 = vector.broadcast %c2_i32_325 : i32 to vector<64x16xi32>
    %501 = arith.shrsi %499, %500 : vector<64x16xi32>
    %c16_i32 = arith.constant 16 : i32
    %502 = vector.broadcast %c16_i32 : i32 to vector<64x16xi32>
    %503 = arith.muli %501, %502 : vector<64x16xi32>
    %c3_i32_326 = arith.constant 3 : i32
    %504 = vector.broadcast %c3_i32_326 : i32 to vector<64x16xi32>
    %505 = arith.andi %499, %504 : vector<64x16xi32>
    %c2_i32_327 = arith.constant 2 : i32
    %506 = vector.broadcast %c2_i32_327 : i32 to vector<64x16xi32>
    %507 = arith.muli %505, %506 : vector<64x16xi32>
    %508 = arith.addi %503, %507 : vector<64x16xi32>
    %509 = arith.cmpi eq, %498, %508 : vector<64x16xi32>
    %cst_328 = arith.constant 1.000000e+00 : f32
    %cst_329 = arith.constant 0.000000e+00 : f32
    %510 = vector.broadcast %cst_328 : f32 to vector<64x16xf32>
    %511 = vector.broadcast %cst_329 : f32 to vector<64x16xf32>
    %512 = arith.select %509, %510, %511 : vector<64x16xi1>, vector<64x16xf32>
    %513 = arith.truncf %512 : vector<64x16xf32> to vector<64x16xbf16>
    %514 = arith.truncf %497 : vector<32x64xf32> to vector<32x64xbf16>
    %cst_330 = arith.constant dense<0.000000e+00> : vector<32x16xf32>
    %515 = tpu.matmul %514, %513, %cst_330 {dimension_numbers = #tpu.dot_dimension_numbers<[1], [0], [0], [1], [0, 0, 1, 1], [], []>} : vector<32x64xbf16>, vector<64x16xbf16>, vector<32x16xf32> -> vector<32x16xf32>
    %c0_331 = arith.constant 0 : index
    %c0_332 = arith.constant 0 : index
    %516 = vector.load %arg11[%c0_331, %c0_332] : memref<32x1xf32, #tpu.memory_space<vmem>>, vector<32x1xf32>
    %517 = vector.broadcast %516 : vector<32x1xf32> to vector<32x16xf32>
    %518 = arith.addf %515, %517 : vector<32x16xf32>
    %cst_333 = arith.constant 0.000000e+00 : f32
    %519 = vector.broadcast %cst_333 : f32 to vector<32x16xf32>
    %520 = arith.cmpf oge, %518, %519 : vector<32x16xf32>
    %cst_334 = arith.constant 0.00999999977 : f32
    %521 = vector.broadcast %cst_334 : f32 to vector<32x16xf32>
    %522 = arith.mulf %521, %518 : vector<32x16xf32>
    %523 = arith.select %520, %518, %522 : vector<32x16xi1>, vector<32x16xf32>
    %524 = tpu.iota {dimensions = array<i32: 1>} : vector<1x16xi32>
    %c2_i32_335 = arith.constant 2 : i32
    %525 = vector.broadcast %c2_i32_335 : i32 to vector<1x16xi32>
    %526 = arith.shrsi %524, %525 : vector<1x16xi32>
    %c3_i32_336 = arith.constant 3 : i32
    %527 = vector.broadcast %c3_i32_336 : i32 to vector<1x16xi32>
    %528 = arith.andi %524, %527 : vector<1x16xi32>
    %c0_337 = arith.constant 0 : index
    %c128_338 = arith.constant 128 : index
    %529 = vector.load %arg30[%c0_337, %c128_338] : memref<32x512xf32, #tpu.memory_space<vmem>>, vector<32x16xf32>
    tpu.vector_store %arg30[%c0_337, %c128_338], %523 {strides = array<i32>} : memref<32x512xf32, #tpu.memory_space<vmem>>, vector<32x16xf32>,
    %c0_339 = arith.constant 0 : index
    %c123 = arith.constant 123 : index
    %530 = vector.load %arg30[%c0_339, %c123] : memref<32x512xf32, #tpu.memory_space<vmem>>, vector<32x16xf32>
    %c0_i32_340 = arith.constant 0 : i32
    %531 = vector.broadcast %c0_i32_340 : i32 to vector<1x16xi32>
    %532 = arith.cmpi sgt, %526, %531 : vector<1x16xi32>
    %c0_i32_341 = arith.constant 0 : i32
    %533 = vector.broadcast %c0_i32_341 : i32 to vector<1x16xi32>
    %534 = arith.cmpi sgt, %528, %533 : vector<1x16xi32>
    %535 = arith.andi %532, %534 : vector<1x16xi1>
    %cst_342 = arith.constant 0.000000e+00 : f32
    %536 = vector.shape_cast %535 : vector<1x16xi1> to vector<1x16xi1>
    %537 = vector.broadcast %536 : vector<1x16xi1> to vector<32x16xi1>
    %538 = vector.broadcast %cst_342 : f32 to vector<32x16xf32>
    %539 = arith.select %537, %530, %538 : vector<32x16xi1>, vector<32x16xf32>
    %c0_343 = arith.constant 0 : index
    %c0_344 = arith.constant 0 : index
    %540 = vector.load %arg31[%c0_343, %c0_344] : memref<288x256xf32, #tpu.memory_space<vmem>>, vector<32x16xf32>
    tpu.vector_store %arg31[%c0_343, %c0_344], %539 {strides = array<i32>} : memref<288x256xf32, #tpu.memory_space<vmem>>, vector<32x16xf32>,
    %c0_345 = arith.constant 0 : index
    %c124 = arith.constant 124 : index
    %541 = vector.load %arg30[%c0_345, %c124] : memref<32x512xf32, #tpu.memory_space<vmem>>, vector<32x16xf32>
    %c0_i32_346 = arith.constant 0 : i32
    %542 = vector.broadcast %c0_i32_346 : i32 to vector<1x16xi32>
    %543 = arith.cmpi sgt, %526, %542 : vector<1x16xi32>
    %cst_347 = arith.constant 0.000000e+00 : f32
    %544 = vector.shape_cast %543 : vector<1x16xi1> to vector<1x16xi1>
    %545 = vector.broadcast %544 : vector<1x16xi1> to vector<32x16xi1>
    %546 = vector.broadcast %cst_347 : f32 to vector<32x16xf32>
    %547 = arith.select %545, %541, %546 : vector<32x16xi1>, vector<32x16xf32>
    %c32_348 = arith.constant 32 : index
    %c0_349 = arith.constant 0 : index
    %548 = vector.load %arg31[%c32_348, %c0_349] : memref<288x256xf32, #tpu.memory_space<vmem>>, vector<32x16xf32>
    tpu.vector_store %arg31[%c32_348, %c0_349], %547 {strides = array<i32>} : memref<288x256xf32, #tpu.memory_space<vmem>>, vector<32x16xf32>,
    %c0_350 = arith.constant 0 : index
    %c125 = arith.constant 125 : index
    %549 = vector.load %arg30[%c0_350, %c125] : memref<32x512xf32, #tpu.memory_space<vmem>>, vector<32x16xf32>
    %c0_i32_351 = arith.constant 0 : i32
    %550 = vector.broadcast %c0_i32_351 : i32 to vector<1x16xi32>
    %551 = arith.cmpi sgt, %526, %550 : vector<1x16xi32>
    %c3_i32_352 = arith.constant 3 : i32
    %552 = vector.broadcast %c3_i32_352 : i32 to vector<1x16xi32>
    %553 = arith.cmpi slt, %528, %552 : vector<1x16xi32>
    %554 = arith.andi %551, %553 : vector<1x16xi1>
    %cst_353 = arith.constant 0.000000e+00 : f32
    %555 = vector.shape_cast %554 : vector<1x16xi1> to vector<1x16xi1>
    %556 = vector.broadcast %555 : vector<1x16xi1> to vector<32x16xi1>
    %557 = vector.broadcast %cst_353 : f32 to vector<32x16xf32>
    %558 = arith.select %556, %549, %557 : vector<32x16xi1>, vector<32x16xf32>
    %c64_354 = arith.constant 64 : index
    %c0_355 = arith.constant 0 : index
    %559 = vector.load %arg31[%c64_354, %c0_355] : memref<288x256xf32, #tpu.memory_space<vmem>>, vector<32x16xf32>
    tpu.vector_store %arg31[%c64_354, %c0_355], %558 {strides = array<i32>} : memref<288x256xf32, #tpu.memory_space<vmem>>, vector<32x16xf32>,
    %c0_356 = arith.constant 0 : index
    %c127_357 = arith.constant 127 : index
    %560 = vector.load %arg30[%c0_356, %c127_357] : memref<32x512xf32, #tpu.memory_space<vmem>>, vector<32x16xf32>
    %c0_i32_358 = arith.constant 0 : i32
    %561 = vector.broadcast %c0_i32_358 : i32 to vector<1x16xi32>
    %562 = arith.cmpi sgt, %528, %561 : vector<1x16xi32>
    %cst_359 = arith.constant 0.000000e+00 : f32
    %563 = vector.shape_cast %562 : vector<1x16xi1> to vector<1x16xi1>
    %564 = vector.broadcast %563 : vector<1x16xi1> to vector<32x16xi1>
    %565 = vector.broadcast %cst_359 : f32 to vector<32x16xf32>
    %566 = arith.select %564, %560, %565 : vector<32x16xi1>, vector<32x16xf32>
    %c96_360 = arith.constant 96 : index
    %c0_361 = arith.constant 0 : index
    %567 = vector.load %arg31[%c96_360, %c0_361] : memref<288x256xf32, #tpu.memory_space<vmem>>, vector<32x16xf32>
    tpu.vector_store %arg31[%c96_360, %c0_361], %566 {strides = array<i32>} : memref<288x256xf32, #tpu.memory_space<vmem>>, vector<32x16xf32>,
    %c0_362 = arith.constant 0 : index
    %c128_363 = arith.constant 128 : index
    %568 = vector.load %arg30[%c0_362, %c128_363] : memref<32x512xf32, #tpu.memory_space<vmem>>, vector<32x16xf32>
    %c128_364 = arith.constant 128 : index
    %c0_365 = arith.constant 0 : index
    %569 = vector.load %arg31[%c128_364, %c0_365] : memref<288x256xf32, #tpu.memory_space<vmem>>, vector<32x16xf32>
    tpu.vector_store %arg31[%c128_364, %c0_365], %568 {strides = array<i32>} : memref<288x256xf32, #tpu.memory_space<vmem>>, vector<32x16xf32>,
    %c0_366 = arith.constant 0 : index
    %c129_367 = arith.constant 129 : index
    %570 = vector.load %arg30[%c0_366, %c129_367] : memref<32x512xf32, #tpu.memory_space<vmem>>, vector<32x16xf32>
    %c3_i32_368 = arith.constant 3 : i32
    %571 = vector.broadcast %c3_i32_368 : i32 to vector<1x16xi32>
    %572 = arith.cmpi slt, %528, %571 : vector<1x16xi32>
    %cst_369 = arith.constant 0.000000e+00 : f32
    %573 = vector.shape_cast %572 : vector<1x16xi1> to vector<1x16xi1>
    %574 = vector.broadcast %573 : vector<1x16xi1> to vector<32x16xi1>
    %575 = vector.broadcast %cst_369 : f32 to vector<32x16xf32>
    %576 = arith.select %574, %570, %575 : vector<32x16xi1>, vector<32x16xf32>
    %c160 = arith.constant 160 : index
    %c0_370 = arith.constant 0 : index
    %577 = vector.load %arg31[%c160, %c0_370] : memref<288x256xf32, #tpu.memory_space<vmem>>, vector<32x16xf32>
    tpu.vector_store %arg31[%c160, %c0_370], %576 {strides = array<i32>} : memref<288x256xf32, #tpu.memory_space<vmem>>, vector<32x16xf32>,
    %c0_371 = arith.constant 0 : index
    %c131 = arith.constant 131 : index
    %578 = vector.load %arg30[%c0_371, %c131] : memref<32x512xf32, #tpu.memory_space<vmem>>, vector<32x16xf32>
    %c3_i32_372 = arith.constant 3 : i32
    %579 = vector.broadcast %c3_i32_372 : i32 to vector<1x16xi32>
    %580 = arith.cmpi slt, %526, %579 : vector<1x16xi32>
    %c0_i32_373 = arith.constant 0 : i32
    %581 = vector.broadcast %c0_i32_373 : i32 to vector<1x16xi32>
    %582 = arith.cmpi sgt, %528, %581 : vector<1x16xi32>
    %583 = arith.andi %580, %582 : vector<1x16xi1>
    %cst_374 = arith.constant 0.000000e+00 : f32
    %584 = vector.shape_cast %583 : vector<1x16xi1> to vector<1x16xi1>
    %585 = vector.broadcast %584 : vector<1x16xi1> to vector<32x16xi1>
    %586 = vector.broadcast %cst_374 : f32 to vector<32x16xf32>
    %587 = arith.select %585, %578, %586 : vector<32x16xi1>, vector<32x16xf32>
    %c192 = arith.constant 192 : index
    %c0_375 = arith.constant 0 : index
    %588 = vector.load %arg31[%c192, %c0_375] : memref<288x256xf32, #tpu.memory_space<vmem>>, vector<32x16xf32>
    tpu.vector_store %arg31[%c192, %c0_375], %587 {strides = array<i32>} : memref<288x256xf32, #tpu.memory_space<vmem>>, vector<32x16xf32>,
    %c0_376 = arith.constant 0 : index
    %c132 = arith.constant 132 : index
    %589 = vector.load %arg30[%c0_376, %c132] : memref<32x512xf32, #tpu.memory_space<vmem>>, vector<32x16xf32>
    %c3_i32_377 = arith.constant 3 : i32
    %590 = vector.broadcast %c3_i32_377 : i32 to vector<1x16xi32>
    %591 = arith.cmpi slt, %526, %590 : vector<1x16xi32>
    %cst_378 = arith.constant 0.000000e+00 : f32
    %592 = vector.shape_cast %591 : vector<1x16xi1> to vector<1x16xi1>
    %593 = vector.broadcast %592 : vector<1x16xi1> to vector<32x16xi1>
    %594 = vector.broadcast %cst_378 : f32 to vector<32x16xf32>
    %595 = arith.select %593, %589, %594 : vector<32x16xi1>, vector<32x16xf32>
    %c224 = arith.constant 224 : index
    %c0_379 = arith.constant 0 : index
    %596 = vector.load %arg31[%c224, %c0_379] : memref<288x256xf32, #tpu.memory_space<vmem>>, vector<32x16xf32>
    tpu.vector_store %arg31[%c224, %c0_379], %595 {strides = array<i32>} : memref<288x256xf32, #tpu.memory_space<vmem>>, vector<32x16xf32>,
    %c0_380 = arith.constant 0 : index
    %c133 = arith.constant 133 : index
    %597 = vector.load %arg30[%c0_380, %c133] : memref<32x512xf32, #tpu.memory_space<vmem>>, vector<32x16xf32>
    %c3_i32_381 = arith.constant 3 : i32
    %598 = vector.broadcast %c3_i32_381 : i32 to vector<1x16xi32>
    %599 = arith.cmpi slt, %526, %598 : vector<1x16xi32>
    %c3_i32_382 = arith.constant 3 : i32
    %600 = vector.broadcast %c3_i32_382 : i32 to vector<1x16xi32>
    %601 = arith.cmpi slt, %528, %600 : vector<1x16xi32>
    %602 = arith.andi %599, %601 : vector<1x16xi1>
    %cst_383 = arith.constant 0.000000e+00 : f32
    %603 = vector.shape_cast %602 : vector<1x16xi1> to vector<1x16xi1>
    %604 = vector.broadcast %603 : vector<1x16xi1> to vector<32x16xi1>
    %605 = vector.broadcast %cst_383 : f32 to vector<32x16xf32>
    %606 = arith.select %604, %597, %605 : vector<32x16xi1>, vector<32x16xf32>
    %c256 = arith.constant 256 : index
    %c0_384 = arith.constant 0 : index
    %607 = vector.load %arg31[%c256, %c0_384] : memref<288x256xf32, #tpu.memory_space<vmem>>, vector<32x16xf32>
    tpu.vector_store %arg31[%c256, %c0_384], %606 {strides = array<i32>} : memref<288x256xf32, #tpu.memory_space<vmem>>, vector<32x16xf32>,
    %c0_385 = arith.constant 0 : index
    %c0_386 = arith.constant 0 : index
    %608 = vector.load %arg12[%c0_385, %c0_386] : memref<32x288xbf16, #tpu.memory_space<vmem>>, vector<32x288xbf16>
    %c0_387 = arith.constant 0 : index
    %c0_388 = arith.constant 0 : index
    %609 = vector.load %arg31[%c0_387, %c0_388] : memref<288x256xf32, #tpu.memory_space<vmem>>, vector<288x16xf32>
    %610 = arith.truncf %609 : vector<288x16xf32> to vector<288x16xbf16>
    %cst_389 = arith.constant dense<0.000000e+00> : vector<32x16xf32>
    %611 = tpu.matmul %608, %610, %cst_389 {dimension_numbers = #tpu.dot_dimension_numbers<[1], [0], [0], [1], [0, 0, 1, 1], [], []>} : vector<32x288xbf16>, vector<288x16xbf16>, vector<32x16xf32> -> vector<32x16xf32>
    %c0_390 = arith.constant 0 : index
    %c0_391 = arith.constant 0 : index
    %612 = vector.load %arg13[%c0_390, %c0_391] : memref<32x1xf32, #tpu.memory_space<vmem>>, vector<32x1xf32>
    %613 = vector.broadcast %612 : vector<32x1xf32> to vector<32x16xf32>
    %614 = arith.addf %611, %613 : vector<32x16xf32>
    %cst_392 = arith.constant 0.000000e+00 : f32
    %615 = vector.broadcast %cst_392 : f32 to vector<32x16xf32>
    %616 = arith.cmpf oge, %614, %615 : vector<32x16xf32>
    %cst_393 = arith.constant 0.00999999977 : f32
    %617 = vector.broadcast %cst_393 : f32 to vector<32x16xf32>
    %618 = arith.mulf %617, %614 : vector<32x16xf32>
    %619 = arith.select %616, %614, %618 : vector<32x16xi1>, vector<32x16xf32>
    %620 = arith.truncf %619 : vector<32x16xf32> to vector<32x16xbf16>
    %621 = tpu.iota {dimensions = array<i32: 0>} : vector<16x64xi32>
    %622 = tpu.iota {dimensions = array<i32: 1>} : vector<16x64xi32>
    %c2_i32_394 = arith.constant 2 : i32
    %623 = vector.broadcast %c2_i32_394 : i32 to vector<16x64xi32>
    %624 = arith.shrsi %621, %623 : vector<16x64xi32>
    %c3_i32_395 = arith.constant 3 : i32
    %625 = vector.broadcast %c3_i32_395 : i32 to vector<16x64xi32>
    %626 = arith.andi %621, %625 : vector<16x64xi32>
    %c2_i32_396 = arith.constant 2 : i32
    %627 = vector.broadcast %c2_i32_396 : i32 to vector<16x64xi32>
    %628 = arith.muli %627, %624 : vector<16x64xi32>
    %c0_i32_397 = arith.constant 0 : i32
    %629 = vector.broadcast %c0_i32_397 : i32 to vector<16x64xi32>
    %630 = arith.addi %628, %629 : vector<16x64xi32>
    %c8_i32 = arith.constant 8 : i32
    %631 = vector.broadcast %c8_i32 : i32 to vector<16x64xi32>
    %632 = arith.muli %630, %631 : vector<16x64xi32>
    %c2_i32_398 = arith.constant 2 : i32
    %633 = vector.broadcast %c2_i32_398 : i32 to vector<16x64xi32>
    %634 = arith.muli %633, %626 : vector<16x64xi32>
    %635 = arith.addi %632, %634 : vector<16x64xi32>
    %c0_i32_399 = arith.constant 0 : i32
    %636 = vector.broadcast %c0_i32_399 : i32 to vector<16x64xi32>
    %637 = arith.addi %635, %636 : vector<16x64xi32>
    %638 = arith.cmpi eq, %622, %637 : vector<16x64xi32>
    %cst_400 = arith.constant 1.000000e+00 : f32
    %cst_401 = arith.constant 0.000000e+00 : f32
    %639 = vector.broadcast %cst_400 : f32 to vector<16x64xf32>
    %640 = vector.broadcast %cst_401 : f32 to vector<16x64xf32>
    %641 = arith.select %638, %639, %640 : vector<16x64xi1>, vector<16x64xf32>
    %642 = arith.truncf %641 : vector<16x64xf32> to vector<16x64xbf16>
    %c0_402 = arith.constant 0 : index
    %c0_403 = arith.constant 0 : index
    %c0_404 = arith.constant 0 : index
    %643 = vector.load %arg14[%c0_402, %c0_403, %c0_404] : memref<4x16x32xbf16, #tpu.memory_space<vmem>>, vector<1x16x32xbf16>
    %644 = vector.shape_cast %643 : vector<1x16x32xbf16> to vector<16x32xbf16>
    %cst_405 = arith.constant dense<0.000000e+00> : vector<16x16xf32>
    %645 = tpu.matmul %644, %620, %cst_405 {dimension_numbers = #tpu.dot_dimension_numbers<[1], [0], [0], [1], [0, 0, 1, 1], [], []>} : vector<16x32xbf16>, vector<32x16xbf16>, vector<16x16xf32> -> vector<16x16xf32>
    %646 = arith.truncf %645 : vector<16x16xf32> to vector<16x16xbf16>
    %cst_406 = arith.constant dense<0.000000e+00> : vector<16x64xf32>
    %647 = tpu.matmul %646, %642, %cst_406 {dimension_numbers = #tpu.dot_dimension_numbers<[1], [0], [0], [1], [0, 0, 1, 1], [], []>} : vector<16x16xbf16>, vector<16x64xbf16>, vector<16x64xf32> -> vector<16x64xf32>
    %c2_i32_407 = arith.constant 2 : i32
    %648 = vector.broadcast %c2_i32_407 : i32 to vector<16x64xi32>
    %649 = arith.muli %648, %624 : vector<16x64xi32>
    %c0_i32_408 = arith.constant 0 : i32
    %650 = vector.broadcast %c0_i32_408 : i32 to vector<16x64xi32>
    %651 = arith.addi %649, %650 : vector<16x64xi32>
    %c8_i32_409 = arith.constant 8 : i32
    %652 = vector.broadcast %c8_i32_409 : i32 to vector<16x64xi32>
    %653 = arith.muli %651, %652 : vector<16x64xi32>
    %c2_i32_410 = arith.constant 2 : i32
    %654 = vector.broadcast %c2_i32_410 : i32 to vector<16x64xi32>
    %655 = arith.muli %654, %626 : vector<16x64xi32>
    %656 = arith.addi %653, %655 : vector<16x64xi32>
    %c1_i32 = arith.constant 1 : i32
    %657 = vector.broadcast %c1_i32 : i32 to vector<16x64xi32>
    %658 = arith.addi %656, %657 : vector<16x64xi32>
    %659 = arith.cmpi eq, %622, %658 : vector<16x64xi32>
    %cst_411 = arith.constant 1.000000e+00 : f32
    %cst_412 = arith.constant 0.000000e+00 : f32
    %660 = vector.broadcast %cst_411 : f32 to vector<16x64xf32>
    %661 = vector.broadcast %cst_412 : f32 to vector<16x64xf32>
    %662 = arith.select %659, %660, %661 : vector<16x64xi1>, vector<16x64xf32>
    %663 = arith.truncf %662 : vector<16x64xf32> to vector<16x64xbf16>
    %c1 = arith.constant 1 : index
    %c0_413 = arith.constant 0 : index
    %c0_414 = arith.constant 0 : index
    %664 = vector.load %arg14[%c1, %c0_413, %c0_414] : memref<4x16x32xbf16, #tpu.memory_space<vmem>>, vector<1x16x32xbf16>
    %665 = vector.shape_cast %664 : vector<1x16x32xbf16> to vector<16x32xbf16>
    %cst_415 = arith.constant dense<0.000000e+00> : vector<16x16xf32>
    %666 = tpu.matmul %665, %620, %cst_415 {dimension_numbers = #tpu.dot_dimension_numbers<[1], [0], [0], [1], [0, 0, 1, 1], [], []>} : vector<16x32xbf16>, vector<32x16xbf16>, vector<16x16xf32> -> vector<16x16xf32>
    %667 = arith.truncf %666 : vector<16x16xf32> to vector<16x16xbf16>
    %cst_416 = arith.constant dense<0.000000e+00> : vector<16x64xf32>
    %668 = tpu.matmul %667, %663, %cst_416 {dimension_numbers = #tpu.dot_dimension_numbers<[1], [0], [0], [1], [0, 0, 1, 1], [], []>} : vector<16x16xbf16>, vector<16x64xbf16>, vector<16x64xf32> -> vector<16x64xf32>
    %669 = arith.addf %647, %668 : vector<16x64xf32>
    %c2_i32_417 = arith.constant 2 : i32
    %670 = vector.broadcast %c2_i32_417 : i32 to vector<16x64xi32>
    %671 = arith.muli %670, %624 : vector<16x64xi32>
    %c1_i32_418 = arith.constant 1 : i32
    %672 = vector.broadcast %c1_i32_418 : i32 to vector<16x64xi32>
    %673 = arith.addi %671, %672 : vector<16x64xi32>
    %c8_i32_419 = arith.constant 8 : i32
    %674 = vector.broadcast %c8_i32_419 : i32 to vector<16x64xi32>
    %675 = arith.muli %673, %674 : vector<16x64xi32>
    %c2_i32_420 = arith.constant 2 : i32
    %676 = vector.broadcast %c2_i32_420 : i32 to vector<16x64xi32>
    %677 = arith.muli %676, %626 : vector<16x64xi32>
    %678 = arith.addi %675, %677 : vector<16x64xi32>
    %c0_i32_421 = arith.constant 0 : i32
    %679 = vector.broadcast %c0_i32_421 : i32 to vector<16x64xi32>
    %680 = arith.addi %678, %679 : vector<16x64xi32>
    %681 = arith.cmpi eq, %622, %680 : vector<16x64xi32>
    %cst_422 = arith.constant 1.000000e+00 : f32
    %cst_423 = arith.constant 0.000000e+00 : f32
    %682 = vector.broadcast %cst_422 : f32 to vector<16x64xf32>
    %683 = vector.broadcast %cst_423 : f32 to vector<16x64xf32>
    %684 = arith.select %681, %682, %683 : vector<16x64xi1>, vector<16x64xf32>
    %685 = arith.truncf %684 : vector<16x64xf32> to vector<16x64xbf16>
    %c2 = arith.constant 2 : index
    %c0_424 = arith.constant 0 : index
    %c0_425 = arith.constant 0 : index
    %686 = vector.load %arg14[%c2, %c0_424, %c0_425] : memref<4x16x32xbf16, #tpu.memory_space<vmem>>, vector<1x16x32xbf16>
    %687 = vector.shape_cast %686 : vector<1x16x32xbf16> to vector<16x32xbf16>
    %cst_426 = arith.constant dense<0.000000e+00> : vector<16x16xf32>
    %688 = tpu.matmul %687, %620, %cst_426 {dimension_numbers = #tpu.dot_dimension_numbers<[1], [0], [0], [1], [0, 0, 1, 1], [], []>} : vector<16x32xbf16>, vector<32x16xbf16>, vector<16x16xf32> -> vector<16x16xf32>
    %689 = arith.truncf %688 : vector<16x16xf32> to vector<16x16xbf16>
    %cst_427 = arith.constant dense<0.000000e+00> : vector<16x64xf32>
    %690 = tpu.matmul %689, %685, %cst_427 {dimension_numbers = #tpu.dot_dimension_numbers<[1], [0], [0], [1], [0, 0, 1, 1], [], []>} : vector<16x16xbf16>, vector<16x64xbf16>, vector<16x64xf32> -> vector<16x64xf32>
    %691 = arith.addf %669, %690 : vector<16x64xf32>
    %c2_i32_428 = arith.constant 2 : i32
    %692 = vector.broadcast %c2_i32_428 : i32 to vector<16x64xi32>
    %693 = arith.muli %692, %624 : vector<16x64xi32>
    %c1_i32_429 = arith.constant 1 : i32
    %694 = vector.broadcast %c1_i32_429 : i32 to vector<16x64xi32>
    %695 = arith.addi %693, %694 : vector<16x64xi32>
    %c8_i32_430 = arith.constant 8 : i32
    %696 = vector.broadcast %c8_i32_430 : i32 to vector<16x64xi32>
    %697 = arith.muli %695, %696 : vector<16x64xi32>
    %c2_i32_431 = arith.constant 2 : i32
    %698 = vector.broadcast %c2_i32_431 : i32 to vector<16x64xi32>
    %699 = arith.muli %698, %626 : vector<16x64xi32>
    %700 = arith.addi %697, %699 : vector<16x64xi32>
    %c1_i32_432 = arith.constant 1 : i32
    %701 = vector.broadcast %c1_i32_432 : i32 to vector<16x64xi32>
    %702 = arith.addi %700, %701 : vector<16x64xi32>
    %703 = arith.cmpi eq, %622, %702 : vector<16x64xi32>
    %cst_433 = arith.constant 1.000000e+00 : f32
    %cst_434 = arith.constant 0.000000e+00 : f32
    %704 = vector.broadcast %cst_433 : f32 to vector<16x64xf32>
    %705 = vector.broadcast %cst_434 : f32 to vector<16x64xf32>
    %706 = arith.select %703, %704, %705 : vector<16x64xi1>, vector<16x64xf32>
    %707 = arith.truncf %706 : vector<16x64xf32> to vector<16x64xbf16>
    %c3 = arith.constant 3 : index
    %c0_435 = arith.constant 0 : index
    %c0_436 = arith.constant 0 : index
    %708 = vector.load %arg14[%c3, %c0_435, %c0_436] : memref<4x16x32xbf16, #tpu.memory_space<vmem>>, vector<1x16x32xbf16>
    %709 = vector.shape_cast %708 : vector<1x16x32xbf16> to vector<16x32xbf16>
    %cst_437 = arith.constant dense<0.000000e+00> : vector<16x16xf32>
    %710 = tpu.matmul %709, %620, %cst_437 {dimension_numbers = #tpu.dot_dimension_numbers<[1], [0], [0], [1], [0, 0, 1, 1], [], []>} : vector<16x32xbf16>, vector<32x16xbf16>, vector<16x16xf32> -> vector<16x16xf32>
    %711 = arith.truncf %710 : vector<16x16xf32> to vector<16x16xbf16>
    %cst_438 = arith.constant dense<0.000000e+00> : vector<16x64xf32>
    %712 = tpu.matmul %711, %707, %cst_438 {dimension_numbers = #tpu.dot_dimension_numbers<[1], [0], [0], [1], [0, 0, 1, 1], [], []>} : vector<16x16xbf16>, vector<16x64xbf16>, vector<16x64xf32> -> vector<16x64xf32>
    %713 = arith.addf %691, %712 : vector<16x64xf32>
    %714 = tpu.iota {dimensions = array<i32: 1>} : vector<1x64xi32>
    %c3_i32_439 = arith.constant 3 : i32
    %715 = vector.broadcast %c3_i32_439 : i32 to vector<1x64xi32>
    %716 = arith.shrsi %714, %715 : vector<1x64xi32>
    %c7_i32_440 = arith.constant 7 : i32
    %717 = vector.broadcast %c7_i32_440 : i32 to vector<1x64xi32>
    %718 = arith.andi %714, %717 : vector<1x64xi32>
    %c0_441 = arith.constant 0 : index
    %c128_442 = arith.constant 128 : index
    %719 = vector.load %arg30[%c0_441, %c128_442] : memref<32x512xf32, #tpu.memory_space<vmem>>, vector<16x64xf32>
    tpu.vector_store %arg30[%c0_441, %c128_442], %713 {strides = array<i32>} : memref<32x512xf32, #tpu.memory_space<vmem>>, vector<16x64xf32>,
    %c0_443 = arith.constant 0 : index
    %c119_444 = arith.constant 119 : index
    %720 = vector.load %arg30[%c0_443, %c119_444] : memref<32x512xf32, #tpu.memory_space<vmem>>, vector<16x64xf32>
    %c0_i32_445 = arith.constant 0 : i32
    %721 = vector.broadcast %c0_i32_445 : i32 to vector<1x64xi32>
    %722 = arith.cmpi sgt, %716, %721 : vector<1x64xi32>
    %c0_i32_446 = arith.constant 0 : i32
    %723 = vector.broadcast %c0_i32_446 : i32 to vector<1x64xi32>
    %724 = arith.cmpi sgt, %718, %723 : vector<1x64xi32>
    %725 = arith.andi %722, %724 : vector<1x64xi1>
    %cst_447 = arith.constant 0.000000e+00 : f32
    %726 = vector.shape_cast %725 : vector<1x64xi1> to vector<1x64xi1>
    %727 = vector.broadcast %726 : vector<1x64xi1> to vector<16x64xi1>
    %728 = vector.broadcast %cst_447 : f32 to vector<16x64xf32>
    %729 = arith.select %727, %720, %728 : vector<16x64xi1>, vector<16x64xf32>
    %c0_448 = arith.constant 0 : index
    %c0_449 = arith.constant 0 : index
    %730 = vector.load %arg31[%c0_448, %c0_449] : memref<288x256xf32, #tpu.memory_space<vmem>>, vector<16x64xf32>
    tpu.vector_store %arg31[%c0_448, %c0_449], %729 {strides = array<i32>} : memref<288x256xf32, #tpu.memory_space<vmem>>, vector<16x64xf32>,
    %c0_450 = arith.constant 0 : index
    %c120_451 = arith.constant 120 : index
    %731 = vector.load %arg30[%c0_450, %c120_451] : memref<32x512xf32, #tpu.memory_space<vmem>>, vector<16x64xf32>
    %c0_i32_452 = arith.constant 0 : i32
    %732 = vector.broadcast %c0_i32_452 : i32 to vector<1x64xi32>
    %733 = arith.cmpi sgt, %716, %732 : vector<1x64xi32>
    %cst_453 = arith.constant 0.000000e+00 : f32
    %734 = vector.shape_cast %733 : vector<1x64xi1> to vector<1x64xi1>
    %735 = vector.broadcast %734 : vector<1x64xi1> to vector<16x64xi1>
    %736 = vector.broadcast %cst_453 : f32 to vector<16x64xf32>
    %737 = arith.select %735, %731, %736 : vector<16x64xi1>, vector<16x64xf32>
    %c32_454 = arith.constant 32 : index
    %c0_455 = arith.constant 0 : index
    %738 = vector.load %arg31[%c32_454, %c0_455] : memref<288x256xf32, #tpu.memory_space<vmem>>, vector<16x64xf32>
    tpu.vector_store %arg31[%c32_454, %c0_455], %737 {strides = array<i32>} : memref<288x256xf32, #tpu.memory_space<vmem>>, vector<16x64xf32>,
    %c0_456 = arith.constant 0 : index
    %c121_457 = arith.constant 121 : index
    %739 = vector.load %arg30[%c0_456, %c121_457] : memref<32x512xf32, #tpu.memory_space<vmem>>, vector<16x64xf32>
    %c0_i32_458 = arith.constant 0 : i32
    %740 = vector.broadcast %c0_i32_458 : i32 to vector<1x64xi32>
    %741 = arith.cmpi sgt, %716, %740 : vector<1x64xi32>
    %c7_i32_459 = arith.constant 7 : i32
    %742 = vector.broadcast %c7_i32_459 : i32 to vector<1x64xi32>
    %743 = arith.cmpi slt, %718, %742 : vector<1x64xi32>
    %744 = arith.andi %741, %743 : vector<1x64xi1>
    %cst_460 = arith.constant 0.000000e+00 : f32
    %745 = vector.shape_cast %744 : vector<1x64xi1> to vector<1x64xi1>
    %746 = vector.broadcast %745 : vector<1x64xi1> to vector<16x64xi1>
    %747 = vector.broadcast %cst_460 : f32 to vector<16x64xf32>
    %748 = arith.select %746, %739, %747 : vector<16x64xi1>, vector<16x64xf32>
    %c64_461 = arith.constant 64 : index
    %c0_462 = arith.constant 0 : index
    %749 = vector.load %arg31[%c64_461, %c0_462] : memref<288x256xf32, #tpu.memory_space<vmem>>, vector<16x64xf32>
    tpu.vector_store %arg31[%c64_461, %c0_462], %748 {strides = array<i32>} : memref<288x256xf32, #tpu.memory_space<vmem>>, vector<16x64xf32>,
    %c0_463 = arith.constant 0 : index
    %c127_464 = arith.constant 127 : index
    %750 = vector.load %arg30[%c0_463, %c127_464] : memref<32x512xf32, #tpu.memory_space<vmem>>, vector<16x64xf32>
    %c0_i32_465 = arith.constant 0 : i32
    %751 = vector.broadcast %c0_i32_465 : i32 to vector<1x64xi32>
    %752 = arith.cmpi sgt, %718, %751 : vector<1x64xi32>
    %cst_466 = arith.constant 0.000000e+00 : f32
    %753 = vector.shape_cast %752 : vector<1x64xi1> to vector<1x64xi1>
    %754 = vector.broadcast %753 : vector<1x64xi1> to vector<16x64xi1>
    %755 = vector.broadcast %cst_466 : f32 to vector<16x64xf32>
    %756 = arith.select %754, %750, %755 : vector<16x64xi1>, vector<16x64xf32>
    %c96_467 = arith.constant 96 : index
    %c0_468 = arith.constant 0 : index
    %757 = vector.load %arg31[%c96_467, %c0_468] : memref<288x256xf32, #tpu.memory_space<vmem>>, vector<16x64xf32>
    tpu.vector_store %arg31[%c96_467, %c0_468], %756 {strides = array<i32>} : memref<288x256xf32, #tpu.memory_space<vmem>>, vector<16x64xf32>,
    %c0_469 = arith.constant 0 : index
    %c128_470 = arith.constant 128 : index
    %758 = vector.load %arg30[%c0_469, %c128_470] : memref<32x512xf32, #tpu.memory_space<vmem>>, vector<16x64xf32>
    %c128_471 = arith.constant 128 : index
    %c0_472 = arith.constant 0 : index
    %759 = vector.load %arg31[%c128_471, %c0_472] : memref<288x256xf32, #tpu.memory_space<vmem>>, vector<16x64xf32>
    tpu.vector_store %arg31[%c128_471, %c0_472], %758 {strides = array<i32>} : memref<288x256xf32, #tpu.memory_space<vmem>>, vector<16x64xf32>,
    %c0_473 = arith.constant 0 : index
    %c129_474 = arith.constant 129 : index
    %760 = vector.load %arg30[%c0_473, %c129_474] : memref<32x512xf32, #tpu.memory_space<vmem>>, vector<16x64xf32>
    %c7_i32_475 = arith.constant 7 : i32
    %761 = vector.broadcast %c7_i32_475 : i32 to vector<1x64xi32>
    %762 = arith.cmpi slt, %718, %761 : vector<1x64xi32>
    %cst_476 = arith.constant 0.000000e+00 : f32
    %763 = vector.shape_cast %762 : vector<1x64xi1> to vector<1x64xi1>
    %764 = vector.broadcast %763 : vector<1x64xi1> to vector<16x64xi1>
    %765 = vector.broadcast %cst_476 : f32 to vector<16x64xf32>
    %766 = arith.select %764, %760, %765 : vector<16x64xi1>, vector<16x64xf32>
    %c160_477 = arith.constant 160 : index
    %c0_478 = arith.constant 0 : index
    %767 = vector.load %arg31[%c160_477, %c0_478] : memref<288x256xf32, #tpu.memory_space<vmem>>, vector<16x64xf32>
    tpu.vector_store %arg31[%c160_477, %c0_478], %766 {strides = array<i32>} : memref<288x256xf32, #tpu.memory_space<vmem>>, vector<16x64xf32>,
    %c0_479 = arith.constant 0 : index
    %c135_480 = arith.constant 135 : index
    %768 = vector.load %arg30[%c0_479, %c135_480] : memref<32x512xf32, #tpu.memory_space<vmem>>, vector<16x64xf32>
    %c7_i32_481 = arith.constant 7 : i32
    %769 = vector.broadcast %c7_i32_481 : i32 to vector<1x64xi32>
    %770 = arith.cmpi slt, %716, %769 : vector<1x64xi32>
    %c0_i32_482 = arith.constant 0 : i32
    %771 = vector.broadcast %c0_i32_482 : i32 to vector<1x64xi32>
    %772 = arith.cmpi sgt, %718, %771 : vector<1x64xi32>
    %773 = arith.andi %770, %772 : vector<1x64xi1>
    %cst_483 = arith.constant 0.000000e+00 : f32
    %774 = vector.shape_cast %773 : vector<1x64xi1> to vector<1x64xi1>
    %775 = vector.broadcast %774 : vector<1x64xi1> to vector<16x64xi1>
    %776 = vector.broadcast %cst_483 : f32 to vector<16x64xf32>
    %777 = arith.select %775, %768, %776 : vector<16x64xi1>, vector<16x64xf32>
    %c192_484 = arith.constant 192 : index
    %c0_485 = arith.constant 0 : index
    %778 = vector.load %arg31[%c192_484, %c0_485] : memref<288x256xf32, #tpu.memory_space<vmem>>, vector<16x64xf32>
    tpu.vector_store %arg31[%c192_484, %c0_485], %777 {strides = array<i32>} : memref<288x256xf32, #tpu.memory_space<vmem>>, vector<16x64xf32>,
    %c0_486 = arith.constant 0 : index
    %c136_487 = arith.constant 136 : index
    %779 = vector.load %arg30[%c0_486, %c136_487] : memref<32x512xf32, #tpu.memory_space<vmem>>, vector<16x64xf32>
    %c7_i32_488 = arith.constant 7 : i32
    %780 = vector.broadcast %c7_i32_488 : i32 to vector<1x64xi32>
    %781 = arith.cmpi slt, %716, %780 : vector<1x64xi32>
    %cst_489 = arith.constant 0.000000e+00 : f32
    %782 = vector.shape_cast %781 : vector<1x64xi1> to vector<1x64xi1>
    %783 = vector.broadcast %782 : vector<1x64xi1> to vector<16x64xi1>
    %784 = vector.broadcast %cst_489 : f32 to vector<16x64xf32>
    %785 = arith.select %783, %779, %784 : vector<16x64xi1>, vector<16x64xf32>
    %c224_490 = arith.constant 224 : index
    %c0_491 = arith.constant 0 : index
    %786 = vector.load %arg31[%c224_490, %c0_491] : memref<288x256xf32, #tpu.memory_space<vmem>>, vector<16x64xf32>
    tpu.vector_store %arg31[%c224_490, %c0_491], %785 {strides = array<i32>} : memref<288x256xf32, #tpu.memory_space<vmem>>, vector<16x64xf32>,
    %c0_492 = arith.constant 0 : index
    %c137_493 = arith.constant 137 : index
    %787 = vector.load %arg30[%c0_492, %c137_493] : memref<32x512xf32, #tpu.memory_space<vmem>>, vector<16x64xf32>
    %c7_i32_494 = arith.constant 7 : i32
    %788 = vector.broadcast %c7_i32_494 : i32 to vector<1x64xi32>
    %789 = arith.cmpi slt, %716, %788 : vector<1x64xi32>
    %c7_i32_495 = arith.constant 7 : i32
    %790 = vector.broadcast %c7_i32_495 : i32 to vector<1x64xi32>
    %791 = arith.cmpi slt, %718, %790 : vector<1x64xi32>
    %792 = arith.andi %789, %791 : vector<1x64xi1>
    %cst_496 = arith.constant 0.000000e+00 : f32
    %793 = vector.shape_cast %792 : vector<1x64xi1> to vector<1x64xi1>
    %794 = vector.broadcast %793 : vector<1x64xi1> to vector<16x64xi1>
    %795 = vector.broadcast %cst_496 : f32 to vector<16x64xf32>
    %796 = arith.select %794, %787, %795 : vector<16x64xi1>, vector<16x64xf32>
    %c256_497 = arith.constant 256 : index
    %c0_498 = arith.constant 0 : index
    %797 = vector.load %arg31[%c256_497, %c0_498] : memref<288x256xf32, #tpu.memory_space<vmem>>, vector<16x64xf32>
    tpu.vector_store %arg31[%c256_497, %c0_498], %796 {strides = array<i32>} : memref<288x256xf32, #tpu.memory_space<vmem>>, vector<16x64xf32>,
    %c0_499 = arith.constant 0 : index
    %c128_500 = arith.constant 128 : index
    %798 = vector.load %arg30[%c0_499, %c128_500] : memref<32x512xf32, #tpu.memory_space<vmem>>, vector<16x64xf32>
    tpu.vector_store %arg30[%c0_499, %c128_500], %409 {strides = array<i32>} : memref<32x512xf32, #tpu.memory_space<vmem>>, vector<16x64xf32>,
    %c0_501 = arith.constant 0 : index
    %c119_502 = arith.constant 119 : index
    %799 = vector.load %arg30[%c0_501, %c119_502] : memref<32x512xf32, #tpu.memory_space<vmem>>, vector<16x64xf32>
    %c0_i32_503 = arith.constant 0 : i32
    %800 = vector.broadcast %c0_i32_503 : i32 to vector<1x64xi32>
    %801 = arith.cmpi sgt, %716, %800 : vector<1x64xi32>
    %c0_i32_504 = arith.constant 0 : i32
    %802 = vector.broadcast %c0_i32_504 : i32 to vector<1x64xi32>
    %803 = arith.cmpi sgt, %718, %802 : vector<1x64xi32>
    %804 = arith.andi %801, %803 : vector<1x64xi1>
    %cst_505 = arith.constant 0.000000e+00 : f32
    %805 = vector.shape_cast %804 : vector<1x64xi1> to vector<1x64xi1>
    %806 = vector.broadcast %805 : vector<1x64xi1> to vector<16x64xi1>
    %807 = vector.broadcast %cst_505 : f32 to vector<16x64xf32>
    %808 = arith.select %806, %799, %807 : vector<16x64xi1>, vector<16x64xf32>
    %c16_506 = arith.constant 16 : index
    %c0_507 = arith.constant 0 : index
    %809 = vector.load %arg31[%c16_506, %c0_507] : memref<288x256xf32, #tpu.memory_space<vmem>>, vector<16x64xf32>
    tpu.vector_store %arg31[%c16_506, %c0_507], %808 {strides = array<i32>} : memref<288x256xf32, #tpu.memory_space<vmem>>, vector<16x64xf32>,
    %c0_508 = arith.constant 0 : index
    %c120_509 = arith.constant 120 : index
    %810 = vector.load %arg30[%c0_508, %c120_509] : memref<32x512xf32, #tpu.memory_space<vmem>>, vector<16x64xf32>
    %c0_i32_510 = arith.constant 0 : i32
    %811 = vector.broadcast %c0_i32_510 : i32 to vector<1x64xi32>
    %812 = arith.cmpi sgt, %716, %811 : vector<1x64xi32>
    %cst_511 = arith.constant 0.000000e+00 : f32
    %813 = vector.shape_cast %812 : vector<1x64xi1> to vector<1x64xi1>
    %814 = vector.broadcast %813 : vector<1x64xi1> to vector<16x64xi1>
    %815 = vector.broadcast %cst_511 : f32 to vector<16x64xf32>
    %816 = arith.select %814, %810, %815 : vector<16x64xi1>, vector<16x64xf32>
    %c48_512 = arith.constant 48 : index
    %c0_513 = arith.constant 0 : index
    %817 = vector.load %arg31[%c48_512, %c0_513] : memref<288x256xf32, #tpu.memory_space<vmem>>, vector<16x64xf32>
    tpu.vector_store %arg31[%c48_512, %c0_513], %816 {strides = array<i32>} : memref<288x256xf32, #tpu.memory_space<vmem>>, vector<16x64xf32>,
    %c0_514 = arith.constant 0 : index
    %c121_515 = arith.constant 121 : index
    %818 = vector.load %arg30[%c0_514, %c121_515] : memref<32x512xf32, #tpu.memory_space<vmem>>, vector<16x64xf32>
    %c0_i32_516 = arith.constant 0 : i32
    %819 = vector.broadcast %c0_i32_516 : i32 to vector<1x64xi32>
    %820 = arith.cmpi sgt, %716, %819 : vector<1x64xi32>
    %c7_i32_517 = arith.constant 7 : i32
    %821 = vector.broadcast %c7_i32_517 : i32 to vector<1x64xi32>
    %822 = arith.cmpi slt, %718, %821 : vector<1x64xi32>
    %823 = arith.andi %820, %822 : vector<1x64xi1>
    %cst_518 = arith.constant 0.000000e+00 : f32
    %824 = vector.shape_cast %823 : vector<1x64xi1> to vector<1x64xi1>
    %825 = vector.broadcast %824 : vector<1x64xi1> to vector<16x64xi1>
    %826 = vector.broadcast %cst_518 : f32 to vector<16x64xf32>
    %827 = arith.select %825, %818, %826 : vector<16x64xi1>, vector<16x64xf32>
    %c80_519 = arith.constant 80 : index
    %c0_520 = arith.constant 0 : index
    %828 = vector.load %arg31[%c80_519, %c0_520] : memref<288x256xf32, #tpu.memory_space<vmem>>, vector<16x64xf32>
    tpu.vector_store %arg31[%c80_519, %c0_520], %827 {strides = array<i32>} : memref<288x256xf32, #tpu.memory_space<vmem>>, vector<16x64xf32>,
    %c0_521 = arith.constant 0 : index
    %c127_522 = arith.constant 127 : index
    %829 = vector.load %arg30[%c0_521, %c127_522] : memref<32x512xf32, #tpu.memory_space<vmem>>, vector<16x64xf32>
    %c0_i32_523 = arith.constant 0 : i32
    %830 = vector.broadcast %c0_i32_523 : i32 to vector<1x64xi32>
    %831 = arith.cmpi sgt, %718, %830 : vector<1x64xi32>
    %cst_524 = arith.constant 0.000000e+00 : f32
    %832 = vector.shape_cast %831 : vector<1x64xi1> to vector<1x64xi1>
    %833 = vector.broadcast %832 : vector<1x64xi1> to vector<16x64xi1>
    %834 = vector.broadcast %cst_524 : f32 to vector<16x64xf32>
    %835 = arith.select %833, %829, %834 : vector<16x64xi1>, vector<16x64xf32>
    %c112_525 = arith.constant 112 : index
    %c0_526 = arith.constant 0 : index
    %836 = vector.load %arg31[%c112_525, %c0_526] : memref<288x256xf32, #tpu.memory_space<vmem>>, vector<16x64xf32>
    tpu.vector_store %arg31[%c112_525, %c0_526], %835 {strides = array<i32>} : memref<288x256xf32, #tpu.memory_space<vmem>>, vector<16x64xf32>,
    %c0_527 = arith.constant 0 : index
    %c128_528 = arith.constant 128 : index
    %837 = vector.load %arg30[%c0_527, %c128_528] : memref<32x512xf32, #tpu.memory_space<vmem>>, vector<16x64xf32>
    %c144_529 = arith.constant 144 : index
    %c0_530 = arith.constant 0 : index
    %838 = vector.load %arg31[%c144_529, %c0_530] : memref<288x256xf32, #tpu.memory_space<vmem>>, vector<16x64xf32>
    tpu.vector_store %arg31[%c144_529, %c0_530], %837 {strides = array<i32>} : memref<288x256xf32, #tpu.memory_space<vmem>>, vector<16x64xf32>,
    %c0_531 = arith.constant 0 : index
    %c129_532 = arith.constant 129 : index
    %839 = vector.load %arg30[%c0_531, %c129_532] : memref<32x512xf32, #tpu.memory_space<vmem>>, vector<16x64xf32>
    %c7_i32_533 = arith.constant 7 : i32
    %840 = vector.broadcast %c7_i32_533 : i32 to vector<1x64xi32>
    %841 = arith.cmpi slt, %718, %840 : vector<1x64xi32>
    %cst_534 = arith.constant 0.000000e+00 : f32
    %842 = vector.shape_cast %841 : vector<1x64xi1> to vector<1x64xi1>
    %843 = vector.broadcast %842 : vector<1x64xi1> to vector<16x64xi1>
    %844 = vector.broadcast %cst_534 : f32 to vector<16x64xf32>
    %845 = arith.select %843, %839, %844 : vector<16x64xi1>, vector<16x64xf32>
    %c176 = arith.constant 176 : index
    %c0_535 = arith.constant 0 : index
    %846 = vector.load %arg31[%c176, %c0_535] : memref<288x256xf32, #tpu.memory_space<vmem>>, vector<16x64xf32>
    tpu.vector_store %arg31[%c176, %c0_535], %845 {strides = array<i32>} : memref<288x256xf32, #tpu.memory_space<vmem>>, vector<16x64xf32>,
    %c0_536 = arith.constant 0 : index
    %c135_537 = arith.constant 135 : index
    %847 = vector.load %arg30[%c0_536, %c135_537] : memref<32x512xf32, #tpu.memory_space<vmem>>, vector<16x64xf32>
    %c7_i32_538 = arith.constant 7 : i32
    %848 = vector.broadcast %c7_i32_538 : i32 to vector<1x64xi32>
    %849 = arith.cmpi slt, %716, %848 : vector<1x64xi32>
    %c0_i32_539 = arith.constant 0 : i32
    %850 = vector.broadcast %c0_i32_539 : i32 to vector<1x64xi32>
    %851 = arith.cmpi sgt, %718, %850 : vector<1x64xi32>
    %852 = arith.andi %849, %851 : vector<1x64xi1>
    %cst_540 = arith.constant 0.000000e+00 : f32
    %853 = vector.shape_cast %852 : vector<1x64xi1> to vector<1x64xi1>
    %854 = vector.broadcast %853 : vector<1x64xi1> to vector<16x64xi1>
    %855 = vector.broadcast %cst_540 : f32 to vector<16x64xf32>
    %856 = arith.select %854, %847, %855 : vector<16x64xi1>, vector<16x64xf32>
    %c208 = arith.constant 208 : index
    %c0_541 = arith.constant 0 : index
    %857 = vector.load %arg31[%c208, %c0_541] : memref<288x256xf32, #tpu.memory_space<vmem>>, vector<16x64xf32>
    tpu.vector_store %arg31[%c208, %c0_541], %856 {strides = array<i32>} : memref<288x256xf32, #tpu.memory_space<vmem>>, vector<16x64xf32>,
    %c0_542 = arith.constant 0 : index
    %c136_543 = arith.constant 136 : index
    %858 = vector.load %arg30[%c0_542, %c136_543] : memref<32x512xf32, #tpu.memory_space<vmem>>, vector<16x64xf32>
    %c7_i32_544 = arith.constant 7 : i32
    %859 = vector.broadcast %c7_i32_544 : i32 to vector<1x64xi32>
    %860 = arith.cmpi slt, %716, %859 : vector<1x64xi32>
    %cst_545 = arith.constant 0.000000e+00 : f32
    %861 = vector.shape_cast %860 : vector<1x64xi1> to vector<1x64xi1>
    %862 = vector.broadcast %861 : vector<1x64xi1> to vector<16x64xi1>
    %863 = vector.broadcast %cst_545 : f32 to vector<16x64xf32>
    %864 = arith.select %862, %858, %863 : vector<16x64xi1>, vector<16x64xf32>
    %c240 = arith.constant 240 : index
    %c0_546 = arith.constant 0 : index
    %865 = vector.load %arg31[%c240, %c0_546] : memref<288x256xf32, #tpu.memory_space<vmem>>, vector<16x64xf32>
    tpu.vector_store %arg31[%c240, %c0_546], %864 {strides = array<i32>} : memref<288x256xf32, #tpu.memory_space<vmem>>, vector<16x64xf32>,
    %c0_547 = arith.constant 0 : index
    %c137_548 = arith.constant 137 : index
    %866 = vector.load %arg30[%c0_547, %c137_548] : memref<32x512xf32, #tpu.memory_space<vmem>>, vector<16x64xf32>
    %c7_i32_549 = arith.constant 7 : i32
    %867 = vector.broadcast %c7_i32_549 : i32 to vector<1x64xi32>
    %868 = arith.cmpi slt, %716, %867 : vector<1x64xi32>
    %c7_i32_550 = arith.constant 7 : i32
    %869 = vector.broadcast %c7_i32_550 : i32 to vector<1x64xi32>
    %870 = arith.cmpi slt, %718, %869 : vector<1x64xi32>
    %871 = arith.andi %868, %870 : vector<1x64xi1>
    %cst_551 = arith.constant 0.000000e+00 : f32
    %872 = vector.shape_cast %871 : vector<1x64xi1> to vector<1x64xi1>
    %873 = vector.broadcast %872 : vector<1x64xi1> to vector<16x64xi1>
    %874 = vector.broadcast %cst_551 : f32 to vector<16x64xf32>
    %875 = arith.select %873, %866, %874 : vector<16x64xi1>, vector<16x64xf32>
    %c272 = arith.constant 272 : index
    %c0_552 = arith.constant 0 : index
    %876 = vector.load %arg31[%c272, %c0_552] : memref<288x256xf32, #tpu.memory_space<vmem>>, vector<16x64xf32>
    tpu.vector_store %arg31[%c272, %c0_552], %875 {strides = array<i32>} : memref<288x256xf32, #tpu.memory_space<vmem>>, vector<16x64xf32>,
    %c0_553 = arith.constant 0 : index
    %c0_554 = arith.constant 0 : index
    %877 = vector.load %arg15[%c0_553, %c0_554] : memref<16x288xbf16, #tpu.memory_space<vmem>>, vector<16x288xbf16>
    %c0_555 = arith.constant 0 : index
    %c0_556 = arith.constant 0 : index
    %878 = vector.load %arg31[%c0_555, %c0_556] : memref<288x256xf32, #tpu.memory_space<vmem>>, vector<288x64xf32>
    %879 = arith.truncf %878 : vector<288x64xf32> to vector<288x64xbf16>
    %cst_557 = arith.constant dense<0.000000e+00> : vector<16x64xf32>
    %880 = tpu.matmul %877, %879, %cst_557 {dimension_numbers = #tpu.dot_dimension_numbers<[1], [0], [0], [1], [0, 0, 1, 1], [], []>} : vector<16x288xbf16>, vector<288x64xbf16>, vector<16x64xf32> -> vector<16x64xf32>
    %c0_558 = arith.constant 0 : index
    %c0_559 = arith.constant 0 : index
    %881 = vector.load %arg16[%c0_558, %c0_559] : memref<16x1xf32, #tpu.memory_space<vmem>>, vector<16x1xf32>
    %882 = vector.broadcast %881 : vector<16x1xf32> to vector<16x64xf32>
    %883 = arith.addf %880, %882 : vector<16x64xf32>
    %cst_560 = arith.constant 0.000000e+00 : f32
    %884 = vector.broadcast %cst_560 : f32 to vector<16x64xf32>
    %885 = arith.cmpf oge, %883, %884 : vector<16x64xf32>
    %cst_561 = arith.constant 0.00999999977 : f32
    %886 = vector.broadcast %cst_561 : f32 to vector<16x64xf32>
    %887 = arith.mulf %886, %883 : vector<16x64xf32>
    %888 = arith.select %885, %883, %887 : vector<16x64xi1>, vector<16x64xf32>
    %889 = tpu.iota {dimensions = array<i32: 1>} : vector<1x64xi32>
    %c3_i32_562 = arith.constant 3 : i32
    %890 = vector.broadcast %c3_i32_562 : i32 to vector<1x64xi32>
    %891 = arith.shrsi %889, %890 : vector<1x64xi32>
    %c7_i32_563 = arith.constant 7 : i32
    %892 = vector.broadcast %c7_i32_563 : i32 to vector<1x64xi32>
    %893 = arith.andi %889, %892 : vector<1x64xi32>
    %c0_564 = arith.constant 0 : index
    %c128_565 = arith.constant 128 : index
    %894 = vector.load %arg30[%c0_564, %c128_565] : memref<32x512xf32, #tpu.memory_space<vmem>>, vector<16x64xf32>
    tpu.vector_store %arg30[%c0_564, %c128_565], %888 {strides = array<i32>} : memref<32x512xf32, #tpu.memory_space<vmem>>, vector<16x64xf32>,
    %c0_566 = arith.constant 0 : index
    %c119_567 = arith.constant 119 : index
    %895 = vector.load %arg30[%c0_566, %c119_567] : memref<32x512xf32, #tpu.memory_space<vmem>>, vector<16x64xf32>
    %c0_i32_568 = arith.constant 0 : i32
    %896 = vector.broadcast %c0_i32_568 : i32 to vector<1x64xi32>
    %897 = arith.cmpi sgt, %891, %896 : vector<1x64xi32>
    %c0_i32_569 = arith.constant 0 : i32
    %898 = vector.broadcast %c0_i32_569 : i32 to vector<1x64xi32>
    %899 = arith.cmpi sgt, %893, %898 : vector<1x64xi32>
    %900 = arith.andi %897, %899 : vector<1x64xi1>
    %cst_570 = arith.constant 0.000000e+00 : f32
    %901 = vector.shape_cast %900 : vector<1x64xi1> to vector<1x64xi1>
    %902 = vector.broadcast %901 : vector<1x64xi1> to vector<16x64xi1>
    %903 = vector.broadcast %cst_570 : f32 to vector<16x64xf32>
    %904 = arith.select %902, %895, %903 : vector<16x64xi1>, vector<16x64xf32>
    %c0_571 = arith.constant 0 : index
    %c0_572 = arith.constant 0 : index
    %905 = vector.load %arg31[%c0_571, %c0_572] : memref<288x256xf32, #tpu.memory_space<vmem>>, vector<16x64xf32>
    tpu.vector_store %arg31[%c0_571, %c0_572], %904 {strides = array<i32>} : memref<288x256xf32, #tpu.memory_space<vmem>>, vector<16x64xf32>,
    %c0_573 = arith.constant 0 : index
    %c120_574 = arith.constant 120 : index
    %906 = vector.load %arg30[%c0_573, %c120_574] : memref<32x512xf32, #tpu.memory_space<vmem>>, vector<16x64xf32>
    %c0_i32_575 = arith.constant 0 : i32
    %907 = vector.broadcast %c0_i32_575 : i32 to vector<1x64xi32>
    %908 = arith.cmpi sgt, %891, %907 : vector<1x64xi32>
    %cst_576 = arith.constant 0.000000e+00 : f32
    %909 = vector.shape_cast %908 : vector<1x64xi1> to vector<1x64xi1>
    %910 = vector.broadcast %909 : vector<1x64xi1> to vector<16x64xi1>
    %911 = vector.broadcast %cst_576 : f32 to vector<16x64xf32>
    %912 = arith.select %910, %906, %911 : vector<16x64xi1>, vector<16x64xf32>
    %c16_577 = arith.constant 16 : index
    %c0_578 = arith.constant 0 : index
    %913 = vector.load %arg31[%c16_577, %c0_578] : memref<288x256xf32, #tpu.memory_space<vmem>>, vector<16x64xf32>
    tpu.vector_store %arg31[%c16_577, %c0_578], %912 {strides = array<i32>} : memref<288x256xf32, #tpu.memory_space<vmem>>, vector<16x64xf32>,
    %c0_579 = arith.constant 0 : index
    %c121_580 = arith.constant 121 : index
    %914 = vector.load %arg30[%c0_579, %c121_580] : memref<32x512xf32, #tpu.memory_space<vmem>>, vector<16x64xf32>
    %c0_i32_581 = arith.constant 0 : i32
    %915 = vector.broadcast %c0_i32_581 : i32 to vector<1x64xi32>
    %916 = arith.cmpi sgt, %891, %915 : vector<1x64xi32>
    %c7_i32_582 = arith.constant 7 : i32
    %917 = vector.broadcast %c7_i32_582 : i32 to vector<1x64xi32>
    %918 = arith.cmpi slt, %893, %917 : vector<1x64xi32>
    %919 = arith.andi %916, %918 : vector<1x64xi1>
    %cst_583 = arith.constant 0.000000e+00 : f32
    %920 = vector.shape_cast %919 : vector<1x64xi1> to vector<1x64xi1>
    %921 = vector.broadcast %920 : vector<1x64xi1> to vector<16x64xi1>
    %922 = vector.broadcast %cst_583 : f32 to vector<16x64xf32>
    %923 = arith.select %921, %914, %922 : vector<16x64xi1>, vector<16x64xf32>
    %c32_584 = arith.constant 32 : index
    %c0_585 = arith.constant 0 : index
    %924 = vector.load %arg31[%c32_584, %c0_585] : memref<288x256xf32, #tpu.memory_space<vmem>>, vector<16x64xf32>
    tpu.vector_store %arg31[%c32_584, %c0_585], %923 {strides = array<i32>} : memref<288x256xf32, #tpu.memory_space<vmem>>, vector<16x64xf32>,
    %c0_586 = arith.constant 0 : index
    %c127_587 = arith.constant 127 : index
    %925 = vector.load %arg30[%c0_586, %c127_587] : memref<32x512xf32, #tpu.memory_space<vmem>>, vector<16x64xf32>
    %c0_i32_588 = arith.constant 0 : i32
    %926 = vector.broadcast %c0_i32_588 : i32 to vector<1x64xi32>
    %927 = arith.cmpi sgt, %893, %926 : vector<1x64xi32>
    %cst_589 = arith.constant 0.000000e+00 : f32
    %928 = vector.shape_cast %927 : vector<1x64xi1> to vector<1x64xi1>
    %929 = vector.broadcast %928 : vector<1x64xi1> to vector<16x64xi1>
    %930 = vector.broadcast %cst_589 : f32 to vector<16x64xf32>
    %931 = arith.select %929, %925, %930 : vector<16x64xi1>, vector<16x64xf32>
    %c48_590 = arith.constant 48 : index
    %c0_591 = arith.constant 0 : index
    %932 = vector.load %arg31[%c48_590, %c0_591] : memref<288x256xf32, #tpu.memory_space<vmem>>, vector<16x64xf32>
    tpu.vector_store %arg31[%c48_590, %c0_591], %931 {strides = array<i32>} : memref<288x256xf32, #tpu.memory_space<vmem>>, vector<16x64xf32>,
    %c0_592 = arith.constant 0 : index
    %c128_593 = arith.constant 128 : index
    %933 = vector.load %arg30[%c0_592, %c128_593] : memref<32x512xf32, #tpu.memory_space<vmem>>, vector<16x64xf32>
    %c64_594 = arith.constant 64 : index
    %c0_595 = arith.constant 0 : index
    %934 = vector.load %arg31[%c64_594, %c0_595] : memref<288x256xf32, #tpu.memory_space<vmem>>, vector<16x64xf32>
    tpu.vector_store %arg31[%c64_594, %c0_595], %933 {strides = array<i32>} : memref<288x256xf32, #tpu.memory_space<vmem>>, vector<16x64xf32>,
    %c0_596 = arith.constant 0 : index
    %c129_597 = arith.constant 129 : index
    %935 = vector.load %arg30[%c0_596, %c129_597] : memref<32x512xf32, #tpu.memory_space<vmem>>, vector<16x64xf32>
    %c7_i32_598 = arith.constant 7 : i32
    %936 = vector.broadcast %c7_i32_598 : i32 to vector<1x64xi32>
    %937 = arith.cmpi slt, %893, %936 : vector<1x64xi32>
    %cst_599 = arith.constant 0.000000e+00 : f32
    %938 = vector.shape_cast %937 : vector<1x64xi1> to vector<1x64xi1>
    %939 = vector.broadcast %938 : vector<1x64xi1> to vector<16x64xi1>
    %940 = vector.broadcast %cst_599 : f32 to vector<16x64xf32>
    %941 = arith.select %939, %935, %940 : vector<16x64xi1>, vector<16x64xf32>
    %c80_600 = arith.constant 80 : index
    %c0_601 = arith.constant 0 : index
    %942 = vector.load %arg31[%c80_600, %c0_601] : memref<288x256xf32, #tpu.memory_space<vmem>>, vector<16x64xf32>
    tpu.vector_store %arg31[%c80_600, %c0_601], %941 {strides = array<i32>} : memref<288x256xf32, #tpu.memory_space<vmem>>, vector<16x64xf32>,
    %c0_602 = arith.constant 0 : index
    %c135_603 = arith.constant 135 : index
    %943 = vector.load %arg30[%c0_602, %c135_603] : memref<32x512xf32, #tpu.memory_space<vmem>>, vector<16x64xf32>
    %c7_i32_604 = arith.constant 7 : i32
    %944 = vector.broadcast %c7_i32_604 : i32 to vector<1x64xi32>
    %945 = arith.cmpi slt, %891, %944 : vector<1x64xi32>
    %c0_i32_605 = arith.constant 0 : i32
    %946 = vector.broadcast %c0_i32_605 : i32 to vector<1x64xi32>
    %947 = arith.cmpi sgt, %893, %946 : vector<1x64xi32>
    %948 = arith.andi %945, %947 : vector<1x64xi1>
    %cst_606 = arith.constant 0.000000e+00 : f32
    %949 = vector.shape_cast %948 : vector<1x64xi1> to vector<1x64xi1>
    %950 = vector.broadcast %949 : vector<1x64xi1> to vector<16x64xi1>
    %951 = vector.broadcast %cst_606 : f32 to vector<16x64xf32>
    %952 = arith.select %950, %943, %951 : vector<16x64xi1>, vector<16x64xf32>
    %c96_607 = arith.constant 96 : index
    %c0_608 = arith.constant 0 : index
    %953 = vector.load %arg31[%c96_607, %c0_608] : memref<288x256xf32, #tpu.memory_space<vmem>>, vector<16x64xf32>
    tpu.vector_store %arg31[%c96_607, %c0_608], %952 {strides = array<i32>} : memref<288x256xf32, #tpu.memory_space<vmem>>, vector<16x64xf32>,
    %c0_609 = arith.constant 0 : index
    %c136_610 = arith.constant 136 : index
    %954 = vector.load %arg30[%c0_609, %c136_610] : memref<32x512xf32, #tpu.memory_space<vmem>>, vector<16x64xf32>
    %c7_i32_611 = arith.constant 7 : i32
    %955 = vector.broadcast %c7_i32_611 : i32 to vector<1x64xi32>
    %956 = arith.cmpi slt, %891, %955 : vector<1x64xi32>
    %cst_612 = arith.constant 0.000000e+00 : f32
    %957 = vector.shape_cast %956 : vector<1x64xi1> to vector<1x64xi1>
    %958 = vector.broadcast %957 : vector<1x64xi1> to vector<16x64xi1>
    %959 = vector.broadcast %cst_612 : f32 to vector<16x64xf32>
    %960 = arith.select %958, %954, %959 : vector<16x64xi1>, vector<16x64xf32>
    %c112_613 = arith.constant 112 : index
    %c0_614 = arith.constant 0 : index
    %961 = vector.load %arg31[%c112_613, %c0_614] : memref<288x256xf32, #tpu.memory_space<vmem>>, vector<16x64xf32>
    tpu.vector_store %arg31[%c112_613, %c0_614], %960 {strides = array<i32>} : memref<288x256xf32, #tpu.memory_space<vmem>>, vector<16x64xf32>,
    %c0_615 = arith.constant 0 : index
    %c137_616 = arith.constant 137 : index
    %962 = vector.load %arg30[%c0_615, %c137_616] : memref<32x512xf32, #tpu.memory_space<vmem>>, vector<16x64xf32>
    %c7_i32_617 = arith.constant 7 : i32
    %963 = vector.broadcast %c7_i32_617 : i32 to vector<1x64xi32>
    %964 = arith.cmpi slt, %891, %963 : vector<1x64xi32>
    %c7_i32_618 = arith.constant 7 : i32
    %965 = vector.broadcast %c7_i32_618 : i32 to vector<1x64xi32>
    %966 = arith.cmpi slt, %893, %965 : vector<1x64xi32>
    %967 = arith.andi %964, %966 : vector<1x64xi1>
    %cst_619 = arith.constant 0.000000e+00 : f32
    %968 = vector.shape_cast %967 : vector<1x64xi1> to vector<1x64xi1>
    %969 = vector.broadcast %968 : vector<1x64xi1> to vector<16x64xi1>
    %970 = vector.broadcast %cst_619 : f32 to vector<16x64xf32>
    %971 = arith.select %969, %962, %970 : vector<16x64xi1>, vector<16x64xf32>
    %c128_620 = arith.constant 128 : index
    %c0_621 = arith.constant 0 : index
    %972 = vector.load %arg31[%c128_620, %c0_621] : memref<288x256xf32, #tpu.memory_space<vmem>>, vector<16x64xf32>
    tpu.vector_store %arg31[%c128_620, %c0_621], %971 {strides = array<i32>} : memref<288x256xf32, #tpu.memory_space<vmem>>, vector<16x64xf32>,
    %c0_622 = arith.constant 0 : index
    %c0_623 = arith.constant 0 : index
    %973 = vector.load %arg17[%c0_622, %c0_623] : memref<16x144xbf16, #tpu.memory_space<vmem>>, vector<16x144xbf16>
    %c0_624 = arith.constant 0 : index
    %c0_625 = arith.constant 0 : index
    %974 = vector.load %arg31[%c0_624, %c0_625] : memref<288x256xf32, #tpu.memory_space<vmem>>, vector<144x64xf32>
    %975 = arith.truncf %974 : vector<144x64xf32> to vector<144x64xbf16>
    %cst_626 = arith.constant dense<0.000000e+00> : vector<16x64xf32>
    %976 = tpu.matmul %973, %975, %cst_626 {dimension_numbers = #tpu.dot_dimension_numbers<[1], [0], [0], [1], [0, 0, 1, 1], [], []>} : vector<16x144xbf16>, vector<144x64xbf16>, vector<16x64xf32> -> vector<16x64xf32>
    %c0_627 = arith.constant 0 : index
    %c0_628 = arith.constant 0 : index
    %977 = vector.load %arg18[%c0_627, %c0_628] : memref<16x1xf32, #tpu.memory_space<vmem>>, vector<16x1xf32>
    %978 = vector.broadcast %977 : vector<16x1xf32> to vector<16x64xf32>
    %979 = arith.addf %976, %978 : vector<16x64xf32>
    %cst_629 = arith.constant 0.000000e+00 : f32
    %980 = vector.broadcast %cst_629 : f32 to vector<16x64xf32>
    %981 = arith.cmpf oge, %979, %980 : vector<16x64xf32>
    %cst_630 = arith.constant 0.00999999977 : f32
    %982 = vector.broadcast %cst_630 : f32 to vector<16x64xf32>
    %983 = arith.mulf %982, %979 : vector<16x64xf32>
    %984 = arith.select %981, %979, %983 : vector<16x64xi1>, vector<16x64xf32>
    %c0_631 = arith.constant 0 : index
    %c0_632 = arith.constant 0 : index
    %985 = vector.load %arg19[%c0_631, %c0_632] : memref<3x16xbf16, #tpu.memory_space<vmem>>, vector<3x16xbf16>
    %986 = arith.truncf %984 : vector<16x64xf32> to vector<16x64xbf16>
    %cst_633 = arith.constant dense<0.000000e+00> : vector<3x64xf32>
    %987 = tpu.matmul %985, %986, %cst_633 {dimension_numbers = #tpu.dot_dimension_numbers<[1], [0], [0], [1], [0, 0, 1, 1], [], []>} : vector<3x16xbf16>, vector<16x64xbf16>, vector<3x64xf32> -> vector<3x64xf32>
    %c0_634 = arith.constant 0 : index
    %c0_635 = arith.constant 0 : index
    %988 = vector.load %arg20[%c0_634, %c0_635] : memref<3x1xf32, #tpu.memory_space<vmem>>, vector<3x1xf32>
    %989 = vector.broadcast %988 : vector<3x1xf32> to vector<3x64xf32>
    %990 = arith.addf %987, %989 : vector<3x64xf32>
    %c0_636 = arith.constant 0 : index
    %c0_637 = arith.constant 0 : index
    %c0_638 = arith.constant 0 : index
    %991 = vector.load %arg29[%c0_636, %c0_637, %c0_638] : memref<1x3x64xf32, #tpu.memory_space<vmem>>, vector<1x3x64xf32>
    %992 = vector.shape_cast %991 : vector<1x3x64xf32> to vector<3x64xf32>
    %993 = vector.shape_cast %990 : vector<3x64xf32> to vector<1x3x64xf32>
    tpu.vector_store %arg29[%c0_636, %c0_637, %c0_638], %993 {strides = array<i32>} : memref<1x3x64xf32, #tpu.memory_space<vmem>>, vector<1x3x64xf32>,
    %994 = arith.truncf %984 : vector<16x64xf32> to vector<16x64xbf16>
    %995 = tpu.iota {dimensions = array<i32: 0>} : vector<64x256xi32>
    %996 = tpu.iota {dimensions = array<i32: 1>} : vector<64x256xi32>
    %c3_i32_639 = arith.constant 3 : i32
    %997 = vector.broadcast %c3_i32_639 : i32 to vector<64x256xi32>
    %998 = arith.shrsi %995, %997 : vector<64x256xi32>
    %c7_i32_640 = arith.constant 7 : i32
    %999 = vector.broadcast %c7_i32_640 : i32 to vector<64x256xi32>
    %1000 = arith.andi %995, %999 : vector<64x256xi32>
    %c2_i32_641 = arith.constant 2 : i32
    %1001 = vector.broadcast %c2_i32_641 : i32 to vector<64x256xi32>
    %1002 = arith.muli %1001, %998 : vector<64x256xi32>
    %c0_i32_642 = arith.constant 0 : i32
    %1003 = vector.broadcast %c0_i32_642 : i32 to vector<64x256xi32>
    %1004 = arith.addi %1002, %1003 : vector<64x256xi32>
    %c16_i32_643 = arith.constant 16 : i32
    %1005 = vector.broadcast %c16_i32_643 : i32 to vector<64x256xi32>
    %1006 = arith.muli %1004, %1005 : vector<64x256xi32>
    %c2_i32_644 = arith.constant 2 : i32
    %1007 = vector.broadcast %c2_i32_644 : i32 to vector<64x256xi32>
    %1008 = arith.muli %1007, %1000 : vector<64x256xi32>
    %1009 = arith.addi %1006, %1008 : vector<64x256xi32>
    %c0_i32_645 = arith.constant 0 : i32
    %1010 = vector.broadcast %c0_i32_645 : i32 to vector<64x256xi32>
    %1011 = arith.addi %1009, %1010 : vector<64x256xi32>
    %1012 = arith.cmpi eq, %996, %1011 : vector<64x256xi32>
    %cst_646 = arith.constant 1.000000e+00 : f32
    %cst_647 = arith.constant 0.000000e+00 : f32
    %1013 = vector.broadcast %cst_646 : f32 to vector<64x256xf32>
    %1014 = vector.broadcast %cst_647 : f32 to vector<64x256xf32>
    %1015 = arith.select %1012, %1013, %1014 : vector<64x256xi1>, vector<64x256xf32>
    %1016 = arith.truncf %1015 : vector<64x256xf32> to vector<64x256xbf16>
    %c0_648 = arith.constant 0 : index
    %c0_649 = arith.constant 0 : index
    %c0_650 = arith.constant 0 : index
    %1017 = vector.load %arg21[%c0_648, %c0_649, %c0_650] : memref<4x8x16xbf16, #tpu.memory_space<vmem>>, vector<1x8x16xbf16>
    %1018 = vector.shape_cast %1017 : vector<1x8x16xbf16> to vector<8x16xbf16>
    %cst_651 = arith.constant dense<0.000000e+00> : vector<8x64xf32>
    %1019 = tpu.matmul %1018, %994, %cst_651 {dimension_numbers = #tpu.dot_dimension_numbers<[1], [0], [0], [1], [0, 0, 1, 1], [], []>} : vector<8x16xbf16>, vector<16x64xbf16>, vector<8x64xf32> -> vector<8x64xf32>
    %1020 = arith.truncf %1019 : vector<8x64xf32> to vector<8x64xbf16>
    %cst_652 = arith.constant dense<0.000000e+00> : vector<8x256xf32>
    %1021 = tpu.matmul %1020, %1016, %cst_652 {dimension_numbers = #tpu.dot_dimension_numbers<[1], [0], [0], [1], [0, 0, 1, 1], [], []>} : vector<8x64xbf16>, vector<64x256xbf16>, vector<8x256xf32> -> vector<8x256xf32>
    %c2_i32_653 = arith.constant 2 : i32
    %1022 = vector.broadcast %c2_i32_653 : i32 to vector<64x256xi32>
    %1023 = arith.muli %1022, %998 : vector<64x256xi32>
    %c0_i32_654 = arith.constant 0 : i32
    %1024 = vector.broadcast %c0_i32_654 : i32 to vector<64x256xi32>
    %1025 = arith.addi %1023, %1024 : vector<64x256xi32>
    %c16_i32_655 = arith.constant 16 : i32
    %1026 = vector.broadcast %c16_i32_655 : i32 to vector<64x256xi32>
    %1027 = arith.muli %1025, %1026 : vector<64x256xi32>
    %c2_i32_656 = arith.constant 2 : i32
    %1028 = vector.broadcast %c2_i32_656 : i32 to vector<64x256xi32>
    %1029 = arith.muli %1028, %1000 : vector<64x256xi32>
    %1030 = arith.addi %1027, %1029 : vector<64x256xi32>
    %c1_i32_657 = arith.constant 1 : i32
    %1031 = vector.broadcast %c1_i32_657 : i32 to vector<64x256xi32>
    %1032 = arith.addi %1030, %1031 : vector<64x256xi32>
    %1033 = arith.cmpi eq, %996, %1032 : vector<64x256xi32>
    %cst_658 = arith.constant 1.000000e+00 : f32
    %cst_659 = arith.constant 0.000000e+00 : f32
    %1034 = vector.broadcast %cst_658 : f32 to vector<64x256xf32>
    %1035 = vector.broadcast %cst_659 : f32 to vector<64x256xf32>
    %1036 = arith.select %1033, %1034, %1035 : vector<64x256xi1>, vector<64x256xf32>
    %1037 = arith.truncf %1036 : vector<64x256xf32> to vector<64x256xbf16>
    %c1_660 = arith.constant 1 : index
    %c0_661 = arith.constant 0 : index
    %c0_662 = arith.constant 0 : index
    %1038 = vector.load %arg21[%c1_660, %c0_661, %c0_662] : memref<4x8x16xbf16, #tpu.memory_space<vmem>>, vector<1x8x16xbf16>
    %1039 = vector.shape_cast %1038 : vector<1x8x16xbf16> to vector<8x16xbf16>
    %cst_663 = arith.constant dense<0.000000e+00> : vector<8x64xf32>
    %1040 = tpu.matmul %1039, %994, %cst_663 {dimension_numbers = #tpu.dot_dimension_numbers<[1], [0], [0], [1], [0, 0, 1, 1], [], []>} : vector<8x16xbf16>, vector<16x64xbf16>, vector<8x64xf32> -> vector<8x64xf32>
    %1041 = arith.truncf %1040 : vector<8x64xf32> to vector<8x64xbf16>
    %cst_664 = arith.constant dense<0.000000e+00> : vector<8x256xf32>
    %1042 = tpu.matmul %1041, %1037, %cst_664 {dimension_numbers = #tpu.dot_dimension_numbers<[1], [0], [0], [1], [0, 0, 1, 1], [], []>} : vector<8x64xbf16>, vector<64x256xbf16>, vector<8x256xf32> -> vector<8x256xf32>
    %1043 = arith.addf %1021, %1042 : vector<8x256xf32>
    %c2_i32_665 = arith.constant 2 : i32
    %1044 = vector.broadcast %c2_i32_665 : i32 to vector<64x256xi32>
    %1045 = arith.muli %1044, %998 : vector<64x256xi32>
    %c1_i32_666 = arith.constant 1 : i32
    %1046 = vector.broadcast %c1_i32_666 : i32 to vector<64x256xi32>
    %1047 = arith.addi %1045, %1046 : vector<64x256xi32>
    %c16_i32_667 = arith.constant 16 : i32
    %1048 = vector.broadcast %c16_i32_667 : i32 to vector<64x256xi32>
    %1049 = arith.muli %1047, %1048 : vector<64x256xi32>
    %c2_i32_668 = arith.constant 2 : i32
    %1050 = vector.broadcast %c2_i32_668 : i32 to vector<64x256xi32>
    %1051 = arith.muli %1050, %1000 : vector<64x256xi32>
    %1052 = arith.addi %1049, %1051 : vector<64x256xi32>
    %c0_i32_669 = arith.constant 0 : i32
    %1053 = vector.broadcast %c0_i32_669 : i32 to vector<64x256xi32>
    %1054 = arith.addi %1052, %1053 : vector<64x256xi32>
    %1055 = arith.cmpi eq, %996, %1054 : vector<64x256xi32>
    %cst_670 = arith.constant 1.000000e+00 : f32
    %cst_671 = arith.constant 0.000000e+00 : f32
    %1056 = vector.broadcast %cst_670 : f32 to vector<64x256xf32>
    %1057 = vector.broadcast %cst_671 : f32 to vector<64x256xf32>
    %1058 = arith.select %1055, %1056, %1057 : vector<64x256xi1>, vector<64x256xf32>
    %1059 = arith.truncf %1058 : vector<64x256xf32> to vector<64x256xbf16>
    %c2_672 = arith.constant 2 : index
    %c0_673 = arith.constant 0 : index
    %c0_674 = arith.constant 0 : index
    %1060 = vector.load %arg21[%c2_672, %c0_673, %c0_674] : memref<4x8x16xbf16, #tpu.memory_space<vmem>>, vector<1x8x16xbf16>
    %1061 = vector.shape_cast %1060 : vector<1x8x16xbf16> to vector<8x16xbf16>
    %cst_675 = arith.constant dense<0.000000e+00> : vector<8x64xf32>
    %1062 = tpu.matmul %1061, %994, %cst_675 {dimension_numbers = #tpu.dot_dimension_numbers<[1], [0], [0], [1], [0, 0, 1, 1], [], []>} : vector<8x16xbf16>, vector<16x64xbf16>, vector<8x64xf32> -> vector<8x64xf32>
    %1063 = arith.truncf %1062 : vector<8x64xf32> to vector<8x64xbf16>
    %cst_676 = arith.constant dense<0.000000e+00> : vector<8x256xf32>
    %1064 = tpu.matmul %1063, %1059, %cst_676 {dimension_numbers = #tpu.dot_dimension_numbers<[1], [0], [0], [1], [0, 0, 1, 1], [], []>} : vector<8x64xbf16>, vector<64x256xbf16>, vector<8x256xf32> -> vector<8x256xf32>
    %1065 = arith.addf %1043, %1064 : vector<8x256xf32>
    %c2_i32_677 = arith.constant 2 : i32
    %1066 = vector.broadcast %c2_i32_677 : i32 to vector<64x256xi32>
    %1067 = arith.muli %1066, %998 : vector<64x256xi32>
    %c1_i32_678 = arith.constant 1 : i32
    %1068 = vector.broadcast %c1_i32_678 : i32 to vector<64x256xi32>
    %1069 = arith.addi %1067, %1068 : vector<64x256xi32>
    %c16_i32_679 = arith.constant 16 : i32
    %1070 = vector.broadcast %c16_i32_679 : i32 to vector<64x256xi32>
    %1071 = arith.muli %1069, %1070 : vector<64x256xi32>
    %c2_i32_680 = arith.constant 2 : i32
    %1072 = vector.broadcast %c2_i32_680 : i32 to vector<64x256xi32>
    %1073 = arith.muli %1072, %1000 : vector<64x256xi32>
    %1074 = arith.addi %1071, %1073 : vector<64x256xi32>
    %c1_i32_681 = arith.constant 1 : i32
    %1075 = vector.broadcast %c1_i32_681 : i32 to vector<64x256xi32>
    %1076 = arith.addi %1074, %1075 : vector<64x256xi32>
    %1077 = arith.cmpi eq, %996, %1076 : vector<64x256xi32>
    %cst_682 = arith.constant 1.000000e+00 : f32
    %cst_683 = arith.constant 0.000000e+00 : f32
    %1078 = vector.broadcast %cst_682 : f32 to vector<64x256xf32>
    %1079 = vector.broadcast %cst_683 : f32 to vector<64x256xf32>
    %1080 = arith.select %1077, %1078, %1079 : vector<64x256xi1>, vector<64x256xf32>
    %1081 = arith.truncf %1080 : vector<64x256xf32> to vector<64x256xbf16>
    %c3_684 = arith.constant 3 : index
    %c0_685 = arith.constant 0 : index
    %c0_686 = arith.constant 0 : index
    %1082 = vector.load %arg21[%c3_684, %c0_685, %c0_686] : memref<4x8x16xbf16, #tpu.memory_space<vmem>>, vector<1x8x16xbf16>
    %1083 = vector.shape_cast %1082 : vector<1x8x16xbf16> to vector<8x16xbf16>
    %cst_687 = arith.constant dense<0.000000e+00> : vector<8x64xf32>
    %1084 = tpu.matmul %1083, %994, %cst_687 {dimension_numbers = #tpu.dot_dimension_numbers<[1], [0], [0], [1], [0, 0, 1, 1], [], []>} : vector<8x16xbf16>, vector<16x64xbf16>, vector<8x64xf32> -> vector<8x64xf32>
    %1085 = arith.truncf %1084 : vector<8x64xf32> to vector<8x64xbf16>
    %cst_688 = arith.constant dense<0.000000e+00> : vector<8x256xf32>
    %1086 = tpu.matmul %1085, %1081, %cst_688 {dimension_numbers = #tpu.dot_dimension_numbers<[1], [0], [0], [1], [0, 0, 1, 1], [], []>} : vector<8x64xbf16>, vector<64x256xbf16>, vector<8x256xf32> -> vector<8x256xf32>
    %1087 = arith.addf %1065, %1086 : vector<8x256xf32>
    %1088 = tpu.iota {dimensions = array<i32: 1>} : vector<1x256xi32>
    %c4_i32_689 = arith.constant 4 : i32
    %1089 = vector.broadcast %c4_i32_689 : i32 to vector<1x256xi32>
    %1090 = arith.shrsi %1088, %1089 : vector<1x256xi32>
    %c15_i32_690 = arith.constant 15 : i32
    %1091 = vector.broadcast %c15_i32_690 : i32 to vector<1x256xi32>
    %1092 = arith.andi %1088, %1091 : vector<1x256xi32>
    %c0_691 = arith.constant 0 : index
    %c128_692 = arith.constant 128 : index
    %1093 = vector.load %arg30[%c0_691, %c128_692] : memref<32x512xf32, #tpu.memory_space<vmem>>, vector<8x256xf32>
    tpu.vector_store %arg30[%c0_691, %c128_692], %1087 {strides = array<i32>} : memref<32x512xf32, #tpu.memory_space<vmem>>, vector<8x256xf32>,
    %c0_693 = arith.constant 0 : index
    %c111_694 = arith.constant 111 : index
    %1094 = vector.load %arg30[%c0_693, %c111_694] : memref<32x512xf32, #tpu.memory_space<vmem>>, vector<8x256xf32>
    %c0_i32_695 = arith.constant 0 : i32
    %1095 = vector.broadcast %c0_i32_695 : i32 to vector<1x256xi32>
    %1096 = arith.cmpi sgt, %1090, %1095 : vector<1x256xi32>
    %c0_i32_696 = arith.constant 0 : i32
    %1097 = vector.broadcast %c0_i32_696 : i32 to vector<1x256xi32>
    %1098 = arith.cmpi sgt, %1092, %1097 : vector<1x256xi32>
    %1099 = arith.andi %1096, %1098 : vector<1x256xi1>
    %cst_697 = arith.constant 0.000000e+00 : f32
    %1100 = vector.shape_cast %1099 : vector<1x256xi1> to vector<1x256xi1>
    %1101 = vector.broadcast %1100 : vector<1x256xi1> to vector<8x256xi1>
    %1102 = vector.broadcast %cst_697 : f32 to vector<8x256xf32>
    %1103 = arith.select %1101, %1094, %1102 : vector<8x256xi1>, vector<8x256xf32>
    %c0_698 = arith.constant 0 : index
    %c0_699 = arith.constant 0 : index
    %1104 = vector.load %arg31[%c0_698, %c0_699] : memref<288x256xf32, #tpu.memory_space<vmem>>, vector<8x256xf32>
    tpu.vector_store %arg31[%c0_698, %c0_699], %1103 {strides = array<i32>} : memref<288x256xf32, #tpu.memory_space<vmem>>, vector<8x256xf32>,
    %c0_700 = arith.constant 0 : index
    %c112_701 = arith.constant 112 : index
    %1105 = vector.load %arg30[%c0_700, %c112_701] : memref<32x512xf32, #tpu.memory_space<vmem>>, vector<8x256xf32>
    %c0_i32_702 = arith.constant 0 : i32
    %1106 = vector.broadcast %c0_i32_702 : i32 to vector<1x256xi32>
    %1107 = arith.cmpi sgt, %1090, %1106 : vector<1x256xi32>
    %cst_703 = arith.constant 0.000000e+00 : f32
    %1108 = vector.shape_cast %1107 : vector<1x256xi1> to vector<1x256xi1>
    %1109 = vector.broadcast %1108 : vector<1x256xi1> to vector<8x256xi1>
    %1110 = vector.broadcast %cst_703 : f32 to vector<8x256xf32>
    %1111 = arith.select %1109, %1105, %1110 : vector<8x256xi1>, vector<8x256xf32>
    %c16_704 = arith.constant 16 : index
    %c0_705 = arith.constant 0 : index
    %1112 = vector.load %arg31[%c16_704, %c0_705] : memref<288x256xf32, #tpu.memory_space<vmem>>, vector<8x256xf32>
    tpu.vector_store %arg31[%c16_704, %c0_705], %1111 {strides = array<i32>} : memref<288x256xf32, #tpu.memory_space<vmem>>, vector<8x256xf32>,
    %c0_706 = arith.constant 0 : index
    %c113_707 = arith.constant 113 : index
    %1113 = vector.load %arg30[%c0_706, %c113_707] : memref<32x512xf32, #tpu.memory_space<vmem>>, vector<8x256xf32>
    %c0_i32_708 = arith.constant 0 : i32
    %1114 = vector.broadcast %c0_i32_708 : i32 to vector<1x256xi32>
    %1115 = arith.cmpi sgt, %1090, %1114 : vector<1x256xi32>
    %c15_i32_709 = arith.constant 15 : i32
    %1116 = vector.broadcast %c15_i32_709 : i32 to vector<1x256xi32>
    %1117 = arith.cmpi slt, %1092, %1116 : vector<1x256xi32>
    %1118 = arith.andi %1115, %1117 : vector<1x256xi1>
    %cst_710 = arith.constant 0.000000e+00 : f32
    %1119 = vector.shape_cast %1118 : vector<1x256xi1> to vector<1x256xi1>
    %1120 = vector.broadcast %1119 : vector<1x256xi1> to vector<8x256xi1>
    %1121 = vector.broadcast %cst_710 : f32 to vector<8x256xf32>
    %1122 = arith.select %1120, %1113, %1121 : vector<8x256xi1>, vector<8x256xf32>
    %c32_711 = arith.constant 32 : index
    %c0_712 = arith.constant 0 : index
    %1123 = vector.load %arg31[%c32_711, %c0_712] : memref<288x256xf32, #tpu.memory_space<vmem>>, vector<8x256xf32>
    tpu.vector_store %arg31[%c32_711, %c0_712], %1122 {strides = array<i32>} : memref<288x256xf32, #tpu.memory_space<vmem>>, vector<8x256xf32>,
    %c0_713 = arith.constant 0 : index
    %c127_714 = arith.constant 127 : index
    %1124 = vector.load %arg30[%c0_713, %c127_714] : memref<32x512xf32, #tpu.memory_space<vmem>>, vector<8x256xf32>
    %c0_i32_715 = arith.constant 0 : i32
    %1125 = vector.broadcast %c0_i32_715 : i32 to vector<1x256xi32>
    %1126 = arith.cmpi sgt, %1092, %1125 : vector<1x256xi32>
    %cst_716 = arith.constant 0.000000e+00 : f32
    %1127 = vector.shape_cast %1126 : vector<1x256xi1> to vector<1x256xi1>
    %1128 = vector.broadcast %1127 : vector<1x256xi1> to vector<8x256xi1>
    %1129 = vector.broadcast %cst_716 : f32 to vector<8x256xf32>
    %1130 = arith.select %1128, %1124, %1129 : vector<8x256xi1>, vector<8x256xf32>
    %c48_717 = arith.constant 48 : index
    %c0_718 = arith.constant 0 : index
    %1131 = vector.load %arg31[%c48_717, %c0_718] : memref<288x256xf32, #tpu.memory_space<vmem>>, vector<8x256xf32>
    tpu.vector_store %arg31[%c48_717, %c0_718], %1130 {strides = array<i32>} : memref<288x256xf32, #tpu.memory_space<vmem>>, vector<8x256xf32>,
    %c0_719 = arith.constant 0 : index
    %c128_720 = arith.constant 128 : index
    %1132 = vector.load %arg30[%c0_719, %c128_720] : memref<32x512xf32, #tpu.memory_space<vmem>>, vector<8x256xf32>
    %c64_721 = arith.constant 64 : index
    %c0_722 = arith.constant 0 : index
    %1133 = vector.load %arg31[%c64_721, %c0_722] : memref<288x256xf32, #tpu.memory_space<vmem>>, vector<8x256xf32>
    tpu.vector_store %arg31[%c64_721, %c0_722], %1132 {strides = array<i32>} : memref<288x256xf32, #tpu.memory_space<vmem>>, vector<8x256xf32>,
    %c0_723 = arith.constant 0 : index
    %c129_724 = arith.constant 129 : index
    %1134 = vector.load %arg30[%c0_723, %c129_724] : memref<32x512xf32, #tpu.memory_space<vmem>>, vector<8x256xf32>
    %c15_i32_725 = arith.constant 15 : i32
    %1135 = vector.broadcast %c15_i32_725 : i32 to vector<1x256xi32>
    %1136 = arith.cmpi slt, %1092, %1135 : vector<1x256xi32>
    %cst_726 = arith.constant 0.000000e+00 : f32
    %1137 = vector.shape_cast %1136 : vector<1x256xi1> to vector<1x256xi1>
    %1138 = vector.broadcast %1137 : vector<1x256xi1> to vector<8x256xi1>
    %1139 = vector.broadcast %cst_726 : f32 to vector<8x256xf32>
    %1140 = arith.select %1138, %1134, %1139 : vector<8x256xi1>, vector<8x256xf32>
    %c80_727 = arith.constant 80 : index
    %c0_728 = arith.constant 0 : index
    %1141 = vector.load %arg31[%c80_727, %c0_728] : memref<288x256xf32, #tpu.memory_space<vmem>>, vector<8x256xf32>
    tpu.vector_store %arg31[%c80_727, %c0_728], %1140 {strides = array<i32>} : memref<288x256xf32, #tpu.memory_space<vmem>>, vector<8x256xf32>,
    %c0_729 = arith.constant 0 : index
    %c143_730 = arith.constant 143 : index
    %1142 = vector.load %arg30[%c0_729, %c143_730] : memref<32x512xf32, #tpu.memory_space<vmem>>, vector<8x256xf32>
    %c15_i32_731 = arith.constant 15 : i32
    %1143 = vector.broadcast %c15_i32_731 : i32 to vector<1x256xi32>
    %1144 = arith.cmpi slt, %1090, %1143 : vector<1x256xi32>
    %c0_i32_732 = arith.constant 0 : i32
    %1145 = vector.broadcast %c0_i32_732 : i32 to vector<1x256xi32>
    %1146 = arith.cmpi sgt, %1092, %1145 : vector<1x256xi32>
    %1147 = arith.andi %1144, %1146 : vector<1x256xi1>
    %cst_733 = arith.constant 0.000000e+00 : f32
    %1148 = vector.shape_cast %1147 : vector<1x256xi1> to vector<1x256xi1>
    %1149 = vector.broadcast %1148 : vector<1x256xi1> to vector<8x256xi1>
    %1150 = vector.broadcast %cst_733 : f32 to vector<8x256xf32>
    %1151 = arith.select %1149, %1142, %1150 : vector<8x256xi1>, vector<8x256xf32>
    %c96_734 = arith.constant 96 : index
    %c0_735 = arith.constant 0 : index
    %1152 = vector.load %arg31[%c96_734, %c0_735] : memref<288x256xf32, #tpu.memory_space<vmem>>, vector<8x256xf32>
    tpu.vector_store %arg31[%c96_734, %c0_735], %1151 {strides = array<i32>} : memref<288x256xf32, #tpu.memory_space<vmem>>, vector<8x256xf32>,
    %c0_736 = arith.constant 0 : index
    %c144_737 = arith.constant 144 : index
    %1153 = vector.load %arg30[%c0_736, %c144_737] : memref<32x512xf32, #tpu.memory_space<vmem>>, vector<8x256xf32>
    %c15_i32_738 = arith.constant 15 : i32
    %1154 = vector.broadcast %c15_i32_738 : i32 to vector<1x256xi32>
    %1155 = arith.cmpi slt, %1090, %1154 : vector<1x256xi32>
    %cst_739 = arith.constant 0.000000e+00 : f32
    %1156 = vector.shape_cast %1155 : vector<1x256xi1> to vector<1x256xi1>
    %1157 = vector.broadcast %1156 : vector<1x256xi1> to vector<8x256xi1>
    %1158 = vector.broadcast %cst_739 : f32 to vector<8x256xf32>
    %1159 = arith.select %1157, %1153, %1158 : vector<8x256xi1>, vector<8x256xf32>
    %c112_740 = arith.constant 112 : index
    %c0_741 = arith.constant 0 : index
    %1160 = vector.load %arg31[%c112_740, %c0_741] : memref<288x256xf32, #tpu.memory_space<vmem>>, vector<8x256xf32>
    tpu.vector_store %arg31[%c112_740, %c0_741], %1159 {strides = array<i32>} : memref<288x256xf32, #tpu.memory_space<vmem>>, vector<8x256xf32>,
    %c0_742 = arith.constant 0 : index
    %c145_743 = arith.constant 145 : index
    %1161 = vector.load %arg30[%c0_742, %c145_743] : memref<32x512xf32, #tpu.memory_space<vmem>>, vector<8x256xf32>
    %c15_i32_744 = arith.constant 15 : i32
    %1162 = vector.broadcast %c15_i32_744 : i32 to vector<1x256xi32>
    %1163 = arith.cmpi slt, %1090, %1162 : vector<1x256xi32>
    %c15_i32_745 = arith.constant 15 : i32
    %1164 = vector.broadcast %c15_i32_745 : i32 to vector<1x256xi32>
    %1165 = arith.cmpi slt, %1092, %1164 : vector<1x256xi32>
    %1166 = arith.andi %1163, %1165 : vector<1x256xi1>
    %cst_746 = arith.constant 0.000000e+00 : f32
    %1167 = vector.shape_cast %1166 : vector<1x256xi1> to vector<1x256xi1>
    %1168 = vector.broadcast %1167 : vector<1x256xi1> to vector<8x256xi1>
    %1169 = vector.broadcast %cst_746 : f32 to vector<8x256xf32>
    %1170 = arith.select %1168, %1161, %1169 : vector<8x256xi1>, vector<8x256xf32>
    %c128_747 = arith.constant 128 : index
    %c0_748 = arith.constant 0 : index
    %1171 = vector.load %arg31[%c128_747, %c0_748] : memref<288x256xf32, #tpu.memory_space<vmem>>, vector<8x256xf32>
    tpu.vector_store %arg31[%c128_747, %c0_748], %1170 {strides = array<i32>} : memref<288x256xf32, #tpu.memory_space<vmem>>, vector<8x256xf32>,
    %c0_749 = arith.constant 0 : index
    %c128_750 = arith.constant 128 : index
    %1172 = vector.load %arg30[%c0_749, %c128_750] : memref<32x512xf32, #tpu.memory_space<vmem>>, vector<8x256xf32>
    tpu.vector_store %arg30[%c0_749, %c128_750], %199 {strides = array<i32>} : memref<32x512xf32, #tpu.memory_space<vmem>>, vector<8x256xf32>,
    %c0_751 = arith.constant 0 : index
    %c111_752 = arith.constant 111 : index
    %1173 = vector.load %arg30[%c0_751, %c111_752] : memref<32x512xf32, #tpu.memory_space<vmem>>, vector<8x256xf32>
    %c0_i32_753 = arith.constant 0 : i32
    %1174 = vector.broadcast %c0_i32_753 : i32 to vector<1x256xi32>
    %1175 = arith.cmpi sgt, %1090, %1174 : vector<1x256xi32>
    %c0_i32_754 = arith.constant 0 : i32
    %1176 = vector.broadcast %c0_i32_754 : i32 to vector<1x256xi32>
    %1177 = arith.cmpi sgt, %1092, %1176 : vector<1x256xi32>
    %1178 = arith.andi %1175, %1177 : vector<1x256xi1>
    %cst_755 = arith.constant 0.000000e+00 : f32
    %1179 = vector.shape_cast %1178 : vector<1x256xi1> to vector<1x256xi1>
    %1180 = vector.broadcast %1179 : vector<1x256xi1> to vector<8x256xi1>
    %1181 = vector.broadcast %cst_755 : f32 to vector<8x256xf32>
    %1182 = arith.select %1180, %1173, %1181 : vector<8x256xi1>, vector<8x256xf32>
    %c8_756 = arith.constant 8 : index
    %c0_757 = arith.constant 0 : index
    %1183 = vector.load %arg31[%c8_756, %c0_757] : memref<288x256xf32, #tpu.memory_space<vmem>>, vector<8x256xf32>
    tpu.vector_store %arg31[%c8_756, %c0_757], %1182 {strides = array<i32>} : memref<288x256xf32, #tpu.memory_space<vmem>>, vector<8x256xf32>,
    %c0_758 = arith.constant 0 : index
    %c112_759 = arith.constant 112 : index
    %1184 = vector.load %arg30[%c0_758, %c112_759] : memref<32x512xf32, #tpu.memory_space<vmem>>, vector<8x256xf32>
    %c0_i32_760 = arith.constant 0 : i32
    %1185 = vector.broadcast %c0_i32_760 : i32 to vector<1x256xi32>
    %1186 = arith.cmpi sgt, %1090, %1185 : vector<1x256xi32>
    %cst_761 = arith.constant 0.000000e+00 : f32
    %1187 = vector.shape_cast %1186 : vector<1x256xi1> to vector<1x256xi1>
    %1188 = vector.broadcast %1187 : vector<1x256xi1> to vector<8x256xi1>
    %1189 = vector.broadcast %cst_761 : f32 to vector<8x256xf32>
    %1190 = arith.select %1188, %1184, %1189 : vector<8x256xi1>, vector<8x256xf32>
    %c24_762 = arith.constant 24 : index
    %c0_763 = arith.constant 0 : index
    %1191 = vector.load %arg31[%c24_762, %c0_763] : memref<288x256xf32, #tpu.memory_space<vmem>>, vector<8x256xf32>
    tpu.vector_store %arg31[%c24_762, %c0_763], %1190 {strides = array<i32>} : memref<288x256xf32, #tpu.memory_space<vmem>>, vector<8x256xf32>,
    %c0_764 = arith.constant 0 : index
    %c113_765 = arith.constant 113 : index
    %1192 = vector.load %arg30[%c0_764, %c113_765] : memref<32x512xf32, #tpu.memory_space<vmem>>, vector<8x256xf32>
    %c0_i32_766 = arith.constant 0 : i32
    %1193 = vector.broadcast %c0_i32_766 : i32 to vector<1x256xi32>
    %1194 = arith.cmpi sgt, %1090, %1193 : vector<1x256xi32>
    %c15_i32_767 = arith.constant 15 : i32
    %1195 = vector.broadcast %c15_i32_767 : i32 to vector<1x256xi32>
    %1196 = arith.cmpi slt, %1092, %1195 : vector<1x256xi32>
    %1197 = arith.andi %1194, %1196 : vector<1x256xi1>
    %cst_768 = arith.constant 0.000000e+00 : f32
    %1198 = vector.shape_cast %1197 : vector<1x256xi1> to vector<1x256xi1>
    %1199 = vector.broadcast %1198 : vector<1x256xi1> to vector<8x256xi1>
    %1200 = vector.broadcast %cst_768 : f32 to vector<8x256xf32>
    %1201 = arith.select %1199, %1192, %1200 : vector<8x256xi1>, vector<8x256xf32>
    %c40_769 = arith.constant 40 : index
    %c0_770 = arith.constant 0 : index
    %1202 = vector.load %arg31[%c40_769, %c0_770] : memref<288x256xf32, #tpu.memory_space<vmem>>, vector<8x256xf32>
    tpu.vector_store %arg31[%c40_769, %c0_770], %1201 {strides = array<i32>} : memref<288x256xf32, #tpu.memory_space<vmem>>, vector<8x256xf32>,
    %c0_771 = arith.constant 0 : index
    %c127_772 = arith.constant 127 : index
    %1203 = vector.load %arg30[%c0_771, %c127_772] : memref<32x512xf32, #tpu.memory_space<vmem>>, vector<8x256xf32>
    %c0_i32_773 = arith.constant 0 : i32
    %1204 = vector.broadcast %c0_i32_773 : i32 to vector<1x256xi32>
    %1205 = arith.cmpi sgt, %1092, %1204 : vector<1x256xi32>
    %cst_774 = arith.constant 0.000000e+00 : f32
    %1206 = vector.shape_cast %1205 : vector<1x256xi1> to vector<1x256xi1>
    %1207 = vector.broadcast %1206 : vector<1x256xi1> to vector<8x256xi1>
    %1208 = vector.broadcast %cst_774 : f32 to vector<8x256xf32>
    %1209 = arith.select %1207, %1203, %1208 : vector<8x256xi1>, vector<8x256xf32>
    %c56_775 = arith.constant 56 : index
    %c0_776 = arith.constant 0 : index
    %1210 = vector.load %arg31[%c56_775, %c0_776] : memref<288x256xf32, #tpu.memory_space<vmem>>, vector<8x256xf32>
    tpu.vector_store %arg31[%c56_775, %c0_776], %1209 {strides = array<i32>} : memref<288x256xf32, #tpu.memory_space<vmem>>, vector<8x256xf32>,
    %c0_777 = arith.constant 0 : index
    %c128_778 = arith.constant 128 : index
    %1211 = vector.load %arg30[%c0_777, %c128_778] : memref<32x512xf32, #tpu.memory_space<vmem>>, vector<8x256xf32>
    %c72 = arith.constant 72 : index
    %c0_779 = arith.constant 0 : index
    %1212 = vector.load %arg31[%c72, %c0_779] : memref<288x256xf32, #tpu.memory_space<vmem>>, vector<8x256xf32>
    tpu.vector_store %arg31[%c72, %c0_779], %1211 {strides = array<i32>} : memref<288x256xf32, #tpu.memory_space<vmem>>, vector<8x256xf32>,
    %c0_780 = arith.constant 0 : index
    %c129_781 = arith.constant 129 : index
    %1213 = vector.load %arg30[%c0_780, %c129_781] : memref<32x512xf32, #tpu.memory_space<vmem>>, vector<8x256xf32>
    %c15_i32_782 = arith.constant 15 : i32
    %1214 = vector.broadcast %c15_i32_782 : i32 to vector<1x256xi32>
    %1215 = arith.cmpi slt, %1092, %1214 : vector<1x256xi32>
    %cst_783 = arith.constant 0.000000e+00 : f32
    %1216 = vector.shape_cast %1215 : vector<1x256xi1> to vector<1x256xi1>
    %1217 = vector.broadcast %1216 : vector<1x256xi1> to vector<8x256xi1>
    %1218 = vector.broadcast %cst_783 : f32 to vector<8x256xf32>
    %1219 = arith.select %1217, %1213, %1218 : vector<8x256xi1>, vector<8x256xf32>
    %c88 = arith.constant 88 : index
    %c0_784 = arith.constant 0 : index
    %1220 = vector.load %arg31[%c88, %c0_784] : memref<288x256xf32, #tpu.memory_space<vmem>>, vector<8x256xf32>
    tpu.vector_store %arg31[%c88, %c0_784], %1219 {strides = array<i32>} : memref<288x256xf32, #tpu.memory_space<vmem>>, vector<8x256xf32>,
    %c0_785 = arith.constant 0 : index
    %c143_786 = arith.constant 143 : index
    %1221 = vector.load %arg30[%c0_785, %c143_786] : memref<32x512xf32, #tpu.memory_space<vmem>>, vector<8x256xf32>
    %c15_i32_787 = arith.constant 15 : i32
    %1222 = vector.broadcast %c15_i32_787 : i32 to vector<1x256xi32>
    %1223 = arith.cmpi slt, %1090, %1222 : vector<1x256xi32>
    %c0_i32_788 = arith.constant 0 : i32
    %1224 = vector.broadcast %c0_i32_788 : i32 to vector<1x256xi32>
    %1225 = arith.cmpi sgt, %1092, %1224 : vector<1x256xi32>
    %1226 = arith.andi %1223, %1225 : vector<1x256xi1>
    %cst_789 = arith.constant 0.000000e+00 : f32
    %1227 = vector.shape_cast %1226 : vector<1x256xi1> to vector<1x256xi1>
    %1228 = vector.broadcast %1227 : vector<1x256xi1> to vector<8x256xi1>
    %1229 = vector.broadcast %cst_789 : f32 to vector<8x256xf32>
    %1230 = arith.select %1228, %1221, %1229 : vector<8x256xi1>, vector<8x256xf32>
    %c104 = arith.constant 104 : index
    %c0_790 = arith.constant 0 : index
    %1231 = vector.load %arg31[%c104, %c0_790] : memref<288x256xf32, #tpu.memory_space<vmem>>, vector<8x256xf32>
    tpu.vector_store %arg31[%c104, %c0_790], %1230 {strides = array<i32>} : memref<288x256xf32, #tpu.memory_space<vmem>>, vector<8x256xf32>,
    %c0_791 = arith.constant 0 : index
    %c144_792 = arith.constant 144 : index
    %1232 = vector.load %arg30[%c0_791, %c144_792] : memref<32x512xf32, #tpu.memory_space<vmem>>, vector<8x256xf32>
    %c15_i32_793 = arith.constant 15 : i32
    %1233 = vector.broadcast %c15_i32_793 : i32 to vector<1x256xi32>
    %1234 = arith.cmpi slt, %1090, %1233 : vector<1x256xi32>
    %cst_794 = arith.constant 0.000000e+00 : f32
    %1235 = vector.shape_cast %1234 : vector<1x256xi1> to vector<1x256xi1>
    %1236 = vector.broadcast %1235 : vector<1x256xi1> to vector<8x256xi1>
    %1237 = vector.broadcast %cst_794 : f32 to vector<8x256xf32>
    %1238 = arith.select %1236, %1232, %1237 : vector<8x256xi1>, vector<8x256xf32>
    %c120_795 = arith.constant 120 : index
    %c0_796 = arith.constant 0 : index
    %1239 = vector.load %arg31[%c120_795, %c0_796] : memref<288x256xf32, #tpu.memory_space<vmem>>, vector<8x256xf32>
    tpu.vector_store %arg31[%c120_795, %c0_796], %1238 {strides = array<i32>} : memref<288x256xf32, #tpu.memory_space<vmem>>, vector<8x256xf32>,
    %c0_797 = arith.constant 0 : index
    %c145_798 = arith.constant 145 : index
    %1240 = vector.load %arg30[%c0_797, %c145_798] : memref<32x512xf32, #tpu.memory_space<vmem>>, vector<8x256xf32>
    %c15_i32_799 = arith.constant 15 : i32
    %1241 = vector.broadcast %c15_i32_799 : i32 to vector<1x256xi32>
    %1242 = arith.cmpi slt, %1090, %1241 : vector<1x256xi32>
    %c15_i32_800 = arith.constant 15 : i32
    %1243 = vector.broadcast %c15_i32_800 : i32 to vector<1x256xi32>
    %1244 = arith.cmpi slt, %1092, %1243 : vector<1x256xi32>
    %1245 = arith.andi %1242, %1244 : vector<1x256xi1>
    %cst_801 = arith.constant 0.000000e+00 : f32
    %1246 = vector.shape_cast %1245 : vector<1x256xi1> to vector<1x256xi1>
    %1247 = vector.broadcast %1246 : vector<1x256xi1> to vector<8x256xi1>
    %1248 = vector.broadcast %cst_801 : f32 to vector<8x256xf32>
    %1249 = arith.select %1247, %1240, %1248 : vector<8x256xi1>, vector<8x256xf32>
    %c136_802 = arith.constant 136 : index
    %c0_803 = arith.constant 0 : index
    %1250 = vector.load %arg31[%c136_802, %c0_803] : memref<288x256xf32, #tpu.memory_space<vmem>>, vector<8x256xf32>
    tpu.vector_store %arg31[%c136_802, %c0_803], %1249 {strides = array<i32>} : memref<288x256xf32, #tpu.memory_space<vmem>>, vector<8x256xf32>,
    %c0_804 = arith.constant 0 : index
    %c0_805 = arith.constant 0 : index
    %1251 = vector.load %arg22[%c0_804, %c0_805] : memref<8x144xbf16, #tpu.memory_space<vmem>>, vector<8x144xbf16>
    %c0_806 = arith.constant 0 : index
    %c0_807 = arith.constant 0 : index
    %1252 = vector.load %arg31[%c0_806, %c0_807] : memref<288x256xf32, #tpu.memory_space<vmem>>, vector<144x256xf32>
    %1253 = arith.truncf %1252 : vector<144x256xf32> to vector<144x256xbf16>
    %cst_808 = arith.constant dense<0.000000e+00> : vector<8x256xf32>
    %1254 = tpu.matmul %1251, %1253, %cst_808 {dimension_numbers = #tpu.dot_dimension_numbers<[1], [0], [0], [1], [0, 0, 1, 1], [], []>} : vector<8x144xbf16>, vector<144x256xbf16>, vector<8x256xf32> -> vector<8x256xf32>
    %c0_809 = arith.constant 0 : index
    %c0_810 = arith.constant 0 : index
    %1255 = vector.load %arg23[%c0_809, %c0_810] : memref<8x1xf32, #tpu.memory_space<vmem>>, vector<8x1xf32>
    %1256 = vector.broadcast %1255 : vector<8x1xf32> to vector<8x256xf32>
    %1257 = arith.addf %1254, %1256 : vector<8x256xf32>
    %cst_811 = arith.constant 0.000000e+00 : f32
    %1258 = vector.broadcast %cst_811 : f32 to vector<8x256xf32>
    %1259 = arith.cmpf oge, %1257, %1258 : vector<8x256xf32>
    %cst_812 = arith.constant 0.00999999977 : f32
    %1260 = vector.broadcast %cst_812 : f32 to vector<8x256xf32>
    %1261 = arith.mulf %1260, %1257 : vector<8x256xf32>
    %1262 = arith.select %1259, %1257, %1261 : vector<8x256xi1>, vector<8x256xf32>
    %1263 = tpu.iota {dimensions = array<i32: 1>} : vector<1x256xi32>
    %c4_i32_813 = arith.constant 4 : i32
    %1264 = vector.broadcast %c4_i32_813 : i32 to vector<1x256xi32>
    %1265 = arith.shrsi %1263, %1264 : vector<1x256xi32>
    %c15_i32_814 = arith.constant 15 : i32
    %1266 = vector.broadcast %c15_i32_814 : i32 to vector<1x256xi32>
    %1267 = arith.andi %1263, %1266 : vector<1x256xi32>
    %c0_815 = arith.constant 0 : index
    %c128_816 = arith.constant 128 : index
    %1268 = vector.load %arg30[%c0_815, %c128_816] : memref<32x512xf32, #tpu.memory_space<vmem>>, vector<8x256xf32>
    tpu.vector_store %arg30[%c0_815, %c128_816], %1262 {strides = array<i32>} : memref<32x512xf32, #tpu.memory_space<vmem>>, vector<8x256xf32>,
    %c0_817 = arith.constant 0 : index
    %c111_818 = arith.constant 111 : index
    %1269 = vector.load %arg30[%c0_817, %c111_818] : memref<32x512xf32, #tpu.memory_space<vmem>>, vector<8x256xf32>
    %c0_i32_819 = arith.constant 0 : i32
    %1270 = vector.broadcast %c0_i32_819 : i32 to vector<1x256xi32>
    %1271 = arith.cmpi sgt, %1265, %1270 : vector<1x256xi32>
    %c0_i32_820 = arith.constant 0 : i32
    %1272 = vector.broadcast %c0_i32_820 : i32 to vector<1x256xi32>
    %1273 = arith.cmpi sgt, %1267, %1272 : vector<1x256xi32>
    %1274 = arith.andi %1271, %1273 : vector<1x256xi1>
    %cst_821 = arith.constant 0.000000e+00 : f32
    %1275 = vector.shape_cast %1274 : vector<1x256xi1> to vector<1x256xi1>
    %1276 = vector.broadcast %1275 : vector<1x256xi1> to vector<8x256xi1>
    %1277 = vector.broadcast %cst_821 : f32 to vector<8x256xf32>
    %1278 = arith.select %1276, %1269, %1277 : vector<8x256xi1>, vector<8x256xf32>
    %c0_822 = arith.constant 0 : index
    %c0_823 = arith.constant 0 : index
    %1279 = vector.load %arg31[%c0_822, %c0_823] : memref<288x256xf32, #tpu.memory_space<vmem>>, vector<8x256xf32>
    tpu.vector_store %arg31[%c0_822, %c0_823], %1278 {strides = array<i32>} : memref<288x256xf32, #tpu.memory_space<vmem>>, vector<8x256xf32>,
    %c0_824 = arith.constant 0 : index
    %c112_825 = arith.constant 112 : index
    %1280 = vector.load %arg30[%c0_824, %c112_825] : memref<32x512xf32, #tpu.memory_space<vmem>>, vector<8x256xf32>
    %c0_i32_826 = arith.constant 0 : i32
    %1281 = vector.broadcast %c0_i32_826 : i32 to vector<1x256xi32>
    %1282 = arith.cmpi sgt, %1265, %1281 : vector<1x256xi32>
    %cst_827 = arith.constant 0.000000e+00 : f32
    %1283 = vector.shape_cast %1282 : vector<1x256xi1> to vector<1x256xi1>
    %1284 = vector.broadcast %1283 : vector<1x256xi1> to vector<8x256xi1>
    %1285 = vector.broadcast %cst_827 : f32 to vector<8x256xf32>
    %1286 = arith.select %1284, %1280, %1285 : vector<8x256xi1>, vector<8x256xf32>
    %c8_828 = arith.constant 8 : index
    %c0_829 = arith.constant 0 : index
    %1287 = vector.load %arg31[%c8_828, %c0_829] : memref<288x256xf32, #tpu.memory_space<vmem>>, vector<8x256xf32>
    tpu.vector_store %arg31[%c8_828, %c0_829], %1286 {strides = array<i32>} : memref<288x256xf32, #tpu.memory_space<vmem>>, vector<8x256xf32>,
    %c0_830 = arith.constant 0 : index
    %c113_831 = arith.constant 113 : index
    %1288 = vector.load %arg30[%c0_830, %c113_831] : memref<32x512xf32, #tpu.memory_space<vmem>>, vector<8x256xf32>
    %c0_i32_832 = arith.constant 0 : i32
    %1289 = vector.broadcast %c0_i32_832 : i32 to vector<1x256xi32>
    %1290 = arith.cmpi sgt, %1265, %1289 : vector<1x256xi32>
    %c15_i32_833 = arith.constant 15 : i32
    %1291 = vector.broadcast %c15_i32_833 : i32 to vector<1x256xi32>
    %1292 = arith.cmpi slt, %1267, %1291 : vector<1x256xi32>
    %1293 = arith.andi %1290, %1292 : vector<1x256xi1>
    %cst_834 = arith.constant 0.000000e+00 : f32
    %1294 = vector.shape_cast %1293 : vector<1x256xi1> to vector<1x256xi1>
    %1295 = vector.broadcast %1294 : vector<1x256xi1> to vector<8x256xi1>
    %1296 = vector.broadcast %cst_834 : f32 to vector<8x256xf32>
    %1297 = arith.select %1295, %1288, %1296 : vector<8x256xi1>, vector<8x256xf32>
    %c16_835 = arith.constant 16 : index
    %c0_836 = arith.constant 0 : index
    %1298 = vector.load %arg31[%c16_835, %c0_836] : memref<288x256xf32, #tpu.memory_space<vmem>>, vector<8x256xf32>
    tpu.vector_store %arg31[%c16_835, %c0_836], %1297 {strides = array<i32>} : memref<288x256xf32, #tpu.memory_space<vmem>>, vector<8x256xf32>,
    %c0_837 = arith.constant 0 : index
    %c127_838 = arith.constant 127 : index
    %1299 = vector.load %arg30[%c0_837, %c127_838] : memref<32x512xf32, #tpu.memory_space<vmem>>, vector<8x256xf32>
    %c0_i32_839 = arith.constant 0 : i32
    %1300 = vector.broadcast %c0_i32_839 : i32 to vector<1x256xi32>
    %1301 = arith.cmpi sgt, %1267, %1300 : vector<1x256xi32>
    %cst_840 = arith.constant 0.000000e+00 : f32
    %1302 = vector.shape_cast %1301 : vector<1x256xi1> to vector<1x256xi1>
    %1303 = vector.broadcast %1302 : vector<1x256xi1> to vector<8x256xi1>
    %1304 = vector.broadcast %cst_840 : f32 to vector<8x256xf32>
    %1305 = arith.select %1303, %1299, %1304 : vector<8x256xi1>, vector<8x256xf32>
    %c24_841 = arith.constant 24 : index
    %c0_842 = arith.constant 0 : index
    %1306 = vector.load %arg31[%c24_841, %c0_842] : memref<288x256xf32, #tpu.memory_space<vmem>>, vector<8x256xf32>
    tpu.vector_store %arg31[%c24_841, %c0_842], %1305 {strides = array<i32>} : memref<288x256xf32, #tpu.memory_space<vmem>>, vector<8x256xf32>,
    %c0_843 = arith.constant 0 : index
    %c128_844 = arith.constant 128 : index
    %1307 = vector.load %arg30[%c0_843, %c128_844] : memref<32x512xf32, #tpu.memory_space<vmem>>, vector<8x256xf32>
    %c32_845 = arith.constant 32 : index
    %c0_846 = arith.constant 0 : index
    %1308 = vector.load %arg31[%c32_845, %c0_846] : memref<288x256xf32, #tpu.memory_space<vmem>>, vector<8x256xf32>
    tpu.vector_store %arg31[%c32_845, %c0_846], %1307 {strides = array<i32>} : memref<288x256xf32, #tpu.memory_space<vmem>>, vector<8x256xf32>,
    %c0_847 = arith.constant 0 : index
    %c129_848 = arith.constant 129 : index
    %1309 = vector.load %arg30[%c0_847, %c129_848] : memref<32x512xf32, #tpu.memory_space<vmem>>, vector<8x256xf32>
    %c15_i32_849 = arith.constant 15 : i32
    %1310 = vector.broadcast %c15_i32_849 : i32 to vector<1x256xi32>
    %1311 = arith.cmpi slt, %1267, %1310 : vector<1x256xi32>
    %cst_850 = arith.constant 0.000000e+00 : f32
    %1312 = vector.shape_cast %1311 : vector<1x256xi1> to vector<1x256xi1>
    %1313 = vector.broadcast %1312 : vector<1x256xi1> to vector<8x256xi1>
    %1314 = vector.broadcast %cst_850 : f32 to vector<8x256xf32>
    %1315 = arith.select %1313, %1309, %1314 : vector<8x256xi1>, vector<8x256xf32>
    %c40_851 = arith.constant 40 : index
    %c0_852 = arith.constant 0 : index
    %1316 = vector.load %arg31[%c40_851, %c0_852] : memref<288x256xf32, #tpu.memory_space<vmem>>, vector<8x256xf32>
    tpu.vector_store %arg31[%c40_851, %c0_852], %1315 {strides = array<i32>} : memref<288x256xf32, #tpu.memory_space<vmem>>, vector<8x256xf32>,
    %c0_853 = arith.constant 0 : index
    %c143_854 = arith.constant 143 : index
    %1317 = vector.load %arg30[%c0_853, %c143_854] : memref<32x512xf32, #tpu.memory_space<vmem>>, vector<8x256xf32>
    %c15_i32_855 = arith.constant 15 : i32
    %1318 = vector.broadcast %c15_i32_855 : i32 to vector<1x256xi32>
    %1319 = arith.cmpi slt, %1265, %1318 : vector<1x256xi32>
    %c0_i32_856 = arith.constant 0 : i32
    %1320 = vector.broadcast %c0_i32_856 : i32 to vector<1x256xi32>
    %1321 = arith.cmpi sgt, %1267, %1320 : vector<1x256xi32>
    %1322 = arith.andi %1319, %1321 : vector<1x256xi1>
    %cst_857 = arith.constant 0.000000e+00 : f32
    %1323 = vector.shape_cast %1322 : vector<1x256xi1> to vector<1x256xi1>
    %1324 = vector.broadcast %1323 : vector<1x256xi1> to vector<8x256xi1>
    %1325 = vector.broadcast %cst_857 : f32 to vector<8x256xf32>
    %1326 = arith.select %1324, %1317, %1325 : vector<8x256xi1>, vector<8x256xf32>
    %c48_858 = arith.constant 48 : index
    %c0_859 = arith.constant 0 : index
    %1327 = vector.load %arg31[%c48_858, %c0_859] : memref<288x256xf32, #tpu.memory_space<vmem>>, vector<8x256xf32>
    tpu.vector_store %arg31[%c48_858, %c0_859], %1326 {strides = array<i32>} : memref<288x256xf32, #tpu.memory_space<vmem>>, vector<8x256xf32>,
    %c0_860 = arith.constant 0 : index
    %c144_861 = arith.constant 144 : index
    %1328 = vector.load %arg30[%c0_860, %c144_861] : memref<32x512xf32, #tpu.memory_space<vmem>>, vector<8x256xf32>
    %c15_i32_862 = arith.constant 15 : i32
    %1329 = vector.broadcast %c15_i32_862 : i32 to vector<1x256xi32>
    %1330 = arith.cmpi slt, %1265, %1329 : vector<1x256xi32>
    %cst_863 = arith.constant 0.000000e+00 : f32
    %1331 = vector.shape_cast %1330 : vector<1x256xi1> to vector<1x256xi1>
    %1332 = vector.broadcast %1331 : vector<1x256xi1> to vector<8x256xi1>
    %1333 = vector.broadcast %cst_863 : f32 to vector<8x256xf32>
    %1334 = arith.select %1332, %1328, %1333 : vector<8x256xi1>, vector<8x256xf32>
    %c56_864 = arith.constant 56 : index
    %c0_865 = arith.constant 0 : index
    %1335 = vector.load %arg31[%c56_864, %c0_865] : memref<288x256xf32, #tpu.memory_space<vmem>>, vector<8x256xf32>
    tpu.vector_store %arg31[%c56_864, %c0_865], %1334 {strides = array<i32>} : memref<288x256xf32, #tpu.memory_space<vmem>>, vector<8x256xf32>,
    %c0_866 = arith.constant 0 : index
    %c145_867 = arith.constant 145 : index
    %1336 = vector.load %arg30[%c0_866, %c145_867] : memref<32x512xf32, #tpu.memory_space<vmem>>, vector<8x256xf32>
    %c15_i32_868 = arith.constant 15 : i32
    %1337 = vector.broadcast %c15_i32_868 : i32 to vector<1x256xi32>
    %1338 = arith.cmpi slt, %1265, %1337 : vector<1x256xi32>
    %c15_i32_869 = arith.constant 15 : i32
    %1339 = vector.broadcast %c15_i32_869 : i32 to vector<1x256xi32>
    %1340 = arith.cmpi slt, %1267, %1339 : vector<1x256xi32>
    %1341 = arith.andi %1338, %1340 : vector<1x256xi1>
    %cst_870 = arith.constant 0.000000e+00 : f32
    %1342 = vector.shape_cast %1341 : vector<1x256xi1> to vector<1x256xi1>
    %1343 = vector.broadcast %1342 : vector<1x256xi1> to vector<8x256xi1>
    %1344 = vector.broadcast %cst_870 : f32 to vector<8x256xf32>
    %1345 = arith.select %1343, %1336, %1344 : vector<8x256xi1>, vector<8x256xf32>
    %c64_871 = arith.constant 64 : index
    %c0_872 = arith.constant 0 : index
    %1346 = vector.load %arg31[%c64_871, %c0_872] : memref<288x256xf32, #tpu.memory_space<vmem>>, vector<8x256xf32>
    tpu.vector_store %arg31[%c64_871, %c0_872], %1345 {strides = array<i32>} : memref<288x256xf32, #tpu.memory_space<vmem>>, vector<8x256xf32>,
    %c0_873 = arith.constant 0 : index
    %c0_874 = arith.constant 0 : index
    %1347 = vector.load %arg24[%c0_873, %c0_874] : memref<8x72xbf16, #tpu.memory_space<vmem>>, vector<8x72xbf16>
    %c0_875 = arith.constant 0 : index
    %c0_876 = arith.constant 0 : index
    %1348 = vector.load %arg31[%c0_875, %c0_876] : memref<288x256xf32, #tpu.memory_space<vmem>>, vector<72x256xf32>
    %1349 = arith.truncf %1348 : vector<72x256xf32> to vector<72x256xbf16>
    %cst_877 = arith.constant dense<0.000000e+00> : vector<8x256xf32>
    %1350 = tpu.matmul %1347, %1349, %cst_877 {dimension_numbers = #tpu.dot_dimension_numbers<[1], [0], [0], [1], [0, 0, 1, 1], [], []>} : vector<8x72xbf16>, vector<72x256xbf16>, vector<8x256xf32> -> vector<8x256xf32>
    %c0_878 = arith.constant 0 : index
    %c0_879 = arith.constant 0 : index
    %1351 = vector.load %arg25[%c0_878, %c0_879] : memref<8x1xf32, #tpu.memory_space<vmem>>, vector<8x1xf32>
    %1352 = vector.broadcast %1351 : vector<8x1xf32> to vector<8x256xf32>
    %1353 = arith.addf %1350, %1352 : vector<8x256xf32>
    %cst_880 = arith.constant 0.000000e+00 : f32
    %1354 = vector.broadcast %cst_880 : f32 to vector<8x256xf32>
    %1355 = arith.cmpf oge, %1353, %1354 : vector<8x256xf32>
    %cst_881 = arith.constant 0.00999999977 : f32
    %1356 = vector.broadcast %cst_881 : f32 to vector<8x256xf32>
    %1357 = arith.mulf %1356, %1353 : vector<8x256xf32>
    %1358 = arith.select %1355, %1353, %1357 : vector<8x256xi1>, vector<8x256xf32>
    %c0_882 = arith.constant 0 : index
    %c0_883 = arith.constant 0 : index
    %1359 = vector.load %arg26[%c0_882, %c0_883] : memref<3x8xbf16, #tpu.memory_space<vmem>>, vector<3x8xbf16>
    %1360 = arith.truncf %1358 : vector<8x256xf32> to vector<8x256xbf16>
    %cst_884 = arith.constant dense<0.000000e+00> : vector<3x256xf32>
    %1361 = tpu.matmul %1359, %1360, %cst_884 {dimension_numbers = #tpu.dot_dimension_numbers<[1], [0], [0], [1], [0, 0, 1, 1], [], []>} : vector<3x8xbf16>, vector<8x256xbf16>, vector<3x256xf32> -> vector<3x256xf32>
    %c0_885 = arith.constant 0 : index
    %c0_886 = arith.constant 0 : index
    %1362 = vector.load %arg27[%c0_885, %c0_886] : memref<3x1xf32, #tpu.memory_space<vmem>>, vector<3x1xf32>
    %1363 = vector.broadcast %1362 : vector<3x1xf32> to vector<3x256xf32>
    %1364 = arith.addf %1361, %1363 : vector<3x256xf32>
    %c0_887 = arith.constant 0 : index
    %c0_888 = arith.constant 0 : index
    %c0_889 = arith.constant 0 : index
    %1365 = vector.load %arg28[%c0_887, %c0_888, %c0_889] : memref<1x3x256xf32, #tpu.memory_space<vmem>>, vector<1x3x256xf32>
    %1366 = vector.shape_cast %1365 : vector<1x3x256xf32> to vector<3x256xf32>
    %1367 = vector.shape_cast %1364 : vector<3x256xf32> to vector<1x3x256xf32>
    tpu.vector_store %arg28[%c0_887, %c0_888, %c0_889], %1367 {strides = array<i32>} : memref<1x3x256xf32, #tpu.memory_space<vmem>>, vector<1x3x256xf32>,
    return
  }
  func.func @transform_0(%arg0: i32) -> (i32, i32, i32) {
    %c0_i32 = arith.constant 0 : i32
    %c0_i32_0 = arith.constant 0 : i32
    %c0_i32_1 = arith.constant 0 : i32
    return %arg0, %c0_i32, %c0_i32_0 : i32, i32, i32
  }
  func.func @transform_1(%arg0: i32) -> (i32, i32) {
    %c0_i32 = arith.constant 0 : i32
    %c0_i32_0 = arith.constant 0 : i32
    %c0_i32_1 = arith.constant 0 : i32
    return %c0_i32, %c0_i32_0 : i32, i32
  }
  func.func @transform_2(%arg0: i32) -> (i32, i32) {
    %c0_i32 = arith.constant 0 : i32
    %c0_i32_0 = arith.constant 0 : i32
    %c0_i32_1 = arith.constant 0 : i32
    return %c0_i32, %c0_i32_0 : i32, i32
  }
  func.func @transform_3(%arg0: i32) -> (i32, i32) {
    %c0_i32 = arith.constant 0 : i32
    %c0_i32_0 = arith.constant 0 : i32
    %c0_i32_1 = arith.constant 0 : i32
    return %c0_i32, %c0_i32_0 : i32, i32
  }
  func.func @transform_4(%arg0: i32) -> (i32, i32) {
    %c0_i32 = arith.constant 0 : i32
    %c0_i32_0 = arith.constant 0 : i32
    %c0_i32_1 = arith.constant 0 : i32
    return %c0_i32, %c0_i32_0 : i32, i32
  }
  func.func @transform_5(%arg0: i32) -> (i32, i32) {
    %c0_i32 = arith.constant 0 : i32
    %c0_i32_0 = arith.constant 0 : i32
    %c0_i32_1 = arith.constant 0 : i32
    return %c0_i32, %c0_i32_0 : i32, i32
  }
  func.func @transform_6(%arg0: i32) -> (i32, i32) {
    %c0_i32 = arith.constant 0 : i32
    %c0_i32_0 = arith.constant 0 : i32
    %c0_i32_1 = arith.constant 0 : i32
    return %c0_i32, %c0_i32_0 : i32, i32
  }
  func.func @transform_7(%arg0: i32) -> (i32, i32) {
    %c0_i32 = arith.constant 0 : i32
    %c0_i32_0 = arith.constant 0 : i32
    %c0_i32_1 = arith.constant 0 : i32
    return %c0_i32, %c0_i32_0 : i32, i32
  }
  func.func @transform_8(%arg0: i32) -> (i32, i32) {
    %c0_i32 = arith.constant 0 : i32
    %c0_i32_0 = arith.constant 0 : i32
    %c0_i32_1 = arith.constant 0 : i32
    return %c0_i32, %c0_i32_0 : i32, i32
  }
  func.func @transform_9(%arg0: i32) -> (i32, i32) {
    %c0_i32 = arith.constant 0 : i32
    %c0_i32_0 = arith.constant 0 : i32
    %c0_i32_1 = arith.constant 0 : i32
    return %c0_i32, %c0_i32_0 : i32, i32
  }
  func.func @transform_10(%arg0: i32) -> (i32, i32) {
    %c0_i32 = arith.constant 0 : i32
    %c0_i32_0 = arith.constant 0 : i32
    %c0_i32_1 = arith.constant 0 : i32
    return %c0_i32, %c0_i32_0 : i32, i32
  }
  func.func @transform_11(%arg0: i32) -> (i32, i32) {
    %c0_i32 = arith.constant 0 : i32
    %c0_i32_0 = arith.constant 0 : i32
    %c0_i32_1 = arith.constant 0 : i32
    return %c0_i32, %c0_i32_0 : i32, i32
  }
  func.func @transform_12(%arg0: i32) -> (i32, i32) {
    %c0_i32 = arith.constant 0 : i32
    %c0_i32_0 = arith.constant 0 : i32
    %c0_i32_1 = arith.constant 0 : i32
    return %c0_i32, %c0_i32_0 : i32, i32
  }
  func.func @transform_13(%arg0: i32) -> (i32, i32, i32) {
    %c0_i32 = arith.constant 0 : i32
    %c0_i32_0 = arith.constant 0 : i32
    %c0_i32_1 = arith.constant 0 : i32
    %c0_i32_2 = arith.constant 0 : i32
    return %c0_i32, %c0_i32_0, %c0_i32_1 : i32, i32, i32
  }
  func.func @transform_14(%arg0: i32) -> (i32, i32) {
    %c0_i32 = arith.constant 0 : i32
    %c0_i32_0 = arith.constant 0 : i32
    %c0_i32_1 = arith.constant 0 : i32
    return %c0_i32, %c0_i32_0 : i32, i32
  }
  func.func @transform_15(%arg0: i32) -> (i32, i32) {
    %c0_i32 = arith.constant 0 : i32
    %c0_i32_0 = arith.constant 0 : i32
    %c0_i32_1 = arith.constant 0 : i32
    return %c0_i32, %c0_i32_0 : i32, i32
  }
  func.func @transform_16(%arg0: i32) -> (i32, i32) {
    %c0_i32 = arith.constant 0 : i32
    %c0_i32_0 = arith.constant 0 : i32
    %c0_i32_1 = arith.constant 0 : i32
    return %c0_i32, %c0_i32_0 : i32, i32
  }
  func.func @transform_17(%arg0: i32) -> (i32, i32) {
    %c0_i32 = arith.constant 0 : i32
    %c0_i32_0 = arith.constant 0 : i32
    %c0_i32_1 = arith.constant 0 : i32
    return %c0_i32, %c0_i32_0 : i32, i32
  }
  func.func @transform_18(%arg0: i32) -> (i32, i32) {
    %c0_i32 = arith.constant 0 : i32
    %c0_i32_0 = arith.constant 0 : i32
    %c0_i32_1 = arith.constant 0 : i32
    return %c0_i32, %c0_i32_0 : i32, i32
  }
  func.func @transform_19(%arg0: i32) -> (i32, i32) {
    %c0_i32 = arith.constant 0 : i32
    %c0_i32_0 = arith.constant 0 : i32
    %c0_i32_1 = arith.constant 0 : i32
    return %c0_i32, %c0_i32_0 : i32, i32
  }
  func.func @transform_20(%arg0: i32) -> (i32, i32, i32) {
    %c0_i32 = arith.constant 0 : i32
    %c0_i32_0 = arith.constant 0 : i32
    %c0_i32_1 = arith.constant 0 : i32
    %c0_i32_2 = arith.constant 0 : i32
    return %c0_i32, %c0_i32_0, %c0_i32_1 : i32, i32, i32
  }
  func.func @transform_21(%arg0: i32) -> (i32, i32) {
    %c0_i32 = arith.constant 0 : i32
    %c0_i32_0 = arith.constant 0 : i32
    %c0_i32_1 = arith.constant 0 : i32
    return %c0_i32, %c0_i32_0 : i32, i32
  }
  func.func @transform_22(%arg0: i32) -> (i32, i32) {
    %c0_i32 = arith.constant 0 : i32
    %c0_i32_0 = arith.constant 0 : i32
    %c0_i32_1 = arith.constant 0 : i32
    return %c0_i32, %c0_i32_0 : i32, i32
  }
  func.func @transform_23(%arg0: i32) -> (i32, i32) {
    %c0_i32 = arith.constant 0 : i32
    %c0_i32_0 = arith.constant 0 : i32
    %c0_i32_1 = arith.constant 0 : i32
    return %c0_i32, %c0_i32_0 : i32, i32
  }
  func.func @transform_24(%arg0: i32) -> (i32, i32) {
    %c0_i32 = arith.constant 0 : i32
    %c0_i32_0 = arith.constant 0 : i32
    %c0_i32_1 = arith.constant 0 : i32
    return %c0_i32, %c0_i32_0 : i32, i32
  }
  func.func @transform_25(%arg0: i32) -> (i32, i32) {
    %c0_i32 = arith.constant 0 : i32
    %c0_i32_0 = arith.constant 0 : i32
    %c0_i32_1 = arith.constant 0 : i32
    return %c0_i32, %c0_i32_0 : i32, i32
  }
  func.func @transform_26(%arg0: i32) -> (i32, i32) {
    %c0_i32 = arith.constant 0 : i32
    %c0_i32_0 = arith.constant 0 : i32
    %c0_i32_1 = arith.constant 0 : i32
    return %c0_i32, %c0_i32_0 : i32, i32
  }
  func.func @transform_27(%arg0: i32) -> (i32, i32, i32) {
    %c0_i32 = arith.constant 0 : i32
    %c0_i32_0 = arith.constant 0 : i32
    %c0_i32_1 = arith.constant 0 : i32
    return %arg0, %c0_i32, %c0_i32_0 : i32, i32, i32
  }
  func.func @transform_28(%arg0: i32) -> (i32, i32, i32) {
    %c0_i32 = arith.constant 0 : i32
    %c0_i32_0 = arith.constant 0 : i32
    %c0_i32_1 = arith.constant 0 : i32
    return %arg0, %c0_i32, %c0_i32_0 : i32, i32, i32
  }
}

</mosaic_0001>

<llo_original>
// kernel: nas_unet_forward.1
$region0: #{nas_unet_forward.1}
  #allocation0 [shape = 'u32[]', space=smem, size = 0x4, offset = 0x4, fixed_abs, tag = 'smem constant byte address 0x4 - core index']
  #allocation1 [shape = 'u32[144,128]{1,0:T(1,128)}', space=vmem, size = 0x12000, scoped, tag = 'internal scratch']
  #allocation2 [shape = 'f32[32,512]{1,0:T(8,128)}', space=vmem, size = 0x10000, scoped, tag = 'scratch operand']
  #allocation3 [shape = 'f32[288,256]{1,0:T(8,128)}', space=vmem, size = 0x48000, scoped, tag = 'scratch operand']
  %s0 = inlined_call_operand.vmem [shape: f32[2,4,256], index: 0, kind: input, shape index: {}]
  %s1 = inlined_call_operand.vmem [shape: bf16[8,72], index: 1, kind: input, shape index: {}]
  %s2 = inlined_call_operand.vmem [shape: f32[8,1], index: 2, kind: input, shape index: {}]
  %s3 = inlined_call_operand.vmem [shape: bf16[8,72], index: 3, kind: input, shape index: {}]
  %s4 = inlined_call_operand.vmem [shape: f32[8,1], index: 4, kind: input, shape index: {}]
  %s5 = inlined_call_operand.vmem [shape: bf16[16,72], index: 5, kind: input, shape index: {}]
  %s6 = inlined_call_operand.vmem [shape: f32[16,1], index: 6, kind: input, shape index: {}]
  %s7 = inlined_call_operand.vmem [shape: bf16[16,144], index: 7, kind: input, shape index: {}]
  %s8 = inlined_call_operand.vmem [shape: f32[16,1], index: 8, kind: input, shape index: {}]
  %s9 = inlined_call_operand.vmem [shape: bf16[32,144], index: 9, kind: input, shape index: {}]
  %s10 = inlined_call_operand.vmem [shape: f32[32,1], index: 10, kind: input, shape index: {}]
  %s11 = inlined_call_operand.vmem [shape: bf16[32,288], index: 11, kind: input, shape index: {}]
  %s12 = inlined_call_operand.vmem [shape: f32[32,1], index: 12, kind: input, shape index: {}]
  %s13 = inlined_call_operand.vmem [shape: bf16[4,16,32], index: 13, kind: input, shape index: {}]
  %s14 = inlined_call_operand.vmem [shape: bf16[16,288], index: 14, kind: input, shape index: {}]
  %s15 = inlined_call_operand.vmem [shape: f32[16,1], index: 15, kind: input, shape index: {}]
  %s16 = inlined_call_operand.vmem [shape: bf16[16,144], index: 16, kind: input, shape index: {}]
  %s17 = inlined_call_operand.vmem [shape: f32[16,1], index: 17, kind: input, shape index: {}]
  %s18 = inlined_call_operand.vmem [shape: bf16[3,16], index: 18, kind: input, shape index: {}]
  %s19 = inlined_call_operand.vmem [shape: f32[3,1], index: 19, kind: input, shape index: {}]
  %s20 = inlined_call_operand.vmem [shape: bf16[4,8,16], index: 20, kind: input, shape index: {}]
  %s21 = inlined_call_operand.vmem [shape: bf16[8,144], index: 21, kind: input, shape index: {}]
  %s22 = inlined_call_operand.vmem [shape: f32[8,1], index: 22, kind: input, shape index: {}]
  %s23 = inlined_call_operand.vmem [shape: bf16[8,72], index: 23, kind: input, shape index: {}]
  %s24 = inlined_call_operand.vmem [shape: f32[8,1], index: 24, kind: input, shape index: {}]
  %s25 = inlined_call_operand.vmem [shape: bf16[3,8], index: 25, kind: input, shape index: {}]
  %s26 = inlined_call_operand.vmem [shape: f32[3,1], index: 26, kind: input, shape index: {}]
  %s27 = inlined_call_operand.vmem [shape: f32[2,3,256], index: 27, kind: output, shape index: {0}]
  %s28 = inlined_call_operand.vmem [shape: f32[2,3,64], index: 28, kind: output, shape index: {1}]
  %29 = xla_tuple %s27, %s28
  %s30 = sld [smem:[#allocation0]]
  $region149: #{nas_unet_forward.1} parent=0
    _
  %s32 = ssub.s32 1, %s30
  %s33 = scalar_select 0, %s32, %s30
  loop: start=0, step=1, limit=4
  $region2: #{nas_unet_forward.1} parent=0 // loop_pre_header
    _
  $region3: #{nas_unet_forward.1} parent=0 // loop_header
    %s35 = sphi 0, %s39
    %p36 = scmp.ge.s32.totalorder %s35, 4
    %s45 = sphi 0, %s47
    %s48 = sphi 0, %s45
    %s49 = sphi 0, %s48
    %s65 = sphi 0, %s49
    %s69 = sphi 0, %s69
    %s71 = sphi 0, %s69
    %s72 = sphi 0, %s71
    %s86 = sphi 0, %s72
    %s90 = sphi 0, %s90
    %s92 = sphi 0, %s90
    %s93 = sphi 0, %s92
    %s107 = sphi 0, %s93
    %s111 = sphi 0, %s111
    %s113 = sphi 0, %s111
    %s114 = sphi 0, %s113
    %s128 = sphi 0, %s114
    %s132 = sphi 0, %s132
    %s134 = sphi 0, %s132
    %s135 = sphi 0, %s134
    %s149 = sphi 0, %s135
    %s153 = sphi 0, %s153
    %s155 = sphi 0, %s153
    %s156 = sphi 0, %s155
    %s170 = sphi 0, %s156
    %s174 = sphi 0, %s174
    %s176 = sphi 0, %s174
    %s177 = sphi 0, %s176
    %s191 = sphi 0, %s177
    %s195 = sphi 0, %s195
    %s197 = sphi 0, %s195
    %s198 = sphi 0, %s197
    %s212 = sphi 0, %s198
    %s216 = sphi 0, %s216
    %s218 = sphi 0, %s216
    %s219 = sphi 0, %s218
    %s233 = sphi 0, %s219
    %s237 = sphi 0, %s237
    %s239 = sphi 0, %s237
    %s240 = sphi 0, %s239
    %s254 = sphi 0, %s240
    %s258 = sphi 0, %s258
    %s260 = sphi 0, %s258
    %s261 = sphi 0, %s260
    %s275 = sphi 0, %s261
    %s279 = sphi 0, %s279
    %s281 = sphi 0, %s279
    %s282 = sphi 0, %s281
    %s296 = sphi 0, %s282
    %s300 = sphi 0, %s300
    %s302 = sphi 0, %s300
    %s303 = sphi 0, %s302
    %s317 = sphi 0, %s303
    %s321 = sphi 0, %s321
    %s323 = sphi 0, %s321
    %s324 = sphi 0, %s323
    %s338 = sphi 0, %s324
    %s342 = sphi 0, %s342
    %s344 = sphi 0, %s342
    %s345 = sphi 0, %s344
    %s359 = sphi 0, %s345
    %s363 = sphi 0, %s363
    %s365 = sphi 0, %s363
    %s366 = sphi 0, %s365
    %s380 = sphi 0, %s366
    %s384 = sphi 0, %s384
    %s386 = sphi 0, %s384
    %s387 = sphi 0, %s386
    %s401 = sphi 0, %s387
    %s405 = sphi 0, %s405
    %s407 = sphi 0, %s405
    %s408 = sphi 0, %s407
    %s422 = sphi 0, %s408
    %s426 = sphi 0, %s426
    %s428 = sphi 0, %s426
    %s429 = sphi 0, %s428
    %s443 = sphi 0, %s429
    %s447 = sphi 0, %s447
    %s449 = sphi 0, %s447
    %s450 = sphi 0, %s449
    %s464 = sphi 0, %s450
    %s468 = sphi 0, %s468
    %s470 = sphi 0, %s468
    %s471 = sphi 0, %s470
    %s485 = sphi 0, %s471
    %s489 = sphi 0, %s489
    %s491 = sphi 0, %s489
    %s492 = sphi 0, %s491
    %s506 = sphi 0, %s492
    %s510 = sphi 0, %s510
    %s512 = sphi 0, %s510
    %s513 = sphi 0, %s512
    %s527 = sphi 0, %s513
    %s531 = sphi 0, %s531
    %s533 = sphi 0, %s531
    %s534 = sphi 0, %s533
    %s548 = sphi 0, %s534
    %s552 = sphi 0, %s552
    %s554 = sphi 0, %s552
    %s555 = sphi 0, %s554
    %s569 = sphi 0, %s555
    %s573 = sphi 0, %s573
    %s575 = sphi 0, %s573
    %s576 = sphi 0, %s575
    %s590 = sphi 0, %s576
    %s594 = sphi 0, %s594
    %s596 = sphi 0, %s594
    %s597 = sphi 0, %s596
    %s611 = sphi 0, %s597
    %s617 = sphi 0, %s619
    %s620 = sphi 0, %s617
    %s621 = sphi 0, %s620
    %s637 = sphi 0, %s621
    %s643 = sphi 0, %s645
    %s646 = sphi 0, %s643
    %s647 = sphi 0, %s646
    %s663 = sphi 0, %s647
  $region4: #{nas_unet_forward.1} parent=0 // loop_header_branch
    %38 = sbr.rel (%p36) target = $region8
  $region5: #{nas_unet_forward.1} parent=0 // loop_body
    %s40 = ssub.s32 %s35, 1
    %s41 = ssub.s32 %s35, 2
    %s42 = sadd.s32 %s35, 1
    %s43 = ssub.s32 %s35, %s42
    %p44 = scmp.eq.s32.totalorder %s43, 0
    %s46 = sadd.s32 %s45, 1
    %s47 = scalar_select %p44, %s45, %s46
    %p50 = pneg %p44
    %p51 = scmp.eq.s32.totalorder %s35, 1
    %p52 = por %p50, %p51
    %p53 = scmp.ne.s32.totalorder %s45, %s48
    %p54 = scmp.eq.s32.totalorder %s35, 0
    %p55 = por %p53, %p54
    %p56 = scmp.ne.s32.totalorder %s45, %s48
    %p57 = scmp.eq.s32.totalorder %s40, 1
    %p58 = por %p56, %p57
    %p59 = scmp.ne.s32.totalorder %s48, %s49
    %p60 = scmp.eq.s32.totalorder %s40, 0
    %p61 = por %p59, %p60
    %p62 = scmp.ne.s32.totalorder %s48, %s49
    %p63 = scmp.eq.s32.totalorder %s41, 1
    %p64 = por %p62, %p63
    %p66 = scmp.ne.s32.totalorder %s49, %s65
    %p67 = scmp.eq.s32.totalorder %s41, 0
    %p68 = por %p66, %p67
    %s70 = sadd.s32 %s69, 1
    %p73 = scmp.eq.s32.totalorder %s35, 1
    %p74 = scmp.ne.s32.totalorder %s69, %s71
    %p75 = scmp.eq.s32.totalorder %s35, 0
    %p76 = por %p74, %p75
    %p77 = scmp.ne.s32.totalorder %s69, %s71
    %p78 = scmp.eq.s32.totalorder %s40, 1
    %p79 = por %p77, %p78
    %p80 = scmp.ne.s32.totalorder %s71, %s72
    %p81 = scmp.eq.s32.totalorder %s40, 0
    %p82 = por %p80, %p81
    %p83 = scmp.ne.s32.totalorder %s71, %s72
    %p84 = scmp.eq.s32.totalorder %s41, 1
    %p85 = por %p83, %p84
    %p87 = scmp.ne.s32.totalorder %s72, %s86
    %p88 = scmp.eq.s32.totalorder %s41, 0
    %p89 = por %p87, %p88
    %s91 = sadd.s32 %s90, 1
    %p94 = scmp.eq.s32.totalorder %s35, 1
    %p95 = scmp.ne.s32.totalorder %s90, %s92
    %p96 = scmp.eq.s32.totalorder %s35, 0
    %p97 = por %p95, %p96
    %p98 = scmp.ne.s32.totalorder %s90, %s92
    %p99 = scmp.eq.s32.totalorder %s40, 1
    %p100 = por %p98, %p99
    %p101 = scmp.ne.s32.totalorder %s92, %s93
    %p102 = scmp.eq.s32.totalorder %s40, 0
    %p103 = por %p101, %p102
    %p104 = scmp.ne.s32.totalorder %s92, %s93
    %p105 = scmp.eq.s32.totalorder %s41, 1
    %p106 = por %p104, %p105
    %p108 = scmp.ne.s32.totalorder %s93, %s107
    %p109 = scmp.eq.s32.totalorder %s41, 0
    %p110 = por %p108, %p109
    %s112 = sadd.s32 %s111, 1
    %p115 = scmp.eq.s32.totalorder %s35, 1
    %p116 = scmp.ne.s32.totalorder %s111, %s113
    %p117 = scmp.eq.s32.totalorder %s35, 0
    %p118 = por %p116, %p117
    %p119 = scmp.ne.s32.totalorder %s111, %s113
    %p120 = scmp.eq.s32.totalorder %s40, 1
    %p121 = por %p119, %p120
    %p122 = scmp.ne.s32.totalorder %s113, %s114
    %p123 = scmp.eq.s32.totalorder %s40, 0
    %p124 = por %p122, %p123
    %p125 = scmp.ne.s32.totalorder %s113, %s114
    %p126 = scmp.eq.s32.totalorder %s41, 1
    %p127 = por %p125, %p126
    %p129 = scmp.ne.s32.totalorder %s114, %s128
    %p130 = scmp.eq.s32.totalorder %s41, 0
    %p131 = por %p129, %p130
    %s133 = sadd.s32 %s132, 1
    %p136 = scmp.eq.s32.totalorder %s35, 1
    %p137 = scmp.ne.s32.totalorder %s132, %s134
    %p138 = scmp.eq.s32.totalorder %s35, 0
    %p139 = por %p137, %p138
    %p140 = scmp.ne.s32.totalorder %s132, %s134
    %p141 = scmp.eq.s32.totalorder %s40, 1
    %p142 = por %p140, %p141
    %p143 = scmp.ne.s32.totalorder %s134, %s135
    %p144 = scmp.eq.s32.totalorder %s40, 0
    %p145 = por %p143, %p144
    %p146 = scmp.ne.s32.totalorder %s134, %s135
    %p147 = scmp.eq.s32.totalorder %s41, 1
    %p148 = por %p146, %p147
    %p150 = scmp.ne.s32.totalorder %s135, %s149
    %p151 = scmp.eq.s32.totalorder %s41, 0
    %p152 = por %p150, %p151
    %s154 = sadd.s32 %s153, 1
    %p157 = scmp.eq.s32.totalorder %s35, 1
    %p158 = scmp.ne.s32.totalorder %s153, %s155
    %p159 = scmp.eq.s32.totalorder %s35, 0
    %p160 = por %p158, %p159
    %p161 = scmp.ne.s32.totalorder %s153, %s155
    %p162 = scmp.eq.s32.totalorder %s40, 1
    %p163 = por %p161, %p162
    %p164 = scmp.ne.s32.totalorder %s155, %s156
    %p165 = scmp.eq.s32.totalorder %s40, 0
    %p166 = por %p164, %p165
    %p167 = scmp.ne.s32.totalorder %s155, %s156
    %p168 = scmp.eq.s32.totalorder %s41, 1
    %p169 = por %p167, %p168
    %p171 = scmp.ne.s32.totalorder %s156, %s170
    %p172 = scmp.eq.s32.totalorder %s41, 0
    %p173 = por %p171, %p172
    %s175 = sadd.s32 %s174, 1
    %p178 = scmp.eq.s32.totalorder %s35, 1
    %p179 = scmp.ne.s32.totalorder %s174, %s176
    %p180 = scmp.eq.s32.totalorder %s35, 0
    %p181 = por %p179, %p180
    %p182 = scmp.ne.s32.totalorder %s174, %s176
    %p183 = scmp.eq.s32.totalorder %s40, 1
    %p184 = por %p182, %p183
    %p185 = scmp.ne.s32.totalorder %s176, %s177
    %p186 = scmp.eq.s32.totalorder %s40, 0
    %p187 = por %p185, %p186
    %p188 = scmp.ne.s32.totalorder %s176, %s177
    %p189 = scmp.eq.s32.totalorder %s41, 1
    %p190 = por %p188, %p189
    %p192 = scmp.ne.s32.totalorder %s177, %s191
    %p193 = scmp.eq.s32.totalorder %s41, 0
    %p194 = por %p192, %p193
    %s196 = sadd.s32 %s195, 1
    %p199 = scmp.eq.s32.totalorder %s35, 1
    %p200 = scmp.ne.s32.totalorder %s195, %s197
    %p201 = scmp.eq.s32.totalorder %s35, 0
    %p202 = por %p200, %p201
    %p203 = scmp.ne.s32.totalorder %s195, %s197
    %p204 = scmp.eq.s32.totalorder %s40, 1
    %p205 = por %p203, %p204
    %p206 = scmp.ne.s32.totalorder %s197, %s198
    %p207 = scmp.eq.s32.totalorder %s40, 0
    %p208 = por %p206, %p207
    %p209 = scmp.ne.s32.totalorder %s197, %s198
    %p210 = scmp.eq.s32.totalorder %s41, 1
    %p211 = por %p209, %p210
    %p213 = scmp.ne.s32.totalorder %s198, %s212
    %p214 = scmp.eq.s32.totalorder %s41, 0
    %p215 = por %p213, %p214
    %s217 = sadd.s32 %s216, 1
    %p220 = scmp.eq.s32.totalorder %s35, 1
    %p221 = scmp.ne.s32.totalorder %s216, %s218
    %p222 = scmp.eq.s32.totalorder %s35, 0
    %p223 = por %p221, %p222
    %p224 = scmp.ne.s32.totalorder %s216, %s218
    %p225 = scmp.eq.s32.totalorder %s40, 1
    %p226 = por %p224, %p225
    %p227 = scmp.ne.s32.totalorder %s218, %s219
    %p228 = scmp.eq.s32.totalorder %s40, 0
    %p229 = por %p227, %p228
    %p230 = scmp.ne.s32.totalorder %s218, %s219
    %p231 = scmp.eq.s32.totalorder %s41, 1
    %p232 = por %p230, %p231
    %p234 = scmp.ne.s32.totalorder %s219, %s233
    %p235 = scmp.eq.s32.totalorder %s41, 0
    %p236 = por %p234, %p235
    %s238 = sadd.s32 %s237, 1
    %p241 = scmp.eq.s32.totalorder %s35, 1
    %p242 = scmp.ne.s32.totalorder %s237, %s239
    %p243 = scmp.eq.s32.totalorder %s35, 0
    %p244 = por %p242, %p243
    %p245 = scmp.ne.s32.totalorder %s237, %s239
    %p246 = scmp.eq.s32.totalorder %s40, 1
    %p247 = por %p245, %p246
    %p248 = scmp.ne.s32.totalorder %s239, %s240
    %p249 = scmp.eq.s32.totalorder %s40, 0
    %p250 = por %p248, %p249
    %p251 = scmp.ne.s32.totalorder %s239, %s240
    %p252 = scmp.eq.s32.totalorder %s41, 1
    %p253 = por %p251, %p252
    %p255 = scmp.ne.s32.totalorder %s240, %s254
    %p256 = scmp.eq.s32.totalorder %s41, 0
    %p257 = por %p255, %p256
    %s259 = sadd.s32 %s258, 1
    %p262 = scmp.eq.s32.totalorder %s35, 1
    %p263 = scmp.ne.s32.totalorder %s258, %s260
    %p264 = scmp.eq.s32.totalorder %s35, 0
    %p265 = por %p263, %p264
    %p266 = scmp.ne.s32.totalorder %s258, %s260
    %p267 = scmp.eq.s32.totalorder %s40, 1
    %p268 = por %p266, %p267
    %p269 = scmp.ne.s32.totalorder %s260, %s261
    %p270 = scmp.eq.s32.totalorder %s40, 0
    %p271 = por %p269, %p270
    %p272 = scmp.ne.s32.totalorder %s260, %s261
    %p273 = scmp.eq.s32.totalorder %s41, 1
    %p274 = por %p272, %p273
    %p276 = scmp.ne.s32.totalorder %s261, %s275
    %p277 = scmp.eq.s32.totalorder %s41, 0
    %p278 = por %p276, %p277
    %s280 = sadd.s32 %s279, 1
    %p283 = scmp.eq.s32.totalorder %s35, 1
    %p284 = scmp.ne.s32.totalorder %s279, %s281
    %p285 = scmp.eq.s32.totalorder %s35, 0
    %p286 = por %p284, %p285
    %p287 = scmp.ne.s32.totalorder %s279, %s281
    %p288 = scmp.eq.s32.totalorder %s40, 1
    %p289 = por %p287, %p288
    %p290 = scmp.ne.s32.totalorder %s281, %s282
    %p291 = scmp.eq.s32.totalorder %s40, 0
    %p292 = por %p290, %p291
    %p293 = scmp.ne.s32.totalorder %s281, %s282
    %p294 = scmp.eq.s32.totalorder %s41, 1
    %p295 = por %p293, %p294
    %p297 = scmp.ne.s32.totalorder %s282, %s296
    %p298 = scmp.eq.s32.totalorder %s41, 0
    %p299 = por %p297, %p298
    %s301 = sadd.s32 %s300, 1
    %p304 = scmp.eq.s32.totalorder %s35, 1
    %p305 = scmp.ne.s32.totalorder %s300, %s302
    %p306 = scmp.eq.s32.totalorder %s35, 0
    %p307 = por %p305, %p306
    %p308 = scmp.ne.s32.totalorder %s300, %s302
    %p309 = scmp.eq.s32.totalorder %s40, 1
    %p310 = por %p308, %p309
    %p311 = scmp.ne.s32.totalorder %s302, %s303
    %p312 = scmp.eq.s32.totalorder %s40, 0
    %p313 = por %p311, %p312
    %p314 = scmp.ne.s32.totalorder %s302, %s303
    %p315 = scmp.eq.s32.totalorder %s41, 1
    %p316 = por %p314, %p315
    %p318 = scmp.ne.s32.totalorder %s303, %s317
    %p319 = scmp.eq.s32.totalorder %s41, 0
    %p320 = por %p318, %p319
    %s322 = sadd.s32 %s321, 1
    %p325 = scmp.eq.s32.totalorder %s35, 1
    %p326 = scmp.ne.s32.totalorder %s321, %s323
    %p327 = scmp.eq.s32.totalorder %s35, 0
    %p328 = por %p326, %p327
    %p329 = scmp.ne.s32.totalorder %s321, %s323
    %p330 = scmp.eq.s32.totalorder %s40, 1
    %p331 = por %p329, %p330
    %p332 = scmp.ne.s32.totalorder %s323, %s324
    %p333 = scmp.eq.s32.totalorder %s40, 0
    %p334 = por %p332, %p333
    %p335 = scmp.ne.s32.totalorder %s323, %s324
    %p336 = scmp.eq.s32.totalorder %s41, 1
    %p337 = por %p335, %p336
    %p339 = scmp.ne.s32.totalorder %s324, %s338
    %p340 = scmp.eq.s32.totalorder %s41, 0
    %p341 = por %p339, %p340
    %s343 = sadd.s32 %s342, 1
    %p346 = scmp.eq.s32.totalorder %s35, 1
    %p347 = scmp.ne.s32.totalorder %s342, %s344
    %p348 = scmp.eq.s32.totalorder %s35, 0
    %p349 = por %p347, %p348
    %p350 = scmp.ne.s32.totalorder %s342, %s344
    %p351 = scmp.eq.s32.totalorder %s40, 1
    %p352 = por %p350, %p351
    %p353 = scmp.ne.s32.totalorder %s344, %s345
    %p354 = scmp.eq.s32.totalorder %s40, 0
    %p355 = por %p353, %p354
    %p356 = scmp.ne.s32.totalorder %s344, %s345
    %p357 = scmp.eq.s32.totalorder %s41, 1
    %p358 = por %p356, %p357
    %p360 = scmp.ne.s32.totalorder %s345, %s359
    %p361 = scmp.eq.s32.totalorder %s41, 0
    %p362 = por %p360, %p361
    %s364 = sadd.s32 %s363, 1
    %p367 = scmp.eq.s32.totalorder %s35, 1
    %p368 = scmp.ne.s32.totalorder %s363, %s365
    %p369 = scmp.eq.s32.totalorder %s35, 0
    %p370 = por %p368, %p369
    %p371 = scmp.ne.s32.totalorder %s363, %s365
    %p372 = scmp.eq.s32.totalorder %s40, 1
    %p373 = por %p371, %p372
    %p374 = scmp.ne.s32.totalorder %s365, %s366
    %p375 = scmp.eq.s32.totalorder %s40, 0
    %p376 = por %p374, %p375
    %p377 = scmp.ne.s32.totalorder %s365, %s366
    %p378 = scmp.eq.s32.totalorder %s41, 1
    %p379 = por %p377, %p378
    %p381 = scmp.ne.s32.totalorder %s366, %s380
    %p382 = scmp.eq.s32.totalorder %s41, 0
    %p383 = por %p381, %p382
    %s385 = sadd.s32 %s384, 1
    %p388 = scmp.eq.s32.totalorder %s35, 1
    %p389 = scmp.ne.s32.totalorder %s384, %s386
    %p390 = scmp.eq.s32.totalorder %s35, 0
    %p391 = por %p389, %p390
    %p392 = scmp.ne.s32.totalorder %s384, %s386
    %p393 = scmp.eq.s32.totalorder %s40, 1
    %p394 = por %p392, %p393
    %p395 = scmp.ne.s32.totalorder %s386, %s387
    %p396 = scmp.eq.s32.totalorder %s40, 0
    %p397 = por %p395, %p396
    %p398 = scmp.ne.s32.totalorder %s386, %s387
    %p399 = scmp.eq.s32.totalorder %s41, 1
    %p400 = por %p398, %p399
    %p402 = scmp.ne.s32.totalorder %s387, %s401
    %p403 = scmp.eq.s32.totalorder %s41, 0
    %p404 = por %p402, %p403
    %s406 = sadd.s32 %s405, 1
    %p409 = scmp.eq.s32.totalorder %s35, 1
    %p410 = scmp.ne.s32.totalorder %s405, %s407
    %p411 = scmp.eq.s32.totalorder %s35, 0
    %p412 = por %p410, %p411
    %p413 = scmp.ne.s32.totalorder %s405, %s407
    %p414 = scmp.eq.s32.totalorder %s40, 1
    %p415 = por %p413, %p414
    %p416 = scmp.ne.s32.totalorder %s407, %s408
    %p417 = scmp.eq.s32.totalorder %s40, 0
    %p418 = por %p416, %p417
    %p419 = scmp.ne.s32.totalorder %s407, %s408
    %p420 = scmp.eq.s32.totalorder %s41, 1
    %p421 = por %p419, %p420
    %p423 = scmp.ne.s32.totalorder %s408, %s422
    %p424 = scmp.eq.s32.totalorder %s41, 0
    %p425 = por %p423, %p424
    %s427 = sadd.s32 %s426, 1
    %p430 = scmp.eq.s32.totalorder %s35, 1
    %p431 = scmp.ne.s32.totalorder %s426, %s428
    %p432 = scmp.eq.s32.totalorder %s35, 0
    %p433 = por %p431, %p432
    %p434 = scmp.ne.s32.totalorder %s426, %s428
    %p435 = scmp.eq.s32.totalorder %s40, 1
    %p436 = por %p434, %p435
    %p437 = scmp.ne.s32.totalorder %s428, %s429
    %p438 = scmp.eq.s32.totalorder %s40, 0
    %p439 = por %p437, %p438
    %p440 = scmp.ne.s32.totalorder %s428, %s429
    %p441 = scmp.eq.s32.totalorder %s41, 1
    %p442 = por %p440, %p441
    %p444 = scmp.ne.s32.totalorder %s429, %s443
    %p445 = scmp.eq.s32.totalorder %s41, 0
    %p446 = por %p444, %p445
    %s448 = sadd.s32 %s447, 1
    %p451 = scmp.eq.s32.totalorder %s35, 1
    %p452 = scmp.ne.s32.totalorder %s447, %s449
    %p453 = scmp.eq.s32.totalorder %s35, 0
    %p454 = por %p452, %p453
    %p455 = scmp.ne.s32.totalorder %s447, %s449
    %p456 = scmp.eq.s32.totalorder %s40, 1
    %p457 = por %p455, %p456
    %p458 = scmp.ne.s32.totalorder %s449, %s450
    %p459 = scmp.eq.s32.totalorder %s40, 0
    %p460 = por %p458, %p459
    %p461 = scmp.ne.s32.totalorder %s449, %s450
    %p462 = scmp.eq.s32.totalorder %s41, 1
    %p463 = por %p461, %p462
    %p465 = scmp.ne.s32.totalorder %s450, %s464
    %p466 = scmp.eq.s32.totalorder %s41, 0
    %p467 = por %p465, %p466
    %s469 = sadd.s32 %s468, 1
    %p472 = scmp.eq.s32.totalorder %s35, 1
    %p473 = scmp.ne.s32.totalorder %s468, %s470
    %p474 = scmp.eq.s32.totalorder %s35, 0
    %p475 = por %p473, %p474
    %p476 = scmp.ne.s32.totalorder %s468, %s470
    %p477 = scmp.eq.s32.totalorder %s40, 1
    %p478 = por %p476, %p477
    %p479 = scmp.ne.s32.totalorder %s470, %s471
    %p480 = scmp.eq.s32.totalorder %s40, 0
    %p481 = por %p479, %p480
    %p482 = scmp.ne.s32.totalorder %s470, %s471
    %p483 = scmp.eq.s32.totalorder %s41, 1
    %p484 = por %p482, %p483
    %p486 = scmp.ne.s32.totalorder %s471, %s485
    %p487 = scmp.eq.s32.totalorder %s41, 0
    %p488 = por %p486, %p487
    %s490 = sadd.s32 %s489, 1
    %p493 = scmp.eq.s32.totalorder %s35, 1
    %p494 = scmp.ne.s32.totalorder %s489, %s491
    %p495 = scmp.eq.s32.totalorder %s35, 0
    %p496 = por %p494, %p495
    %p497 = scmp.ne.s32.totalorder %s489, %s491
    %p498 = scmp.eq.s32.totalorder %s40, 1
    %p499 = por %p497, %p498
    %p500 = scmp.ne.s32.totalorder %s491, %s492
    %p501 = scmp.eq.s32.totalorder %s40, 0
    %p502 = por %p500, %p501
    %p503 = scmp.ne.s32.totalorder %s491, %s492
    %p504 = scmp.eq.s32.totalorder %s41, 1
    %p505 = por %p503, %p504
    %p507 = scmp.ne.s32.totalorder %s492, %s506
    %p508 = scmp.eq.s32.totalorder %s41, 0
    %p509 = por %p507, %p508
    %s511 = sadd.s32 %s510, 1
    %p514 = scmp.eq.s32.totalorder %s35, 1
    %p515 = scmp.ne.s32.totalorder %s510, %s512
    %p516 = scmp.eq.s32.totalorder %s35, 0
    %p517 = por %p515, %p516
    %p518 = scmp.ne.s32.totalorder %s510, %s512
    %p519 = scmp.eq.s32.totalorder %s40, 1
    %p520 = por %p518, %p519
    %p521 = scmp.ne.s32.totalorder %s512, %s513
    %p522 = scmp.eq.s32.totalorder %s40, 0
    %p523 = por %p521, %p522
    %p524 = scmp.ne.s32.totalorder %s512, %s513
    %p525 = scmp.eq.s32.totalorder %s41, 1
    %p526 = por %p524, %p525
    %p528 = scmp.ne.s32.totalorder %s513, %s527
    %p529 = scmp.eq.s32.totalorder %s41, 0
    %p530 = por %p528, %p529
    %s532 = sadd.s32 %s531, 1
    %p535 = scmp.eq.s32.totalorder %s35, 1
    %p536 = scmp.ne.s32.totalorder %s531, %s533
    %p537 = scmp.eq.s32.totalorder %s35, 0
    %p538 = por %p536, %p537
    %p539 = scmp.ne.s32.totalorder %s531, %s533
    %p540 = scmp.eq.s32.totalorder %s40, 1
    %p541 = por %p539, %p540
    %p542 = scmp.ne.s32.totalorder %s533, %s534
    %p543 = scmp.eq.s32.totalorder %s40, 0
    %p544 = por %p542, %p543
    %p545 = scmp.ne.s32.totalorder %s533, %s534
    %p546 = scmp.eq.s32.totalorder %s41, 1
    %p547 = por %p545, %p546
    %p549 = scmp.ne.s32.totalorder %s534, %s548
    %p550 = scmp.eq.s32.totalorder %s41, 0
    %p551 = por %p549, %p550
    %s553 = sadd.s32 %s552, 1
    %p556 = scmp.eq.s32.totalorder %s35, 1
    %p557 = scmp.ne.s32.totalorder %s552, %s554
    %p558 = scmp.eq.s32.totalorder %s35, 0
    %p559 = por %p557, %p558
    %p560 = scmp.ne.s32.totalorder %s552, %s554
    %p561 = scmp.eq.s32.totalorder %s40, 1
    %p562 = por %p560, %p561
    %p563 = scmp.ne.s32.totalorder %s554, %s555
    %p564 = scmp.eq.s32.totalorder %s40, 0
    %p565 = por %p563, %p564
    %p566 = scmp.ne.s32.totalorder %s554, %s555
    %p567 = scmp.eq.s32.totalorder %s41, 1
    %p568 = por %p566, %p567
    %p570 = scmp.ne.s32.totalorder %s555, %s569
    %p571 = scmp.eq.s32.totalorder %s41, 0
    %p572 = por %p570, %p571
    %s574 = sadd.s32 %s573, 1
    %p577 = scmp.eq.s32.totalorder %s35, 1
    %p578 = scmp.ne.s32.totalorder %s573, %s575
    %p579 = scmp.eq.s32.totalorder %s35, 0
    %p580 = por %p578, %p579
    %p581 = scmp.ne.s32.totalorder %s573, %s575
    %p582 = scmp.eq.s32.totalorder %s40, 1
    %p583 = por %p581, %p582
    %p584 = scmp.ne.s32.totalorder %s575, %s576
    %p585 = scmp.eq.s32.totalorder %s40, 0
    %p586 = por %p584, %p585
    %p587 = scmp.ne.s32.totalorder %s575, %s576
    %p588 = scmp.eq.s32.totalorder %s41, 1
    %p589 = por %p587, %p588
    %p591 = scmp.ne.s32.totalorder %s576, %s590
    %p592 = scmp.eq.s32.totalorder %s41, 0
    %p593 = por %p591, %p592
    %s595 = sadd.s32 %s594, 1
    %p598 = scmp.eq.s32.totalorder %s35, 1
    %p599 = scmp.ne.s32.totalorder %s594, %s596
    %p600 = scmp.eq.s32.totalorder %s35, 0
    %p601 = por %p599, %p600
    %p602 = scmp.ne.s32.totalorder %s594, %s596
    %p603 = scmp.eq.s32.totalorder %s40, 1
    %p604 = por %p602, %p603
    %p605 = scmp.ne.s32.totalorder %s596, %s597
    %p606 = scmp.eq.s32.totalorder %s40, 0
    %p607 = por %p605, %p606
    %p608 = scmp.ne.s32.totalorder %s596, %s597
    %p609 = scmp.eq.s32.totalorder %s41, 1
    %p610 = por %p608, %p609
    %p612 = scmp.ne.s32.totalorder %s597, %s611
    %p613 = scmp.eq.s32.totalorder %s41, 0
    %p614 = por %p612, %p613
    %s615 = ssub.s32 %s35, %s42
    %p616 = scmp.eq.s32.totalorder %s615, 0
    %s618 = sadd.s32 %s617, 1
    %s619 = scalar_select %p616, %s617, %s618
    %p622 = pneg %p616
    %p623 = scmp.eq.s32.totalorder %s35, 1
    %p624 = por %p622, %p623
    %p625 = scmp.ne.s32.totalorder %s617, %s620
    %p626 = scmp.eq.s32.totalorder %s35, 0
    %p627 = por %p625, %p626
    %p628 = scmp.ne.s32.totalorder %s617, %s620
    %p629 = scmp.eq.s32.totalorder %s40, 1
    %p630 = por %p628, %p629
    %p631 = scmp.ne.s32.totalorder %s620, %s621
    %p632 = scmp.eq.s32.totalorder %s40, 0
    %p633 = por %p631, %p632
    %p634 = scmp.ne.s32.totalorder %s620, %s621
    %p635 = scmp.eq.s32.totalorder %s41, 1
    %p636 = por %p634, %p635
    %p638 = scmp.ne.s32.totalorder %s621, %s637
    %p639 = scmp.eq.s32.totalorder %s41, 0
    %p640 = por %p638, %p639
    %s641 = ssub.s32 %s35, %s42
    %p642 = scmp.eq.s32.totalorder %s641, 0
    %s644 = sadd.s32 %s643, 1
    %s645 = scalar_select %p642, %s643, %s644
    %p648 = pneg %p642
    %p649 = scmp.eq.s32.totalorder %s35, 1
    %p650 = por %p648, %p649
    %p651 = scmp.ne.s32.totalorder %s643, %s646
    %p652 = scmp.eq.s32.totalorder %s35, 0
    %p653 = por %p651, %p652
    %p654 = scmp.ne.s32.totalorder %s643, %s646
    %p655 = scmp.eq.s32.totalorder %s40, 1
    %p656 = por %p654, %p655
    %p657 = scmp.ne.s32.totalorder %s646, %s647
    %p658 = scmp.eq.s32.totalorder %s40, 0
    %p659 = por %p657, %p658
    %p660 = scmp.ne.s32.totalorder %s646, %s647
    %p661 = scmp.eq.s32.totalorder %s41, 1
    %p662 = por %p660, %p661
    %p664 = scmp.ne.s32.totalorder %s647, %s663
    %p665 = scmp.eq.s32.totalorder %s41, 0
    %p666 = por %p664, %p665
    %p667 = scmp.le.s32.totalorder 1, %s35
    %p668 = scmp.lt.s32.totalorder %s35, 3
    %p669 = pnand %p667, %p668
    %p670 = pneg %p669
    // Predicated region
    $region9: #{nas_unet_forward.1} parent=5 // pred_check
      _
    $region10: #{nas_unet_forward.1} parent=5 // pred_check_branch
      %672 = sbr.rel (%p669) target = $region12
    $region11: #{nas_unet_forward.1} parent=5 // pred_region
      %s673 = ssub.s32 %s35, 1
      // Predicated region
      $region13: #{nas_unet_forward.1} parent=11 // pred_check
        %p674 = pneg %p82
      $region14: #{nas_unet_forward.1} parent=11 // pred_check_branch
        %676 = sbr.rel (%p674) target = $region16
      $region15: #{nas_unet_forward.1} parent=11 // pred_region
        _
      $region16: #{nas_unet_forward.1} parent=11 // pred_fallthru
        _
      // Predicated region
      $region17: #{nas_unet_forward.1} parent=11 // pred_check
        %p677 = pneg %p103
      $region18: #{nas_unet_forward.1} parent=11 // pred_check_branch
        %679 = sbr.rel (%p677) target = $region20
      $region19: #{nas_unet_forward.1} parent=11 // pred_region
        _
      $region20: #{nas_unet_forward.1} parent=11 // pred_fallthru
        _
      // Predicated region
      $region21: #{nas_unet_forward.1} parent=11 // pred_check
        %p680 = pneg %p124
      $region22: #{nas_unet_forward.1} parent=11 // pred_check_branch
        %682 = sbr.rel (%p680) target = $region24
      $region23: #{nas_unet_forward.1} parent=11 // pred_region
        _
      $region24: #{nas_unet_forward.1} parent=11 // pred_fallthru
        _
      // Predicated region
      $region25: #{nas_unet_forward.1} parent=11 // pred_check
        %p683 = pneg %p145
      $region26: #{nas_unet_forward.1} parent=11 // pred_check_branch
        %685 = sbr.rel (%p683) target = $region28
      $region27: #{nas_unet_forward.1} parent=11 // pred_region
        _
      $region28: #{nas_unet_forward.1} parent=11 // pred_fallthru
        _
      // Predicated region
      $region29: #{nas_unet_forward.1} parent=11 // pred_check
        %p686 = pneg %p166
      $region30: #{nas_unet_forward.1} parent=11 // pred_check_branch
        %688 = sbr.rel (%p686) target = $region32
      $region31: #{nas_unet_forward.1} parent=11 // pred_region
        _
      $region32: #{nas_unet_forward.1} parent=11 // pred_fallthru
        _
      // Predicated region
      $region33: #{nas_unet_forward.1} parent=11 // pred_check
        %p689 = pneg %p187
      $region34: #{nas_unet_forward.1} parent=11 // pred_check_branch
        %691 = sbr.rel (%p689) target = $region36
      $region35: #{nas_unet_forward.1} parent=11 // pred_region
        _
      $region36: #{nas_unet_forward.1} parent=11 // pred_fallthru
        _
      // Predicated region
      $region37: #{nas_unet_forward.1} parent=11 // pred_check
        %p692 = pneg %p208
      $region38: #{nas_unet_forward.1} parent=11 // pred_check_branch
        %694 = sbr.rel (%p692) target = $region40
      $region39: #{nas_unet_forward.1} parent=11 // pred_region
        _
      $region40: #{nas_unet_forward.1} parent=11 // pred_fallthru
        _
      // Predicated region
      $region41: #{nas_unet_forward.1} parent=11 // pred_check
        %p695 = pneg %p229
      $region42: #{nas_unet_forward.1} parent=11 // pred_check_branch
        %697 = sbr.rel (%p695) target = $region44
      $region43: #{nas_unet_forward.1} parent=11 // pred_region
        _
      $region44: #{nas_unet_forward.1} parent=11 // pred_fallthru
        _
      // Predicated region
      $region45: #{nas_unet_forward.1} parent=11 // pred_check
        %p698 = pneg %p250
      $region46: #{nas_unet_forward.1} parent=11 // pred_check_branch
        %700 = sbr.rel (%p698) target = $region48
      $region47: #{nas_unet_forward.1} parent=11 // pred_region
        _
      $region48: #{nas_unet_forward.1} parent=11 // pred_fallthru
        _
      // Predicated region
      $region49: #{nas_unet_forward.1} parent=11 // pred_check
        %p701 = pneg %p271
      $region50: #{nas_unet_forward.1} parent=11 // pred_check_branch
        %703 = sbr.rel (%p701) target = $region52
      $region51: #{nas_unet_forward.1} parent=11 // pred_region
        _
      $region52: #{nas_unet_forward.1} parent=11 // pred_fallthru
        _
      // Predicated region
      $region53: #{nas_unet_forward.1} parent=11 // pred_check
        %p704 = pneg %p292
      $region54: #{nas_unet_forward.1} parent=11 // pred_check_branch
        %706 = sbr.rel (%p704) target = $region56
      $region55: #{nas_unet_forward.1} parent=11 // pred_region
        _
      $region56: #{nas_unet_forward.1} parent=11 // pred_fallthru
        _
      // Predicated region
      $region57: #{nas_unet_forward.1} parent=11 // pred_check
        %p707 = pneg %p313
      $region58: #{nas_unet_forward.1} parent=11 // pred_check_branch
        %709 = sbr.rel (%p707) target = $region60
      $region59: #{nas_unet_forward.1} parent=11 // pred_region
        _
      $region60: #{nas_unet_forward.1} parent=11 // pred_fallthru
        _
      // Predicated region
      $region61: #{nas_unet_forward.1} parent=11 // pred_check
        %p710 = pneg %p334
      $region62: #{nas_unet_forward.1} parent=11 // pred_check_branch
        %712 = sbr.rel (%p710) target = $region64
      $region63: #{nas_unet_forward.1} parent=11 // pred_region
        _
      $region64: #{nas_unet_forward.1} parent=11 // pred_fallthru
        _
      // Predicated region
      $region65: #{nas_unet_forward.1} parent=11 // pred_check
        %p713 = pneg %p355
      $region66: #{nas_unet_forward.1} parent=11 // pred_check_branch
        %715 = sbr.rel (%p713) target = $region68
      $region67: #{nas_unet_forward.1} parent=11 // pred_region
        _
      $region68: #{nas_unet_forward.1} parent=11 // pred_fallthru
        _
      // Predicated region
      $region69: #{nas_unet_forward.1} parent=11 // pred_check
        %p716 = pneg %p376
      $region70: #{nas_unet_forward.1} parent=11 // pred_check_branch
        %718 = sbr.rel (%p716) target = $region72
      $region71: #{nas_unet_forward.1} parent=11 // pred_region
        _
      $region72: #{nas_unet_forward.1} parent=11 // pred_fallthru
        _
      // Predicated region
      $region73: #{nas_unet_forward.1} parent=11 // pred_check
        %p719 = pneg %p397
      $region74: #{nas_unet_forward.1} parent=11 // pred_check_branch
        %721 = sbr.rel (%p719) target = $region76
      $region75: #{nas_unet_forward.1} parent=11 // pred_region
        _
      $region76: #{nas_unet_forward.1} parent=11 // pred_fallthru
        _
      // Predicated region
      $region77: #{nas_unet_forward.1} parent=11 // pred_check
        %p722 = pneg %p418
      $region78: #{nas_unet_forward.1} parent=11 // pred_check_branch
        %724 = sbr.rel (%p722) target = $region80
      $region79: #{nas_unet_forward.1} parent=11 // pred_region
        _
      $region80: #{nas_unet_forward.1} parent=11 // pred_fallthru
        _
      // Predicated region
      $region81: #{nas_unet_forward.1} parent=11 // pred_check
        %p725 = pneg %p439
      $region82: #{nas_unet_forward.1} parent=11 // pred_check_branch
        %727 = sbr.rel (%p725) target = $region84
      $region83: #{nas_unet_forward.1} parent=11 // pred_region
        _
      $region84: #{nas_unet_forward.1} parent=11 // pred_fallthru
        _
      // Predicated region
      $region85: #{nas_unet_forward.1} parent=11 // pred_check
        %p728 = pneg %p460
      $region86: #{nas_unet_forward.1} parent=11 // pred_check_branch
        %730 = sbr.rel (%p728) target = $region88
      $region87: #{nas_unet_forward.1} parent=11 // pred_region
        _
      $region88: #{nas_unet_forward.1} parent=11 // pred_fallthru
        _
      // Predicated region
      $region89: #{nas_unet_forward.1} parent=11 // pred_check
        %p731 = pneg %p481
      $region90: #{nas_unet_forward.1} parent=11 // pred_check_branch
        %733 = sbr.rel (%p731) target = $region92
      $region91: #{nas_unet_forward.1} parent=11 // pred_region
        _
      $region92: #{nas_unet_forward.1} parent=11 // pred_fallthru
        _
      // Predicated region
      $region93: #{nas_unet_forward.1} parent=11 // pred_check
        %p734 = pneg %p502
      $region94: #{nas_unet_forward.1} parent=11 // pred_check_branch
        %736 = sbr.rel (%p734) target = $region96
      $region95: #{nas_unet_forward.1} parent=11 // pred_region
        _
      $region96: #{nas_unet_forward.1} parent=11 // pred_fallthru
        _
      // Predicated region
      $region97: #{nas_unet_forward.1} parent=11 // pred_check
        %p737 = pneg %p523
      $region98: #{nas_unet_forward.1} parent=11 // pred_check_branch
        %739 = sbr.rel (%p737) target = $region100
      $region99: #{nas_unet_forward.1} parent=11 // pred_region
        _
      $region100: #{nas_unet_forward.1} parent=11 // pred_fallthru
        _
      // Predicated region
      $region101: #{nas_unet_forward.1} parent=11 // pred_check
        %p740 = pneg %p544
      $region102: #{nas_unet_forward.1} parent=11 // pred_check_branch
        %742 = sbr.rel (%p740) target = $region104
      $region103: #{nas_unet_forward.1} parent=11 // pred_region
        _
      $region104: #{nas_unet_forward.1} parent=11 // pred_fallthru
        _
      // Predicated region
      $region105: #{nas_unet_forward.1} parent=11 // pred_check
        %p743 = pneg %p565
      $region106: #{nas_unet_forward.1} parent=11 // pred_check_branch
        %745 = sbr.rel (%p743) target = $region108
      $region107: #{nas_unet_forward.1} parent=11 // pred_region
        _
      $region108: #{nas_unet_forward.1} parent=11 // pred_fallthru
        _
      // Predicated region
      $region109: #{nas_unet_forward.1} parent=11 // pred_check
        %p746 = pneg %p586
      $region110: #{nas_unet_forward.1} parent=11 // pred_check_branch
        %748 = sbr.rel (%p746) target = $region112
      $region111: #{nas_unet_forward.1} parent=11 // pred_region
        _
      $region112: #{nas_unet_forward.1} parent=11 // pred_fallthru
        _
      // Predicated region
      $region113: #{nas_unet_forward.1} parent=11 // pred_check
        %p749 = pneg %p607
      $region114: #{nas_unet_forward.1} parent=11 // pred_check_branch
        %751 = sbr.rel (%p749) target = $region116
      $region115: #{nas_unet_forward.1} parent=11 // pred_region
        _
      $region116: #{nas_unet_forward.1} parent=11 // pred_fallthru
        _
    $region12: #{nas_unet_forward.1} parent=5 // pred_fallthru
      _
    %p752 = scmp.lt.s32.totalorder %s35, 2
    // Predicated region
    $region117: #{nas_unet_forward.1} parent=5 // pred_check
      %p753 = pneg %p752
    $region118: #{nas_unet_forward.1} parent=5 // pred_check_branch
      %755 = sbr.rel (%p753) target = $region120
    $region119: #{nas_unet_forward.1} parent=5 // pred_region
      // Predicated region
      $region121: #{nas_unet_forward.1} parent=119 // pred_check
        %p756 = pneg %p55
      $region122: #{nas_unet_forward.1} parent=119 // pred_check_branch
        %758 = sbr.rel (%p756) target = $region124
      $region123: #{nas_unet_forward.1} parent=119 // pred_region
        %p759 = scmp.lt.s32.totalorder %s35, 1
        %s760 = scalar_select %p759, %s35, 1
        %s761 = smul.addr %s760, 2
        %s762 = smul.addr %s761, 4
        %s763 = scalar_lea.vmem %s0, %s762
      $region124: #{nas_unet_forward.1} parent=119 // pred_fallthru
        _
    $region120: #{nas_unet_forward.1} parent=5 // pred_fallthru
      _
    %p764 = scmp.le.s32.totalorder 1, %s35
    %p765 = scmp.lt.s32.totalorder %s35, 3
    %p766 = pnand %p764, %p765
    %p767 = pneg %p766
    // Predicated region
    $region125: #{nas_unet_forward.1} parent=5 // pred_check
      _
    $region126: #{nas_unet_forward.1} parent=5 // pred_check_branch
      %769 = sbr.rel (%p766) target = $region128
    $region127: #{nas_unet_forward.1} parent=5 // pred_region
      %s770 = ssub.s32 %s35, 1
      %p771 = scmp.lt.s32.totalorder %s40, 1
      %s772 = scalar_select %p771, %s40, 1
      %s773 = smul.addr %s772, 2
      %s774 = smul.addr %s773, 4
      %s775 = scalar_lea.vmem %s0, %s774
      %p776 = pneg %p61
      %p777 = pneg %p58
      %p778 = pneg %p82
      %p779 = pneg %p79
      %p780 = pneg %p103
      %p781 = pneg %p100
      %p782 = pneg %p124
      %p783 = pneg %p121
      %p784 = pneg %p145
      %p785 = pneg %p142
      %p786 = pneg %p166
      %p787 = pneg %p163
      %p788 = pneg %p187
      %p789 = pneg %p184
      %p790 = pneg %p208
      %p791 = pneg %p205
      %p792 = pneg %p229
      %p793 = pneg %p226
      %p794 = pneg %p250
      %p795 = pneg %p247
      %p796 = pneg %p271
      %p797 = pneg %p268
      %p798 = pneg %p292
      %p799 = pneg %p289
      %p800 = pneg %p313
      %p801 = pneg %p310
      %p802 = pneg %p334
      %p803 = pneg %p331
      %p804 = pneg %p355
      %p805 = pneg %p352
      %p806 = pneg %p376
      %p807 = pneg %p373
      %p808 = pneg %p397
      %p809 = pneg %p394
      %p810 = pneg %p418
      %p811 = pneg %p415
      %p812 = pneg %p439
      %p813 = pneg %p436
      %p814 = pneg %p460
      %p815 = pneg %p457
      %p816 = pneg %p481
      %p817 = pneg %p478
      %p818 = pneg %p502
      %p819 = pneg %p499
      %p820 = pneg %p523
      %p821 = pneg %p520
      %p822 = pneg %p544
      %p823 = pneg %p541
      %p824 = pneg %p565
      %p825 = pneg %p562
      %p826 = pneg %p586
      %p827 = pneg %p583
      %p828 = pneg %p607
      %p829 = pneg %p604
      %p830 = pneg %p633
      %p831 = pneg %p630
      %p832 = scmp.lt.s32.totalorder %s40, 1
      %s833 = scalar_select %p832, %s40, 1
      %s834 = smul.addr %s833, 2
      %s835 = smul.addr %s834, 4
      %s836 = scalar_lea.vmem %s27, %s835
      %p837 = pneg %p659
      %p838 = pneg %p656
      %p839 = scmp.lt.s32.totalorder %s40, 1
      %s840 = scalar_select %p839, %s40, 1
      %s841 = smul.addr %s840, 4
      %s842 = scalar_lea.vmem %s28, %s841
      %p843 = scmp.lt.s32.totalorder %s40, 1
      %s844 = scalar_select %p843, %s40, 1
      %s845 = smul.addr %s844, 2
      %s846 = smul.addr %s845, 4
      %s847 = scalar_lea.vmem %s0, %s846
      %p848 = scmp.lt.s32.totalorder %s40, 1
      %s849 = scalar_select %p848, %s40, 1
      %s850 = smul.addr %s849, 2
      %s851 = smul.addr %s850, 4
      %s852 = scalar_lea.vmem %s27, %s851
      %p853 = scmp.lt.s32.totalorder %s40, 1
      %s854 = scalar_select %p853, %s40, 1
      %s855 = smul.addr %s854, 4
      %s856 = scalar_lea.vmem %s28, %s855
      %vm858 = vcmask 1048320
      %859 = vst.msk [vmem:[#allocation2] sm:$0xff] %vm858, 0.0
      %860 = vst.msk [vmem:[#allocation2 + $0x20] sm:$0xff] %vm858, 0.0
      %861 = vst.msk [vmem:[#allocation2 + $0x40] sm:$0xff] %vm858, 0.0
      %862 = vst.msk [vmem:[#allocation2 + $0x60] sm:$0xff] %vm858, 0.0
      %vm863 = vcmask 261120
      %864 = vst.msk [vmem:[#allocation2 + $0x18] sm:$0xff] %vm863, 0.0
      %865 = vst.msk [vmem:[#allocation2 + $0x38] sm:$0xff] %vm863, 0.0
      %866 = vst.msk [vmem:[#allocation2 + $0x58] sm:$0xff] %vm863, 0.0
      %867 = vst.msk [vmem:[#allocation2 + $0x78] sm:$0xff] %vm863, 0.0
      %v868 = vld [vmem:[%s847] sm:$0xff]
      %v869 = vlaneseq
      %v870 = vand.u32 %v869, 127
      %v871 = vadd.s32 %v870, 128
      %v872 = vshra.s32 %v870, 4
      %v873 = vshra.s32 %v871, 4
      %v874 = vand.u32 %v870, 15
      %v875 = vand.u32 %v871, 15
      %876 = vst [vmem:[#allocation3] sm:$0xff] 0.0
      %877 = vst [vmem:[#allocation3 + $0x8] sm:$0xff] 0.0
      %878 = vst [vmem:[#allocation3 + $0x10] sm:$0xff] 0.0
      %879 = vst [vmem:[#allocation3 + $0x18] sm:$0xff] 0.0
      %880 = vst [vmem:[#allocation3 + $0x20] sm:$0xff] 0.0
      %881 = vst [vmem:[#allocation3 + $0x28] sm:$0xff] 0.0
      %882 = vst [vmem:[#allocation3 + $0x30] sm:$0xff] 0.0
      %883 = vst [vmem:[#allocation3 + $0x38] sm:$0xff] 0.0
      %884 = vst [vmem:[#allocation3 + $0x40] sm:$0xff] 0.0
      %885 = vst [vmem:[#allocation3 + $0x48] sm:$0xff] 0.0
      %886 = vst [vmem:[#allocation3 + $0x50] sm:$0xff] 0.0
      %887 = vst [vmem:[#allocation3 + $0x58] sm:$0xff] 0.0
      %888 = vst [vmem:[#allocation3 + $0x60] sm:$0xff] 0.0
      %889 = vst [vmem:[#allocation3 + $0x68] sm:$0xff] 0.0
      %890 = vst [vmem:[#allocation3 + $0x70] sm:$0xff] 0.0
      %891 = vst [vmem:[#allocation3 + $0x78] sm:$0xff] 0.0
      %892 = vst [vmem:[#allocation3 + $0x80] sm:$0xff] 0.0
      %893 = vst [vmem:[#allocation3 + $0x88] sm:$0xff] 0.0
      %v895 = vcombine.high %v868, %v868
      %897 = vst [vmem:[#allocation2 + $0x8] sm:$0xf] %v868
      %898 = vst [vmem:[#allocation2 + $0x10] sm:$0xf] %v895
      %v899 = vld [vmem:[#allocation2] sm:$0xf]
      %v900 = vld [vmem:[#allocation2 + $0x8] sm:$0xf]
      %v901 = vld [vmem:[#allocation2 + $0x10] sm:$0xf]
      %vm902 = vcmp.gt.s32.totalorder %v872, 0
      %vm903 = vcmp.gt.s32.totalorder %v873, 0
      %vm904 = vcmp.gt.s32.totalorder %v874, 0
      %vm905 = vcmp.gt.s32.totalorder %v875, 0
      %vm906 = vmand %vm902, %vm904
      %vm907 = vmand %vm903, %vm905
      %v908 = vsel %vm906, 1, 0
      %v909 = vsel %vm907, 1, 0
      %vm910 = vcmp.eq.s32.totalorder %v908, 1
      %vm911 = vcmp.eq.s32.totalorder %v909, 1
      %915 = vrot.lane.b32.xlu0 %v899, 17
      %v916 = vpop.permute.xlu0 %915
      %917 = vrot.lane.b32.xlu0 %v900, 17
      %v918 = vpop.permute.xlu0 %917
      %919 = vrot.lane.b32.xlu0 %v901, 17
      %v920 = vpop.permute.xlu0 %919
      %vm921 = vcmask 138240
      %v922 = vsel %vm921, %v916, %v918
      %v923 = vsel %vm921, %v918, %v920
      %v926 = vsel %vm910, %v922, 0.0
      %v927 = vsel %vm911, %v923, 0.0
      %928 = vst [vmem:[#allocation3] sm:$0xf] %v926
      %929 = vst [vmem:[#allocation3 + $0x8] sm:$0xf] %v927
      %v930 = vld [vmem:[#allocation2] sm:$0xf]
      %v931 = vld [vmem:[#allocation2 + $0x8] sm:$0xf]
      %v932 = vld [vmem:[#allocation2 + $0x10] sm:$0xf]
      %v933 = vsel %vm902, 1, 0
      %v934 = vsel %vm903, 1, 0
      %vm935 = vcmp.eq.s32.totalorder %v933, 1
      %vm936 = vcmp.eq.s32.totalorder %v934, 1
      %940 = vrot.lane.b32.xlu0 %v930, 16
      %v941 = vpop.permute.xlu0 %940
      %942 = vrot.lane.b32.xlu0 %v931, 16
      %v943 = vpop.permute.xlu0 %942
      %944 = vrot.lane.b32.xlu0 %v932, 16
      %v945 = vpop.permute.xlu0 %944
      %vm946 = vcmask 130048
      %v947 = vsel %vm946, %v941, %v943
      %v948 = vsel %vm946, %v943, %v945
      %v951 = vsel %vm935, %v947, 0.0
      %v952 = vsel %vm936, %v948, 0.0
      %953 = vst [vmem:[#allocation3 + $0x10] sm:$0xf] %v951
      %954 = vst [vmem:[#allocation3 + $0x18] sm:$0xf] %v952
      %v955 = vld [vmem:[#allocation2] sm:$0xf]
      %v956 = vld [vmem:[#allocation2 + $0x8] sm:$0xf]
      %v957 = vld [vmem:[#allocation2 + $0x10] sm:$0xf]
      %vm958 = vcmp.lt.s32.totalorder %v874, 15
      %vm959 = vcmp.lt.s32.totalorder %v875, 15
      %vm960 = vmand %vm902, %vm958
      %vm961 = vmand %vm903, %vm959
      %v962 = vsel %vm960, 1, 0
      %v963 = vsel %vm961, 1, 0
      %vm964 = vcmp.eq.s32.totalorder %v962, 1
      %vm965 = vcmp.eq.s32.totalorder %v963, 1
      %969 = vrot.lane.b32.xlu0 %v955, 15
      %v970 = vpop.permute.xlu0 %969
      %971 = vrot.lane.b32.xlu0 %v956, 15
      %v972 = vpop.permute.xlu0 %971
      %973 = vrot.lane.b32.xlu0 %v957, 15
      %v974 = vpop.permute.xlu0 %973
      %vm975 = vcmask 121856
      %v976 = vsel %vm975, %v970, %v972
      %v977 = vsel %vm975, %v972, %v974
      %v980 = vsel %vm964, %v976, 0.0
      %v981 = vsel %vm965, %v977, 0.0
      %982 = vst [vmem:[#allocation3 + $0x20] sm:$0xf] %v980
      %983 = vst [vmem:[#allocation3 + $0x28] sm:$0xf] %v981
      %v984 = vld [vmem:[#allocation2] sm:$0xf]
      %v985 = vld [vmem:[#allocation2 + $0x8] sm:$0xf]
      %v986 = vld [vmem:[#allocation2 + $0x10] sm:$0xf]
      %v987 = vsel %vm904, 1, 0
      %v988 = vsel %vm905, 1, 0
      %vm989 = vcmp.eq.s32.totalorder %v987, 1
      %vm990 = vcmp.eq.s32.totalorder %v988, 1
      %994 = vrot.lane.b32.xlu0 %v984, 1
      %v995 = vpop.permute.xlu0 %994
      %996 = vrot.lane.b32.xlu0 %v985, 1
      %v997 = vpop.permute.xlu0 %996
      %998 = vrot.lane.b32.xlu0 %v986, 1
      %v999 = vpop.permute.xlu0 %998
      %vm1000 = vcmask 7168
      %v1001 = vsel %vm1000, %v995, %v997
      %v1002 = vsel %vm1000, %v997, %v999
      %v1005 = vsel %vm989, %v1001, 0.0
      %v1006 = vsel %vm990, %v1002, 0.0
      %1007 = vst [vmem:[#allocation3 + $0x30] sm:$0xf] %v1005
      %1008 = vst [vmem:[#allocation3 + $0x38] sm:$0xf] %v1006
      %v1009 = vld [vmem:[#allocation2 + $0x8] sm:$0xf]
      %v1010 = vld [vmem:[#allocation2 + $0x10] sm:$0xf]
      %1011 = vst [vmem:[#allocation3 + $0x40] sm:$0xf] %v1009
      %1012 = vst [vmem:[#allocation3 + $0x48] sm:$0xf] %v1010
      %v1013 = vld [vmem:[#allocation2 + $0x8] sm:$0xf]
      %v1014 = vld [vmem:[#allocation2 + $0x10] sm:$0xf]
      %v1015 = vld [vmem:[#allocation2 + $0x18] sm:$0xf]
      %v1016 = vsel %vm958, 1, 0
      %v1017 = vsel %vm959, 1, 0
      %vm1018 = vcmp.eq.s32.totalorder %v1016, 1
      %vm1019 = vcmp.eq.s32.totalorder %v1017, 1
      %1023 = vrot.lane.b32.xlu0 %v1013, 127
      %v1024 = vpop.permute.xlu0 %1023
      %1025 = vrot.lane.b32.xlu0 %v1014, 127
      %v1026 = vpop.permute.xlu0 %1025
      %1027 = vrot.lane.b32.xlu0 %v1015, 127
      %v1028 = vpop.permute.xlu0 %1027
      %vm1029 = vcmask 1039360
      %v1030 = vsel %vm1029, %v1024, %v1026
      %v1031 = vsel %vm1029, %v1026, %v1028
      %v1034 = vsel %vm1018, %v1030, 0.0
      %v1035 = vsel %vm1019, %v1031, 0.0
      %1036 = vst [vmem:[#allocation3 + $0x50] sm:$0xf] %v1034
      %1037 = vst [vmem:[#allocation3 + $0x58] sm:$0xf] %v1035
      %v1038 = vld [vmem:[#allocation2 + $0x8] sm:$0xf]
      %v1039 = vld [vmem:[#allocation2 + $0x10] sm:$0xf]
      %v1040 = vld [vmem:[#allocation2 + $0x18] sm:$0xf]
      %vm1041 = vcmp.lt.s32.totalorder %v872, 15
      %vm1042 = vcmp.lt.s32.totalorder %v873, 15
      %vm1043 = vmand %vm1041, %vm904
      %vm1044 = vmand %vm1042, %vm905
      %v1045 = vsel %vm1043, 1, 0
      %v1046 = vsel %vm1044, 1, 0
      %vm1047 = vcmp.eq.s32.totalorder %v1045, 1
      %vm1048 = vcmp.eq.s32.totalorder %v1046, 1
      %1052 = vrot.lane.b32.xlu0 %v1038, 113
      %v1053 = vpop.permute.xlu0 %1052
      %1054 = vrot.lane.b32.xlu0 %v1039, 113
      %v1055 = vpop.permute.xlu0 %1054
      %1056 = vrot.lane.b32.xlu0 %v1040, 113
      %v1057 = vpop.permute.xlu0 %1056
      %vm1058 = vcmask 924672
      %v1059 = vsel %vm1058, %v1053, %v1055
      %v1060 = vsel %vm1058, %v1055, %v1057
      %v1063 = vsel %vm1047, %v1059, 0.0
      %v1064 = vsel %vm1048, %v1060, 0.0
      %1065 = vst [vmem:[#allocation3 + $0x60] sm:$0xf] %v1063
      %1066 = vst [vmem:[#allocation3 + $0x68] sm:$0xf] %v1064
      %v1067 = vld [vmem:[#allocation2 + $0x8] sm:$0xf]
      %v1068 = vld [vmem:[#allocation2 + $0x10] sm:$0xf]
      %v1069 = vld [vmem:[#allocation2 + $0x18] sm:$0xf]
      %v1070 = vsel %vm1041, 1, 0
      %v1071 = vsel %vm1042, 1, 0
      %vm1072 = vcmp.eq.s32.totalorder %v1070, 1
      %vm1073 = vcmp.eq.s32.totalorder %v1071, 1
      %1077 = vrot.lane.b32.xlu0 %v1067, 112
      %v1078 = vpop.permute.xlu0 %1077
      %1079 = vrot.lane.b32.xlu0 %v1068, 112
      %v1080 = vpop.permute.xlu0 %1079
      %1081 = vrot.lane.b32.xlu0 %v1069, 112
      %v1082 = vpop.permute.xlu0 %1081
      %vm1083 = vcmask 916480
      %v1084 = vsel %vm1083, %v1078, %v1080
      %v1085 = vsel %vm1083, %v1080, %v1082
      %v1088 = vsel %vm1072, %v1084, 0.0
      %v1089 = vsel %vm1073, %v1085, 0.0
      %1090 = vst [vmem:[#allocation3 + $0x70] sm:$0xf] %v1088
      %1091 = vst [vmem:[#allocation3 + $0x78] sm:$0xf] %v1089
      %v1092 = vld [vmem:[#allocation2 + $0x8] sm:$0xf]
      %v1093 = vld [vmem:[#allocation2 + $0x10] sm:$0xf]
      %v1094 = vld [vmem:[#allocation2 + $0x18] sm:$0xf]
      %vm1095 = vmand %vm1041, %vm958
      %vm1096 = vmand %vm1042, %vm959
      %v1097 = vsel %vm1095, 1, 0
      %v1098 = vsel %vm1096, 1, 0
      %vm1099 = vcmp.eq.s32.totalorder %v1097, 1
      %vm1100 = vcmp.eq.s32.totalorder %v1098, 1
      %1104 = vrot.lane.b32.xlu0 %v1092, 111
      %v1105 = vpop.permute.xlu0 %1104
      %1106 = vrot.lane.b32.xlu0 %v1093, 111
      %v1107 = vpop.permute.xlu0 %1106
      %1108 = vrot.lane.b32.xlu0 %v1094, 111
      %v1109 = vpop.permute.xlu0 %1108
      %vm1110 = vcmask 908288
      %v1111 = vsel %vm1110, %v1105, %v1107
      %v1112 = vsel %vm1110, %v1107, %v1109
      %v1115 = vsel %vm1099, %v1111, 0.0
      %v1116 = vsel %vm1100, %v1112, 0.0
      %1117 = vst [vmem:[#allocation3 + $0x80] sm:$0xf] %v1115
      %1118 = vst [vmem:[#allocation3 + $0x88] sm:$0xf] %v1116
      %v1119 = vld [vmem:[%s1] sm:$0xf]
      %v1120 = vld [vmem:[#allocation3] sm:$0xff]
      %v1121 = vld [vmem:[#allocation3 + $0x8] sm:$0xff]
      %v1122 = vld [vmem:[#allocation3 + $0x10] sm:$0xff]
      %v1123 = vld [vmem:[#allocation3 + $0x18] sm:$0xff]
      %v1124 = vld [vmem:[#allocation3 + $0x20] sm:$0xff]
      %v1125 = vld [vmem:[#allocation3 + $0x28] sm:$0xff]
      %v1126 = vld [vmem:[#allocation3 + $0x30] sm:$0xff]
      %v1127 = vld [vmem:[#allocation3 + $0x38] sm:$0xff]
      %v1128 = vld [vmem:[#allocation3 + $0x40] sm:$0xff]
      %v1129 = vld [vmem:[#allocation3 + $0x48] sm:$0xff]
      %v1130 = vld [vmem:[#allocation3 + $0x50] sm:$0xff]
      %v1131 = vld [vmem:[#allocation3 + $0x58] sm:$0xff]
      %v1132 = vld [vmem:[#allocation3 + $0x60] sm:$0xff]
      %v1133 = vld [vmem:[#allocation3 + $0x68] sm:$0xff]
      %v1134 = vld [vmem:[#allocation3 + $0x70] sm:$0xff]
      %v1135 = vld [vmem:[#allocation3 + $0x78] sm:$0xff]
      %v1136 = vld [vmem:[#allocation3 + $0x80] sm:$0xff]
      %v1137 = vld [vmem:[#allocation3 + $0x88] sm:$0xff]
      %v1138 = vpack.c.bf16 %v1122, %v1120
      %v1139 = vpack.c.bf16 %v1123, %v1121
      %v1140 = vpack.c.bf16 %v1126, %v1124
      %v1141 = vpack.c.bf16 %v1127, %v1125
      %v1142 = vpack.c.bf16 %v1130, %v1128
      %v1143 = vpack.c.bf16 %v1131, %v1129
      %v1144 = vpack.c.bf16 %v1134, %v1132
      %v1145 = vpack.c.bf16 %v1135, %v1133
      %v1146 = vpack.c.bf16 %v1136, %v1136
      %v1147 = vpack.c.bf16 %v1137, %v1137
      %v1148 = vld [vmem:[%s2] sm:$0xff]
      %1150 = vset.pattern.permute.xlu0 0
      %1151 = vperm.xlu0 %1150, %v1148
      %v1152 = vpop.permute.xlu0 %1151
      %vm1154 = vcmask 588800
      %v1156 = vsel %vm1154, %v1119, 0
      %vm1158 = vcmask 1043456
      %v1160 = vsel %vm1158, %v1146, 0
      %v1163 = vsel %vm1158, %v1147, 0
      %1165 = vmatprep.subr.bf16.mxu0 0
      %1166 = vmatpush1.bf16.msra.mxu0 0
      %1167 = vmatprep.subr.bf16.mxu0 0
      %1168 = vmatpush1.bf16.msra.mxu0 0
      %1169 = vmatprep.subr.bf16.mxu0 0
      %1170 = vmatpush1.bf16.msra.mxu0 0
      %1171 = vmatprep.subr.bf16.mxu0 %v1163
      %1172 = vmatpush1.bf16.msra.mxu0 %v1160
      %1173 = vmatprep.subr.bf16.mxu0 %v1145
      %1174 = vmatpush1.bf16.msra.mxu0 %v1144
      %1175 = vmatprep.subr.bf16.mxu0 %v1143
      %1176 = vmatpush1.bf16.msra.mxu0 %v1142
      %1177 = vmatprep.subr.bf16.mxu0 %v1141
      %1178 = vmatpush1.bf16.msra.mxu0 %v1140
      %1179 = vmatprep.subr.bf16.mxu0 %v1139
      %1180 = vmatpush1.bf16.msra.mxu0 %v1138
      %1181 = vmatprep.subr.bf16.mxu0 0
      %1182 = vmatpush2.bf16.msra.mxu0 0
      %1183 = vmatprep.subr.bf16.mxu0 0
      %1184 = vmatpush2.bf16.msra.mxu0 0
      %1185 = vmatprep.subr.bf16.mxu0 0
      %1186 = vmatpush2.bf16.msra.mxu0 0
      %1187 = vmatprep.subr.bf16.mxu0 0
      %1188 = vmatpush2.bf16.msra.mxu0 0
      %1189 = vmatprep.subr.bf16.mxu0 0
      %1190 = vmatpush2.bf16.msra.mxu0 0
      %1191 = vmatprep.subr.bf16.mxu0 0
      %1192 = vmatpush2.bf16.msra.mxu0 0
      %1193 = vmatprep.subr.bf16.mxu0 0
      %1194 = vmatpush2.bf16.msra.mxu0 0
      %1195 = vmatprep.subr.bf16.mxu0 0
      %1196 = vmatpush2.bf16.msra.mxu0 0
      %1197 = vmatprep.mubr.bf16.mxu0 0
      %1198 = vmatmul.mubr.bf16.gmra.mxu0 %v1156
      %v1199 = vpop.f32.mrf.mxu0
      %v1200 = vadd.f32 %v1152, %v1199
      %v1201 = vpop.f32.mrf.mxu0
      %v1202 = vadd.f32 %v1152, %v1201
      %v1203 = vpop.f32.mrf.mxu0
      %v1204 = vpop.f32.mrf.mxu0
      %1205 = vdwg.mxu0
      %vm1206 = vcmp.ge.f32.partialorder %v1200, 0.0
      %vm1207 = vcmp.ge.f32.partialorder %v1202, 0.0
      %v1208 = vmul.f32 %v1200, 0.01
      %v1209 = vmul.f32 %v1202, 0.01
      %v1210 = vsel %vm1206, %v1200, %v1208
      %v1211 = vsel %vm1207, %v1202, %v1209
      %1212 = vst [vmem:[#allocation2 + $0x8] sm:$0xff] %v1210
      %1213 = vst [vmem:[#allocation2 + $0x10] sm:$0xff] %v1211
      %v1214 = vld [vmem:[#allocation2] sm:$0xff]
      %v1215 = vld [vmem:[#allocation2 + $0x8] sm:$0xff]
      %v1216 = vld [vmem:[#allocation2 + $0x10] sm:$0xff]
      %1220 = vrot.lane.b32.xlu0 %v1214, 17
      %v1221 = vpop.permute.xlu0 %1220
      %1222 = vrot.lane.b32.xlu0 %v1215, 17
      %v1223 = vpop.permute.xlu0 %1222
      %1224 = vrot.lane.b32.xlu0 %v1216, 17
      %v1225 = vpop.permute.xlu0 %1224
      %v1226 = vsel %vm921, %v1221, %v1223
      %v1227 = vsel %vm921, %v1223, %v1225
      %v1230 = vsel %vm910, %v1226, 0.0
      %v1231 = vsel %vm911, %v1227, 0.0
      %1232 = vst [vmem:[#allocation3] sm:$0xff] %v1230
      %1233 = vst [vmem:[#allocation3 + $0x8] sm:$0xff] %v1231
      %v1234 = vld [vmem:[#allocation2] sm:$0xff]
      %v1235 = vld [vmem:[#allocation2 + $0x8] sm:$0xff]
      %v1236 = vld [vmem:[#allocation2 + $0x10] sm:$0xff]
      %1240 = vrot.lane.b32.xlu0 %v1234, 16
      %v1241 = vpop.permute.xlu0 %1240
      %1242 = vrot.lane.b32.xlu0 %v1235, 16
      %v1243 = vpop.permute.xlu0 %1242
      %1244 = vrot.lane.b32.xlu0 %v1236, 16
      %v1245 = vpop.permute.xlu0 %1244
      %v1246 = vsel %vm946, %v1241, %v1243
      %v1247 = vsel %vm946, %v1243, %v1245
      %v1250 = vsel %vm935, %v1246, 0.0
      %v1251 = vsel %vm936, %v1247, 0.0
      %1252 = vst [vmem:[#allocation3 + $0x10] sm:$0xff] %v1250
      %1253 = vst [vmem:[#allocation3 + $0x18] sm:$0xff] %v1251
      %v1254 = vld [vmem:[#allocation2] sm:$0xff]
      %v1255 = vld [vmem:[#allocation2 + $0x8] sm:$0xff]
      %v1256 = vld [vmem:[#allocation2 + $0x10] sm:$0xff]
      %1260 = vrot.lane.b32.xlu0 %v1254, 15
      %v1261 = vpop.permute.xlu0 %1260
      %1262 = vrot.lane.b32.xlu0 %v1255, 15
      %v1263 = vpop.permute.xlu0 %1262
      %1264 = vrot.lane.b32.xlu0 %v1256, 15
      %v1265 = vpop.permute.xlu0 %1264
      %v1266 = vsel %vm975, %v1261, %v1263
      %v1267 = vsel %vm975, %v1263, %v1265
      %v1270 = vsel %vm964, %v1266, 0.0
      %v1271 = vsel %vm965, %v1267, 0.0
      %1272 = vst [vmem:[#allocation3 + $0x20] sm:$0xff] %v1270
      %1273 = vst [vmem:[#allocation3 + $0x28] sm:$0xff] %v1271
      %v1274 = vld [vmem:[#allocation2] sm:$0xff]
      %v1275 = vld [vmem:[#allocation2 + $0x8] sm:$0xff]
      %v1276 = vld [vmem:[#allocation2 + $0x10] sm:$0xff]
      %1280 = vrot.lane.b32.xlu0 %v1274, 1
      %v1281 = vpop.permute.xlu0 %1280
      %1282 = vrot.lane.b32.xlu0 %v1275, 1
      %v1283 = vpop.permute.xlu0 %1282
      %1284 = vrot.lane.b32.xlu0 %v1276, 1
      %v1285 = vpop.permute.xlu0 %1284
      %v1286 = vsel %vm1000, %v1281, %v1283
      %v1287 = vsel %vm1000, %v1283, %v1285
      %v1290 = vsel %vm989, %v1286, 0.0
      %v1291 = vsel %vm990, %v1287, 0.0
      %1292 = vst [vmem:[#allocation3 + $0x30] sm:$0xff] %v1290
      %1293 = vst [vmem:[#allocation3 + $0x38] sm:$0xff] %v1291
      %v1294 = vld [vmem:[#allocation2 + $0x8] sm:$0xff]
      %v1295 = vld [vmem:[#allocation2 + $0x10] sm:$0xff]
      %1296 = vst [vmem:[#allocation3 + $0x40] sm:$0xff] %v1294
      %1297 = vst [vmem:[#allocation3 + $0x48] sm:$0xff] %v1295
      %v1298 = vld [vmem:[#allocation2 + $0x8] sm:$0xff]
      %v1299 = vld [vmem:[#allocation2 + $0x10] sm:$0xff]
      %v1300 = vld [vmem:[#allocation2 + $0x18] sm:$0xff]
      %1304 = vrot.lane.b32.xlu0 %v1298, 127
      %v1305 = vpop.permute.xlu0 %1304
      %1306 = vrot.lane.b32.xlu0 %v1299, 127
      %v1307 = vpop.permute.xlu0 %1306
      %1308 = vrot.lane.b32.xlu0 %v1300, 127
      %v1309 = vpop.permute.xlu0 %1308
      %v1310 = vsel %vm1029, %v1305, %v1307
      %v1311 = vsel %vm1029, %v1307, %v1309
      %v1314 = vsel %vm1018, %v1310, 0.0
      %v1315 = vsel %vm1019, %v1311, 0.0
      %1316 = vst [vmem:[#allocation3 + $0x50] sm:$0xff] %v1314
      %1317 = vst [vmem:[#allocation3 + $0x58] sm:$0xff] %v1315
      %v1318 = vld [vmem:[#allocation2 + $0x8] sm:$0xff]
      %v1319 = vld [vmem:[#allocation2 + $0x10] sm:$0xff]
      %v1320 = vld [vmem:[#allocation2 + $0x18] sm:$0xff]
      %1324 = vrot.lane.b32.xlu0 %v1318, 113
      %v1325 = vpop.permute.xlu0 %1324
      %1326 = vrot.lane.b32.xlu0 %v1319, 113
      %v1327 = vpop.permute.xlu0 %1326
      %1328 = vrot.lane.b32.xlu0 %v1320, 113
      %v1329 = vpop.permute.xlu0 %1328
      %v1330 = vsel %vm1058, %v1325, %v1327
      %v1331 = vsel %vm1058, %v1327, %v1329
      %v1334 = vsel %vm1047, %v1330, 0.0
      %v1335 = vsel %vm1048, %v1331, 0.0
      %1336 = vst [vmem:[#allocation3 + $0x60] sm:$0xff] %v1334
      %1337 = vst [vmem:[#allocation3 + $0x68] sm:$0xff] %v1335
      %v1338 = vld [vmem:[#allocation2 + $0x8] sm:$0xff]
      %v1339 = vld [vmem:[#allocation2 + $0x10] sm:$0xff]
      %v1340 = vld [vmem:[#allocation2 + $0x18] sm:$0xff]
      %1344 = vrot.lane.b32.xlu0 %v1338, 112
      %v1345 = vpop.permute.xlu0 %1344
      %1346 = vrot.lane.b32.xlu0 %v1339, 112
      %v1347 = vpop.permute.xlu0 %1346
      %1348 = vrot.lane.b32.xlu0 %v1340, 112
      %v1349 = vpop.permute.xlu0 %1348
      %v1350 = vsel %vm1083, %v1345, %v1347
      %v1351 = vsel %vm1083, %v1347, %v1349
      %v1354 = vsel %vm1072, %v1350, 0.0
      %v1355 = vsel %vm1073, %v1351, 0.0
      %1356 = vst [vmem:[#allocation3 + $0x70] sm:$0xff] %v1354
      %1357 = vst [vmem:[#allocation3 + $0x78] sm:$0xff] %v1355
      %v1358 = vld [vmem:[#allocation2 + $0x8] sm:$0xff]
      %v1359 = vld [vmem:[#allocation2 + $0x10] sm:$0xff]
      %v1360 = vld [vmem:[#allocation2 + $0x18] sm:$0xff]
      %1364 = vrot.lane.b32.xlu0 %v1358, 111
      %v1365 = vpop.permute.xlu0 %1364
      %1366 = vrot.lane.b32.xlu0 %v1359, 111
      %v1367 = vpop.permute.xlu0 %1366
      %1368 = vrot.lane.b32.xlu0 %v1360, 111
      %v1369 = vpop.permute.xlu0 %1368
      %v1370 = vsel %vm1110, %v1365, %v1367
      %v1371 = vsel %vm1110, %v1367, %v1369
      %v1374 = vsel %vm1099, %v1370, 0.0
      %v1375 = vsel %vm1100, %v1371, 0.0
      %1376 = vst [vmem:[#allocation3 + $0x80] sm:$0xff] %v1374
      %1377 = vst [vmem:[#allocation3 + $0x88] sm:$0xff] %v1375
      %v1378 = vld [vmem:[%s3] sm:$0xf]
      %v1379 = vld [vmem:[#allocation3] sm:$0xff]
      %v1380 = vld [vmem:[#allocation3 + $0x8] sm:$0xff]
      %v1381 = vld [vmem:[#allocation3 + $0x10] sm:$0xff]
      %v1382 = vld [vmem:[#allocation3 + $0x18] sm:$0xff]
      %v1383 = vld [vmem:[#allocation3 + $0x20] sm:$0xff]
      %v1384 = vld [vmem:[#allocation3 + $0x28] sm:$0xff]
      %v1385 = vld [vmem:[#allocation3 + $0x30] sm:$0xff]
      %v1386 = vld [vmem:[#allocation3 + $0x38] sm:$0xff]
      %v1387 = vld [vmem:[#allocation3 + $0x40] sm:$0xff]
      %v1388 = vld [vmem:[#allocation3 + $0x48] sm:$0xff]
      %v1389 = vld [vmem:[#allocation3 + $0x50] sm:$0xff]
      %v1390 = vld [vmem:[#allocation3 + $0x58] sm:$0xff]
      %v1391 = vld [vmem:[#allocation3 + $0x60] sm:$0xff]
      %v1392 = vld [vmem:[#allocation3 + $0x68] sm:$0xff]
      %v1393 = vld [vmem:[#allocation3 + $0x70] sm:$0xff]
      %v1394 = vld [vmem:[#allocation3 + $0x78] sm:$0xff]
      %v1395 = vld [vmem:[#allocation3 + $0x80] sm:$0xff]
      %v1396 = vld [vmem:[#allocation3 + $0x88] sm:$0xff]
      %v1397 = vpack.c.bf16 %v1381, %v1379
      %v1398 = vpack.c.bf16 %v1382, %v1380
      %v1399 = vpack.c.bf16 %v1385, %v1383
      %v1400 = vpack.c.bf16 %v1386, %v1384
      %v1401 = vpack.c.bf16 %v1389, %v1387
      %v1402 = vpack.c.bf16 %v1390, %v1388
      %v1403 = vpack.c.bf16 %v1393, %v1391
      %v1404 = vpack.c.bf16 %v1394, %v1392
      %v1405 = vpack.c.bf16 %v1395, %v1395
      %v1406 = vpack.c.bf16 %v1396, %v1396
      %v1407 = vld [vmem:[%s4] sm:$0xff]
      %1409 = vset.pattern.permute.xlu0 0
      %1410 = vperm.xlu0 %1409, %v1407
      %v1411 = vpop.permute.xlu0 %1410
      %v1414 = vsel %vm1154, %v1378, 0
      %v1417 = vsel %vm1158, %v1405, 0
      %v1420 = vsel %vm1158, %v1406, 0
      %1422 = vmatprep.subr.bf16.mxu0 0
      %1423 = vmatpush1.bf16.msra.mxu0 0
      %1424 = vmatprep.subr.bf16.mxu0 0
      %1425 = vmatpush1.bf16.msra.mxu0 0
      %1426 = vmatprep.subr.bf16.mxu0 0
      %1427 = vmatpush1.bf16.msra.mxu0 0
      %1428 = vmatprep.subr.bf16.mxu0 %v1420
      %1429 = vmatpush1.bf16.msra.mxu0 %v1417
      %1430 = vmatprep.subr.bf16.mxu0 %v1404
      %1431 = vmatpush1.bf16.msra.mxu0 %v1403
      %1432 = vmatprep.subr.bf16.mxu0 %v1402
      %1433 = vmatpush1.bf16.msra.mxu0 %v1401
      %1434 = vmatprep.subr.bf16.mxu0 %v1400
      %1435 = vmatpush1.bf16.msra.mxu0 %v1399
      %1436 = vmatprep.subr.bf16.mxu0 %v1398
      %1437 = vmatpush1.bf16.msra.mxu0 %v1397
      %1438 = vmatprep.subr.bf16.mxu0 0
      %1439 = vmatpush2.bf16.msra.mxu0 0
      %1440 = vmatprep.subr.bf16.mxu0 0
      %1441 = vmatpush2.bf16.msra.mxu0 0
      %1442 = vmatprep.subr.bf16.mxu0 0
      %1443 = vmatpush2.bf16.msra.mxu0 0
      %1444 = vmatprep.subr.bf16.mxu0 0
      %1445 = vmatpush2.bf16.msra.mxu0 0
      %1446 = vmatprep.subr.bf16.mxu0 0
      %1447 = vmatpush2.bf16.msra.mxu0 0
      %1448 = vmatprep.subr.bf16.mxu0 0
      %1449 = vmatpush2.bf16.msra.mxu0 0
      %1450 = vmatprep.subr.bf16.mxu0 0
      %1451 = vmatpush2.bf16.msra.mxu0 0
      %1452 = vmatprep.subr.bf16.mxu0 0
      %1453 = vmatpush2.bf16.msra.mxu0 0
      %1454 = vmatprep.mubr.bf16.mxu0 0
      %1455 = vmatmul.mubr.bf16.gmra.mxu0 %v1414
      %v1456 = vpop.f32.mrf.mxu0
      %v1457 = vadd.f32 %v1411, %v1456
      %v1458 = vpop.f32.mrf.mxu0
      %v1459 = vadd.f32 %v1411, %v1458
      %v1460 = vpop.f32.mrf.mxu0
      %v1461 = vpop.f32.mrf.mxu0
      %1462 = vdwg.mxu0
      %vm1463 = vcmp.ge.f32.partialorder %v1457, 0.0
      %vm1464 = vcmp.ge.f32.partialorder %v1459, 0.0
      %v1465 = vmul.f32 %v1457, 0.01
      %v1466 = vmul.f32 %v1459, 0.01
      %v1467 = vsel %vm1463, %v1457, %v1465
      %v1468 = vsel %vm1464, %v1459, %v1466
      %1469 = vst [vmem:[#allocation2 + $0x8] sm:$0xff] %v1467
      %1470 = vst [vmem:[#allocation2 + $0x10] sm:$0xff] %v1468
      %v1471 = vld [vmem:[#allocation2] sm:$0xff]
      %v1472 = vld [vmem:[#allocation2 + $0x8] sm:$0xff]
      %v1473 = vld [vmem:[#allocation2 + $0x10] sm:$0xff]
      %1477 = vrot.lane.b32.xlu0 %v1471, 17
      %v1478 = vpop.permute.xlu0 %1477
      %1479 = vrot.lane.b32.xlu0 %v1472, 17
      %v1480 = vpop.permute.xlu0 %1479
      %1481 = vrot.lane.b32.xlu0 %v1473, 17
      %v1482 = vpop.permute.xlu0 %1481
      %v1483 = vsel %vm921, %v1478, %v1480
      %v1484 = vsel %vm921, %v1480, %v1482
      %v1487 = vsel %vm910, %v1483, 0.0
      %v1488 = vsel %vm911, %v1484, 0.0
      %1489 = vst [vmem:[#allocation3] sm:$0xff] %v1487
      %1490 = vst [vmem:[#allocation3 + $0x8] sm:$0xff] %v1488
      %v1491 = vld [vmem:[#allocation2] sm:$0xff]
      %v1492 = vld [vmem:[#allocation2 + $0x8] sm:$0xff]
      %v1493 = vld [vmem:[#allocation2 + $0x10] sm:$0xff]
      %1497 = vrot.lane.b32.xlu0 %v1491, 16
      %v1498 = vpop.permute.xlu0 %1497
      %1499 = vrot.lane.b32.xlu0 %v1492, 16
      %v1500 = vpop.permute.xlu0 %1499
      %1501 = vrot.lane.b32.xlu0 %v1493, 16
      %v1502 = vpop.permute.xlu0 %1501
      %v1503 = vsel %vm946, %v1498, %v1500
      %v1504 = vsel %vm946, %v1500, %v1502
      %v1507 = vsel %vm935, %v1503, 0.0
      %v1508 = vsel %vm936, %v1504, 0.0
      %1509 = vst [vmem:[#allocation3 + $0x10] sm:$0xff] %v1507
      %1510 = vst [vmem:[#allocation3 + $0x18] sm:$0xff] %v1508
      %v1511 = vld [vmem:[#allocation2] sm:$0xff]
      %v1512 = vld [vmem:[#allocation2 + $0x8] sm:$0xff]
      %v1513 = vld [vmem:[#allocation2 + $0x10] sm:$0xff]
      %1517 = vrot.lane.b32.xlu0 %v1511, 15
      %v1518 = vpop.permute.xlu0 %1517
      %1519 = vrot.lane.b32.xlu0 %v1512, 15
      %v1520 = vpop.permute.xlu0 %1519
      %1521 = vrot.lane.b32.xlu0 %v1513, 15
      %v1522 = vpop.permute.xlu0 %1521
      %v1523 = vsel %vm975, %v1518, %v1520
      %v1524 = vsel %vm975, %v1520, %v1522
      %v1527 = vsel %vm964, %v1523, 0.0
      %v1528 = vsel %vm965, %v1524, 0.0
      %1529 = vst [vmem:[#allocation3 + $0x20] sm:$0xff] %v1527
      %1530 = vst [vmem:[#allocation3 + $0x28] sm:$0xff] %v1528
      %v1531 = vld [vmem:[#allocation2] sm:$0xff]
      %v1532 = vld [vmem:[#allocation2 + $0x8] sm:$0xff]
      %v1533 = vld [vmem:[#allocation2 + $0x10] sm:$0xff]
      %1537 = vrot.lane.b32.xlu0 %v1531, 1
      %v1538 = vpop.permute.xlu0 %1537
      %1539 = vrot.lane.b32.xlu0 %v1532, 1
      %v1540 = vpop.permute.xlu0 %1539
      %1541 = vrot.lane.b32.xlu0 %v1533, 1
      %v1542 = vpop.permute.xlu0 %1541
      %v1543 = vsel %vm1000, %v1538, %v1540
      %v1544 = vsel %vm1000, %v1540, %v1542
      %v1547 = vsel %vm989, %v1543, 0.0
      %v1548 = vsel %vm990, %v1544, 0.0
      %1549 = vst [vmem:[#allocation3 + $0x30] sm:$0xff] %v1547
      %1550 = vst [vmem:[#allocation3 + $0x38] sm:$0xff] %v1548
      %v1551 = vld [vmem:[#allocation2 + $0x8] sm:$0xff]
      %v1552 = vld [vmem:[#allocation2 + $0x10] sm:$0xff]
      %1553 = vst [vmem:[#allocation3 + $0x40] sm:$0xff] %v1551
      %1554 = vst [vmem:[#allocation3 + $0x48] sm:$0xff] %v1552
      %v1555 = vld [vmem:[#allocation2 + $0x8] sm:$0xff]
      %v1556 = vld [vmem:[#allocation2 + $0x10] sm:$0xff]
      %v1557 = vld [vmem:[#allocation2 + $0x18] sm:$0xff]
      %1561 = vrot.lane.b32.xlu0 %v1555, 127
      %v1562 = vpop.permute.xlu0 %1561
      %1563 = vrot.lane.b32.xlu0 %v1556, 127
      %v1564 = vpop.permute.xlu0 %1563
      %1565 = vrot.lane.b32.xlu0 %v1557, 127
      %v1566 = vpop.permute.xlu0 %1565
      %v1567 = vsel %vm1029, %v1562, %v1564
      %v1568 = vsel %vm1029, %v1564, %v1566
      %v1571 = vsel %vm1018, %v1567, 0.0
      %v1572 = vsel %vm1019, %v1568, 0.0
      %1573 = vst [vmem:[#allocation3 + $0x50] sm:$0xff] %v1571
      %1574 = vst [vmem:[#allocation3 + $0x58] sm:$0xff] %v1572
      %v1575 = vld [vmem:[#allocation2 + $0x8] sm:$0xff]
      %v1576 = vld [vmem:[#allocation2 + $0x10] sm:$0xff]
      %v1577 = vld [vmem:[#allocation2 + $0x18] sm:$0xff]
      %1581 = vrot.lane.b32.xlu0 %v1575, 113
      %v1582 = vpop.permute.xlu0 %1581
      %1583 = vrot.lane.b32.xlu0 %v1576, 113
      %v1584 = vpop.permute.xlu0 %1583
      %1585 = vrot.lane.b32.xlu0 %v1577, 113
      %v1586 = vpop.permute.xlu0 %1585
      %v1587 = vsel %vm1058, %v1582, %v1584
      %v1588 = vsel %vm1058, %v1584, %v1586
      %v1591 = vsel %vm1047, %v1587, 0.0
      %v1592 = vsel %vm1048, %v1588, 0.0
      %1593 = vst [vmem:[#allocation3 + $0x60] sm:$0xff] %v1591
      %1594 = vst [vmem:[#allocation3 + $0x68] sm:$0xff] %v1592
      %v1595 = vld [vmem:[#allocation2 + $0x8] sm:$0xff]
      %v1596 = vld [vmem:[#allocation2 + $0x10] sm:$0xff]
      %v1597 = vld [vmem:[#allocation2 + $0x18] sm:$0xff]
      %1601 = vrot.lane.b32.xlu0 %v1595, 112
      %v1602 = vpop.permute.xlu0 %1601
      %1603 = vrot.lane.b32.xlu0 %v1596, 112
      %v1604 = vpop.permute.xlu0 %1603
      %1605 = vrot.lane.b32.xlu0 %v1597, 112
      %v1606 = vpop.permute.xlu0 %1605
      %v1607 = vsel %vm1083, %v1602, %v1604
      %v1608 = vsel %vm1083, %v1604, %v1606
      %v1611 = vsel %vm1072, %v1607, 0.0
      %v1612 = vsel %vm1073, %v1608, 0.0
      %1613 = vst [vmem:[#allocation3 + $0x70] sm:$0xff] %v1611
      %1614 = vst [vmem:[#allocation3 + $0x78] sm:$0xff] %v1612
      %v1615 = vld [vmem:[#allocation2 + $0x8] sm:$0xff]
      %v1616 = vld [vmem:[#allocation2 + $0x10] sm:$0xff]
      %v1617 = vld [vmem:[#allocation2 + $0x18] sm:$0xff]
      %1621 = vrot.lane.b32.xlu0 %v1615, 111
      %v1622 = vpop.permute.xlu0 %1621
      %1623 = vrot.lane.b32.xlu0 %v1616, 111
      %v1624 = vpop.permute.xlu0 %1623
      %1625 = vrot.lane.b32.xlu0 %v1617, 111
      %v1626 = vpop.permute.xlu0 %1625
      %v1627 = vsel %vm1110, %v1622, %v1624
      %v1628 = vsel %vm1110, %v1624, %v1626
      %v1631 = vsel %vm1099, %v1627, 0.0
      %v1632 = vsel %vm1100, %v1628, 0.0
      %1633 = vst [vmem:[#allocation3 + $0x80] sm:$0xff] %v1631
      %1634 = vst [vmem:[#allocation3 + $0x88] sm:$0xff] %v1632
      %v1635 = vld [vmem:[%s5] sm:$0xf]
      %v1636 = vld [vmem:[%s5 + $0x4] sm:$0xf]
      %v1637 = vld [vmem:[#allocation3] sm:$0xff]
      %v1638 = vld [vmem:[#allocation3 + $0x8] sm:$0xff]
      %v1639 = vld [vmem:[#allocation3 + $0x10] sm:$0xff]
      %v1640 = vld [vmem:[#allocation3 + $0x18] sm:$0xff]
      %v1641 = vld [vmem:[#allocation3 + $0x20] sm:$0xff]
      %v1642 = vld [vmem:[#allocation3 + $0x28] sm:$0xff]
      %v1643 = vld [vmem:[#allocation3 + $0x30] sm:$0xff]
      %v1644 = vld [vmem:[#allocation3 + $0x38] sm:$0xff]
      %v1645 = vld [vmem:[#allocation3 + $0x40] sm:$0xff]
      %v1646 = vld [vmem:[#allocation3 + $0x48] sm:$0xff]
      %v1647 = vld [vmem:[#allocation3 + $0x50] sm:$0xff]
      %v1648 = vld [vmem:[#allocation3 + $0x58] sm:$0xff]
      %v1649 = vld [vmem:[#allocation3 + $0x60] sm:$0xff]
      %v1650 = vld [vmem:[#allocation3 + $0x68] sm:$0xff]
      %v1651 = vld [vmem:[#allocation3 + $0x70] sm:$0xff]
      %v1652 = vld [vmem:[#allocation3 + $0x78] sm:$0xff]
      %v1653 = vld [vmem:[#allocation3 + $0x80] sm:$0xff]
      %v1654 = vld [vmem:[#allocation3 + $0x88] sm:$0xff]
      %v1655 = vpack.c.bf16 %v1639, %v1637
      %v1656 = vpack.c.bf16 %v1640, %v1638
      %v1657 = vpack.c.bf16 %v1643, %v1641
      %v1658 = vpack.c.bf16 %v1644, %v1642
      %v1659 = vpack.c.bf16 %v1647, %v1645
      %v1660 = vpack.c.bf16 %v1648, %v1646
      %v1661 = vpack.c.bf16 %v1651, %v1649
      %v1662 = vpack.c.bf16 %v1652, %v1650
      %v1663 = vpack.c.bf16 %v1653, %v1653
      %v1664 = vpack.c.bf16 %v1654, %v1654
      %v1667 = vunpack.c.l.b16 %v1635
      %v1668 = vunpack.c.l.b16 %v1636
      %v1669 = vpack.c.b16 %v1668, %v1667
      %v1671 = vsel %vm1154, %v1669, 0
      %v1674 = vsel %vm1158, %v1663, 0
      %v1677 = vsel %vm1158, %v1664, 0
      %1679 = vmatprep.subr.bf16.mxu0 0
      %1680 = vmatpush1.bf16.msra.mxu0 0
      %1681 = vmatprep.subr.bf16.mxu0 0
      %1682 = vmatpush1.bf16.msra.mxu0 0
      %1683 = vmatprep.subr.bf16.mxu0 0
      %1684 = vmatpush1.bf16.msra.mxu0 0
      %1685 = vmatprep.subr.bf16.mxu0 %v1677
      %1686 = vmatpush1.bf16.msra.mxu0 %v1674
      %1687 = vmatprep.subr.bf16.mxu0 %v1662
      %1688 = vmatpush1.bf16.msra.mxu0 %v1661
      %1689 = vmatprep.subr.bf16.mxu0 %v1660
      %1690 = vmatpush1.bf16.msra.mxu0 %v1659
      %1691 = vmatprep.subr.bf16.mxu0 %v1658
      %1692 = vmatpush1.bf16.msra.mxu0 %v1657
      %1693 = vmatprep.subr.bf16.mxu0 %v1656
      %1694 = vmatpush1.bf16.msra.mxu0 %v1655
      %1695 = vmatprep.subr.bf16.mxu0 0
      %1696 = vmatpush2.bf16.msra.mxu0 0
      %1697 = vmatprep.subr.bf16.mxu0 0
      %1698 = vmatpush2.bf16.msra.mxu0 0
      %1699 = vmatprep.subr.bf16.mxu0 0
      %1700 = vmatpush2.bf16.msra.mxu0 0
      %1701 = vmatprep.subr.bf16.mxu0 0
      %1702 = vmatpush2.bf16.msra.mxu0 0
      %1703 = vmatprep.subr.bf16.mxu0 0
      %1704 = vmatpush2.bf16.msra.mxu0 0
      %1705 = vmatprep.subr.bf16.mxu0 0
      %1706 = vmatpush2.bf16.msra.mxu0 0
      %1707 = vmatprep.subr.bf16.mxu0 0
      %1708 = vmatpush2.bf16.msra.mxu0 0
      %1709 = vmatprep.subr.bf16.mxu0 0
      %1710 = vmatpush2.bf16.msra.mxu0 0
      %1711 = vmatprep.mubr.bf16.mxu0 0
      %1712 = vmatmul.mubr.bf16.gmra.mxu0 %v1671
      %v1713 = vpop.f32.mrf.mxu0
      %v1714 = vadd.f32 0.0, %v1713
      %v1715 = vpop.f32.mrf.mxu0
      %v1716 = vadd.f32 0.0, %v1715
      %v1717 = vpop.f32.mrf.mxu0
      %v1718 = vadd.f32 0.0, %v1717
      %v1719 = vpop.f32.mrf.mxu0
      %v1720 = vadd.f32 0.0, %v1719
      %1721 = vdwg.mxu0
      %v1722 = vlaneseq
      %v1723 = vshrl.u32 %v1722, 7
      %v1724 = vadd.s32 %v1723, 8
      %v1725 = vadd.s32 %v1723, 16
      %v1726 = vadd.s32 %v1723, 24
      %v1727 = vadd.s32 %v1723, 32
      %v1728 = vadd.s32 %v1723, 40
      %v1729 = vadd.s32 %v1723, 48
      %v1730 = vadd.s32 %v1723, 56
      %v1731 = vadd.s32 %v1723, 64
      %v1732 = vadd.s32 %v1723, 72
      %v1733 = vadd.s32 %v1723, 80
      %v1734 = vadd.s32 %v1723, 88
      %v1735 = vadd.s32 %v1723, 96
      %v1736 = vadd.s32 %v1723, 104
      %v1737 = vadd.s32 %v1723, 112
      %v1738 = vadd.s32 %v1723, 120
      %v1739 = vadd.s32 %v1723, 128
      %v1740 = vadd.s32 %v1723, 136
      %v1741 = vadd.s32 %v1723, 144
      %v1742 = vadd.s32 %v1723, 152
      %v1743 = vadd.s32 %v1723, 160
      %v1744 = vadd.s32 %v1723, 168
      %v1745 = vadd.s32 %v1723, 176
      %v1746 = vadd.s32 %v1723, 184
      %v1747 = vadd.s32 %v1723, 192
      %v1748 = vadd.s32 %v1723, 200
      %v1749 = vadd.s32 %v1723, 208
      %v1750 = vadd.s32 %v1723, 216
      %v1751 = vadd.s32 %v1723, 224
      %v1752 = vadd.s32 %v1723, 232
      %v1753 = vadd.s32 %v1723, 240
      %v1754 = vadd.s32 %v1723, 248
      %v1755 = vshra.s32 %v870, 3
      %v1756 = vmul.u32 %v1755, 32
      %v1757 = vand.u32 %v870, 7
      %v1758 = vmul.u32 %v1757, 2
      %v1759 = vadd.s32 %v1756, %v1758
      %vm1760 = vcmp.eq.s32.totalorder %v1723, %v1759
      %vm1761 = vcmp.eq.s32.totalorder %v1724, %v1759
      %vm1762 = vcmp.eq.s32.totalorder %v1725, %v1759
      %vm1763 = vcmp.eq.s32.totalorder %v1726, %v1759
      %vm1764 = vcmp.eq.s32.totalorder %v1727, %v1759
      %vm1765 = vcmp.eq.s32.totalorder %v1728, %v1759
      %vm1766 = vcmp.eq.s32.totalorder %v1729, %v1759
      %vm1767 = vcmp.eq.s32.totalorder %v1730, %v1759
      %vm1768 = vcmp.eq.s32.totalorder %v1731, %v1759
      %vm1769 = vcmp.eq.s32.totalorder %v1732, %v1759
      %vm1770 = vcmp.eq.s32.totalorder %v1733, %v1759
      %vm1771 = vcmp.eq.s32.totalorder %v1734, %v1759
      %vm1772 = vcmp.eq.s32.totalorder %v1735, %v1759
      %vm1773 = vcmp.eq.s32.totalorder %v1736, %v1759
      %vm1774 = vcmp.eq.s32.totalorder %v1737, %v1759
      %vm1775 = vcmp.eq.s32.totalorder %v1738, %v1759
      %vm1776 = vcmp.eq.s32.totalorder %v1739, %v1759
      %vm1777 = vcmp.eq.s32.totalorder %v1740, %v1759
      %vm1778 = vcmp.eq.s32.totalorder %v1741, %v1759
      %vm1779 = vcmp.eq.s32.totalorder %v1742, %v1759
      %vm1780 = vcmp.eq.s32.totalorder %v1743, %v1759
      %vm1781 = vcmp.eq.s32.totalorder %v1744, %v1759
      %vm1782 = vcmp.eq.s32.totalorder %v1745, %v1759
      %vm1783 = vcmp.eq.s32.totalorder %v1746, %v1759
      %vm1784 = vcmp.eq.s32.totalorder %v1747, %v1759
      %vm1785 = vcmp.eq.s32.totalorder %v1748, %v1759
      %vm1786 = vcmp.eq.s32.totalorder %v1749, %v1759
      %vm1787 = vcmp.eq.s32.totalorder %v1750, %v1759
      %vm1788 = vcmp.eq.s32.totalorder %v1751, %v1759
      %vm1789 = vcmp.eq.s32.totalorder %v1752, %v1759
      %vm1790 = vcmp.eq.s32.totalorder %v1753, %v1759
      %vm1791 = vcmp.eq.s32.totalorder %v1754, %v1759
      %v1792 = vsel %vm1760, 1.0, 0.0
      %v1793 = vsel %vm1761, 1.0, 0.0
      %v1794 = vsel %vm1762, 1.0, 0.0
      %v1795 = vsel %vm1763, 1.0, 0.0
      %v1796 = vsel %vm1764, 1.0, 0.0
      %v1797 = vsel %vm1765, 1.0, 0.0
      %v1798 = vsel %vm1766, 1.0, 0.0
      %v1799 = vsel %vm1767, 1.0, 0.0
      %v1800 = vsel %vm1768, 1.0, 0.0
      %v1801 = vsel %vm1769, 1.0, 0.0
      %v1802 = vsel %vm1770, 1.0, 0.0
      %v1803 = vsel %vm1771, 1.0, 0.0
      %v1804 = vsel %vm1772, 1.0, 0.0
      %v1805 = vsel %vm1773, 1.0, 0.0
      %v1806 = vsel %vm1774, 1.0, 0.0
      %v1807 = vsel %vm1775, 1.0, 0.0
      %v1808 = vsel %vm1776, 1.0, 0.0
      %v1809 = vsel %vm1777, 1.0, 0.0
      %v1810 = vsel %vm1778, 1.0, 0.0
      %v1811 = vsel %vm1779, 1.0, 0.0
      %v1812 = vsel %vm1780, 1.0, 0.0
      %v1813 = vsel %vm1781, 1.0, 0.0
      %v1814 = vsel %vm1782, 1.0, 0.0
      %v1815 = vsel %vm1783, 1.0, 0.0
      %v1816 = vsel %vm1784, 1.0, 0.0
      %v1817 = vsel %vm1785, 1.0, 0.0
      %v1818 = vsel %vm1786, 1.0, 0.0
      %v1819 = vsel %vm1787, 1.0, 0.0
      %v1820 = vsel %vm1788, 1.0, 0.0
      %v1821 = vsel %vm1789, 1.0, 0.0
      %v1822 = vsel %vm1790, 1.0, 0.0
      %v1823 = vsel %vm1791, 1.0, 0.0
      %v1824 = vpack.c.bf16 %v1793, %v1792
      %v1825 = vpack.c.bf16 %v1795, %v1794
      %v1826 = vpack.c.bf16 %v1797, %v1796
      %v1827 = vpack.c.bf16 %v1799, %v1798
      %v1828 = vpack.c.bf16 %v1801, %v1800
      %v1829 = vpack.c.bf16 %v1803, %v1802
      %v1830 = vpack.c.bf16 %v1805, %v1804
      %v1831 = vpack.c.bf16 %v1807, %v1806
      %v1832 = vpack.c.bf16 %v1809, %v1808
      %v1833 = vpack.c.bf16 %v1811, %v1810
      %v1834 = vpack.c.bf16 %v1813, %v1812
      %v1835 = vpack.c.bf16 %v1815, %v1814
      %v1836 = vpack.c.bf16 %v1817, %v1816
      %v1837 = vpack.c.bf16 %v1819, %v1818
      %v1838 = vpack.c.bf16 %v1821, %v1820
      %v1839 = vpack.c.bf16 %v1823, %v1822
      %v1840 = vpack.c.bf16 %v1718, %v1714
      %v1841 = vpack.c.bf16 %v1720, %v1716
      %v1842 = vld [vmem:[%s6] sm:$0xff]
      %v1843 = vld [vmem:[%s6 + $0x8] sm:$0xff]
      %1845 = vset.pattern.permute.xlu0 0
      %1846 = vperm.xlu0 %1845, %v1842
      %v1847 = vpop.permute.xlu0 %1846
      %1850 = vset.pattern.permute.xlu0 0
      %1851 = vperm.xlu0 %1850, %v1843
      %v1852 = vpop.permute.xlu0 %1851
      %1854 = vmatprep.subr.bf16.mxu0 0
      %1855 = vmatpush1.bf16.msra.mxu0 %v1831
      %1856 = vmatprep.subr.bf16.mxu0 0
      %1857 = vmatpush1.bf16.msra.mxu0 %v1830
      %1858 = vmatprep.subr.bf16.mxu0 0
      %1859 = vmatpush1.bf16.msra.mxu0 %v1829
      %1860 = vmatprep.subr.bf16.mxu0 0
      %1861 = vmatpush1.bf16.msra.mxu0 %v1828
      %1862 = vmatprep.subr.bf16.mxu0 0
      %1863 = vmatpush1.bf16.msra.mxu0 %v1827
      %1864 = vmatprep.subr.bf16.mxu0 0
      %1865 = vmatpush1.bf16.msra.mxu0 %v1826
      %1866 = vmatprep.subr.bf16.mxu0 0
      %1867 = vmatpush1.bf16.msra.mxu0 %v1825
      %1868 = vmatprep.subr.bf16.mxu0 0
      %1869 = vmatpush1.bf16.msra.mxu0 %v1824
      %1870 = vmatprep.subr.bf16.mxu0 0
      %1871 = vmatpush2.bf16.msra.mxu0 %v1839
      %1872 = vmatprep.subr.bf16.mxu0 0
      %1873 = vmatpush2.bf16.msra.mxu0 %v1838
      %1874 = vmatprep.subr.bf16.mxu0 0
      %1875 = vmatpush2.bf16.msra.mxu0 %v1837
      %1876 = vmatprep.subr.bf16.mxu0 0
      %1877 = vmatpush2.bf16.msra.mxu0 %v1836
      %1878 = vmatprep.subr.bf16.mxu0 0
      %1879 = vmatpush2.bf16.msra.mxu0 %v1835
      %1880 = vmatprep.subr.bf16.mxu0 0
      %1881 = vmatpush2.bf16.msra.mxu0 %v1834
      %1882 = vmatprep.subr.bf16.mxu0 0
      %1883 = vmatpush2.bf16.msra.mxu0 %v1833
      %1884 = vmatprep.subr.bf16.mxu0 0
      %1885 = vmatpush2.bf16.msra.mxu0 %v1832
      %1886 = vmatprep.mubr.bf16.mxu0 %v1841
      %1887 = vmatmul.mubr.bf16.gmra.mxu0 %v1840
      %v1888 = vpop.f32.mrf.mxu0
      %v1889 = vadd.f32 %v1847, %v1888
      %v1890 = vpop.f32.mrf.mxu0
      %v1891 = vpop.f32.mrf.mxu0
      %v1892 = vadd.f32 %v1852, %v1891
      %v1893 = vpop.f32.mrf.mxu0
      %1894 = vdwg.mxu0
      %vm1895 = vcmp.ge.f32.partialorder %v1889, 0.0
      %vm1896 = vcmp.ge.f32.partialorder %v1892, 0.0
      %v1897 = vmul.f32 %v1889, 0.01
      %v1898 = vmul.f32 %v1892, 0.01
      %v1899 = vsel %vm1895, %v1889, %v1897
      %v1900 = vsel %vm1896, %v1892, %v1898
      %vm1901 = vcmask 523264
      %1902 = vst.msk [vmem:[#allocation2 + $0x8] sm:$0xff] %vm1901, %v1899
      %1903 = vst.msk [vmem:[#allocation2 + $0x28] sm:$0xff] %vm1901, %v1900
      %v1904 = vld [vmem:[#allocation2] sm:$0xff]
      %v1905 = vld [vmem:[#allocation2 + $0x8] sm:$0xff]
      %v1906 = vld [vmem:[#allocation2 + $0x20] sm:$0xff]
      %v1907 = vld [vmem:[#allocation2 + $0x28] sm:$0xff]
      %vm1908 = vcmp.gt.s32.totalorder %v1755, 0
      %vm1909 = vcmp.gt.s32.totalorder %v1757, 0
      %vm1910 = vmand %vm1908, %vm1909
      %v1911 = vsel %vm1910, 1, 0
      %vm1912 = vcmp.eq.s32.totalorder %v1911, 1
      %1917 = vrot.lane.b32.xlu0 %v1904, 9
      %v1918 = vpop.permute.xlu0 %1917
      %1919 = vrot.lane.b32.xlu0 %v1905, 9
      %v1920 = vpop.permute.xlu0 %1919
      %1921 = vrot.lane.b32.xlu0 %v1906, 9
      %v1922 = vpop.permute.xlu0 %1921
      %1923 = vrot.lane.b32.xlu0 %v1907, 9
      %v1924 = vpop.permute.xlu0 %1923
      %vm1925 = vcmask 72704
      %v1926 = vsel %vm1925, %v1918, %v1920
      %v1927 = vsel %vm1925, %v1922, %v1924
      %v1930 = vsel %vm1912, %v1926, 0.0
      %v1931 = vsel %vm1912, %v1927, 0.0
      %1932 = vst.msk [vmem:[#allocation3] sm:$0xff] %vm1901, %v1930
      %1933 = vst.msk [vmem:[#allocation3 + $0x10] sm:$0xff] %vm1901, %v1931
      %v1934 = vld [vmem:[#allocation2] sm:$0xff]
      %v1935 = vld [vmem:[#allocation2 + $0x8] sm:$0xff]
      %v1936 = vld [vmem:[#allocation2 + $0x20] sm:$0xff]
      %v1937 = vld [vmem:[#allocation2 + $0x28] sm:$0xff]
      %v1938 = vsel %vm1908, 1, 0
      %vm1939 = vcmp.eq.s32.totalorder %v1938, 1
      %1944 = vrot.lane.b32.xlu0 %v1934, 8
      %v1945 = vpop.permute.xlu0 %1944
      %1946 = vrot.lane.b32.xlu0 %v1935, 8
      %v1947 = vpop.permute.xlu0 %1946
      %1948 = vrot.lane.b32.xlu0 %v1936, 8
      %v1949 = vpop.permute.xlu0 %1948
      %1950 = vrot.lane.b32.xlu0 %v1937, 8
      %v1951 = vpop.permute.xlu0 %1950
      %vm1952 = vcmask 64512
      %v1953 = vsel %vm1952, %v1945, %v1947
      %v1954 = vsel %vm1952, %v1949, %v1951
      %v1957 = vsel %vm1939, %v1953, 0.0
      %v1958 = vsel %vm1939, %v1954, 0.0
      %1959 = vst.msk [vmem:[#allocation3 + $0x20] sm:$0xff] %vm1901, %v1957
      %1960 = vst.msk [vmem:[#allocation3 + $0x30] sm:$0xff] %vm1901, %v1958
      %v1961 = vld [vmem:[#allocation2] sm:$0xff]
      %v1962 = vld [vmem:[#allocation2 + $0x8] sm:$0xff]
      %v1963 = vld [vmem:[#allocation2 + $0x20] sm:$0xff]
      %v1964 = vld [vmem:[#allocation2 + $0x28] sm:$0xff]
      %vm1965 = vcmp.lt.s32.totalorder %v1757, 7
      %vm1966 = vmand %vm1908, %vm1965
      %v1967 = vsel %vm1966, 1, 0
      %vm1968 = vcmp.eq.s32.totalorder %v1967, 1
      %1973 = vrot.lane.b32.xlu0 %v1961, 7
      %v1974 = vpop.permute.xlu0 %1973
      %1975 = vrot.lane.b32.xlu0 %v1962, 7
      %v1976 = vpop.permute.xlu0 %1975
      %1977 = vrot.lane.b32.xlu0 %v1963, 7
      %v1978 = vpop.permute.xlu0 %1977
      %1979 = vrot.lane.b32.xlu0 %v1964, 7
      %v1980 = vpop.permute.xlu0 %1979
      %vm1981 = vcmask 56320
      %v1982 = vsel %vm1981, %v1974, %v1976
      %v1983 = vsel %vm1981, %v1978, %v1980
      %v1986 = vsel %vm1968, %v1982, 0.0
      %v1987 = vsel %vm1968, %v1983, 0.0
      %1988 = vst.msk [vmem:[#allocation3 + $0x40] sm:$0xff] %vm1901, %v1986
      %1989 = vst.msk [vmem:[#allocation3 + $0x50] sm:$0xff] %vm1901, %v1987
      %v1990 = vld [vmem:[#allocation2] sm:$0xff]
      %v1991 = vld [vmem:[#allocation2 + $0x8] sm:$0xff]
      %v1992 = vld [vmem:[#allocation2 + $0x20] sm:$0xff]
      %v1993 = vld [vmem:[#allocation2 + $0x28] sm:$0xff]
      %v1994 = vsel %vm1909, 1, 0
      %vm1995 = vcmp.eq.s32.totalorder %v1994, 1
      %2000 = vrot.lane.b32.xlu0 %v1990, 1
      %v2001 = vpop.permute.xlu0 %2000
      %2002 = vrot.lane.b32.xlu0 %v1991, 1
      %v2003 = vpop.permute.xlu0 %2002
      %2004 = vrot.lane.b32.xlu0 %v1992, 1
      %v2005 = vpop.permute.xlu0 %2004
      %2006 = vrot.lane.b32.xlu0 %v1993, 1
      %v2007 = vpop.permute.xlu0 %2006
      %v2008 = vsel %vm1000, %v2001, %v2003
      %v2009 = vsel %vm1000, %v2005, %v2007
      %v2012 = vsel %vm1995, %v2008, 0.0
      %v2013 = vsel %vm1995, %v2009, 0.0
      %2014 = vst.msk [vmem:[#allocation3 + $0x60] sm:$0xff] %vm1901, %v2012
      %2015 = vst.msk [vmem:[#allocation3 + $0x70] sm:$0xff] %vm1901, %v2013
      %v2016 = vld [vmem:[#allocation2 + $0x8] sm:$0xff]
      %v2017 = vld [vmem:[#allocation2 + $0x28] sm:$0xff]
      %2018 = vst.msk [vmem:[#allocation3 + $0x80] sm:$0xff] %vm1901, %v2016
      %2019 = vst.msk [vmem:[#allocation3 + $0x90] sm:$0xff] %vm1901, %v2017
      %v2020 = vld [vmem:[#allocation2 + $0x8] sm:$0xff]
      %v2021 = vld [vmem:[#allocation2 + $0x28] sm:$0xff]
      %v2022 = vsel %vm1965, 1, 0
      %vm2023 = vcmp.eq.s32.totalorder %v2022, 1
      %2026 = vrot.lane.b32.xlu0 %v2020, 127
      %v2027 = vpop.permute.xlu0 %2026
      %2028 = vrot.lane.b32.xlu0 %v2021, 127
      %v2029 = vpop.permute.xlu0 %2028
      %v2032 = vsel %vm2023, %v2027, 0.0
      %v2033 = vsel %vm2023, %v2029, 0.0
      %2034 = vst.msk [vmem:[#allocation3 + $0xa0] sm:$0xff] %vm1901, %v2032
      %2035 = vst.msk [vmem:[#allocation3 + $0xb0] sm:$0xff] %vm1901, %v2033
      %v2036 = vld [vmem:[#allocation2 + $0x8] sm:$0xff]
      %v2037 = vld [vmem:[#allocation2 + $0x28] sm:$0xff]
      %vm2038 = vcmp.lt.s32.totalorder %v1755, 7
      %vm2039 = vmand %vm2038, %vm1909
      %v2040 = vsel %vm2039, 1, 0
      %vm2041 = vcmp.eq.s32.totalorder %v2040, 1
      %2044 = vrot.lane.b32.xlu0 %v2036, 121
      %v2045 = vpop.permute.xlu0 %2044
      %2046 = vrot.lane.b32.xlu0 %v2037, 121
      %v2047 = vpop.permute.xlu0 %2046
      %v2050 = vsel %vm2041, %v2045, 0.0
      %v2051 = vsel %vm2041, %v2047, 0.0
      %2052 = vst.msk [vmem:[#allocation3 + $0xc0] sm:$0xff] %vm1901, %v2050
      %2053 = vst.msk [vmem:[#allocation3 + $0xd0] sm:$0xff] %vm1901, %v2051
      %v2054 = vld [vmem:[#allocation2 + $0x8] sm:$0xff]
      %v2055 = vld [vmem:[#allocation2 + $0x28] sm:$0xff]
      %v2056 = vsel %vm2038, 1, 0
      %vm2057 = vcmp.eq.s32.totalorder %v2056, 1
      %2060 = vrot.lane.b32.xlu0 %v2054, 120
      %v2061 = vpop.permute.xlu0 %2060
      %2062 = vrot.lane.b32.xlu0 %v2055, 120
      %v2063 = vpop.permute.xlu0 %2062
      %v2066 = vsel %vm2057, %v2061, 0.0
      %v2067 = vsel %vm2057, %v2063, 0.0
      %2068 = vst.msk [vmem:[#allocation3 + $0xe0] sm:$0xff] %vm1901, %v2066
      %2069 = vst.msk [vmem:[#allocation3 + $0xf0] sm:$0xff] %vm1901, %v2067
      %v2070 = vld [vmem:[#allocation2 + $0x8] sm:$0xff]
      %v2071 = vld [vmem:[#allocation2 + $0x28] sm:$0xff]
      %vm2072 = vmand %vm2038, %vm1965
      %v2073 = vsel %vm2072, 1, 0
      %vm2074 = vcmp.eq.s32.totalorder %v2073, 1
      %2077 = vrot.lane.b32.xlu0 %v2070, 119
      %v2078 = vpop.permute.xlu0 %2077
      %2079 = vrot.lane.b32.xlu0 %v2071, 119
      %v2080 = vpop.permute.xlu0 %2079
      %v2083 = vsel %vm2074, %v2078, 0.0
      %v2084 = vsel %vm2074, %v2080, 0.0
      %2085 = vst.msk [vmem:[#allocation3 + $0x100] sm:$0xff] %vm1901, %v2083
      %2086 = vst.msk [vmem:[#allocation3 + $0x110] sm:$0xff] %vm1901, %v2084
      %v2087 = vld [vmem:[%s7] sm:$0xff]
      %v2088 = vld [vmem:[%s7 + $0x8] sm:$0xff]
      %v2089 = vld [vmem:[#allocation3] sm:$0xff]
      %v2090 = vld [vmem:[#allocation3 + $0x10] sm:$0xff]
      %v2091 = vld [vmem:[#allocation3 + $0x20] sm:$0xff]
      %v2092 = vld [vmem:[#allocation3 + $0x30] sm:$0xff]
      %v2093 = vld [vmem:[#allocation3 + $0x40] sm:$0xff]
      %v2094 = vld [vmem:[#allocation3 + $0x50] sm:$0xff]
      %v2095 = vld [vmem:[#allocation3 + $0x60] sm:$0xff]
      %v2096 = vld [vmem:[#allocation3 + $0x70] sm:$0xff]
      %v2097 = vld [vmem:[#allocation3 + $0x80] sm:$0xff]
      %v2098 = vld [vmem:[#allocation3 + $0x90] sm:$0xff]
      %v2099 = vld [vmem:[#allocation3 + $0xa0] sm:$0xff]
      %v2100 = vld [vmem:[#allocation3 + $0xb0] sm:$0xff]
      %v2101 = vld [vmem:[#allocation3 + $0xc0] sm:$0xff]
      %v2102 = vld [vmem:[#allocation3 + $0xd0] sm:$0xff]
      %v2103 = vld [vmem:[#allocation3 + $0xe0] sm:$0xff]
      %v2104 = vld [vmem:[#allocation3 + $0xf0] sm:$0xff]
      %v2105 = vld [vmem:[#allocation3 + $0x100] sm:$0xff]
      %v2106 = vld [vmem:[#allocation3 + $0x110] sm:$0xff]
      %v2107 = vpack.c.bf16 %v2090, %v2089
      %v2108 = vpack.c.bf16 %v2092, %v2091
      %v2109 = vpack.c.bf16 %v2094, %v2093
      %v2110 = vpack.c.bf16 %v2096, %v2095
      %v2111 = vpack.c.bf16 %v2098, %v2097
      %v2112 = vpack.c.bf16 %v2100, %v2099
      %v2113 = vpack.c.bf16 %v2102, %v2101
      %v2114 = vpack.c.bf16 %v2104, %v2103
      %v2115 = vpack.c.bf16 %v2106, %v2105
      %v2116 = vld [vmem:[%s8] sm:$0xff]
      %v2117 = vld [vmem:[%s8 + $0x8] sm:$0xff]
      %2119 = vset.pattern.permute.xlu0 0
      %2120 = vperm.xlu0 %2119, %v2116
      %v2121 = vpop.permute.xlu0 %2120
      %2124 = vset.pattern.permute.xlu0 0
      %2125 = vperm.xlu0 %2124, %v2117
      %v2126 = vpop.permute.xlu0 %2125
      %v2130 = vunpack.c.l.b16 %v2087
      %v2131 = vunpack.c.h.b16 %v2087
      %v2132 = vunpack.c.l.b16 %v2088
      %v2133 = vunpack.c.h.b16 %v2088
      %v2134 = vpack.c.b16 %v2132, %v2130
      %v2135 = vpack.c.b16 %v2133, %v2131
      %v2138 = vsel %vm946, %v2135, 0
      %2140 = vmatprep.subr.bf16.mxu0 0
      %2141 = vmatpush1.bf16.msra.mxu0 %v2114
      %2142 = vmatprep.subr.bf16.mxu0 0
      %2143 = vmatpush1.bf16.msra.mxu0 %v2113
      %2144 = vmatprep.subr.bf16.mxu0 0
      %2145 = vmatpush1.bf16.msra.mxu0 %v2112
      %2146 = vmatprep.subr.bf16.mxu0 0
      %2147 = vmatpush1.bf16.msra.mxu0 %v2111
      %2148 = vmatprep.subr.bf16.mxu0 0
      %2149 = vmatpush1.bf16.msra.mxu0 %v2110
      %2150 = vmatprep.subr.bf16.mxu0 0
      %2151 = vmatpush1.bf16.msra.mxu0 %v2109
      %2152 = vmatprep.subr.bf16.mxu0 0
      %2153 = vmatpush1.bf16.msra.mxu0 %v2108
      %2154 = vmatprep.subr.bf16.mxu0 0
      %2155 = vmatpush1.bf16.msra.mxu0 %v2107
      %2156 = vmatprep.subr.bf16.mxu0 0
      %2157 = vmatpush2.bf16.msra.mxu0 0
      %2158 = vmatprep.subr.bf16.mxu0 0
      %2159 = vmatpush2.bf16.msra.mxu0 0
      %2160 = vmatprep.subr.bf16.mxu0 0
      %2161 = vmatpush2.bf16.msra.mxu0 0
      %2162 = vmatprep.subr.bf16.mxu0 0
      %2163 = vmatpush2.bf16.msra.mxu0 0
      %2164 = vmatprep.subr.bf16.mxu0 0
      %2165 = vmatpush2.bf16.msra.mxu0 0
      %2166 = vmatprep.subr.bf16.mxu0 0
      %2167 = vmatpush2.bf16.msra.mxu0 0
      %2168 = vmatprep.subr.bf16.mxu0 0
      %2169 = vmatpush2.bf16.msra.mxu0 0
      %2170 = vmatprep.subr.bf16.mxu0 0
      %2171 = vmatpush2.bf16.msra.mxu0 %v2115
      %2172 = vmatprep.mubr.bf16.mxu0 %v2138
      %2173 = vmatmul.mubr.bf16.gmra.mxu0 %v2134
      %v2174 = vpop.f32.mrf.mxu0
      %v2175 = vadd.f32 %v2121, %v2174
      %v2176 = vpop.f32.mrf.mxu0
      %v2177 = vpop.f32.mrf.mxu0
      %v2178 = vadd.f32 %v2126, %v2177
      %v2179 = vpop.f32.mrf.mxu0
      %2180 = vdwg.mxu0
      %vm2181 = vcmp.ge.f32.partialorder %v2175, 0.0
      %vm2182 = vcmp.ge.f32.partialorder %v2178, 0.0
      %v2183 = vmul.f32 %v2175, 0.01
      %v2184 = vmul.f32 %v2178, 0.01
      %v2185 = vsel %vm2181, %v2175, %v2183
      %v2186 = vsel %vm2182, %v2178, %v2184
      %2187 = vst.msk [vmem:[#allocation2 + $0x8] sm:$0xff] %vm1901, %v2185
      %2188 = vst.msk [vmem:[#allocation2 + $0x28] sm:$0xff] %vm1901, %v2186
      %v2189 = vld [vmem:[#allocation2] sm:$0xff]
      %v2190 = vld [vmem:[#allocation2 + $0x8] sm:$0xff]
      %v2191 = vld [vmem:[#allocation2 + $0x20] sm:$0xff]
      %v2192 = vld [vmem:[#allocation2 + $0x28] sm:$0xff]
      %2197 = vrot.lane.b32.xlu0 %v2189, 9
      %v2198 = vpop.permute.xlu0 %2197
      %2199 = vrot.lane.b32.xlu0 %v2190, 9
      %v2200 = vpop.permute.xlu0 %2199
      %2201 = vrot.lane.b32.xlu0 %v2191, 9
      %v2202 = vpop.permute.xlu0 %2201
      %2203 = vrot.lane.b32.xlu0 %v2192, 9
      %v2204 = vpop.permute.xlu0 %2203
      %v2205 = vsel %vm1925, %v2198, %v2200
      %v2206 = vsel %vm1925, %v2202, %v2204
      %v2209 = vsel %vm1912, %v2205, 0.0
      %v2210 = vsel %vm1912, %v2206, 0.0
      %2211 = vst.msk [vmem:[#allocation3] sm:$0xff] %vm1901, %v2209
      %2212 = vst.msk [vmem:[#allocation3 + $0x10] sm:$0xff] %vm1901, %v2210
      %v2213 = vld [vmem:[#allocation2] sm:$0xff]
      %v2214 = vld [vmem:[#allocation2 + $0x8] sm:$0xff]
      %v2215 = vld [vmem:[#allocation2 + $0x20] sm:$0xff]
      %v2216 = vld [vmem:[#allocation2 + $0x28] sm:$0xff]
      %2221 = vrot.lane.b32.xlu0 %v2213, 8
      %v2222 = vpop.permute.xlu0 %2221
      %2223 = vrot.lane.b32.xlu0 %v2214, 8
      %v2224 = vpop.permute.xlu0 %2223
      %2225 = vrot.lane.b32.xlu0 %v2215, 8
      %v2226 = vpop.permute.xlu0 %2225
      %2227 = vrot.lane.b32.xlu0 %v2216, 8
      %v2228 = vpop.permute.xlu0 %2227
      %v2229 = vsel %vm1952, %v2222, %v2224
      %v2230 = vsel %vm1952, %v2226, %v2228
      %v2233 = vsel %vm1939, %v2229, 0.0
      %v2234 = vsel %vm1939, %v2230, 0.0
      %2235 = vst.msk [vmem:[#allocation3 + $0x20] sm:$0xff] %vm1901, %v2233
      %2236 = vst.msk [vmem:[#allocation3 + $0x30] sm:$0xff] %vm1901, %v2234
      %v2237 = vld [vmem:[#allocation2] sm:$0xff]
      %v2238 = vld [vmem:[#allocation2 + $0x8] sm:$0xff]
      %v2239 = vld [vmem:[#allocation2 + $0x20] sm:$0xff]
      %v2240 = vld [vmem:[#allocation2 + $0x28] sm:$0xff]
      %2245 = vrot.lane.b32.xlu0 %v2237, 7
      %v2246 = vpop.permute.xlu0 %2245
      %2247 = vrot.lane.b32.xlu0 %v2238, 7
      %v2248 = vpop.permute.xlu0 %2247
      %2249 = vrot.lane.b32.xlu0 %v2239, 7
      %v2250 = vpop.permute.xlu0 %2249
      %2251 = vrot.lane.b32.xlu0 %v2240, 7
      %v2252 = vpop.permute.xlu0 %2251
      %v2253 = vsel %vm1981, %v2246, %v2248
      %v2254 = vsel %vm1981, %v2250, %v2252
      %v2257 = vsel %vm1968, %v2253, 0.0
      %v2258 = vsel %vm1968, %v2254, 0.0
      %2259 = vst.msk [vmem:[#allocation3 + $0x40] sm:$0xff] %vm1901, %v2257
      %2260 = vst.msk [vmem:[#allocation3 + $0x50] sm:$0xff] %vm1901, %v2258
      %v2261 = vld [vmem:[#allocation2] sm:$0xff]
      %v2262 = vld [vmem:[#allocation2 + $0x8] sm:$0xff]
      %v2263 = vld [vmem:[#allocation2 + $0x20] sm:$0xff]
      %v2264 = vld [vmem:[#allocation2 + $0x28] sm:$0xff]
      %2269 = vrot.lane.b32.xlu0 %v2261, 1
      %v2270 = vpop.permute.xlu0 %2269
      %2271 = vrot.lane.b32.xlu0 %v2262, 1
      %v2272 = vpop.permute.xlu0 %2271
      %2273 = vrot.lane.b32.xlu0 %v2263, 1
      %v2274 = vpop.permute.xlu0 %2273
      %2275 = vrot.lane.b32.xlu0 %v2264, 1
      %v2276 = vpop.permute.xlu0 %2275
      %v2277 = vsel %vm1000, %v2270, %v2272
      %v2278 = vsel %vm1000, %v2274, %v2276
      %v2281 = vsel %vm1995, %v2277, 0.0
      %v2282 = vsel %vm1995, %v2278, 0.0
      %2283 = vst.msk [vmem:[#allocation3 + $0x60] sm:$0xff] %vm1901, %v2281
      %2284 = vst.msk [vmem:[#allocation3 + $0x70] sm:$0xff] %vm1901, %v2282
      %v2285 = vld [vmem:[#allocation2 + $0x8] sm:$0xff]
      %v2286 = vld [vmem:[#allocation2 + $0x28] sm:$0xff]
      %2287 = vst.msk [vmem:[#allocation3 + $0x80] sm:$0xff] %vm1901, %v2285
      %2288 = vst.msk [vmem:[#allocation3 + $0x90] sm:$0xff] %vm1901, %v2286
      %v2289 = vld [vmem:[#allocation2 + $0x8] sm:$0xff]
      %v2290 = vld [vmem:[#allocation2 + $0x28] sm:$0xff]
      %2293 = vrot.lane.b32.xlu0 %v2289, 127
      %v2294 = vpop.permute.xlu0 %2293
      %2295 = vrot.lane.b32.xlu0 %v2290, 127
      %v2296 = vpop.permute.xlu0 %2295
      %v2299 = vsel %vm2023, %v2294, 0.0
      %v2300 = vsel %vm2023, %v2296, 0.0
      %2301 = vst.msk [vmem:[#allocation3 + $0xa0] sm:$0xff] %vm1901, %v2299
      %2302 = vst.msk [vmem:[#allocation3 + $0xb0] sm:$0xff] %vm1901, %v2300
      %v2303 = vld [vmem:[#allocation2 + $0x8] sm:$0xff]
      %v2304 = vld [vmem:[#allocation2 + $0x28] sm:$0xff]
      %2307 = vrot.lane.b32.xlu0 %v2303, 121
      %v2308 = vpop.permute.xlu0 %2307
      %2309 = vrot.lane.b32.xlu0 %v2304, 121
      %v2310 = vpop.permute.xlu0 %2309
      %v2313 = vsel %vm2041, %v2308, 0.0
      %v2314 = vsel %vm2041, %v2310, 0.0
      %2315 = vst.msk [vmem:[#allocation3 + $0xc0] sm:$0xff] %vm1901, %v2313
      %2316 = vst.msk [vmem:[#allocation3 + $0xd0] sm:$0xff] %vm1901, %v2314
      %v2317 = vld [vmem:[#allocation2 + $0x8] sm:$0xff]
      %v2318 = vld [vmem:[#allocation2 + $0x28] sm:$0xff]
      %2321 = vrot.lane.b32.xlu0 %v2317, 120
      %v2322 = vpop.permute.xlu0 %2321
      %2323 = vrot.lane.b32.xlu0 %v2318, 120
      %v2324 = vpop.permute.xlu0 %2323
      %v2327 = vsel %vm2057, %v2322, 0.0
      %v2328 = vsel %vm2057, %v2324, 0.0
      %2329 = vst.msk [vmem:[#allocation3 + $0xe0] sm:$0xff] %vm1901, %v2327
      %2330 = vst.msk [vmem:[#allocation3 + $0xf0] sm:$0xff] %vm1901, %v2328
      %v2331 = vld [vmem:[#allocation2 + $0x8] sm:$0xff]
      %v2332 = vld [vmem:[#allocation2 + $0x28] sm:$0xff]
      %2335 = vrot.lane.b32.xlu0 %v2331, 119
      %v2336 = vpop.permute.xlu0 %2335
      %2337 = vrot.lane.b32.xlu0 %v2332, 119
      %v2338 = vpop.permute.xlu0 %2337
      %v2341 = vsel %vm2074, %v2336, 0.0
      %v2342 = vsel %vm2074, %v2338, 0.0
      %2343 = vst.msk [vmem:[#allocation3 + $0x100] sm:$0xff] %vm1901, %v2341
      %2344 = vst.msk [vmem:[#allocation3 + $0x110] sm:$0xff] %vm1901, %v2342
      %v2345 = vld [vmem:[%s9] sm:$0xff]
      %v2346 = vld [vmem:[%s9 + $0x8] sm:$0xff]
      %v2347 = vld [vmem:[%s9 + $0x10] sm:$0xff]
      %v2348 = vld [vmem:[%s9 + $0x18] sm:$0xff]
      %v2349 = vld [vmem:[#allocation3] sm:$0xff]
      %v2350 = vld [vmem:[#allocation3 + $0x10] sm:$0xff]
      %v2351 = vld [vmem:[#allocation3 + $0x20] sm:$0xff]
      %v2352 = vld [vmem:[#allocation3 + $0x30] sm:$0xff]
      %v2353 = vld [vmem:[#allocation3 + $0x40] sm:$0xff]
      %v2354 = vld [vmem:[#allocation3 + $0x50] sm:$0xff]
      %v2355 = vld [vmem:[#allocation3 + $0x60] sm:$0xff]
      %v2356 = vld [vmem:[#allocation3 + $0x70] sm:$0xff]
      %v2357 = vld [vmem:[#allocation3 + $0x80] sm:$0xff]
      %v2358 = vld [vmem:[#allocation3 + $0x90] sm:$0xff]
      %v2359 = vld [vmem:[#allocation3 + $0xa0] sm:$0xff]
      %v2360 = vld [vmem:[#allocation3 + $0xb0] sm:$0xff]
      %v2361 = vld [vmem:[#allocation3 + $0xc0] sm:$0xff]
      %v2362 = vld [vmem:[#allocation3 + $0xd0] sm:$0xff]
      %v2363 = vld [vmem:[#allocation3 + $0xe0] sm:$0xff]
      %v2364 = vld [vmem:[#allocation3 + $0xf0] sm:$0xff]
      %v2365 = vld [vmem:[#allocation3 + $0x100] sm:$0xff]
      %v2366 = vld [vmem:[#allocation3 + $0x110] sm:$0xff]
      %v2367 = vpack.c.bf16 %v2350, %v2349
      %v2368 = vpack.c.bf16 %v2352, %v2351
      %v2369 = vpack.c.bf16 %v2354, %v2353
      %v2370 = vpack.c.bf16 %v2356, %v2355
      %v2371 = vpack.c.bf16 %v2358, %v2357
      %v2372 = vpack.c.bf16 %v2360, %v2359
      %v2373 = vpack.c.bf16 %v2362, %v2361
      %v2374 = vpack.c.bf16 %v2364, %v2363
      %v2375 = vpack.c.bf16 %v2366, %v2365
      %v2380 = vunpack.c.l.b16 %v2345
      %v2381 = vunpack.c.h.b16 %v2345
      %v2382 = vunpack.c.l.b16 %v2346
      %v2383 = vunpack.c.h.b16 %v2346
      %v2384 = vunpack.c.l.b16 %v2347
      %v2385 = vunpack.c.h.b16 %v2347
      %v2386 = vunpack.c.l.b16 %v2348
      %v2387 = vunpack.c.h.b16 %v2348
      %v2388 = vpack.c.b16 %v2382, %v2380
      %v2389 = vpack.c.b16 %v2383, %v2381
      %v2390 = vpack.c.b16 %v2386, %v2384
      %v2391 = vpack.c.b16 %v2387, %v2385
      %v2395 = vsel %vm946, %v2389, 0
      %v2398 = vsel %vm946, %v2391, 0
      %2400 = vmatprep.subr.bf16.mxu0 0
      %2401 = vmatpush1.bf16.msra.mxu0 %v2374
      %2402 = vmatprep.subr.bf16.mxu0 0
      %2403 = vmatpush1.bf16.msra.mxu0 %v2373
      %2404 = vmatprep.subr.bf16.mxu0 0
      %2405 = vmatpush1.bf16.msra.mxu0 %v2372
      %2406 = vmatprep.subr.bf16.mxu0 0
      %2407 = vmatpush1.bf16.msra.mxu0 %v2371
      %2408 = vmatprep.subr.bf16.mxu0 0
      %2409 = vmatpush1.bf16.msra.mxu0 %v2370
      %2410 = vmatprep.subr.bf16.mxu0 0
      %2411 = vmatpush1.bf16.msra.mxu0 %v2369
      %2412 = vmatprep.subr.bf16.mxu0 0
      %2413 = vmatpush1.bf16.msra.mxu0 %v2368
      %2414 = vmatprep.subr.bf16.mxu0 0
      %2415 = vmatpush1.bf16.msra.mxu0 %v2367
      %2416 = vmatprep.subr.bf16.mxu0 0
      %2417 = vmatpush2.bf16.msra.mxu0 0
      %2418 = vmatprep.subr.bf16.mxu0 0
      %2419 = vmatpush2.bf16.msra.mxu0 0
      %2420 = vmatprep.subr.bf16.mxu0 0
      %2421 = vmatpush2.bf16.msra.mxu0 0
      %2422 = vmatprep.subr.bf16.mxu0 0
      %2423 = vmatpush2.bf16.msra.mxu0 0
      %2424 = vmatprep.subr.bf16.mxu0 0
      %2425 = vmatpush2.bf16.msra.mxu0 0
      %2426 = vmatprep.subr.bf16.mxu0 0
      %2427 = vmatpush2.bf16.msra.mxu0 0
      %2428 = vmatprep.subr.bf16.mxu0 0
      %2429 = vmatpush2.bf16.msra.mxu0 0
      %2430 = vmatprep.subr.bf16.mxu0 0
      %2431 = vmatpush2.bf16.msra.mxu0 %v2375
      %2432 = vmatprep.mubr.bf16.mxu0 %v2395
      %2433 = vmatmul.mubr.bf16.gmra.mxu0 %v2388
      %v2434 = vpop.f32.mrf.mxu0
      %v2435 = vadd.f32 0.0, %v2434
      %v2436 = vpop.f32.mrf.mxu0
      %v2437 = vpop.f32.mrf.mxu0
      %v2438 = vadd.f32 0.0, %v2437
      %v2439 = vpop.f32.mrf.mxu0
      %2440 = vmatprep.mubr.bf16.mxu0 %v2398
      %2441 = vmatmul.mubr.bf16.gmra.mxu0 %v2390
      %v2442 = vpop.f32.mrf.mxu0
      %v2443 = vadd.f32 0.0, %v2442
      %v2444 = vpop.f32.mrf.mxu0
      %v2445 = vpop.f32.mrf.mxu0
      %v2446 = vadd.f32 0.0, %v2445
      %v2447 = vpop.f32.mrf.mxu0
      %2448 = vdwg.mxu0
      %v2449 = vshra.s32 %v870, 2
      %v2450 = vmul.u32 %v2449, 16
      %v2451 = vand.u32 %v870, 3
      %v2452 = vmul.u32 %v2451, 2
      %v2453 = vadd.s32 %v2450, %v2452
      %vm2454 = vcmp.eq.s32.totalorder %v1723, %v2453
      %vm2455 = vcmp.eq.s32.totalorder %v1724, %v2453
      %vm2456 = vcmp.eq.s32.totalorder %v1725, %v2453
      %vm2457 = vcmp.eq.s32.totalorder %v1726, %v2453
      %vm2458 = vcmp.eq.s32.totalorder %v1727, %v2453
      %vm2459 = vcmp.eq.s32.totalorder %v1728, %v2453
      %vm2460 = vcmp.eq.s32.totalorder %v1729, %v2453
      %vm2461 = vcmp.eq.s32.totalorder %v1730, %v2453
      %v2462 = vsel %vm2454, 1.0, 0.0
      %v2463 = vsel %vm2455, 1.0, 0.0
      %v2464 = vsel %vm2456, 1.0, 0.0
      %v2465 = vsel %vm2457, 1.0, 0.0
      %v2466 = vsel %vm2458, 1.0, 0.0
      %v2467 = vsel %vm2459, 1.0, 0.0
      %v2468 = vsel %vm2460, 1.0, 0.0
      %v2469 = vsel %vm2461, 1.0, 0.0
      %v2470 = vpack.c.bf16 %v2463, %v2462
      %v2471 = vpack.c.bf16 %v2465, %v2464
      %v2472 = vpack.c.bf16 %v2467, %v2466
      %v2473 = vpack.c.bf16 %v2469, %v2468
      %v2474 = vpack.c.bf16 %v2438, %v2435
      %v2475 = vpack.c.bf16 %v2446, %v2443
      %v2476 = vld [vmem:[%s10] sm:$0xff]
      %v2477 = vld [vmem:[%s10 + $0x8] sm:$0xff]
      %v2478 = vld [vmem:[%s10 + $0x10] sm:$0xff]
      %v2479 = vld [vmem:[%s10 + $0x18] sm:$0xff]
      %2481 = vset.pattern.permute.xlu0 0
      %2482 = vperm.xlu0 %2481, %v2476
      %v2483 = vpop.permute.xlu0 %2482
      %2486 = vset.pattern.permute.xlu0 0
      %2487 = vperm.xlu0 %2486, %v2477
      %v2488 = vpop.permute.xlu0 %2487
      %2491 = vset.pattern.permute.xlu0 0
      %2492 = vperm.xlu0 %2491, %v2478
      %v2493 = vpop.permute.xlu0 %2492
      %2496 = vset.pattern.permute.xlu0 0
      %2497 = vperm.xlu0 %2496, %v2479
      %v2498 = vpop.permute.xlu0 %2497
      %v2501 = vsel %vm1901, %v2474, 0
      %v2504 = vsel %vm1901, %v2475, 0
      %2506 = vmatprep.subr.bf16.mxu0 0
      %2507 = vmatpush1.bf16.msra.mxu0 0
      %2508 = vmatprep.subr.bf16.mxu0 0
      %2509 = vmatpush1.bf16.msra.mxu0 0
      %2510 = vmatprep.subr.bf16.mxu0 0
      %2511 = vmatpush1.bf16.msra.mxu0 0
      %2512 = vmatprep.subr.bf16.mxu0 0
      %2513 = vmatpush1.bf16.msra.mxu0 0
      %2514 = vmatprep.subr.bf16.mxu0 0
      %2515 = vmatpush1.bf16.msra.mxu0 %v2473
      %2516 = vmatprep.subr.bf16.mxu0 0
      %2517 = vmatpush1.bf16.msra.mxu0 %v2472
      %2518 = vmatprep.subr.bf16.mxu0 0
      %2519 = vmatpush1.bf16.msra.mxu0 %v2471
      %2520 = vmatprep.subr.bf16.mxu0 0
      %2521 = vmatpush1.bf16.msra.mxu0 %v2470
      %2522 = vmatprep.subr.bf16.mxu0 0
      %2523 = vmatpush2.bf16.msra.mxu0 0
      %2524 = vmatprep.subr.bf16.mxu0 0
      %2525 = vmatpush2.bf16.msra.mxu0 0
      %2526 = vmatprep.subr.bf16.mxu0 0
      %2527 = vmatpush2.bf16.msra.mxu0 0
      %2528 = vmatprep.subr.bf16.mxu0 0
      %2529 = vmatpush2.bf16.msra.mxu0 0
      %2530 = vmatprep.subr.bf16.mxu0 0
      %2531 = vmatpush2.bf16.msra.mxu0 0
      %2532 = vmatprep.subr.bf16.mxu0 0
      %2533 = vmatpush2.bf16.msra.mxu0 0
      %2534 = vmatprep.subr.bf16.mxu0 0
      %2535 = vmatpush2.bf16.msra.mxu0 0
      %2536 = vmatprep.subr.bf16.mxu0 0
      %2537 = vmatpush2.bf16.msra.mxu0 0
      %2538 = vmatprep.mubr.bf16.mxu0 0
      %2539 = vmatmul.mubr.bf16.gmra.mxu0 %v2501
      %v2540 = vpop.f32.mrf.mxu0
      %v2541 = vadd.f32 %v2483, %v2540
      %v2542 = vpop.f32.mrf.mxu0
      %v2543 = vpop.f32.mrf.mxu0
      %v2544 = vadd.f32 %v2488, %v2543
      %v2545 = vpop.f32.mrf.mxu0
      %2546 = vmatprep.mubr.bf16.mxu0 0
      %2547 = vmatmul.mubr.bf16.gmra.mxu0 %v2504
      %v2548 = vpop.f32.mrf.mxu0
      %v2549 = vadd.f32 %v2493, %v2548
      %v2550 = vpop.f32.mrf.mxu0
      %v2551 = vpop.f32.mrf.mxu0
      %v2552 = vadd.f32 %v2498, %v2551
      %v2553 = vpop.f32.mrf.mxu0
      %2554 = vdwg.mxu0
      %vm2555 = vcmp.ge.f32.partialorder %v2541, 0.0
      %vm2556 = vcmp.ge.f32.partialorder %v2544, 0.0
      %vm2557 = vcmp.ge.f32.partialorder %v2549, 0.0
      %vm2558 = vcmp.ge.f32.partialorder %v2552, 0.0
      %v2559 = vmul.f32 %v2541, 0.01
      %v2560 = vmul.f32 %v2544, 0.01
      %v2561 = vmul.f32 %v2549, 0.01
      %v2562 = vmul.f32 %v2552, 0.01
      %v2563 = vsel %vm2555, %v2541, %v2559
      %v2564 = vsel %vm2556, %v2544, %v2560
      %v2565 = vsel %vm2557, %v2549, %v2561
      %v2566 = vsel %vm2558, %v2552, %v2562
      %2567 = vst.msk [vmem:[#allocation2 + $0x8] sm:$0xff] %vm946, %v2563
      %2568 = vst.msk [vmem:[#allocation2 + $0x28] sm:$0xff] %vm946, %v2564
      %2569 = vst.msk [vmem:[#allocation2 + $0x48] sm:$0xff] %vm946, %v2565
      %2570 = vst.msk [vmem:[#allocation2 + $0x68] sm:$0xff] %vm946, %v2566
      %v2571 = vld [vmem:[#allocation2] sm:$0xff]
      %v2572 = vld [vmem:[#allocation2 + $0x8] sm:$0xff]
      %v2573 = vld [vmem:[#allocation2 + $0x20] sm:$0xff]
      %v2574 = vld [vmem:[#allocation2 + $0x28] sm:$0xff]
      %v2575 = vld [vmem:[#allocation2 + $0x40] sm:$0xff]
      %v2576 = vld [vmem:[#allocation2 + $0x48] sm:$0xff]
      %v2577 = vld [vmem:[#allocation2 + $0x60] sm:$0xff]
      %v2578 = vld [vmem:[#allocation2 + $0x68] sm:$0xff]
      %vm2579 = vcmp.gt.s32.totalorder %v2449, 0
      %vm2580 = vcmp.gt.s32.totalorder %v2451, 0
      %vm2581 = vmand %vm2579, %vm2580
      %v2582 = vsel %vm2581, 1, 0
      %vm2583 = vcmp.eq.s32.totalorder %v2582, 1
      %2592 = vrot.lane.b32.xlu0 %v2571, 5
      %v2593 = vpop.permute.xlu0 %2592
      %2594 = vrot.lane.b32.xlu0 %v2572, 5
      %v2595 = vpop.permute.xlu0 %2594
      %2596 = vrot.lane.b32.xlu0 %v2573, 5
      %v2597 = vpop.permute.xlu0 %2596
      %2598 = vrot.lane.b32.xlu0 %v2574, 5
      %v2599 = vpop.permute.xlu0 %2598
      %2600 = vrot.lane.b32.xlu0 %v2575, 5
      %v2601 = vpop.permute.xlu0 %2600
      %2602 = vrot.lane.b32.xlu0 %v2576, 5
      %v2603 = vpop.permute.xlu0 %2602
      %2604 = vrot.lane.b32.xlu0 %v2577, 5
      %v2605 = vpop.permute.xlu0 %2604
      %2606 = vrot.lane.b32.xlu0 %v2578, 5
      %v2607 = vpop.permute.xlu0 %2606
      %vm2608 = vcmask 39936
      %v2609 = vsel %vm2608, %v2593, %v2595
      %v2610 = vsel %vm2608, %v2597, %v2599
      %v2611 = vsel %vm2608, %v2601, %v2603
      %v2612 = vsel %vm2608, %v2605, %v2607
      %v2617 = vsel %vm2583, %v2609, 0.0
      %v2618 = vsel %vm2583, %v2610, 0.0
      %v2619 = vsel %vm2583, %v2611, 0.0
      %v2620 = vsel %vm2583, %v2612, 0.0
      %2621 = vst.msk [vmem:[#allocation3] sm:$0xff] %vm946, %v2617
      %2622 = vst.msk [vmem:[#allocation3 + $0x10] sm:$0xff] %vm946, %v2618
      %2623 = vst.msk [vmem:[#allocation3 + $0x20] sm:$0xff] %vm946, %v2619
      %2624 = vst.msk [vmem:[#allocation3 + $0x30] sm:$0xff] %vm946, %v2620
      %v2625 = vld [vmem:[#allocation2] sm:$0xff]
      %v2626 = vld [vmem:[#allocation2 + $0x8] sm:$0xff]
      %v2627 = vld [vmem:[#allocation2 + $0x20] sm:$0xff]
      %v2628 = vld [vmem:[#allocation2 + $0x28] sm:$0xff]
      %v2629 = vld [vmem:[#allocation2 + $0x40] sm:$0xff]
      %v2630 = vld [vmem:[#allocation2 + $0x48] sm:$0xff]
      %v2631 = vld [vmem:[#allocation2 + $0x60] sm:$0xff]
      %v2632 = vld [vmem:[#allocation2 + $0x68] sm:$0xff]
      %v2633 = vsel %vm2579, 1, 0
      %vm2634 = vcmp.eq.s32.totalorder %v2633, 1
      %2643 = vrot.lane.b32.xlu0 %v2625, 4
      %v2644 = vpop.permute.xlu0 %2643
      %2645 = vrot.lane.b32.xlu0 %v2626, 4
      %v2646 = vpop.permute.xlu0 %2645
      %2647 = vrot.lane.b32.xlu0 %v2627, 4
      %v2648 = vpop.permute.xlu0 %2647
      %2649 = vrot.lane.b32.xlu0 %v2628, 4
      %v2650 = vpop.permute.xlu0 %2649
      %2651 = vrot.lane.b32.xlu0 %v2629, 4
      %v2652 = vpop.permute.xlu0 %2651
      %2653 = vrot.lane.b32.xlu0 %v2630, 4
      %v2654 = vpop.permute.xlu0 %2653
      %2655 = vrot.lane.b32.xlu0 %v2631, 4
      %v2656 = vpop.permute.xlu0 %2655
      %2657 = vrot.lane.b32.xlu0 %v2632, 4
      %v2658 = vpop.permute.xlu0 %2657
      %vm2659 = vcmask 31744
      %v2660 = vsel %vm2659, %v2644, %v2646
      %v2661 = vsel %vm2659, %v2648, %v2650
      %v2662 = vsel %vm2659, %v2652, %v2654
      %v2663 = vsel %vm2659, %v2656, %v2658
      %v2668 = vsel %vm2634, %v2660, 0.0
      %v2669 = vsel %vm2634, %v2661, 0.0
      %v2670 = vsel %vm2634, %v2662, 0.0
      %v2671 = vsel %vm2634, %v2663, 0.0
      %2672 = vst.msk [vmem:[#allocation3 + $0x40] sm:$0xff] %vm946, %v2668
      %2673 = vst.msk [vmem:[#allocation3 + $0x50] sm:$0xff] %vm946, %v2669
      %2674 = vst.msk [vmem:[#allocation3 + $0x60] sm:$0xff] %vm946, %v2670
      %2675 = vst.msk [vmem:[#allocation3 + $0x70] sm:$0xff] %vm946, %v2671
      %v2676 = vld [vmem:[#allocation2] sm:$0xff]
      %v2677 = vld [vmem:[#allocation2 + $0x8] sm:$0xff]
      %v2678 = vld [vmem:[#allocation2 + $0x20] sm:$0xff]
      %v2679 = vld [vmem:[#allocation2 + $0x28] sm:$0xff]
      %v2680 = vld [vmem:[#allocation2 + $0x40] sm:$0xff]
      %v2681 = vld [vmem:[#allocation2 + $0x48] sm:$0xff]
      %v2682 = vld [vmem:[#allocation2 + $0x60] sm:$0xff]
      %v2683 = vld [vmem:[#allocation2 + $0x68] sm:$0xff]
      %vm2684 = vcmp.lt.s32.totalorder %v2451, 3
      %vm2685 = vmand %vm2579, %vm2684
      %v2686 = vsel %vm2685, 1, 0
      %vm2687 = vcmp.eq.s32.totalorder %v2686, 1
      %2696 = vrot.lane.b32.xlu0 %v2676, 3
      %v2697 = vpop.permute.xlu0 %2696
      %2698 = vrot.lane.b32.xlu0 %v2677, 3
      %v2699 = vpop.permute.xlu0 %2698
      %2700 = vrot.lane.b32.xlu0 %v2678, 3
      %v2701 = vpop.permute.xlu0 %2700
      %2702 = vrot.lane.b32.xlu0 %v2679, 3
      %v2703 = vpop.permute.xlu0 %2702
      %2704 = vrot.lane.b32.xlu0 %v2680, 3
      %v2705 = vpop.permute.xlu0 %2704
      %2706 = vrot.lane.b32.xlu0 %v2681, 3
      %v2707 = vpop.permute.xlu0 %2706
      %2708 = vrot.lane.b32.xlu0 %v2682, 3
      %v2709 = vpop.permute.xlu0 %2708
      %2710 = vrot.lane.b32.xlu0 %v2683, 3
      %v2711 = vpop.permute.xlu0 %2710
      %vm2712 = vcmask 23552
      %v2713 = vsel %vm2712, %v2697, %v2699
      %v2714 = vsel %vm2712, %v2701, %v2703
      %v2715 = vsel %vm2712, %v2705, %v2707
      %v2716 = vsel %vm2712, %v2709, %v2711
      %v2721 = vsel %vm2687, %v2713, 0.0
      %v2722 = vsel %vm2687, %v2714, 0.0
      %v2723 = vsel %vm2687, %v2715, 0.0
      %v2724 = vsel %vm2687, %v2716, 0.0
      %2725 = vst.msk [vmem:[#allocation3 + $0x80] sm:$0xff] %vm946, %v2721
      %2726 = vst.msk [vmem:[#allocation3 + $0x90] sm:$0xff] %vm946, %v2722
      %2727 = vst.msk [vmem:[#allocation3 + $0xa0] sm:$0xff] %vm946, %v2723
      %2728 = vst.msk [vmem:[#allocation3 + $0xb0] sm:$0xff] %vm946, %v2724
      %v2729 = vld [vmem:[#allocation2] sm:$0xff]
      %v2730 = vld [vmem:[#allocation2 + $0x8] sm:$0xff]
      %v2731 = vld [vmem:[#allocation2 + $0x20] sm:$0xff]
      %v2732 = vld [vmem:[#allocation2 + $0x28] sm:$0xff]
      %v2733 = vld [vmem:[#allocation2 + $0x40] sm:$0xff]
      %v2734 = vld [vmem:[#allocation2 + $0x48] sm:$0xff]
      %v2735 = vld [vmem:[#allocation2 + $0x60] sm:$0xff]
      %v2736 = vld [vmem:[#allocation2 + $0x68] sm:$0xff]
      %v2737 = vsel %vm2580, 1, 0
      %vm2738 = vcmp.eq.s32.totalorder %v2737, 1
      %2747 = vrot.lane.b32.xlu0 %v2729, 1
      %v2748 = vpop.permute.xlu0 %2747
      %2749 = vrot.lane.b32.xlu0 %v2730, 1
      %v2750 = vpop.permute.xlu0 %2749
      %2751 = vrot.lane.b32.xlu0 %v2731, 1
      %v2752 = vpop.permute.xlu0 %2751
      %2753 = vrot.lane.b32.xlu0 %v2732, 1
      %v2754 = vpop.permute.xlu0 %2753
      %2755 = vrot.lane.b32.xlu0 %v2733, 1
      %v2756 = vpop.permute.xlu0 %2755
      %2757 = vrot.lane.b32.xlu0 %v2734, 1
      %v2758 = vpop.permute.xlu0 %2757
      %2759 = vrot.lane.b32.xlu0 %v2735, 1
      %v2760 = vpop.permute.xlu0 %2759
      %2761 = vrot.lane.b32.xlu0 %v2736, 1
      %v2762 = vpop.permute.xlu0 %2761
      %v2763 = vsel %vm1000, %v2748, %v2750
      %v2764 = vsel %vm1000, %v2752, %v2754
      %v2765 = vsel %vm1000, %v2756, %v2758
      %v2766 = vsel %vm1000, %v2760, %v2762
      %v2771 = vsel %vm2738, %v2763, 0.0
      %v2772 = vsel %vm2738, %v2764, 0.0
      %v2773 = vsel %vm2738, %v2765, 0.0
      %v2774 = vsel %vm2738, %v2766, 0.0
      %2775 = vst.msk [vmem:[#allocation3 + $0xc0] sm:$0xff] %vm946, %v2771
      %2776 = vst.msk [vmem:[#allocation3 + $0xd0] sm:$0xff] %vm946, %v2772
      %2777 = vst.msk [vmem:[#allocation3 + $0xe0] sm:$0xff] %vm946, %v2773
      %2778 = vst.msk [vmem:[#allocation3 + $0xf0] sm:$0xff] %vm946, %v2774
      %v2779 = vld [vmem:[#allocation2 + $0x8] sm:$0xff]
      %v2780 = vld [vmem:[#allocation2 + $0x28] sm:$0xff]
      %v2781 = vld [vmem:[#allocation2 + $0x48] sm:$0xff]
      %v2782 = vld [vmem:[#allocation2 + $0x68] sm:$0xff]
      %2783 = vst.msk [vmem:[#allocation3 + $0x100] sm:$0xff] %vm946, %v2779
      %2784 = vst.msk [vmem:[#allocation3 + $0x110] sm:$0xff] %vm946, %v2780
      %2785 = vst.msk [vmem:[#allocation3 + $0x120] sm:$0xff] %vm946, %v2781
      %2786 = vst.msk [vmem:[#allocation3 + $0x130] sm:$0xff] %vm946, %v2782
      %v2787 = vld [vmem:[#allocation2 + $0x8] sm:$0xff]
      %v2788 = vld [vmem:[#allocation2 + $0x28] sm:$0xff]
      %v2789 = vld [vmem:[#allocation2 + $0x48] sm:$0xff]
      %v2790 = vld [vmem:[#allocation2 + $0x68] sm:$0xff]
      %v2791 = vsel %vm2684, 1, 0
      %vm2792 = vcmp.eq.s32.totalorder %v2791, 1
      %2797 = vrot.lane.b32.xlu0 %v2787, 127
      %v2798 = vpop.permute.xlu0 %2797
      %2799 = vrot.lane.b32.xlu0 %v2788, 127
      %v2800 = vpop.permute.xlu0 %2799
      %2801 = vrot.lane.b32.xlu0 %v2789, 127
      %v2802 = vpop.permute.xlu0 %2801
      %2803 = vrot.lane.b32.xlu0 %v2790, 127
      %v2804 = vpop.permute.xlu0 %2803
      %v2809 = vsel %vm2792, %v2798, 0.0
      %v2810 = vsel %vm2792, %v2800, 0.0
      %v2811 = vsel %vm2792, %v2802, 0.0
      %v2812 = vsel %vm2792, %v2804, 0.0
      %2813 = vst.msk [vmem:[#allocation3 + $0x140] sm:$0xff] %vm946, %v2809
      %2814 = vst.msk [vmem:[#allocation3 + $0x150] sm:$0xff] %vm946, %v2810
      %2815 = vst.msk [vmem:[#allocation3 + $0x160] sm:$0xff] %vm946, %v2811
      %2816 = vst.msk [vmem:[#allocation3 + $0x170] sm:$0xff] %vm946, %v2812
      %v2817 = vld [vmem:[#allocation2 + $0x8] sm:$0xff]
      %v2818 = vld [vmem:[#allocation2 + $0x28] sm:$0xff]
      %v2819 = vld [vmem:[#allocation2 + $0x48] sm:$0xff]
      %v2820 = vld [vmem:[#allocation2 + $0x68] sm:$0xff]
      %vm2821 = vcmp.lt.s32.totalorder %v2449, 3
      %vm2822 = vmand %vm2821, %vm2580
      %v2823 = vsel %vm2822, 1, 0
      %vm2824 = vcmp.eq.s32.totalorder %v2823, 1
      %2829 = vrot.lane.b32.xlu0 %v2817, 125
      %v2830 = vpop.permute.xlu0 %2829
      %2831 = vrot.lane.b32.xlu0 %v2818, 125
      %v2832 = vpop.permute.xlu0 %2831
      %2833 = vrot.lane.b32.xlu0 %v2819, 125
      %v2834 = vpop.permute.xlu0 %2833
      %2835 = vrot.lane.b32.xlu0 %v2820, 125
      %v2836 = vpop.permute.xlu0 %2835
      %v2841 = vsel %vm2824, %v2830, 0.0
      %v2842 = vsel %vm2824, %v2832, 0.0
      %v2843 = vsel %vm2824, %v2834, 0.0
      %v2844 = vsel %vm2824, %v2836, 0.0
      %2845 = vst.msk [vmem:[#allocation3 + $0x180] sm:$0xff] %vm946, %v2841
      %2846 = vst.msk [vmem:[#allocation3 + $0x190] sm:$0xff] %vm946, %v2842
      %2847 = vst.msk [vmem:[#allocation3 + $0x1a0] sm:$0xff] %vm946, %v2843
      %2848 = vst.msk [vmem:[#allocation3 + $0x1b0] sm:$0xff] %vm946, %v2844
      %v2849 = vld [vmem:[#allocation2 + $0x8] sm:$0xff]
      %v2850 = vld [vmem:[#allocation2 + $0x28] sm:$0xff]
      %v2851 = vld [vmem:[#allocation2 + $0x48] sm:$0xff]
      %v2852 = vld [vmem:[#allocation2 + $0x68] sm:$0xff]
      %v2853 = vsel %vm2821, 1, 0
      %vm2854 = vcmp.eq.s32.totalorder %v2853, 1
      %2859 = vrot.lane.b32.xlu0 %v2849, 124
      %v2860 = vpop.permute.xlu0 %2859
      %2861 = vrot.lane.b32.xlu0 %v2850, 124
      %v2862 = vpop.permute.xlu0 %2861
      %2863 = vrot.lane.b32.xlu0 %v2851, 124
      %v2864 = vpop.permute.xlu0 %2863
      %2865 = vrot.lane.b32.xlu0 %v2852, 124
      %v2866 = vpop.permute.xlu0 %2865
      %v2871 = vsel %vm2854, %v2860, 0.0
      %v2872 = vsel %vm2854, %v2862, 0.0
      %v2873 = vsel %vm2854, %v2864, 0.0
      %v2874 = vsel %vm2854, %v2866, 0.0
      %2875 = vst.msk [vmem:[#allocation3 + $0x1c0] sm:$0xff] %vm946, %v2871
      %2876 = vst.msk [vmem:[#allocation3 + $0x1d0] sm:$0xff] %vm946, %v2872
      %2877 = vst.msk [vmem:[#allocation3 + $0x1e0] sm:$0xff] %vm946, %v2873
      %2878 = vst.msk [vmem:[#allocation3 + $0x1f0] sm:$0xff] %vm946, %v2874
      %v2879 = vld [vmem:[#allocation2 + $0x8] sm:$0xff]
      %v2880 = vld [vmem:[#allocation2 + $0x28] sm:$0xff]
      %v2881 = vld [vmem:[#allocation2 + $0x48] sm:$0xff]
      %v2882 = vld [vmem:[#allocation2 + $0x68] sm:$0xff]
      %vm2883 = vmand %vm2821, %vm2684
      %v2884 = vsel %vm2883, 1, 0
      %vm2885 = vcmp.eq.s32.totalorder %v2884, 1
      %2890 = vrot.lane.b32.xlu0 %v2879, 123
      %v2891 = vpop.permute.xlu0 %2890
      %2892 = vrot.lane.b32.xlu0 %v2880, 123
      %v2893 = vpop.permute.xlu0 %2892
      %2894 = vrot.lane.b32.xlu0 %v2881, 123
      %v2895 = vpop.permute.xlu0 %2894
      %2896 = vrot.lane.b32.xlu0 %v2882, 123
      %v2897 = vpop.permute.xlu0 %2896
      %v2902 = vsel %vm2885, %v2891, 0.0
      %v2903 = vsel %vm2885, %v2893, 0.0
      %v2904 = vsel %vm2885, %v2895, 0.0
      %v2905 = vsel %vm2885, %v2897, 0.0
      %2906 = vst.msk [vmem:[#allocation3 + $0x200] sm:$0xff] %vm946, %v2902
      %2907 = vst.msk [vmem:[#allocation3 + $0x210] sm:$0xff] %vm946, %v2903
      %2908 = vst.msk [vmem:[#allocation3 + $0x220] sm:$0xff] %vm946, %v2904
      %2909 = vst.msk [vmem:[#allocation3 + $0x230] sm:$0xff] %vm946, %v2905
      %v2910 = vld [vmem:[%s11] sm:$0xff]
      %v2911 = vld [vmem:[%s11 + $0x8] sm:$0xf]
      %v2912 = vld [vmem:[%s11 + $0xc] sm:$0xff]
      %v2913 = vld [vmem:[%s11 + $0x14] sm:$0xf]
      %v2914 = vld [vmem:[%s11 + $0x18] sm:$0xff]
      %v2915 = vld [vmem:[%s11 + $0x20] sm:$0xf]
      %v2916 = vld [vmem:[%s11 + $0x24] sm:$0xff]
      %v2917 = vld [vmem:[%s11 + $0x2c] sm:$0xf]
      %v2918 = vld [vmem:[#allocation3] sm:$0xff]
      %v2919 = vld [vmem:[#allocation3 + $0x10] sm:$0xff]
      %v2920 = vld [vmem:[#allocation3 + $0x20] sm:$0xff]
      %v2921 = vld [vmem:[#allocation3 + $0x30] sm:$0xff]
      %v2922 = vld [vmem:[#allocation3 + $0x40] sm:$0xff]
      %v2923 = vld [vmem:[#allocation3 + $0x50] sm:$0xff]
      %v2924 = vld [vmem:[#allocation3 + $0x60] sm:$0xff]
      %v2925 = vld [vmem:[#allocation3 + $0x70] sm:$0xff]
      %v2926 = vld [vmem:[#allocation3 + $0x80] sm:$0xff]
      %v2927 = vld [vmem:[#allocation3 + $0x90] sm:$0xff]
      %v2928 = vld [vmem:[#allocation3 + $0xa0] sm:$0xff]
      %v2929 = vld [vmem:[#allocation3 + $0xb0] sm:$0xff]
      %v2930 = vld [vmem:[#allocation3 + $0xc0] sm:$0xff]
      %v2931 = vld [vmem:[#allocation3 + $0xd0] sm:$0xff]
      %v2932 = vld [vmem:[#allocation3 + $0xe0] sm:$0xff]
      %v2933 = vld [vmem:[#allocation3 + $0xf0] sm:$0xff]
      %v2934 = vld [vmem:[#allocation3 + $0x100] sm:$0xff]
      %v2935 = vld [vmem:[#allocation3 + $0x110] sm:$0xff]
      %v2936 = vld [vmem:[#allocation3 + $0x120] sm:$0xff]
      %v2937 = vld [vmem:[#allocation3 + $0x130] sm:$0xff]
      %v2938 = vld [vmem:[#allocation3 + $0x140] sm:$0xff]
      %v2939 = vld [vmem:[#allocation3 + $0x150] sm:$0xff]
      %v2940 = vld [vmem:[#allocation3 + $0x160] sm:$0xff]
      %v2941 = vld [vmem:[#allocation3 + $0x170] sm:$0xff]
      %v2942 = vld [vmem:[#allocation3 + $0x180] sm:$0xff]
      %v2943 = vld [vmem:[#allocation3 + $0x190] sm:$0xff]
      %v2944 = vld [vmem:[#allocation3 + $0x1a0] sm:$0xff]
      %v2945 = vld [vmem:[#allocation3 + $0x1b0] sm:$0xff]
      %v2946 = vld [vmem:[#allocation3 + $0x1c0] sm:$0xff]
      %v2947 = vld [vmem:[#allocation3 + $0x1d0] sm:$0xff]
      %v2948 = vld [vmem:[#allocation3 + $0x1e0] sm:$0xff]
      %v2949 = vld [vmem:[#allocation3 + $0x1f0] sm:$0xff]
      %v2950 = vld [vmem:[#allocation3 + $0x200] sm:$0xff]
      %v2951 = vld [vmem:[#allocation3 + $0x210] sm:$0xff]
      %v2952 = vld [vmem:[#allocation3 + $0x220] sm:$0xff]
      %v2953 = vld [vmem:[#allocation3 + $0x230] sm:$0xff]
      %v2954 = vpack.c.bf16 %v2919, %v2918
      %v2955 = vpack.c.bf16 %v2921, %v2920
      %v2956 = vpack.c.bf16 %v2923, %v2922
      %v2957 = vpack.c.bf16 %v2925, %v2924
      %v2958 = vpack.c.bf16 %v2927, %v2926
      %v2959 = vpack.c.bf16 %v2929, %v2928
      %v2960 = vpack.c.bf16 %v2931, %v2930
      %v2961 = vpack.c.bf16 %v2933, %v2932
      %v2962 = vpack.c.bf16 %v2935, %v2934
      %v2963 = vpack.c.bf16 %v2937, %v2936
      %v2964 = vpack.c.bf16 %v2939, %v2938
      %v2965 = vpack.c.bf16 %v2941, %v2940
      %v2966 = vpack.c.bf16 %v2943, %v2942
      %v2967 = vpack.c.bf16 %v2945, %v2944
      %v2968 = vpack.c.bf16 %v2947, %v2946
      %v2969 = vpack.c.bf16 %v2949, %v2948
      %v2970 = vpack.c.bf16 %v2951, %v2950
      %v2971 = vpack.c.bf16 %v2953, %v2952
      %v2972 = vld [vmem:[%s12] sm:$0xff]
      %v2973 = vld [vmem:[%s12 + $0x8] sm:$0xff]
      %v2974 = vld [vmem:[%s12 + $0x10] sm:$0xff]
      %v2975 = vld [vmem:[%s12 + $0x18] sm:$0xff]
      %2977 = vset.pattern.permute.xlu0 0
      %2978 = vperm.xlu0 %2977, %v2972
      %v2979 = vpop.permute.xlu0 %2978
      %2982 = vset.pattern.permute.xlu0 0
      %2983 = vperm.xlu0 %2982, %v2973
      %v2984 = vpop.permute.xlu0 %2983
      %2987 = vset.pattern.permute.xlu0 0
      %2988 = vperm.xlu0 %2987, %v2974
      %v2989 = vpop.permute.xlu0 %2988
      %2992 = vset.pattern.permute.xlu0 0
      %2993 = vperm.xlu0 %2992, %v2975
      %v2994 = vpop.permute.xlu0 %2993
      %v3004 = vunpack.c.l.b16 %v2910
      %v3005 = vunpack.c.h.b16 %v2910
      %v3006 = vunpack.c.l.b16 %v2911
      %v3007 = vunpack.c.l.b16 %v2912
      %v3008 = vunpack.c.h.b16 %v2912
      %v3009 = vunpack.c.l.b16 %v2913
      %v3010 = vunpack.c.l.b16 %v2914
      %v3011 = vunpack.c.h.b16 %v2914
      %v3012 = vunpack.c.l.b16 %v2915
      %v3013 = vunpack.c.l.b16 %v2916
      %v3014 = vunpack.c.h.b16 %v2916
      %v3015 = vunpack.c.l.b16 %v2917
      %v3016 = vpack.c.b16 %v3007, %v3004
      %v3017 = vpack.c.b16 %v3008, %v3005
      %v3018 = vpack.c.b16 %v3009, %v3006
      %v3019 = vpack.c.b16 %v3013, %v3010
      %v3020 = vpack.c.b16 %v3014, %v3011
      %v3021 = vpack.c.b16 %v3015, %v3012
      %v3027 = vsel %vm863, %v3018, 0
      %v3030 = vsel %vm863, %v3021, 0
      %3032 = vmatprep.subr.bf16.mxu0 0
      %3033 = vmatpush1.bf16.msra.mxu0 %v2961
      %3034 = vmatprep.subr.bf16.mxu0 0
      %3035 = vmatpush1.bf16.msra.mxu0 %v2960
      %3036 = vmatprep.subr.bf16.mxu0 0
      %3037 = vmatpush1.bf16.msra.mxu0 %v2959
      %3038 = vmatprep.subr.bf16.mxu0 0
      %3039 = vmatpush1.bf16.msra.mxu0 %v2958
      %3040 = vmatprep.subr.bf16.mxu0 0
      %3041 = vmatpush1.bf16.msra.mxu0 %v2957
      %3042 = vmatprep.subr.bf16.mxu0 0
      %3043 = vmatpush1.bf16.msra.mxu0 %v2956
      %3044 = vmatprep.subr.bf16.mxu0 0
      %3045 = vmatpush1.bf16.msra.mxu0 %v2955
      %3046 = vmatprep.subr.bf16.mxu0 0
      %3047 = vmatpush1.bf16.msra.mxu0 %v2954
      %3048 = vmatprep.subr.bf16.mxu0 0
      %3049 = vmatpush2.bf16.msra.mxu0 %v2969
      %3050 = vmatprep.subr.bf16.mxu0 0
      %3051 = vmatpush2.bf16.msra.mxu0 %v2968
      %3052 = vmatprep.subr.bf16.mxu0 0
      %3053 = vmatpush2.bf16.msra.mxu0 %v2967
      %3054 = vmatprep.subr.bf16.mxu0 0
      %3055 = vmatpush2.bf16.msra.mxu0 %v2966
      %3056 = vmatprep.subr.bf16.mxu0 0
      %3057 = vmatpush2.bf16.msra.mxu0 %v2965
      %3058 = vmatprep.subr.bf16.mxu0 0
      %3059 = vmatpush2.bf16.msra.mxu0 %v2964
      %3060 = vmatprep.subr.bf16.mxu0 0
      %3061 = vmatpush2.bf16.msra.mxu0 %v2963
      %3062 = vmatprep.subr.bf16.mxu0 0
      %3063 = vmatpush2.bf16.msra.mxu0 %v2962
      %3064 = vmatprep.mubr.bf16.mxu0 %v3017
      %3065 = vmatmul.mubr.bf16.gmra.mxu0 %v3016
      %v3066 = vpop.f32.mrf.mxu0
      %v3067 = vadd.f32 %v2979, %v3066
      %v3068 = vpop.f32.mrf.mxu0
      %v3069 = vpop.f32.mrf.mxu0
      %v3070 = vadd.f32 %v2984, %v3069
      %v3071 = vpop.f32.mrf.mxu0
      %3072 = vmatprep.mubr.bf16.mxu0 %v3020
      %3073 = vmatmul.mubr.bf16.gmra.mxu0 %v3019
      %v3074 = vpop.f32.mrf.mxu0
      %v3075 = vadd.f32 %v2989, %v3074
      %v3076 = vpop.f32.mrf.mxu0
      %v3077 = vpop.f32.mrf.mxu0
      %v3078 = vadd.f32 %v2994, %v3077
      %v3079 = vpop.f32.mrf.mxu0
      %3080 = vdwg.mxu0
      %3081 = vmatprep.subr.bf16.mxu0 0
      %3082 = vmatpush1.bf16.msra.mxu0 0
      %3083 = vmatprep.subr.bf16.mxu0 0
      %3084 = vmatpush1.bf16.msra.mxu0 0
      %3085 = vmatprep.subr.bf16.mxu0 0
      %3086 = vmatpush1.bf16.msra.mxu0 0
      %3087 = vmatprep.subr.bf16.mxu0 0
      %3088 = vmatpush1.bf16.msra.mxu0 0
      %3089 = vmatprep.subr.bf16.mxu0 0
      %3090 = vmatpush1.bf16.msra.mxu0 0
      %3091 = vmatprep.subr.bf16.mxu0 0
      %3092 = vmatpush1.bf16.msra.mxu0 0
      %3093 = vmatprep.subr.bf16.mxu0 0
      %3094 = vmatpush1.bf16.msra.mxu0 %v2971
      %3095 = vmatprep.subr.bf16.mxu0 0
      %3096 = vmatpush1.bf16.msra.mxu0 %v2970
      %3097 = vmatprep.subr.bf16.mxu0 0
      %3098 = vmatpush2.bf16.msra.mxu0 0
      %3099 = vmatprep.subr.bf16.mxu0 0
      %3100 = vmatpush2.bf16.msra.mxu0 0
      %3101 = vmatprep.subr.bf16.mxu0 0
      %3102 = vmatpush2.bf16.msra.mxu0 0
      %3103 = vmatprep.subr.bf16.mxu0 0
      %3104 = vmatpush2.bf16.msra.mxu0 0
      %3105 = vmatprep.subr.bf16.mxu0 0
      %3106 = vmatpush2.bf16.msra.mxu0 0
      %3107 = vmatprep.subr.bf16.mxu0 0
      %3108 = vmatpush2.bf16.msra.mxu0 0
      %3109 = vmatprep.subr.bf16.mxu0 0
      %3110 = vmatpush2.bf16.msra.mxu0 0
      %3111 = vmatprep.subr.bf16.mxu0 0
      %3112 = vmatpush2.bf16.msra.mxu0 0
      %3113 = vmatprep.mubr.bf16.mxu0 0
      %3114 = vmatmul.mubr.bf16.gmra.mxu0 %v3027
      %v3115 = vpop.f32.mrf.mxu0
      %v3116 = vadd.f32 %v3067, %v3115
      %v3117 = vpop.f32.mrf.mxu0
      %v3118 = vpop.f32.mrf.mxu0
      %v3119 = vadd.f32 %v3070, %v3118
      %v3120 = vpop.f32.mrf.mxu0
      %3121 = vmatprep.mubr.bf16.mxu0 0
      %3122 = vmatmul.mubr.bf16.gmra.mxu0 %v3030
      %v3123 = vpop.f32.mrf.mxu0
      %v3124 = vadd.f32 %v3075, %v3123
      %v3125 = vpop.f32.mrf.mxu0
      %v3126 = vpop.f32.mrf.mxu0
      %v3127 = vadd.f32 %v3078, %v3126
      %v3128 = vpop.f32.mrf.mxu0
      %3129 = vdwg.mxu0
      %vm3130 = vcmp.ge.f32.partialorder %v3116, 0.0
      %vm3131 = vcmp.ge.f32.partialorder %v3119, 0.0
      %vm3132 = vcmp.ge.f32.partialorder %v3124, 0.0
      %vm3133 = vcmp.ge.f32.partialorder %v3127, 0.0
      %v3134 = vmul.f32 %v3116, 0.01
      %v3135 = vmul.f32 %v3119, 0.01
      %v3136 = vmul.f32 %v3124, 0.01
      %v3137 = vmul.f32 %v3127, 0.01
      %v3138 = vsel %vm3130, %v3116, %v3134
      %v3139 = vsel %vm3131, %v3119, %v3135
      %v3140 = vsel %vm3132, %v3124, %v3136
      %v3141 = vsel %vm3133, %v3127, %v3137
      %v3142 = vpack.c.bf16 %v3139, %v3138
      %v3143 = vpack.c.bf16 %v3141, %v3140
      %v3144 = vshra.s32 %v1723, 2
      %v3145 = vshra.s32 %v1724, 2
      %v3146 = vand.u32 %v1723, 3
      %v3147 = vand.u32 %v1724, 3
      %v3148 = vmul.u32 %v3144, 2
      %v3149 = vmul.u32 %v3145, 2
      %v3150 = vmul.u32 %v3148, 8
      %v3151 = vmul.u32 %v3149, 8
      %v3152 = vmul.u32 %v3146, 2
      %v3153 = vmul.u32 %v3147, 2
      %v3154 = vadd.s32 %v3150, %v3152
      %v3155 = vadd.s32 %v3151, %v3153
      %vm3156 = vcmp.eq.s32.totalorder %v870, %v3154
      %vm3157 = vcmp.eq.s32.totalorder %v870, %v3155
      %v3158 = vsel %vm3156, 1.0, 0.0
      %v3159 = vsel %vm3157, 1.0, 0.0
      %v3160 = vpack.c.bf16 %v3159, %v3158
      %v3161 = vld [vmem:[%s13] sm:$0xf]
      %v3162 = vld [vmem:[%s13 + $0x4] sm:$0xf]
      %v3165 = vunpack.c.l.b16 %v3161
      %v3166 = vunpack.c.l.b16 %v3162
      %v3167 = vpack.c.b16 %v3166, %v3165
      %v3169 = vsel %vm863, %v3167, 0
      %3171 = vmatprep.subr.bf16.mxu0 0
      %3172 = vmatpush1.bf16.msra.mxu0 0
      %3173 = vmatprep.subr.bf16.mxu0 0
      %3174 = vmatpush1.bf16.msra.mxu0 0
      %3175 = vmatprep.subr.bf16.mxu0 0
      %3176 = vmatpush1.bf16.msra.mxu0 0
      %3177 = vmatprep.subr.bf16.mxu0 0
      %3178 = vmatpush1.bf16.msra.mxu0 0
      %3179 = vmatprep.subr.bf16.mxu0 0
      %3180 = vmatpush1.bf16.msra.mxu0 0
      %3181 = vmatprep.subr.bf16.mxu0 0
      %3182 = vmatpush1.bf16.msra.mxu0 0
      %3183 = vmatprep.subr.bf16.mxu0 0
      %3184 = vmatpush1.bf16.msra.mxu0 %v3143
      %3185 = vmatprep.subr.bf16.mxu0 0
      %3186 = vmatpush1.bf16.msra.mxu0 %v3142
      %3187 = vmatprep.subr.bf16.mxu0 0
      %3188 = vmatpush2.bf16.msra.mxu0 0
      %3189 = vmatprep.subr.bf16.mxu0 0
      %3190 = vmatpush2.bf16.msra.mxu0 0
      %3191 = vmatprep.subr.bf16.mxu0 0
      %3192 = vmatpush2.bf16.msra.mxu0 0
      %3193 = vmatprep.subr.bf16.mxu0 0
      %3194 = vmatpush2.bf16.msra.mxu0 0
      %3195 = vmatprep.subr.bf16.mxu0 0
      %3196 = vmatpush2.bf16.msra.mxu0 0
      %3197 = vmatprep.subr.bf16.mxu0 0
      %3198 = vmatpush2.bf16.msra.mxu0 0
      %3199 = vmatprep.subr.bf16.mxu0 0
      %3200 = vmatpush2.bf16.msra.mxu0 0
      %3201 = vmatprep.subr.bf16.mxu0 0
      %3202 = vmatpush2.bf16.msra.mxu0 0
      %3203 = vmatprep.mubr.bf16.mxu0 0
      %3204 = vmatmul.mubr.bf16.gmra.mxu0 %v3169
      %v3205 = vpop.f32.mrf.mxu0
      %v3206 = vadd.f32 0.0, %v3205
      %v3207 = vpop.f32.mrf.mxu0
      %v3208 = vpop.f32.mrf.mxu0
      %v3209 = vadd.f32 0.0, %v3208
      %v3210 = vpop.f32.mrf.mxu0
      %3211 = vdwg.mxu0
      %v3212 = vpack.c.bf16 %v3209, %v3206
      %v3213 = vadd.s32 %v3154, 1
      %v3214 = vadd.s32 %v3155, 1
      %vm3215 = vcmp.eq.s32.totalorder %v870, %v3213
      %vm3216 = vcmp.eq.s32.totalorder %v870, %v3214
      %v3217 = vsel %vm3215, 1.0, 0.0
      %v3218 = vsel %vm3216, 1.0, 0.0
      %v3219 = vpack.c.bf16 %v3218, %v3217
      %s3220 = scalar_lea.vmem %s13, 8
      %v3221 = vld [vmem:[%s3220] sm:$0xf]
      %v3222 = vld [vmem:[%s3220 + $0x4] sm:$0xf]
      %v3225 = vunpack.c.l.b16 %v3221
      %v3226 = vunpack.c.l.b16 %v3222
      %v3227 = vpack.c.b16 %v3226, %v3225
      %v3229 = vsel %vm863, %v3227, 0
      %3231 = vmatprep.subr.bf16.mxu0 0
      %3232 = vmatpush1.bf16.msra.mxu0 0
      %3233 = vmatprep.subr.bf16.mxu0 0
      %3234 = vmatpush1.bf16.msra.mxu0 0
      %3235 = vmatprep.subr.bf16.mxu0 0
      %3236 = vmatpush1.bf16.msra.mxu0 0
      %3237 = vmatprep.subr.bf16.mxu0 0
      %3238 = vmatpush1.bf16.msra.mxu0 0
      %3239 = vmatprep.subr.bf16.mxu0 0
      %3240 = vmatpush1.bf16.msra.mxu0 0
      %3241 = vmatprep.subr.bf16.mxu0 0
      %3242 = vmatpush1.bf16.msra.mxu0 0
      %3243 = vmatprep.subr.bf16.mxu0 0
      %3244 = vmatpush1.bf16.msra.mxu0 %v3143
      %3245 = vmatprep.subr.bf16.mxu0 0
      %3246 = vmatpush1.bf16.msra.mxu0 %v3142
      %3247 = vmatprep.subr.bf16.mxu0 0
      %3248 = vmatpush2.bf16.msra.mxu0 0
      %3249 = vmatprep.subr.bf16.mxu0 0
      %3250 = vmatpush2.bf16.msra.mxu0 0
      %3251 = vmatprep.subr.bf16.mxu0 0
      %3252 = vmatpush2.bf16.msra.mxu0 0
      %3253 = vmatprep.subr.bf16.mxu0 0
      %3254 = vmatpush2.bf16.msra.mxu0 0
      %3255 = vmatprep.subr.bf16.mxu0 0
      %3256 = vmatpush2.bf16.msra.mxu0 0
      %3257 = vmatprep.subr.bf16.mxu0 0
      %3258 = vmatpush2.bf16.msra.mxu0 0
      %3259 = vmatprep.subr.bf16.mxu0 0
      %3260 = vmatpush2.bf16.msra.mxu0 0
      %3261 = vmatprep.subr.bf16.mxu0 0
      %3262 = vmatpush2.bf16.msra.mxu0 0
      %3263 = vmatprep.mubr.bf16.mxu0 0
      %3264 = vmatmul.mubr.bf16.gmra.mxu0 %v3229
      %v3265 = vpop.f32.mrf.mxu0
      %v3266 = vadd.f32 0.0, %v3265
      %v3267 = vpop.f32.mrf.mxu0
      %v3268 = vpop.f32.mrf.mxu0
      %v3269 = vadd.f32 0.0, %v3268
      %v3270 = vpop.f32.mrf.mxu0
      %3271 = vdwg.mxu0
      %v3272 = vpack.c.bf16 %v3269, %v3266
      %v3274 = vsel %vm946, %v3272, 0
      %3276 = vmatprep.subr.bf16.mxu0 0
      %3277 = vmatpush1.bf16.msra.mxu0 0
      %3278 = vmatprep.subr.bf16.mxu0 0
      %3279 = vmatpush1.bf16.msra.mxu0 0
      %3280 = vmatprep.subr.bf16.mxu0 0
      %3281 = vmatpush1.bf16.msra.mxu0 0
      %3282 = vmatprep.subr.bf16.mxu0 0
      %3283 = vmatpush1.bf16.msra.mxu0 0
      %3284 = vmatprep.subr.bf16.mxu0 0
      %3285 = vmatpush1.bf16.msra.mxu0 0
      %3286 = vmatprep.subr.bf16.mxu0 0
      %3287 = vmatpush1.bf16.msra.mxu0 0
      %3288 = vmatprep.subr.bf16.mxu0 0
      %3289 = vmatpush1.bf16.msra.mxu0 0
      %3290 = vmatprep.subr.bf16.mxu0 0
      %3291 = vmatpush1.bf16.msra.mxu0 %v3219
      %3292 = vmatprep.subr.bf16.mxu0 0
      %3293 = vmatpush2.bf16.msra.mxu0 0
      %3294 = vmatprep.subr.bf16.mxu0 0
      %3295 = vmatpush2.bf16.msra.mxu0 0
      %3296 = vmatprep.subr.bf16.mxu0 0
      %3297 = vmatpush2.bf16.msra.mxu0 0
      %3298 = vmatprep.subr.bf16.mxu0 0
      %3299 = vmatpush2.bf16.msra.mxu0 0
      %3300 = vmatprep.subr.bf16.mxu0 0
      %3301 = vmatpush2.bf16.msra.mxu0 0
      %3302 = vmatprep.subr.bf16.mxu0 0
      %3303 = vmatpush2.bf16.msra.mxu0 0
      %3304 = vmatprep.subr.bf16.mxu0 0
      %3305 = vmatpush2.bf16.msra.mxu0 0
      %3306 = vmatprep.subr.bf16.mxu0 0
      %3307 = vmatpush2.bf16.msra.mxu0 0
      %3308 = vmatprep.mubr.bf16.mxu0 0
      %3309 = vmatmul.mubr.bf16.gmra.mxu0 %v3274
      %v3310 = vpop.f32.mrf.mxu0
      %v3311 = vadd.f32 0.0, %v3310
      %v3312 = vpop.f32.mrf.mxu0
      %v3313 = vpop.f32.mrf.mxu0
      %v3314 = vadd.f32 0.0, %v3313
      %v3315 = vpop.f32.mrf.mxu0
      %3316 = vdwg.mxu0
      %v3318 = vsel %vm946, %v3212, 0
      %3320 = vmatprep.subr.bf16.mxu0 0
      %3321 = vmatpush1.bf16.msra.mxu0 0
      %3322 = vmatprep.subr.bf16.mxu0 0
      %3323 = vmatpush1.bf16.msra.mxu0 0
      %3324 = vmatprep.subr.bf16.mxu0 0
      %3325 = vmatpush1.bf16.msra.mxu0 0
      %3326 = vmatprep.subr.bf16.mxu0 0
      %3327 = vmatpush1.bf16.msra.mxu0 0
      %3328 = vmatprep.subr.bf16.mxu0 0
      %3329 = vmatpush1.bf16.msra.mxu0 0
      %3330 = vmatprep.subr.bf16.mxu0 0
      %3331 = vmatpush1.bf16.msra.mxu0 0
      %3332 = vmatprep.subr.bf16.mxu0 0
      %3333 = vmatpush1.bf16.msra.mxu0 0
      %3334 = vmatprep.subr.bf16.mxu0 0
      %3335 = vmatpush1.bf16.msra.mxu0 %v3160
      %3336 = vmatprep.subr.bf16.mxu0 0
      %3337 = vmatpush2.bf16.msra.mxu0 0
      %3338 = vmatprep.subr.bf16.mxu0 0
      %3339 = vmatpush2.bf16.msra.mxu0 0
      %3340 = vmatprep.subr.bf16.mxu0 0
      %3341 = vmatpush2.bf16.msra.mxu0 0
      %3342 = vmatprep.subr.bf16.mxu0 0
      %3343 = vmatpush2.bf16.msra.mxu0 0
      %3344 = vmatprep.subr.bf16.mxu0 0
      %3345 = vmatpush2.bf16.msra.mxu0 0
      %3346 = vmatprep.subr.bf16.mxu0 0
      %3347 = vmatpush2.bf16.msra.mxu0 0
      %3348 = vmatprep.subr.bf16.mxu0 0
      %3349 = vmatpush2.bf16.msra.mxu0 0
      %3350 = vmatprep.subr.bf16.mxu0 0
      %3351 = vmatpush2.bf16.msra.mxu0 0
      %3352 = vmatprep.mubr.bf16.mxu0 0
      %3353 = vmatmul.mubr.bf16.gmra.mxu0 %v3318
      %v3354 = vpop.f32.mrf.mxu0
      %v3355 = vadd.f32 %v3311, %v3354
      %v3356 = vpop.f32.mrf.mxu0
      %v3357 = vpop.f32.mrf.mxu0
      %v3358 = vadd.f32 %v3314, %v3357
      %v3359 = vpop.f32.mrf.mxu0
      %3360 = vdwg.mxu0
      %v3361 = vadd.s32 %v3148, 1
      %v3362 = vadd.s32 %v3149, 1
      %v3363 = vmul.u32 %v3361, 8
      %v3364 = vmul.u32 %v3362, 8
      %v3365 = vadd.s32 %v3363, %v3152
      %v3366 = vadd.s32 %v3364, %v3153
      %vm3367 = vcmp.eq.s32.totalorder %v870, %v3365
      %vm3368 = vcmp.eq.s32.totalorder %v870, %v3366
      %v3369 = vsel %vm3367, 1.0, 0.0
      %v3370 = vsel %vm3368, 1.0, 0.0
      %v3371 = vpack.c.bf16 %v3370, %v3369
      %s3372 = scalar_lea.vmem %s13, 16
      %v3373 = vld [vmem:[%s3372] sm:$0xf]
      %v3374 = vld [vmem:[%s3372 + $0x4] sm:$0xf]
      %v3377 = vunpack.c.l.b16 %v3373
      %v3378 = vunpack.c.l.b16 %v3374
      %v3379 = vpack.c.b16 %v3378, %v3377
      %v3381 = vsel %vm863, %v3379, 0
      %3383 = vmatprep.subr.bf16.mxu0 0
      %3384 = vmatpush1.bf16.msra.mxu0 0
      %3385 = vmatprep.subr.bf16.mxu0 0
      %3386 = vmatpush1.bf16.msra.mxu0 0
      %3387 = vmatprep.subr.bf16.mxu0 0
      %3388 = vmatpush1.bf16.msra.mxu0 0
      %3389 = vmatprep.subr.bf16.mxu0 0
      %3390 = vmatpush1.bf16.msra.mxu0 0
      %3391 = vmatprep.subr.bf16.mxu0 0
      %3392 = vmatpush1.bf16.msra.mxu0 0
      %3393 = vmatprep.subr.bf16.mxu0 0
      %3394 = vmatpush1.bf16.msra.mxu0 0
      %3395 = vmatprep.subr.bf16.mxu0 0
      %3396 = vmatpush1.bf16.msra.mxu0 %v3143
      %3397 = vmatprep.subr.bf16.mxu0 0
      %3398 = vmatpush1.bf16.msra.mxu0 %v3142
      %3399 = vmatprep.subr.bf16.mxu0 0
      %3400 = vmatpush2.bf16.msra.mxu0 0
      %3401 = vmatprep.subr.bf16.mxu0 0
      %3402 = vmatpush2.bf16.msra.mxu0 0
      %3403 = vmatprep.subr.bf16.mxu0 0
      %3404 = vmatpush2.bf16.msra.mxu0 0
      %3405 = vmatprep.subr.bf16.mxu0 0
      %3406 = vmatpush2.bf16.msra.mxu0 0
      %3407 = vmatprep.subr.bf16.mxu0 0
      %3408 = vmatpush2.bf16.msra.mxu0 0
      %3409 = vmatprep.subr.bf16.mxu0 0
      %3410 = vmatpush2.bf16.msra.mxu0 0
      %3411 = vmatprep.subr.bf16.mxu0 0
      %3412 = vmatpush2.bf16.msra.mxu0 0
      %3413 = vmatprep.subr.bf16.mxu0 0
      %3414 = vmatpush2.bf16.msra.mxu0 0
      %3415 = vmatprep.mubr.bf16.mxu0 0
      %3416 = vmatmul.mubr.bf16.gmra.mxu0 %v3381
      %v3417 = vpop.f32.mrf.mxu0
      %v3418 = vadd.f32 0.0, %v3417
      %v3419 = vpop.f32.mrf.mxu0
      %v3420 = vpop.f32.mrf.mxu0
      %v3421 = vadd.f32 0.0, %v3420
      %v3422 = vpop.f32.mrf.mxu0
      %3423 = vdwg.mxu0
      %v3424 = vpack.c.bf16 %v3421, %v3418
      %v3426 = vsel %vm946, %v3424, 0
      %3428 = vmatprep.subr.bf16.mxu0 0
      %3429 = vmatpush1.bf16.msra.mxu0 0
      %3430 = vmatprep.subr.bf16.mxu0 0
      %3431 = vmatpush1.bf16.msra.mxu0 0
      %3432 = vmatprep.subr.bf16.mxu0 0
      %3433 = vmatpush1.bf16.msra.mxu0 0
      %3434 = vmatprep.subr.bf16.mxu0 0
      %3435 = vmatpush1.bf16.msra.mxu0 0
      %3436 = vmatprep.subr.bf16.mxu0 0
      %3437 = vmatpush1.bf16.msra.mxu0 0
      %3438 = vmatprep.subr.bf16.mxu0 0
      %3439 = vmatpush1.bf16.msra.mxu0 0
      %3440 = vmatprep.subr.bf16.mxu0 0
      %3441 = vmatpush1.bf16.msra.mxu0 0
      %3442 = vmatprep.subr.bf16.mxu0 0
      %3443 = vmatpush1.bf16.msra.mxu0 %v3371
      %3444 = vmatprep.subr.bf16.mxu0 0
      %3445 = vmatpush2.bf16.msra.mxu0 0
      %3446 = vmatprep.subr.bf16.mxu0 0
      %3447 = vmatpush2.bf16.msra.mxu0 0
      %3448 = vmatprep.subr.bf16.mxu0 0
      %3449 = vmatpush2.bf16.msra.mxu0 0
      %3450 = vmatprep.subr.bf16.mxu0 0
      %3451 = vmatpush2.bf16.msra.mxu0 0
      %3452 = vmatprep.subr.bf16.mxu0 0
      %3453 = vmatpush2.bf16.msra.mxu0 0
      %3454 = vmatprep.subr.bf16.mxu0 0
      %3455 = vmatpush2.bf16.msra.mxu0 0
      %3456 = vmatprep.subr.bf16.mxu0 0
      %3457 = vmatpush2.bf16.msra.mxu0 0
      %3458 = vmatprep.subr.bf16.mxu0 0
      %3459 = vmatpush2.bf16.msra.mxu0 0
      %3460 = vmatprep.mubr.bf16.mxu0 0
      %3461 = vmatmul.mubr.bf16.gmra.mxu0 %v3426
      %v3462 = vpop.f32.mrf.mxu0
      %v3463 = vadd.f32 0.0, %v3462
      %v3464 = vpop.f32.mrf.mxu0
      %v3465 = vpop.f32.mrf.mxu0
      %v3466 = vadd.f32 0.0, %v3465
      %v3467 = vpop.f32.mrf.mxu0
      %3468 = vdwg.mxu0
      %v3469 = vadd.f32 %v3355, %v3463
      %v3470 = vadd.f32 %v3358, %v3466
      %v3471 = vadd.s32 %v3365, 1
      %v3472 = vadd.s32 %v3366, 1
      %vm3473 = vcmp.eq.s32.totalorder %v870, %v3471
      %vm3474 = vcmp.eq.s32.totalorder %v870, %v3472
      %v3475 = vsel %vm3473, 1.0, 0.0
      %v3476 = vsel %vm3474, 1.0, 0.0
      %v3477 = vpack.c.bf16 %v3476, %v3475
      %s3478 = scalar_lea.vmem %s13, 24
      %v3479 = vld [vmem:[%s3478] sm:$0xf]
      %v3480 = vld [vmem:[%s3478 + $0x4] sm:$0xf]
      %v3483 = vunpack.c.l.b16 %v3479
      %v3484 = vunpack.c.l.b16 %v3480
      %v3485 = vpack.c.b16 %v3484, %v3483
      %v3487 = vsel %vm863, %v3485, 0
      %3489 = vmatprep.subr.bf16.mxu0 0
      %3490 = vmatpush1.bf16.msra.mxu0 0
      %3491 = vmatprep.subr.bf16.mxu0 0
      %3492 = vmatpush1.bf16.msra.mxu0 0
      %3493 = vmatprep.subr.bf16.mxu0 0
      %3494 = vmatpush1.bf16.msra.mxu0 0
      %3495 = vmatprep.subr.bf16.mxu0 0
      %3496 = vmatpush1.bf16.msra.mxu0 0
      %3497 = vmatprep.subr.bf16.mxu0 0
      %3498 = vmatpush1.bf16.msra.mxu0 0
      %3499 = vmatprep.subr.bf16.mxu0 0
      %3500 = vmatpush1.bf16.msra.mxu0 0
      %3501 = vmatprep.subr.bf16.mxu0 0
      %3502 = vmatpush1.bf16.msra.mxu0 %v3143
      %3503 = vmatprep.subr.bf16.mxu0 0
      %3504 = vmatpush1.bf16.msra.mxu0 %v3142
      %3505 = vmatprep.subr.bf16.mxu0 0
      %3506 = vmatpush2.bf16.msra.mxu0 0
      %3507 = vmatprep.subr.bf16.mxu0 0
      %3508 = vmatpush2.bf16.msra.mxu0 0
      %3509 = vmatprep.subr.bf16.mxu0 0
      %3510 = vmatpush2.bf16.msra.mxu0 0
      %3511 = vmatprep.subr.bf16.mxu0 0
      %3512 = vmatpush2.bf16.msra.mxu0 0
      %3513 = vmatprep.subr.bf16.mxu0 0
      %3514 = vmatpush2.bf16.msra.mxu0 0
      %3515 = vmatprep.subr.bf16.mxu0 0
      %3516 = vmatpush2.bf16.msra.mxu0 0
      %3517 = vmatprep.subr.bf16.mxu0 0
      %3518 = vmatpush2.bf16.msra.mxu0 0
      %3519 = vmatprep.subr.bf16.mxu0 0
      %3520 = vmatpush2.bf16.msra.mxu0 0
      %3521 = vmatprep.mubr.bf16.mxu0 0
      %3522 = vmatmul.mubr.bf16.gmra.mxu0 %v3487
      %v3523 = vpop.f32.mrf.mxu0
      %v3524 = vadd.f32 0.0, %v3523
      %v3525 = vpop.f32.mrf.mxu0
      %v3526 = vpop.f32.mrf.mxu0
      %v3527 = vadd.f32 0.0, %v3526
      %v3528 = vpop.f32.mrf.mxu0
      %3529 = vdwg.mxu0
      %v3530 = vpack.c.bf16 %v3527, %v3524
      %v3532 = vsel %vm946, %v3530, 0
      %3534 = vmatprep.subr.bf16.mxu0 0
      %3535 = vmatpush1.bf16.msra.mxu0 0
      %3536 = vmatprep.subr.bf16.mxu0 0
      %3537 = vmatpush1.bf16.msra.mxu0 0
      %3538 = vmatprep.subr.bf16.mxu0 0
      %3539 = vmatpush1.bf16.msra.mxu0 0
      %3540 = vmatprep.subr.bf16.mxu0 0
      %3541 = vmatpush1.bf16.msra.mxu0 0
      %3542 = vmatprep.subr.bf16.mxu0 0
      %3543 = vmatpush1.bf16.msra.mxu0 0
      %3544 = vmatprep.subr.bf16.mxu0 0
      %3545 = vmatpush1.bf16.msra.mxu0 0
      %3546 = vmatprep.subr.bf16.mxu0 0
      %3547 = vmatpush1.bf16.msra.mxu0 0
      %3548 = vmatprep.subr.bf16.mxu0 0
      %3549 = vmatpush1.bf16.msra.mxu0 %v3477
      %3550 = vmatprep.subr.bf16.mxu0 0
      %3551 = vmatpush2.bf16.msra.mxu0 0
      %3552 = vmatprep.subr.bf16.mxu0 0
      %3553 = vmatpush2.bf16.msra.mxu0 0
      %3554 = vmatprep.subr.bf16.mxu0 0
      %3555 = vmatpush2.bf16.msra.mxu0 0
      %3556 = vmatprep.subr.bf16.mxu0 0
      %3557 = vmatpush2.bf16.msra.mxu0 0
      %3558 = vmatprep.subr.bf16.mxu0 0
      %3559 = vmatpush2.bf16.msra.mxu0 0
      %3560 = vmatprep.subr.bf16.mxu0 0
      %3561 = vmatpush2.bf16.msra.mxu0 0
      %3562 = vmatprep.subr.bf16.mxu0 0
      %3563 = vmatpush2.bf16.msra.mxu0 0
      %3564 = vmatprep.subr.bf16.mxu0 0
      %3565 = vmatpush2.bf16.msra.mxu0 0
      %3566 = vmatprep.mubr.bf16.mxu0 0
      %3567 = vmatmul.mubr.bf16.gmra.mxu0 %v3532
      %v3568 = vpop.f32.mrf.mxu0
      %v3569 = vadd.f32 0.0, %v3568
      %v3570 = vpop.f32.mrf.mxu0
      %v3571 = vpop.f32.mrf.mxu0
      %v3572 = vadd.f32 0.0, %v3571
      %v3573 = vpop.f32.mrf.mxu0
      %3574 = vdwg.mxu0
      %v3575 = vadd.f32 %v3469, %v3569
      %v3576 = vadd.f32 %v3470, %v3572
      %3577 = vst.msk [vmem:[#allocation2 + $0x8] sm:$0xff] %vm1901, %v3575
      %3578 = vst.msk [vmem:[#allocation2 + $0x28] sm:$0xff] %vm1901, %v3576
      %v3579 = vld [vmem:[#allocation2] sm:$0xff]
      %v3580 = vld [vmem:[#allocation2 + $0x8] sm:$0xff]
      %v3581 = vld [vmem:[#allocation2 + $0x20] sm:$0xff]
      %v3582 = vld [vmem:[#allocation2 + $0x28] sm:$0xff]
      %3587 = vrot.lane.b32.xlu0 %v3579, 9
      %v3588 = vpop.permute.xlu0 %3587
      %3589 = vrot.lane.b32.xlu0 %v3580, 9
      %v3590 = vpop.permute.xlu0 %3589
      %3591 = vrot.lane.b32.xlu0 %v3581, 9
      %v3592 = vpop.permute.xlu0 %3591
      %3593 = vrot.lane.b32.xlu0 %v3582, 9
      %v3594 = vpop.permute.xlu0 %3593
      %v3595 = vsel %vm1925, %v3588, %v3590
      %v3596 = vsel %vm1925, %v3592, %v3594
      %v3599 = vsel %vm1912, %v3595, 0.0
      %v3600 = vsel %vm1912, %v3596, 0.0
      %3601 = vst.msk [vmem:[#allocation3] sm:$0xff] %vm1901, %v3599
      %3602 = vst.msk [vmem:[#allocation3 + $0x10] sm:$0xff] %vm1901, %v3600
      %v3603 = vld [vmem:[#allocation2] sm:$0xff]
      %v3604 = vld [vmem:[#allocation2 + $0x8] sm:$0xff]
      %v3605 = vld [vmem:[#allocation2 + $0x20] sm:$0xff]
      %v3606 = vld [vmem:[#allocation2 + $0x28] sm:$0xff]
      %3611 = vrot.lane.b32.xlu0 %v3603, 8
      %v3612 = vpop.permute.xlu0 %3611
      %3613 = vrot.lane.b32.xlu0 %v3604, 8
      %v3614 = vpop.permute.xlu0 %3613
      %3615 = vrot.lane.b32.xlu0 %v3605, 8
      %v3616 = vpop.permute.xlu0 %3615
      %3617 = vrot.lane.b32.xlu0 %v3606, 8
      %v3618 = vpop.permute.xlu0 %3617
      %v3619 = vsel %vm1952, %v3612, %v3614
      %v3620 = vsel %vm1952, %v3616, %v3618
      %v3623 = vsel %vm1939, %v3619, 0.0
      %v3624 = vsel %vm1939, %v3620, 0.0
      %3625 = vst.msk [vmem:[#allocation3 + $0x40] sm:$0xff] %vm1901, %v3623
      %3626 = vst.msk [vmem:[#allocation3 + $0x50] sm:$0xff] %vm1901, %v3624
      %v3627 = vld [vmem:[#allocation2] sm:$0xff]
      %v3628 = vld [vmem:[#allocation2 + $0x8] sm:$0xff]
      %v3629 = vld [vmem:[#allocation2 + $0x20] sm:$0xff]
      %v3630 = vld [vmem:[#allocation2 + $0x28] sm:$0xff]
      %3635 = vrot.lane.b32.xlu0 %v3627, 7
      %v3636 = vpop.permute.xlu0 %3635
      %3637 = vrot.lane.b32.xlu0 %v3628, 7
      %v3638 = vpop.permute.xlu0 %3637
      %3639 = vrot.lane.b32.xlu0 %v3629, 7
      %v3640 = vpop.permute.xlu0 %3639
      %3641 = vrot.lane.b32.xlu0 %v3630, 7
      %v3642 = vpop.permute.xlu0 %3641
      %v3643 = vsel %vm1981, %v3636, %v3638
      %v3644 = vsel %vm1981, %v3640, %v3642
      %v3647 = vsel %vm1968, %v3643, 0.0
      %v3648 = vsel %vm1968, %v3644, 0.0
      %3649 = vst.msk [vmem:[#allocation3 + $0x80] sm:$0xff] %vm1901, %v3647
      %3650 = vst.msk [vmem:[#allocation3 + $0x90] sm:$0xff] %vm1901, %v3648
      %v3651 = vld [vmem:[#allocation2] sm:$0xff]
      %v3652 = vld [vmem:[#allocation2 + $0x8] sm:$0xff]
      %v3653 = vld [vmem:[#allocation2 + $0x20] sm:$0xff]
      %v3654 = vld [vmem:[#allocation2 + $0x28] sm:$0xff]
      %3659 = vrot.lane.b32.xlu0 %v3651, 1
      %v3660 = vpop.permute.xlu0 %3659
      %3661 = vrot.lane.b32.xlu0 %v3652, 1
      %v3662 = vpop.permute.xlu0 %3661
      %3663 = vrot.lane.b32.xlu0 %v3653, 1
      %v3664 = vpop.permute.xlu0 %3663
      %3665 = vrot.lane.b32.xlu0 %v3654, 1
      %v3666 = vpop.permute.xlu0 %3665
      %v3667 = vsel %vm1000, %v3660, %v3662
      %v3668 = vsel %vm1000, %v3664, %v3666
      %v3671 = vsel %vm1995, %v3667, 0.0
      %v3672 = vsel %vm1995, %v3668, 0.0
      %3673 = vst.msk [vmem:[#allocation3 + $0xc0] sm:$0xff] %vm1901, %v3671
      %3674 = vst.msk [vmem:[#allocation3 + $0xd0] sm:$0xff] %vm1901, %v3672
      %v3675 = vld [vmem:[#allocation2 + $0x8] sm:$0xff]
      %v3676 = vld [vmem:[#allocation2 + $0x28] sm:$0xff]
      %3677 = vst.msk [vmem:[#allocation3 + $0x100] sm:$0xff] %vm1901, %v3675
      %3678 = vst.msk [vmem:[#allocation3 + $0x110] sm:$0xff] %vm1901, %v3676
      %v3679 = vld [vmem:[#allocation2 + $0x8] sm:$0xff]
      %v3680 = vld [vmem:[#allocation2 + $0x28] sm:$0xff]
      %3683 = vrot.lane.b32.xlu0 %v3679, 127
      %v3684 = vpop.permute.xlu0 %3683
      %3685 = vrot.lane.b32.xlu0 %v3680, 127
      %v3686 = vpop.permute.xlu0 %3685
      %v3689 = vsel %vm2023, %v3684, 0.0
      %v3690 = vsel %vm2023, %v3686, 0.0
      %3691 = vst.msk [vmem:[#allocation3 + $0x140] sm:$0xff] %vm1901, %v3689
      %3692 = vst.msk [vmem:[#allocation3 + $0x150] sm:$0xff] %vm1901, %v3690
      %v3693 = vld [vmem:[#allocation2 + $0x8] sm:$0xff]
      %v3694 = vld [vmem:[#allocation2 + $0x28] sm:$0xff]
      %3697 = vrot.lane.b32.xlu0 %v3693, 121
      %v3698 = vpop.permute.xlu0 %3697
      %3699 = vrot.lane.b32.xlu0 %v3694, 121
      %v3700 = vpop.permute.xlu0 %3699
      %v3703 = vsel %vm2041, %v3698, 0.0
      %v3704 = vsel %vm2041, %v3700, 0.0
      %3705 = vst.msk [vmem:[#allocation3 + $0x180] sm:$0xff] %vm1901, %v3703
      %3706 = vst.msk [vmem:[#allocation3 + $0x190] sm:$0xff] %vm1901, %v3704
      %v3707 = vld [vmem:[#allocation2 + $0x8] sm:$0xff]
      %v3708 = vld [vmem:[#allocation2 + $0x28] sm:$0xff]
      %3711 = vrot.lane.b32.xlu0 %v3707, 120
      %v3712 = vpop.permute.xlu0 %3711
      %3713 = vrot.lane.b32.xlu0 %v3708, 120
      %v3714 = vpop.permute.xlu0 %3713
      %v3717 = vsel %vm2057, %v3712, 0.0
      %v3718 = vsel %vm2057, %v3714, 0.0
      %3719 = vst.msk [vmem:[#allocation3 + $0x1c0] sm:$0xff] %vm1901, %v3717
      %3720 = vst.msk [vmem:[#allocation3 + $0x1d0] sm:$0xff] %vm1901, %v3718
      %v3721 = vld [vmem:[#allocation2 + $0x8] sm:$0xff]
      %v3722 = vld [vmem:[#allocation2 + $0x28] sm:$0xff]
      %3725 = vrot.lane.b32.xlu0 %v3721, 119
      %v3726 = vpop.permute.xlu0 %3725
      %3727 = vrot.lane.b32.xlu0 %v3722, 119
      %v3728 = vpop.permute.xlu0 %3727
      %v3731 = vsel %vm2074, %v3726, 0.0
      %v3732 = vsel %vm2074, %v3728, 0.0
      %3733 = vst.msk [vmem:[#allocation3 + $0x200] sm:$0xff] %vm1901, %v3731
      %3734 = vst.msk [vmem:[#allocation3 + $0x210] sm:$0xff] %vm1901, %v3732
      %3735 = vst.msk [vmem:[#allocation2 + $0x8] sm:$0xff] %vm1901, %v2185
      %3736 = vst.msk [vmem:[#allocation2 + $0x28] sm:$0xff] %vm1901, %v2186
      %v3737 = vld [vmem:[#allocation2] sm:$0xff]
      %v3738 = vld [vmem:[#allocation2 + $0x8] sm:$0xff]
      %v3739 = vld [vmem:[#allocation2 + $0x20] sm:$0xff]
      %v3740 = vld [vmem:[#allocation2 + $0x28] sm:$0xff]
      %3745 = vrot.lane.b32.xlu0 %v3737, 9
      %v3746 = vpop.permute.xlu0 %3745
      %3747 = vrot.lane.b32.xlu0 %v3738, 9
      %v3748 = vpop.permute.xlu0 %3747
      %3749 = vrot.lane.b32.xlu0 %v3739, 9
      %v3750 = vpop.permute.xlu0 %3749
      %3751 = vrot.lane.b32.xlu0 %v3740, 9
      %v3752 = vpop.permute.xlu0 %3751
      %v3753 = vsel %vm1925, %v3746, %v3748
      %v3754 = vsel %vm1925, %v3750, %v3752
      %v3757 = vsel %vm1912, %v3753, 0.0
      %v3758 = vsel %vm1912, %v3754, 0.0
      %3759 = vst.msk [vmem:[#allocation3 + $0x20] sm:$0xff] %vm1901, %v3757
      %3760 = vst.msk [vmem:[#allocation3 + $0x30] sm:$0xff] %vm1901, %v3758
      %v3761 = vld [vmem:[#allocation2] sm:$0xff]
      %v3762 = vld [vmem:[#allocation2 + $0x8] sm:$0xff]
      %v3763 = vld [vmem:[#allocation2 + $0x20] sm:$0xff]
      %v3764 = vld [vmem:[#allocation2 + $0x28] sm:$0xff]
      %3769 = vrot.lane.b32.xlu0 %v3761, 8
      %v3770 = vpop.permute.xlu0 %3769
      %3771 = vrot.lane.b32.xlu0 %v3762, 8
      %v3772 = vpop.permute.xlu0 %3771
      %3773 = vrot.lane.b32.xlu0 %v3763, 8
      %v3774 = vpop.permute.xlu0 %3773
      %3775 = vrot.lane.b32.xlu0 %v3764, 8
      %v3776 = vpop.permute.xlu0 %3775
      %v3777 = vsel %vm1952, %v3770, %v3772
      %v3778 = vsel %vm1952, %v3774, %v3776
      %v3781 = vsel %vm1939, %v3777, 0.0
      %v3782 = vsel %vm1939, %v3778, 0.0
      %3783 = vst.msk [vmem:[#allocation3 + $0x60] sm:$0xff] %vm1901, %v3781
      %3784 = vst.msk [vmem:[#allocation3 + $0x70] sm:$0xff] %vm1901, %v3782
      %v3785 = vld [vmem:[#allocation2] sm:$0xff]
      %v3786 = vld [vmem:[#allocation2 + $0x8] sm:$0xff]
      %v3787 = vld [vmem:[#allocation2 + $0x20] sm:$0xff]
      %v3788 = vld [vmem:[#allocation2 + $0x28] sm:$0xff]
      %3793 = vrot.lane.b32.xlu0 %v3785, 7
      %v3794 = vpop.permute.xlu0 %3793
      %3795 = vrot.lane.b32.xlu0 %v3786, 7
      %v3796 = vpop.permute.xlu0 %3795
      %3797 = vrot.lane.b32.xlu0 %v3787, 7
      %v3798 = vpop.permute.xlu0 %3797
      %3799 = vrot.lane.b32.xlu0 %v3788, 7
      %v3800 = vpop.permute.xlu0 %3799
      %v3801 = vsel %vm1981, %v3794, %v3796
      %v3802 = vsel %vm1981, %v3798, %v3800
      %v3805 = vsel %vm1968, %v3801, 0.0
      %v3806 = vsel %vm1968, %v3802, 0.0
      %3807 = vst.msk [vmem:[#allocation3 + $0xa0] sm:$0xff] %vm1901, %v3805
      %3808 = vst.msk [vmem:[#allocation3 + $0xb0] sm:$0xff] %vm1901, %v3806
      %v3809 = vld [vmem:[#allocation2] sm:$0xff]
      %v3810 = vld [vmem:[#allocation2 + $0x8] sm:$0xff]
      %v3811 = vld [vmem:[#allocation2 + $0x20] sm:$0xff]
      %v3812 = vld [vmem:[#allocation2 + $0x28] sm:$0xff]
      %3817 = vrot.lane.b32.xlu0 %v3809, 1
      %v3818 = vpop.permute.xlu0 %3817
      %3819 = vrot.lane.b32.xlu0 %v3810, 1
      %v3820 = vpop.permute.xlu0 %3819
      %3821 = vrot.lane.b32.xlu0 %v3811, 1
      %v3822 = vpop.permute.xlu0 %3821
      %3823 = vrot.lane.b32.xlu0 %v3812, 1
      %v3824 = vpop.permute.xlu0 %3823
      %v3825 = vsel %vm1000, %v3818, %v3820
      %v3826 = vsel %vm1000, %v3822, %v3824
      %v3829 = vsel %vm1995, %v3825, 0.0
      %v3830 = vsel %vm1995, %v3826, 0.0
      %3831 = vst.msk [vmem:[#allocation3 + $0xe0] sm:$0xff] %vm1901, %v3829
      %3832 = vst.msk [vmem:[#allocation3 + $0xf0] sm:$0xff] %vm1901, %v3830
      %v3833 = vld [vmem:[#allocation2 + $0x8] sm:$0xff]
      %v3834 = vld [vmem:[#allocation2 + $0x28] sm:$0xff]
      %3835 = vst.msk [vmem:[#allocation3 + $0x120] sm:$0xff] %vm1901, %v3833
      %3836 = vst.msk [vmem:[#allocation3 + $0x130] sm:$0xff] %vm1901, %v3834
      %v3837 = vld [vmem:[#allocation2 + $0x8] sm:$0xff]
      %v3838 = vld [vmem:[#allocation2 + $0x28] sm:$0xff]
      %3841 = vrot.lane.b32.xlu0 %v3837, 127
      %v3842 = vpop.permute.xlu0 %3841
      %3843 = vrot.lane.b32.xlu0 %v3838, 127
      %v3844 = vpop.permute.xlu0 %3843
      %v3847 = vsel %vm2023, %v3842, 0.0
      %v3848 = vsel %vm2023, %v3844, 0.0
      %3849 = vst.msk [vmem:[#allocation3 + $0x160] sm:$0xff] %vm1901, %v3847
      %3850 = vst.msk [vmem:[#allocation3 + $0x170] sm:$0xff] %vm1901, %v3848
      %v3851 = vld [vmem:[#allocation2 + $0x8] sm:$0xff]
      %v3852 = vld [vmem:[#allocation2 + $0x28] sm:$0xff]
      %3855 = vrot.lane.b32.xlu0 %v3851, 121
      %v3856 = vpop.permute.xlu0 %3855
      %3857 = vrot.lane.b32.xlu0 %v3852, 121
      %v3858 = vpop.permute.xlu0 %3857
      %v3861 = vsel %vm2041, %v3856, 0.0
      %v3862 = vsel %vm2041, %v3858, 0.0
      %3863 = vst.msk [vmem:[#allocation3 + $0x1a0] sm:$0xff] %vm1901, %v3861
      %3864 = vst.msk [vmem:[#allocation3 + $0x1b0] sm:$0xff] %vm1901, %v3862
      %v3865 = vld [vmem:[#allocation2 + $0x8] sm:$0xff]
      %v3866 = vld [vmem:[#allocation2 + $0x28] sm:$0xff]
      %3869 = vrot.lane.b32.xlu0 %v3865, 120
      %v3870 = vpop.permute.xlu0 %3869
      %3871 = vrot.lane.b32.xlu0 %v3866, 120
      %v3872 = vpop.permute.xlu0 %3871
      %v3875 = vsel %vm2057, %v3870, 0.0
      %v3876 = vsel %vm2057, %v3872, 0.0
      %3877 = vst.msk [vmem:[#allocation3 + $0x1e0] sm:$0xff] %vm1901, %v3875
      %3878 = vst.msk [vmem:[#allocation3 + $0x1f0] sm:$0xff] %vm1901, %v3876
      %v3879 = vld [vmem:[#allocation2 + $0x8] sm:$0xff]
      %v3880 = vld [vmem:[#allocation2 + $0x28] sm:$0xff]
      %3883 = vrot.lane.b32.xlu0 %v3879, 119
      %v3884 = vpop.permute.xlu0 %3883
      %3885 = vrot.lane.b32.xlu0 %v3880, 119
      %v3886 = vpop.permute.xlu0 %3885
      %v3889 = vsel %vm2074, %v3884, 0.0
      %v3890 = vsel %vm2074, %v3886, 0.0
      %3891 = vst.msk [vmem:[#allocation3 + $0x220] sm:$0xff] %vm1901, %v3889
      %3892 = vst.msk [vmem:[#allocation3 + $0x230] sm:$0xff] %vm1901, %v3890
      %v3893 = vld [vmem:[%s14] sm:$0xff]
      %v3894 = vld [vmem:[%s14 + $0x8] sm:$0xf]
      %v3895 = vld [vmem:[%s14 + $0xc] sm:$0xff]
      %v3896 = vld [vmem:[%s14 + $0x14] sm:$0xf]
      %v3897 = vld [vmem:[#allocation3] sm:$0xff]
      %v3898 = vld [vmem:[#allocation3 + $0x10] sm:$0xff]
      %v3899 = vld [vmem:[#allocation3 + $0x20] sm:$0xff]
      %v3900 = vld [vmem:[#allocation3 + $0x30] sm:$0xff]
      %v3901 = vld [vmem:[#allocation3 + $0x40] sm:$0xff]
      %v3902 = vld [vmem:[#allocation3 + $0x50] sm:$0xff]
      %v3903 = vld [vmem:[#allocation3 + $0x60] sm:$0xff]
      %v3904 = vld [vmem:[#allocation3 + $0x70] sm:$0xff]
      %v3905 = vld [vmem:[#allocation3 + $0x80] sm:$0xff]
      %v3906 = vld [vmem:[#allocation3 + $0x90] sm:$0xff]
      %v3907 = vld [vmem:[#allocation3 + $0xa0] sm:$0xff]
      %v3908 = vld [vmem:[#allocation3 + $0xb0] sm:$0xff]
      %v3909 = vld [vmem:[#allocation3 + $0xc0] sm:$0xff]
      %v3910 = vld [vmem:[#allocation3 + $0xd0] sm:$0xff]
      %v3911 = vld [vmem:[#allocation3 + $0xe0] sm:$0xff]
      %v3912 = vld [vmem:[#allocation3 + $0xf0] sm:$0xff]
      %v3913 = vld [vmem:[#allocation3 + $0x100] sm:$0xff]
      %v3914 = vld [vmem:[#allocation3 + $0x110] sm:$0xff]
      %v3915 = vld [vmem:[#allocation3 + $0x120] sm:$0xff]
      %v3916 = vld [vmem:[#allocation3 + $0x130] sm:$0xff]
      %v3917 = vld [vmem:[#allocation3 + $0x140] sm:$0xff]
      %v3918 = vld [vmem:[#allocation3 + $0x150] sm:$0xff]
      %v3919 = vld [vmem:[#allocation3 + $0x160] sm:$0xff]
      %v3920 = vld [vmem:[#allocation3 + $0x170] sm:$0xff]
      %v3921 = vld [vmem:[#allocation3 + $0x180] sm:$0xff]
      %v3922 = vld [vmem:[#allocation3 + $0x190] sm:$0xff]
      %v3923 = vld [vmem:[#allocation3 + $0x1a0] sm:$0xff]
      %v3924 = vld [vmem:[#allocation3 + $0x1b0] sm:$0xff]
      %v3925 = vld [vmem:[#allocation3 + $0x1c0] sm:$0xff]
      %v3926 = vld [vmem:[#allocation3 + $0x1d0] sm:$0xff]
      %v3927 = vld [vmem:[#allocation3 + $0x1e0] sm:$0xff]
      %v3928 = vld [vmem:[#allocation3 + $0x1f0] sm:$0xff]
      %v3929 = vld [vmem:[#allocation3 + $0x200] sm:$0xff]
      %v3930 = vld [vmem:[#allocation3 + $0x210] sm:$0xff]
      %v3931 = vld [vmem:[#allocation3 + $0x220] sm:$0xff]
      %v3932 = vld [vmem:[#allocation3 + $0x230] sm:$0xff]
      %v3933 = vpack.c.bf16 %v3898, %v3897
      %v3934 = vpack.c.bf16 %v3900, %v3899
      %v3935 = vpack.c.bf16 %v3902, %v3901
      %v3936 = vpack.c.bf16 %v3904, %v3903
      %v3937 = vpack.c.bf16 %v3906, %v3905
      %v3938 = vpack.c.bf16 %v3908, %v3907
      %v3939 = vpack.c.bf16 %v3910, %v3909
      %v3940 = vpack.c.bf16 %v3912, %v3911
      %v3941 = vpack.c.bf16 %v3914, %v3913
      %v3942 = vpack.c.bf16 %v3916, %v3915
      %v3943 = vpack.c.bf16 %v3918, %v3917
      %v3944 = vpack.c.bf16 %v3920, %v3919
      %v3945 = vpack.c.bf16 %v3922, %v3921
      %v3946 = vpack.c.bf16 %v3924, %v3923
      %v3947 = vpack.c.bf16 %v3926, %v3925
      %v3948 = vpack.c.bf16 %v3928, %v3927
      %v3949 = vpack.c.bf16 %v3930, %v3929
      %v3950 = vpack.c.bf16 %v3932, %v3931
      %v3951 = vld [vmem:[%s15] sm:$0xff]
      %v3952 = vld [vmem:[%s15 + $0x8] sm:$0xff]
      %3954 = vset.pattern.permute.xlu0 0
      %3955 = vperm.xlu0 %3954, %v3951
      %v3956 = vpop.permute.xlu0 %3955
      %3959 = vset.pattern.permute.xlu0 0
      %3960 = vperm.xlu0 %3959, %v3952
      %v3961 = vpop.permute.xlu0 %3960
      %v3967 = vunpack.c.l.b16 %v3893
      %v3968 = vunpack.c.h.b16 %v3893
      %v3969 = vunpack.c.l.b16 %v3894
      %v3970 = vunpack.c.l.b16 %v3895
      %v3971 = vunpack.c.h.b16 %v3895
      %v3972 = vunpack.c.l.b16 %v3896
      %v3973 = vpack.c.b16 %v3970, %v3967
      %v3974 = vpack.c.b16 %v3971, %v3968
      %v3975 = vpack.c.b16 %v3972, %v3969
      %v3979 = vsel %vm863, %v3975, 0
      %3981 = vmatprep.subr.bf16.mxu0 0
      %3982 = vmatpush1.bf16.msra.mxu0 %v3940
      %3983 = vmatprep.subr.bf16.mxu0 0
      %3984 = vmatpush1.bf16.msra.mxu0 %v3939
      %3985 = vmatprep.subr.bf16.mxu0 0
      %3986 = vmatpush1.bf16.msra.mxu0 %v3938
      %3987 = vmatprep.subr.bf16.mxu0 0
      %3988 = vmatpush1.bf16.msra.mxu0 %v3937
      %3989 = vmatprep.subr.bf16.mxu0 0
      %3990 = vmatpush1.bf16.msra.mxu0 %v3936
      %3991 = vmatprep.subr.bf16.mxu0 0
      %3992 = vmatpush1.bf16.msra.mxu0 %v3935
      %3993 = vmatprep.subr.bf16.mxu0 0
      %3994 = vmatpush1.bf16.msra.mxu0 %v3934
      %3995 = vmatprep.subr.bf16.mxu0 0
      %3996 = vmatpush1.bf16.msra.mxu0 %v3933
      %3997 = vmatprep.subr.bf16.mxu0 0
      %3998 = vmatpush2.bf16.msra.mxu0 %v3948
      %3999 = vmatprep.subr.bf16.mxu0 0
      %4000 = vmatpush2.bf16.msra.mxu0 %v3947
      %4001 = vmatprep.subr.bf16.mxu0 0
      %4002 = vmatpush2.bf16.msra.mxu0 %v3946
      %4003 = vmatprep.subr.bf16.mxu0 0
      %4004 = vmatpush2.bf16.msra.mxu0 %v3945
      %4005 = vmatprep.subr.bf16.mxu0 0
      %4006 = vmatpush2.bf16.msra.mxu0 %v3944
      %4007 = vmatprep.subr.bf16.mxu0 0
      %4008 = vmatpush2.bf16.msra.mxu0 %v3943
      %4009 = vmatprep.subr.bf16.mxu0 0
      %4010 = vmatpush2.bf16.msra.mxu0 %v3942
      %4011 = vmatprep.subr.bf16.mxu0 0
      %4012 = vmatpush2.bf16.msra.mxu0 %v3941
      %4013 = vmatprep.mubr.bf16.mxu0 %v3974
      %4014 = vmatmul.mubr.bf16.gmra.mxu0 %v3973
      %v4015 = vpop.f32.mrf.mxu0
      %v4016 = vadd.f32 %v3956, %v4015
      %v4017 = vpop.f32.mrf.mxu0
      %v4018 = vpop.f32.mrf.mxu0
      %v4019 = vadd.f32 %v3961, %v4018
      %v4020 = vpop.f32.mrf.mxu0
      %4021 = vdwg.mxu0
      %4022 = vmatprep.subr.bf16.mxu0 0
      %4023 = vmatpush1.bf16.msra.mxu0 0
      %4024 = vmatprep.subr.bf16.mxu0 0
      %4025 = vmatpush1.bf16.msra.mxu0 0
      %4026 = vmatprep.subr.bf16.mxu0 0
      %4027 = vmatpush1.bf16.msra.mxu0 0
      %4028 = vmatprep.subr.bf16.mxu0 0
      %4029 = vmatpush1.bf16.msra.mxu0 0
      %4030 = vmatprep.subr.bf16.mxu0 0
      %4031 = vmatpush1.bf16.msra.mxu0 0
      %4032 = vmatprep.subr.bf16.mxu0 0
      %4033 = vmatpush1.bf16.msra.mxu0 0
      %4034 = vmatprep.subr.bf16.mxu0 0
      %4035 = vmatpush1.bf16.msra.mxu0 %v3950
      %4036 = vmatprep.subr.bf16.mxu0 0
      %4037 = vmatpush1.bf16.msra.mxu0 %v3949
      %4038 = vmatprep.subr.bf16.mxu0 0
      %4039 = vmatpush2.bf16.msra.mxu0 0
      %4040 = vmatprep.subr.bf16.mxu0 0
      %4041 = vmatpush2.bf16.msra.mxu0 0
      %4042 = vmatprep.subr.bf16.mxu0 0
      %4043 = vmatpush2.bf16.msra.mxu0 0
      %4044 = vmatprep.subr.bf16.mxu0 0
      %4045 = vmatpush2.bf16.msra.mxu0 0
      %4046 = vmatprep.subr.bf16.mxu0 0
      %4047 = vmatpush2.bf16.msra.mxu0 0
      %4048 = vmatprep.subr.bf16.mxu0 0
      %4049 = vmatpush2.bf16.msra.mxu0 0
      %4050 = vmatprep.subr.bf16.mxu0 0
      %4051 = vmatpush2.bf16.msra.mxu0 0
      %4052 = vmatprep.subr.bf16.mxu0 0
      %4053 = vmatpush2.bf16.msra.mxu0 0
      %4054 = vmatprep.mubr.bf16.mxu0 0
      %4055 = vmatmul.mubr.bf16.gmra.mxu0 %v3979
      %v4056 = vpop.f32.mrf.mxu0
      %v4057 = vadd.f32 %v4016, %v4056
      %v4058 = vpop.f32.mrf.mxu0
      %v4059 = vpop.f32.mrf.mxu0
      %v4060 = vadd.f32 %v4019, %v4059
      %v4061 = vpop.f32.mrf.mxu0
      %4062 = vdwg.mxu0
      %vm4063 = vcmp.ge.f32.partialorder %v4057, 0.0
      %vm4064 = vcmp.ge.f32.partialorder %v4060, 0.0
      %v4065 = vmul.f32 %v4057, 0.01
      %v4066 = vmul.f32 %v4060, 0.01
      %v4067 = vsel %vm4063, %v4057, %v4065
      %v4068 = vsel %vm4064, %v4060, %v4066
      %4069 = vst.msk [vmem:[#allocation2 + $0x8] sm:$0xff] %vm1901, %v4067
      %4070 = vst.msk [vmem:[#allocation2 + $0x28] sm:$0xff] %vm1901, %v4068
      %v4071 = vld [vmem:[#allocation2] sm:$0xff]
      %v4072 = vld [vmem:[#allocation2 + $0x8] sm:$0xff]
      %v4073 = vld [vmem:[#allocation2 + $0x20] sm:$0xff]
      %v4074 = vld [vmem:[#allocation2 + $0x28] sm:$0xff]
      %4079 = vrot.lane.b32.xlu0 %v4071, 9
      %v4080 = vpop.permute.xlu0 %4079
      %4081 = vrot.lane.b32.xlu0 %v4072, 9
      %v4082 = vpop.permute.xlu0 %4081
      %4083 = vrot.lane.b32.xlu0 %v4073, 9
      %v4084 = vpop.permute.xlu0 %4083
      %4085 = vrot.lane.b32.xlu0 %v4074, 9
      %v4086 = vpop.permute.xlu0 %4085
      %v4087 = vsel %vm1925, %v4080, %v4082
      %v4088 = vsel %vm1925, %v4084, %v4086
      %v4091 = vsel %vm1912, %v4087, 0.0
      %v4092 = vsel %vm1912, %v4088, 0.0
      %4093 = vst.msk [vmem:[#allocation3] sm:$0xff] %vm1901, %v4091
      %4094 = vst.msk [vmem:[#allocation3 + $0x10] sm:$0xff] %vm1901, %v4092
      %v4095 = vld [vmem:[#allocation2] sm:$0xff]
      %v4096 = vld [vmem:[#allocation2 + $0x8] sm:$0xff]
      %v4097 = vld [vmem:[#allocation2 + $0x20] sm:$0xff]
      %v4098 = vld [vmem:[#allocation2 + $0x28] sm:$0xff]
      %4103 = vrot.lane.b32.xlu0 %v4095, 8
      %v4104 = vpop.permute.xlu0 %4103
      %4105 = vrot.lane.b32.xlu0 %v4096, 8
      %v4106 = vpop.permute.xlu0 %4105
      %4107 = vrot.lane.b32.xlu0 %v4097, 8
      %v4108 = vpop.permute.xlu0 %4107
      %4109 = vrot.lane.b32.xlu0 %v4098, 8
      %v4110 = vpop.permute.xlu0 %4109
      %v4111 = vsel %vm1952, %v4104, %v4106
      %v4112 = vsel %vm1952, %v4108, %v4110
      %v4115 = vsel %vm1939, %v4111, 0.0
      %v4116 = vsel %vm1939, %v4112, 0.0
      %4117 = vst.msk [vmem:[#allocation3 + $0x20] sm:$0xff] %vm1901, %v4115
      %4118 = vst.msk [vmem:[#allocation3 + $0x30] sm:$0xff] %vm1901, %v4116
      %v4119 = vld [vmem:[#allocation2] sm:$0xff]
      %v4120 = vld [vmem:[#allocation2 + $0x8] sm:$0xff]
      %v4121 = vld [vmem:[#allocation2 + $0x20] sm:$0xff]
      %v4122 = vld [vmem:[#allocation2 + $0x28] sm:$0xff]
      %4127 = vrot.lane.b32.xlu0 %v4119, 7
      %v4128 = vpop.permute.xlu0 %4127
      %4129 = vrot.lane.b32.xlu0 %v4120, 7
      %v4130 = vpop.permute.xlu0 %4129
      %4131 = vrot.lane.b32.xlu0 %v4121, 7
      %v4132 = vpop.permute.xlu0 %4131
      %4133 = vrot.lane.b32.xlu0 %v4122, 7
      %v4134 = vpop.permute.xlu0 %4133
      %v4135 = vsel %vm1981, %v4128, %v4130
      %v4136 = vsel %vm1981, %v4132, %v4134
      %v4139 = vsel %vm1968, %v4135, 0.0
      %v4140 = vsel %vm1968, %v4136, 0.0
      %4141 = vst.msk [vmem:[#allocation3 + $0x40] sm:$0xff] %vm1901, %v4139
      %4142 = vst.msk [vmem:[#allocation3 + $0x50] sm:$0xff] %vm1901, %v4140
      %v4143 = vld [vmem:[#allocation2] sm:$0xff]
      %v4144 = vld [vmem:[#allocation2 + $0x8] sm:$0xff]
      %v4145 = vld [vmem:[#allocation2 + $0x20] sm:$0xff]
      %v4146 = vld [vmem:[#allocation2 + $0x28] sm:$0xff]
      %4151 = vrot.lane.b32.xlu0 %v4143, 1
      %v4152 = vpop.permute.xlu0 %4151
      %4153 = vrot.lane.b32.xlu0 %v4144, 1
      %v4154 = vpop.permute.xlu0 %4153
      %4155 = vrot.lane.b32.xlu0 %v4145, 1
      %v4156 = vpop.permute.xlu0 %4155
      %4157 = vrot.lane.b32.xlu0 %v4146, 1
      %v4158 = vpop.permute.xlu0 %4157
      %v4159 = vsel %vm1000, %v4152, %v4154
      %v4160 = vsel %vm1000, %v4156, %v4158
      %v4163 = vsel %vm1995, %v4159, 0.0
      %v4164 = vsel %vm1995, %v4160, 0.0
      %4165 = vst.msk [vmem:[#allocation3 + $0x60] sm:$0xff] %vm1901, %v4163
      %4166 = vst.msk [vmem:[#allocation3 + $0x70] sm:$0xff] %vm1901, %v4164
      %v4167 = vld [vmem:[#allocation2 + $0x8] sm:$0xff]
      %v4168 = vld [vmem:[#allocation2 + $0x28] sm:$0xff]
      %4169 = vst.msk [vmem:[#allocation3 + $0x80] sm:$0xff] %vm1901, %v4167
      %4170 = vst.msk [vmem:[#allocation3 + $0x90] sm:$0xff] %vm1901, %v4168
      %v4171 = vld [vmem:[#allocation2 + $0x8] sm:$0xff]
      %v4172 = vld [vmem:[#allocation2 + $0x28] sm:$0xff]
      %4175 = vrot.lane.b32.xlu0 %v4171, 127
      %v4176 = vpop.permute.xlu0 %4175
      %4177 = vrot.lane.b32.xlu0 %v4172, 127
      %v4178 = vpop.permute.xlu0 %4177
      %v4181 = vsel %vm2023, %v4176, 0.0
      %v4182 = vsel %vm2023, %v4178, 0.0
      %4183 = vst.msk [vmem:[#allocation3 + $0xa0] sm:$0xff] %vm1901, %v4181
      %4184 = vst.msk [vmem:[#allocation3 + $0xb0] sm:$0xff] %vm1901, %v4182
      %v4185 = vld [vmem:[#allocation2 + $0x8] sm:$0xff]
      %v4186 = vld [vmem:[#allocation2 + $0x28] sm:$0xff]
      %4189 = vrot.lane.b32.xlu0 %v4185, 121
      %v4190 = vpop.permute.xlu0 %4189
      %4191 = vrot.lane.b32.xlu0 %v4186, 121
      %v4192 = vpop.permute.xlu0 %4191
      %v4195 = vsel %vm2041, %v4190, 0.0
      %v4196 = vsel %vm2041, %v4192, 0.0
      %4197 = vst.msk [vmem:[#allocation3 + $0xc0] sm:$0xff] %vm1901, %v4195
      %4198 = vst.msk [vmem:[#allocation3 + $0xd0] sm:$0xff] %vm1901, %v4196
      %v4199 = vld [vmem:[#allocation2 + $0x8] sm:$0xff]
      %v4200 = vld [vmem:[#allocation2 + $0x28] sm:$0xff]
      %4203 = vrot.lane.b32.xlu0 %v4199, 120
      %v4204 = vpop.permute.xlu0 %4203
      %4205 = vrot.lane.b32.xlu0 %v4200, 120
      %v4206 = vpop.permute.xlu0 %4205
      %v4209 = vsel %vm2057, %v4204, 0.0
      %v4210 = vsel %vm2057, %v4206, 0.0
      %4211 = vst.msk [vmem:[#allocation3 + $0xe0] sm:$0xff] %vm1901, %v4209
      %4212 = vst.msk [vmem:[#allocation3 + $0xf0] sm:$0xff] %vm1901, %v4210
      %v4213 = vld [vmem:[#allocation2 + $0x8] sm:$0xff]
      %v4214 = vld [vmem:[#allocation2 + $0x28] sm:$0xff]
      %4217 = vrot.lane.b32.xlu0 %v4213, 119
      %v4218 = vpop.permute.xlu0 %4217
      %4219 = vrot.lane.b32.xlu0 %v4214, 119
      %v4220 = vpop.permute.xlu0 %4219
      %v4223 = vsel %vm2074, %v4218, 0.0
      %v4224 = vsel %vm2074, %v4220, 0.0
      %4225 = vst.msk [vmem:[#allocation3 + $0x100] sm:$0xff] %vm1901, %v4223
      %4226 = vst.msk [vmem:[#allocation3 + $0x110] sm:$0xff] %vm1901, %v4224
      %v4227 = vld [vmem:[%s16] sm:$0xff]
      %v4228 = vld [vmem:[%s16 + $0x8] sm:$0xff]
      %v4229 = vld [vmem:[#allocation3] sm:$0xff]
      %v4230 = vld [vmem:[#allocation3 + $0x10] sm:$0xff]
      %v4231 = vld [vmem:[#allocation3 + $0x20] sm:$0xff]
      %v4232 = vld [vmem:[#allocation3 + $0x30] sm:$0xff]
      %v4233 = vld [vmem:[#allocation3 + $0x40] sm:$0xff]
      %v4234 = vld [vmem:[#allocation3 + $0x50] sm:$0xff]
      %v4235 = vld [vmem:[#allocation3 + $0x60] sm:$0xff]
      %v4236 = vld [vmem:[#allocation3 + $0x70] sm:$0xff]
      %v4237 = vld [vmem:[#allocation3 + $0x80] sm:$0xff]
      %v4238 = vld [vmem:[#allocation3 + $0x90] sm:$0xff]
      %v4239 = vld [vmem:[#allocation3 + $0xa0] sm:$0xff]
      %v4240 = vld [vmem:[#allocation3 + $0xb0] sm:$0xff]
      %v4241 = vld [vmem:[#allocation3 + $0xc0] sm:$0xff]
      %v4242 = vld [vmem:[#allocation3 + $0xd0] sm:$0xff]
      %v4243 = vld [vmem:[#allocation3 + $0xe0] sm:$0xff]
      %v4244 = vld [vmem:[#allocation3 + $0xf0] sm:$0xff]
      %v4245 = vld [vmem:[#allocation3 + $0x100] sm:$0xff]
      %v4246 = vld [vmem:[#allocation3 + $0x110] sm:$0xff]
      %v4247 = vpack.c.bf16 %v4230, %v4229
      %v4248 = vpack.c.bf16 %v4232, %v4231
      %v4249 = vpack.c.bf16 %v4234, %v4233
      %v4250 = vpack.c.bf16 %v4236, %v4235
      %v4251 = vpack.c.bf16 %v4238, %v4237
      %v4252 = vpack.c.bf16 %v4240, %v4239
      %v4253 = vpack.c.bf16 %v4242, %v4241
      %v4254 = vpack.c.bf16 %v4244, %v4243
      %v4255 = vpack.c.bf16 %v4246, %v4245
      %v4256 = vld [vmem:[%s17] sm:$0xff]
      %v4257 = vld [vmem:[%s17 + $0x8] sm:$0xff]
      %4259 = vset.pattern.permute.xlu0 0
      %4260 = vperm.xlu0 %4259, %v4256
      %v4261 = vpop.permute.xlu0 %4260
      %4264 = vset.pattern.permute.xlu0 0
      %4265 = vperm.xlu0 %4264, %v4257
      %v4266 = vpop.permute.xlu0 %4265
      %v4270 = vunpack.c.l.b16 %v4227
      %v4271 = vunpack.c.h.b16 %v4227
      %v4272 = vunpack.c.l.b16 %v4228
      %v4273 = vunpack.c.h.b16 %v4228
      %v4274 = vpack.c.b16 %v4272, %v4270
      %v4275 = vpack.c.b16 %v4273, %v4271
      %v4278 = vsel %vm946, %v4275, 0
      %4280 = vmatprep.subr.bf16.mxu0 0
      %4281 = vmatpush1.bf16.msra.mxu0 %v4254
      %4282 = vmatprep.subr.bf16.mxu0 0
      %4283 = vmatpush1.bf16.msra.mxu0 %v4253
      %4284 = vmatprep.subr.bf16.mxu0 0
      %4285 = vmatpush1.bf16.msra.mxu0 %v4252
      %4286 = vmatprep.subr.bf16.mxu0 0
      %4287 = vmatpush1.bf16.msra.mxu0 %v4251
      %4288 = vmatprep.subr.bf16.mxu0 0
      %4289 = vmatpush1.bf16.msra.mxu0 %v4250
      %4290 = vmatprep.subr.bf16.mxu0 0
      %4291 = vmatpush1.bf16.msra.mxu0 %v4249
      %4292 = vmatprep.subr.bf16.mxu0 0
      %4293 = vmatpush1.bf16.msra.mxu0 %v4248
      %4294 = vmatprep.subr.bf16.mxu0 0
      %4295 = vmatpush1.bf16.msra.mxu0 %v4247
      %4296 = vmatprep.subr.bf16.mxu0 0
      %4297 = vmatpush2.bf16.msra.mxu0 0
      %4298 = vmatprep.subr.bf16.mxu0 0
      %4299 = vmatpush2.bf16.msra.mxu0 0
      %4300 = vmatprep.subr.bf16.mxu0 0
      %4301 = vmatpush2.bf16.msra.mxu0 0
      %4302 = vmatprep.subr.bf16.mxu0 0
      %4303 = vmatpush2.bf16.msra.mxu0 0
      %4304 = vmatprep.subr.bf16.mxu0 0
      %4305 = vmatpush2.bf16.msra.mxu0 0
      %4306 = vmatprep.subr.bf16.mxu0 0
      %4307 = vmatpush2.bf16.msra.mxu0 0
      %4308 = vmatprep.subr.bf16.mxu0 0
      %4309 = vmatpush2.bf16.msra.mxu0 0
      %4310 = vmatprep.subr.bf16.mxu0 0
      %4311 = vmatpush2.bf16.msra.mxu0 %v4255
      %4312 = vmatprep.mubr.bf16.mxu0 %v4278
      %4313 = vmatmul.mubr.bf16.gmra.mxu0 %v4274
      %v4314 = vpop.f32.mrf.mxu0
      %v4315 = vadd.f32 %v4261, %v4314
      %v4316 = vpop.f32.mrf.mxu0
      %v4317 = vpop.f32.mrf.mxu0
      %v4318 = vadd.f32 %v4266, %v4317
      %v4319 = vpop.f32.mrf.mxu0
      %4320 = vdwg.mxu0
      %vm4321 = vcmp.ge.f32.partialorder %v4315, 0.0
      %vm4322 = vcmp.ge.f32.partialorder %v4318, 0.0
      %v4323 = vmul.f32 %v4315, 0.01
      %v4324 = vmul.f32 %v4318, 0.01
      %v4325 = vsel %vm4321, %v4315, %v4323
      %v4326 = vsel %vm4322, %v4318, %v4324
      %v4327 = vld [vmem:[%s18] sm:$0x3]
      %v4328 = vpack.c.bf16 %v4326, %v4325
      %v4329 = vld [vmem:[%s19] sm:$0x7]
      %4331 = vset.pattern.permute.xlu0 0
      %4332 = vperm.xlu0 %4331, %v4329
      %v4333 = vpop.permute.xlu0 %4332
      %v4336 = vsel %vm946, %v4327, 0
      %4338 = vmatprep.subr.bf16.mxu0 0
      %4339 = vmatpush1.bf16.msra.mxu0 0
      %4340 = vmatprep.subr.bf16.mxu0 0
      %4341 = vmatpush1.bf16.msra.mxu0 0
      %4342 = vmatprep.subr.bf16.mxu0 0
      %4343 = vmatpush1.bf16.msra.mxu0 0
      %4344 = vmatprep.subr.bf16.mxu0 0
      %4345 = vmatpush1.bf16.msra.mxu0 0
      %4346 = vmatprep.subr.bf16.mxu0 0
      %4347 = vmatpush1.bf16.msra.mxu0 0
      %4348 = vmatprep.subr.bf16.mxu0 0
      %4349 = vmatpush1.bf16.msra.mxu0 0
      %4350 = vmatprep.subr.bf16.mxu0 0
      %4351 = vmatpush1.bf16.msra.mxu0 0
      %4352 = vmatprep.subr.bf16.mxu0 0
      %4353 = vmatpush1.bf16.msra.mxu0 %v4328
      %4354 = vmatprep.subr.bf16.mxu0 0
      %4355 = vmatpush2.bf16.msra.mxu0 0
      %4356 = vmatprep.subr.bf16.mxu0 0
      %4357 = vmatpush2.bf16.msra.mxu0 0
      %4358 = vmatprep.subr.bf16.mxu0 0
      %4359 = vmatpush2.bf16.msra.mxu0 0
      %4360 = vmatprep.subr.bf16.mxu0 0
      %4361 = vmatpush2.bf16.msra.mxu0 0
      %4362 = vmatprep.subr.bf16.mxu0 0
      %4363 = vmatpush2.bf16.msra.mxu0 0
      %4364 = vmatprep.subr.bf16.mxu0 0
      %4365 = vmatpush2.bf16.msra.mxu0 0
      %4366 = vmatprep.subr.bf16.mxu0 0
      %4367 = vmatpush2.bf16.msra.mxu0 0
      %4368 = vmatprep.subr.bf16.mxu0 0
      %4369 = vmatpush2.bf16.msra.mxu0 0
      %4370 = vmatprep.mubr.bf16.mxu0 0
      %4371 = vmatmul.mubr.bf16.gmra.mxu0 %v4336
      %v4372 = vpop.f32.mrf.mxu0
      %v4373 = vadd.f32 %v4333, %v4372
      %v4374 = vpop.f32.mrf.mxu0
      %v4375 = vpop.f32.mrf.mxu0
      %v4376 = vpop.f32.mrf.mxu0
      %4377 = vdwg.mxu0
      %vm4378 = vcmask 518144
      %4379 = vst.msk [vmem:[%s856] sm:$0x7] %vm4378, %v4373
      %v4380 = vshra.s32 %v1723, 3
      %v4381 = vshra.s32 %v1724, 3
      %v4382 = vshra.s32 %v1725, 3
      %v4383 = vshra.s32 %v1726, 3
      %v4384 = vshra.s32 %v1727, 3
      %v4385 = vshra.s32 %v1728, 3
      %v4386 = vshra.s32 %v1729, 3
      %v4387 = vshra.s32 %v1730, 3
      %v4388 = vand.u32 %v1723, 7
      %v4389 = vand.u32 %v1724, 7
      %v4390 = vand.u32 %v1725, 7
      %v4391 = vand.u32 %v1726, 7
      %v4392 = vand.u32 %v1727, 7
      %v4393 = vand.u32 %v1728, 7
      %v4394 = vand.u32 %v1729, 7
      %v4395 = vand.u32 %v1730, 7
      %v4396 = vmul.u32 %v4380, 2
      %v4397 = vmul.u32 %v4381, 2
      %v4398 = vmul.u32 %v4382, 2
      %v4399 = vmul.u32 %v4383, 2
      %v4400 = vmul.u32 %v4384, 2
      %v4401 = vmul.u32 %v4385, 2
      %v4402 = vmul.u32 %v4386, 2
      %v4403 = vmul.u32 %v4387, 2
      %v4404 = vmul.u32 %v4396, 16
      %v4405 = vmul.u32 %v4397, 16
      %v4406 = vmul.u32 %v4398, 16
      %v4407 = vmul.u32 %v4399, 16
      %v4408 = vmul.u32 %v4400, 16
      %v4409 = vmul.u32 %v4401, 16
      %v4410 = vmul.u32 %v4402, 16
      %v4411 = vmul.u32 %v4403, 16
      %v4412 = vmul.u32 %v4388, 2
      %v4413 = vmul.u32 %v4389, 2
      %v4414 = vmul.u32 %v4390, 2
      %v4415 = vmul.u32 %v4391, 2
      %v4416 = vmul.u32 %v4392, 2
      %v4417 = vmul.u32 %v4393, 2
      %v4418 = vmul.u32 %v4394, 2
      %v4419 = vmul.u32 %v4395, 2
      %v4420 = vadd.s32 %v4404, %v4412
      %v4421 = vadd.s32 %v4405, %v4413
      %v4422 = vadd.s32 %v4406, %v4414
      %v4423 = vadd.s32 %v4407, %v4415
      %v4424 = vadd.s32 %v4408, %v4416
      %v4425 = vadd.s32 %v4409, %v4417
      %v4426 = vadd.s32 %v4410, %v4418
      %v4427 = vadd.s32 %v4411, %v4419
      %vm4428 = vcmp.eq.s32.totalorder %v870, %v4420
      %vm4429 = vcmp.eq.s32.totalorder %v871, %v4420
      %vm4430 = vcmp.eq.s32.totalorder %v870, %v4421
      %vm4431 = vcmp.eq.s32.totalorder %v871, %v4421
      %vm4432 = vcmp.eq.s32.totalorder %v870, %v4422
      %vm4433 = vcmp.eq.s32.totalorder %v871, %v4422
      %vm4434 = vcmp.eq.s32.totalorder %v870, %v4423
      %vm4435 = vcmp.eq.s32.totalorder %v871, %v4423
      %vm4436 = vcmp.eq.s32.totalorder %v870, %v4424
      %vm4437 = vcmp.eq.s32.totalorder %v871, %v4424
      %vm4438 = vcmp.eq.s32.totalorder %v870, %v4425
      %vm4439 = vcmp.eq.s32.totalorder %v871, %v4425
      %vm4440 = vcmp.eq.s32.totalorder %v870, %v4426
      %vm4441 = vcmp.eq.s32.totalorder %v871, %v4426
      %vm4442 = vcmp.eq.s32.totalorder %v870, %v4427
      %vm4443 = vcmp.eq.s32.totalorder %v871, %v4427
      %v4444 = vsel %vm4428, 1.0, 0.0
      %v4445 = vsel %vm4429, 1.0, 0.0
      %v4446 = vsel %vm4430, 1.0, 0.0
      %v4447 = vsel %vm4431, 1.0, 0.0
      %v4448 = vsel %vm4432, 1.0, 0.0
      %v4449 = vsel %vm4433, 1.0, 0.0
      %v4450 = vsel %vm4434, 1.0, 0.0
      %v4451 = vsel %vm4435, 1.0, 0.0
      %v4452 = vsel %vm4436, 1.0, 0.0
      %v4453 = vsel %vm4437, 1.0, 0.0
      %v4454 = vsel %vm4438, 1.0, 0.0
      %v4455 = vsel %vm4439, 1.0, 0.0
      %v4456 = vsel %vm4440, 1.0, 0.0
      %v4457 = vsel %vm4441, 1.0, 0.0
      %v4458 = vsel %vm4442, 1.0, 0.0
      %v4459 = vsel %vm4443, 1.0, 0.0
      %v4460 = vpack.c.bf16 %v4446, %v4444
      %v4461 = vpack.c.bf16 %v4447, %v4445
      %v4462 = vpack.c.bf16 %v4450, %v4448
      %v4463 = vpack.c.bf16 %v4451, %v4449
      %v4464 = vpack.c.bf16 %v4454, %v4452
      %v4465 = vpack.c.bf16 %v4455, %v4453
      %v4466 = vpack.c.bf16 %v4458, %v4456
      %v4467 = vpack.c.bf16 %v4459, %v4457
      %v4468 = vld [vmem:[%s20] sm:$0xf]
      %v4470 = vsel %vm946, %v4468, 0
      %4472 = vmatprep.subr.bf16.mxu0 0
      %4473 = vmatpush1.bf16.msra.mxu0 0
      %4474 = vmatprep.subr.bf16.mxu0 0
      %4475 = vmatpush1.bf16.msra.mxu0 0
      %4476 = vmatprep.subr.bf16.mxu0 0
      %4477 = vmatpush1.bf16.msra.mxu0 0
      %4478 = vmatprep.subr.bf16.mxu0 0
      %4479 = vmatpush1.bf16.msra.mxu0 0
      %4480 = vmatprep.subr.bf16.mxu0 0
      %4481 = vmatpush1.bf16.msra.mxu0 0
      %4482 = vmatprep.subr.bf16.mxu0 0
      %4483 = vmatpush1.bf16.msra.mxu0 0
      %4484 = vmatprep.subr.bf16.mxu0 0
      %4485 = vmatpush1.bf16.msra.mxu0 0
      %4486 = vmatprep.subr.bf16.mxu0 0
      %4487 = vmatpush1.bf16.msra.mxu0 %v4328
      %4488 = vmatprep.subr.bf16.mxu0 0
      %4489 = vmatpush2.bf16.msra.mxu0 0
      %4490 = vmatprep.subr.bf16.mxu0 0
      %4491 = vmatpush2.bf16.msra.mxu0 0
      %4492 = vmatprep.subr.bf16.mxu0 0
      %4493 = vmatpush2.bf16.msra.mxu0 0
      %4494 = vmatprep.subr.bf16.mxu0 0
      %4495 = vmatpush2.bf16.msra.mxu0 0
      %4496 = vmatprep.subr.bf16.mxu0 0
      %4497 = vmatpush2.bf16.msra.mxu0 0
      %4498 = vmatprep.subr.bf16.mxu0 0
      %4499 = vmatpush2.bf16.msra.mxu0 0
      %4500 = vmatprep.subr.bf16.mxu0 0
      %4501 = vmatpush2.bf16.msra.mxu0 0
      %4502 = vmatprep.subr.bf16.mxu0 0
      %4503 = vmatpush2.bf16.msra.mxu0 0
      %4504 = vmatprep.mubr.bf16.mxu0 0
      %4505 = vmatmul.mubr.bf16.gmra.mxu0 %v4470
      %v4506 = vpop.f32.mrf.mxu0
      %v4507 = vadd.f32 0.0, %v4506
      %v4508 = vpop.f32.mrf.mxu0
      %v4509 = vpop.f32.mrf.mxu0
      %v4510 = vpop.f32.mrf.mxu0
      %4511 = vdwg.mxu0
      %v4512 = vpack.c.bf16 %v4507, %v4507
      %v4513 = vadd.s32 %v4420, 1
      %v4514 = vadd.s32 %v4421, 1
      %v4515 = vadd.s32 %v4422, 1
      %v4516 = vadd.s32 %v4423, 1
      %v4517 = vadd.s32 %v4424, 1
      %v4518 = vadd.s32 %v4425, 1
      %v4519 = vadd.s32 %v4426, 1
      %v4520 = vadd.s32 %v4427, 1
      %vm4521 = vcmp.eq.s32.totalorder %v870, %v4513
      %vm4522 = vcmp.eq.s32.totalorder %v871, %v4513
      %vm4523 = vcmp.eq.s32.totalorder %v870, %v4514
      %vm4524 = vcmp.eq.s32.totalorder %v871, %v4514
      %vm4525 = vcmp.eq.s32.totalorder %v870, %v4515
      %vm4526 = vcmp.eq.s32.totalorder %v871, %v4515
      %vm4527 = vcmp.eq.s32.totalorder %v870, %v4516
      %vm4528 = vcmp.eq.s32.totalorder %v871, %v4516
      %vm4529 = vcmp.eq.s32.totalorder %v870, %v4517
      %vm4530 = vcmp.eq.s32.totalorder %v871, %v4517
      %vm4531 = vcmp.eq.s32.totalorder %v870, %v4518
      %vm4532 = vcmp.eq.s32.totalorder %v871, %v4518
      %vm4533 = vcmp.eq.s32.totalorder %v870, %v4519
      %vm4534 = vcmp.eq.s32.totalorder %v871, %v4519
      %vm4535 = vcmp.eq.s32.totalorder %v870, %v4520
      %vm4536 = vcmp.eq.s32.totalorder %v871, %v4520
      %v4537 = vsel %vm4521, 1.0, 0.0
      %v4538 = vsel %vm4522, 1.0, 0.0
      %v4539 = vsel %vm4523, 1.0, 0.0
      %v4540 = vsel %vm4524, 1.0, 0.0
      %v4541 = vsel %vm4525, 1.0, 0.0
      %v4542 = vsel %vm4526, 1.0, 0.0
      %v4543 = vsel %vm4527, 1.0, 0.0
      %v4544 = vsel %vm4528, 1.0, 0.0
      %v4545 = vsel %vm4529, 1.0, 0.0
      %v4546 = vsel %vm4530, 1.0, 0.0
      %v4547 = vsel %vm4531, 1.0, 0.0
      %v4548 = vsel %vm4532, 1.0, 0.0
      %v4549 = vsel %vm4533, 1.0, 0.0
      %v4550 = vsel %vm4534, 1.0, 0.0
      %v4551 = vsel %vm4535, 1.0, 0.0
      %v4552 = vsel %vm4536, 1.0, 0.0
      %v4553 = vpack.c.bf16 %v4539, %v4537
      %v4554 = vpack.c.bf16 %v4540, %v4538
      %v4555 = vpack.c.bf16 %v4543, %v4541
      %v4556 = vpack.c.bf16 %v4544, %v4542
      %v4557 = vpack.c.bf16 %v4547, %v4545
      %v4558 = vpack.c.bf16 %v4548, %v4546
      %v4559 = vpack.c.bf16 %v4551, %v4549
      %v4560 = vpack.c.bf16 %v4552, %v4550
      %s4561 = scalar_lea.vmem %s20, 4
      %v4562 = vld [vmem:[%s4561] sm:$0xf]
      %v4564 = vsel %vm946, %v4562, 0
      %4566 = vmatprep.subr.bf16.mxu0 0
      %4567 = vmatpush1.bf16.msra.mxu0 0
      %4568 = vmatprep.subr.bf16.mxu0 0
      %4569 = vmatpush1.bf16.msra.mxu0 0
      %4570 = vmatprep.subr.bf16.mxu0 0
      %4571 = vmatpush1.bf16.msra.mxu0 0
      %4572 = vmatprep.subr.bf16.mxu0 0
      %4573 = vmatpush1.bf16.msra.mxu0 0
      %4574 = vmatprep.subr.bf16.mxu0 0
      %4575 = vmatpush1.bf16.msra.mxu0 0
      %4576 = vmatprep.subr.bf16.mxu0 0
      %4577 = vmatpush1.bf16.msra.mxu0 0
      %4578 = vmatprep.subr.bf16.mxu0 0
      %4579 = vmatpush1.bf16.msra.mxu0 0
      %4580 = vmatprep.subr.bf16.mxu0 0
      %4581 = vmatpush1.bf16.msra.mxu0 %v4328
      %4582 = vmatprep.subr.bf16.mxu0 0
      %4583 = vmatpush2.bf16.msra.mxu0 0
      %4584 = vmatprep.subr.bf16.mxu0 0
      %4585 = vmatpush2.bf16.msra.mxu0 0
      %4586 = vmatprep.subr.bf16.mxu0 0
      %4587 = vmatpush2.bf16.msra.mxu0 0
      %4588 = vmatprep.subr.bf16.mxu0 0
      %4589 = vmatpush2.bf16.msra.mxu0 0
      %4590 = vmatprep.subr.bf16.mxu0 0
      %4591 = vmatpush2.bf16.msra.mxu0 0
      %4592 = vmatprep.subr.bf16.mxu0 0
      %4593 = vmatpush2.bf16.msra.mxu0 0
      %4594 = vmatprep.subr.bf16.mxu0 0
      %4595 = vmatpush2.bf16.msra.mxu0 0
      %4596 = vmatprep.subr.bf16.mxu0 0
      %4597 = vmatpush2.bf16.msra.mxu0 0
      %4598 = vmatprep.mubr.bf16.mxu0 0
      %4599 = vmatmul.mubr.bf16.gmra.mxu0 %v4564
      %v4600 = vpop.f32.mrf.mxu0
      %v4601 = vadd.f32 0.0, %v4600
      %v4602 = vpop.f32.mrf.mxu0
      %v4603 = vpop.f32.mrf.mxu0
      %v4604 = vpop.f32.mrf.mxu0
      %4605 = vdwg.mxu0
      %v4606 = vpack.c.bf16 %v4601, %v4601
      %v4608 = vsel %vm1901, %v4606, 0
      %4610 = vmatprep.subr.bf16.mxu0 0
      %4611 = vmatpush1.bf16.msra.mxu0 0
      %4612 = vmatprep.subr.bf16.mxu0 0
      %4613 = vmatpush1.bf16.msra.mxu0 0
      %4614 = vmatprep.subr.bf16.mxu0 0
      %4615 = vmatpush1.bf16.msra.mxu0 0
      %4616 = vmatprep.subr.bf16.mxu0 0
      %4617 = vmatpush1.bf16.msra.mxu0 0
      %4618 = vmatprep.subr.bf16.mxu0 %v4560
      %4619 = vmatpush1.bf16.msra.mxu0 %v4559
      %4620 = vmatprep.subr.bf16.mxu0 %v4558
      %4621 = vmatpush1.bf16.msra.mxu0 %v4557
      %4622 = vmatprep.subr.bf16.mxu0 %v4556
      %4623 = vmatpush1.bf16.msra.mxu0 %v4555
      %4624 = vmatprep.subr.bf16.mxu0 %v4554
      %4625 = vmatpush1.bf16.msra.mxu0 %v4553
      %4626 = vmatprep.subr.bf16.mxu0 0
      %4627 = vmatpush2.bf16.msra.mxu0 0
      %4628 = vmatprep.subr.bf16.mxu0 0
      %4629 = vmatpush2.bf16.msra.mxu0 0
      %4630 = vmatprep.subr.bf16.mxu0 0
      %4631 = vmatpush2.bf16.msra.mxu0 0
      %4632 = vmatprep.subr.bf16.mxu0 0
      %4633 = vmatpush2.bf16.msra.mxu0 0
      %4634 = vmatprep.subr.bf16.mxu0 0
      %4635 = vmatpush2.bf16.msra.mxu0 0
      %4636 = vmatprep.subr.bf16.mxu0 0
      %4637 = vmatpush2.bf16.msra.mxu0 0
      %4638 = vmatprep.subr.bf16.mxu0 0
      %4639 = vmatpush2.bf16.msra.mxu0 0
      %4640 = vmatprep.subr.bf16.mxu0 0
      %4641 = vmatpush2.bf16.msra.mxu0 0
      %4642 = vmatprep.mubr.bf16.mxu0 0
      %4643 = vmatmul.mubr.bf16.gmra.mxu0 %v4608
      %v4644 = vpop.f32.mrf.mxu0
      %v4645 = vadd.f32 0.0, %v4644
      %v4646 = vpop.f32.mrf.mxu0
      %v4647 = vadd.f32 0.0, %v4646
      %v4648 = vpop.f32.mrf.mxu0
      %v4649 = vpop.f32.mrf.mxu0
      %4650 = vdwg.mxu0
      %v4652 = vsel %vm1901, %v4512, 0
      %4654 = vmatprep.subr.bf16.mxu0 0
      %4655 = vmatpush1.bf16.msra.mxu0 0
      %4656 = vmatprep.subr.bf16.mxu0 0
      %4657 = vmatpush1.bf16.msra.mxu0 0
      %4658 = vmatprep.subr.bf16.mxu0 0
      %4659 = vmatpush1.bf16.msra.mxu0 0
      %4660 = vmatprep.subr.bf16.mxu0 0
      %4661 = vmatpush1.bf16.msra.mxu0 0
      %4662 = vmatprep.subr.bf16.mxu0 %v4467
      %4663 = vmatpush1.bf16.msra.mxu0 %v4466
      %4664 = vmatprep.subr.bf16.mxu0 %v4465
      %4665 = vmatpush1.bf16.msra.mxu0 %v4464
      %4666 = vmatprep.subr.bf16.mxu0 %v4463
      %4667 = vmatpush1.bf16.msra.mxu0 %v4462
      %4668 = vmatprep.subr.bf16.mxu0 %v4461
      %4669 = vmatpush1.bf16.msra.mxu0 %v4460
      %4670 = vmatprep.subr.bf16.mxu0 0
      %4671 = vmatpush2.bf16.msra.mxu0 0
      %4672 = vmatprep.subr.bf16.mxu0 0
      %4673 = vmatpush2.bf16.msra.mxu0 0
      %4674 = vmatprep.subr.bf16.mxu0 0
      %4675 = vmatpush2.bf16.msra.mxu0 0
      %4676 = vmatprep.subr.bf16.mxu0 0
      %4677 = vmatpush2.bf16.msra.mxu0 0
      %4678 = vmatprep.subr.bf16.mxu0 0
      %4679 = vmatpush2.bf16.msra.mxu0 0
      %4680 = vmatprep.subr.bf16.mxu0 0
      %4681 = vmatpush2.bf16.msra.mxu0 0
      %4682 = vmatprep.subr.bf16.mxu0 0
      %4683 = vmatpush2.bf16.msra.mxu0 0
      %4684 = vmatprep.subr.bf16.mxu0 0
      %4685 = vmatpush2.bf16.msra.mxu0 0
      %4686 = vmatprep.mubr.bf16.mxu0 0
      %4687 = vmatmul.mubr.bf16.gmra.mxu0 %v4652
      %v4688 = vpop.f32.mrf.mxu0
      %v4689 = vadd.f32 %v4645, %v4688
      %v4690 = vpop.f32.mrf.mxu0
      %v4691 = vadd.f32 %v4647, %v4690
      %v4692 = vpop.f32.mrf.mxu0
      %v4693 = vpop.f32.mrf.mxu0
      %4694 = vdwg.mxu0
      %v4695 = vadd.s32 %v4396, 1
      %v4696 = vadd.s32 %v4397, 1
      %v4697 = vadd.s32 %v4398, 1
      %v4698 = vadd.s32 %v4399, 1
      %v4699 = vadd.s32 %v4400, 1
      %v4700 = vadd.s32 %v4401, 1
      %v4701 = vadd.s32 %v4402, 1
      %v4702 = vadd.s32 %v4403, 1
      %v4703 = vmul.u32 %v4695, 16
      %v4704 = vmul.u32 %v4696, 16
      %v4705 = vmul.u32 %v4697, 16
      %v4706 = vmul.u32 %v4698, 16
      %v4707 = vmul.u32 %v4699, 16
      %v4708 = vmul.u32 %v4700, 16
      %v4709 = vmul.u32 %v4701, 16
      %v4710 = vmul.u32 %v4702, 16
      %v4711 = vadd.s32 %v4703, %v4412
      %v4712 = vadd.s32 %v4704, %v4413
      %v4713 = vadd.s32 %v4705, %v4414
      %v4714 = vadd.s32 %v4706, %v4415
      %v4715 = vadd.s32 %v4707, %v4416
      %v4716 = vadd.s32 %v4708, %v4417
      %v4717 = vadd.s32 %v4709, %v4418
      %v4718 = vadd.s32 %v4710, %v4419
      %vm4719 = vcmp.eq.s32.totalorder %v870, %v4711
      %vm4720 = vcmp.eq.s32.totalorder %v871, %v4711
      %vm4721 = vcmp.eq.s32.totalorder %v870, %v4712
      %vm4722 = vcmp.eq.s32.totalorder %v871, %v4712
      %vm4723 = vcmp.eq.s32.totalorder %v870, %v4713
      %vm4724 = vcmp.eq.s32.totalorder %v871, %v4713
      %vm4725 = vcmp.eq.s32.totalorder %v870, %v4714
      %vm4726 = vcmp.eq.s32.totalorder %v871, %v4714
      %vm4727 = vcmp.eq.s32.totalorder %v870, %v4715
      %vm4728 = vcmp.eq.s32.totalorder %v871, %v4715
      %vm4729 = vcmp.eq.s32.totalorder %v870, %v4716
      %vm4730 = vcmp.eq.s32.totalorder %v871, %v4716
      %vm4731 = vcmp.eq.s32.totalorder %v870, %v4717
      %vm4732 = vcmp.eq.s32.totalorder %v871, %v4717
      %vm4733 = vcmp.eq.s32.totalorder %v870, %v4718
      %vm4734 = vcmp.eq.s32.totalorder %v871, %v4718
      %v4735 = vsel %vm4719, 1.0, 0.0
      %v4736 = vsel %vm4720, 1.0, 0.0
      %v4737 = vsel %vm4721, 1.0, 0.0
      %v4738 = vsel %vm4722, 1.0, 0.0
      %v4739 = vsel %vm4723, 1.0, 0.0
      %v4740 = vsel %vm4724, 1.0, 0.0
      %v4741 = vsel %vm4725, 1.0, 0.0
      %v4742 = vsel %vm4726, 1.0, 0.0
      %v4743 = vsel %vm4727, 1.0, 0.0
      %v4744 = vsel %vm4728, 1.0, 0.0
      %v4745 = vsel %vm4729, 1.0, 0.0
      %v4746 = vsel %vm4730, 1.0, 0.0
      %v4747 = vsel %vm4731, 1.0, 0.0
      %v4748 = vsel %vm4732, 1.0, 0.0
      %v4749 = vsel %vm4733, 1.0, 0.0
      %v4750 = vsel %vm4734, 1.0, 0.0
      %v4751 = vpack.c.bf16 %v4737, %v4735
      %v4752 = vpack.c.bf16 %v4738, %v4736
      %v4753 = vpack.c.bf16 %v4741, %v4739
      %v4754 = vpack.c.bf16 %v4742, %v4740
      %v4755 = vpack.c.bf16 %v4745, %v4743
      %v4756 = vpack.c.bf16 %v4746, %v4744
      %v4757 = vpack.c.bf16 %v4749, %v4747
      %v4758 = vpack.c.bf16 %v4750, %v4748
      %s4759 = scalar_lea.vmem %s20, 8
      %v4760 = vld [vmem:[%s4759] sm:$0xf]
      %v4762 = vsel %vm946, %v4760, 0
      %4764 = vmatprep.subr.bf16.mxu0 0
      %4765 = vmatpush1.bf16.msra.mxu0 0
      %4766 = vmatprep.subr.bf16.mxu0 0
      %4767 = vmatpush1.bf16.msra.mxu0 0
      %4768 = vmatprep.subr.bf16.mxu0 0
      %4769 = vmatpush1.bf16.msra.mxu0 0
      %4770 = vmatprep.subr.bf16.mxu0 0
      %4771 = vmatpush1.bf16.msra.mxu0 0
      %4772 = vmatprep.subr.bf16.mxu0 0
      %4773 = vmatpush1.bf16.msra.mxu0 0
      %4774 = vmatprep.subr.bf16.mxu0 0
      %4775 = vmatpush1.bf16.msra.mxu0 0
      %4776 = vmatprep.subr.bf16.mxu0 0
      %4777 = vmatpush1.bf16.msra.mxu0 0
      %4778 = vmatprep.subr.bf16.mxu0 0
      %4779 = vmatpush1.bf16.msra.mxu0 %v4328
      %4780 = vmatprep.subr.bf16.mxu0 0
      %4781 = vmatpush2.bf16.msra.mxu0 0
      %4782 = vmatprep.subr.bf16.mxu0 0
      %4783 = vmatpush2.bf16.msra.mxu0 0
      %4784 = vmatprep.subr.bf16.mxu0 0
      %4785 = vmatpush2.bf16.msra.mxu0 0
      %4786 = vmatprep.subr.bf16.mxu0 0
      %4787 = vmatpush2.bf16.msra.mxu0 0
      %4788 = vmatprep.subr.bf16.mxu0 0
      %4789 = vmatpush2.bf16.msra.mxu0 0
      %4790 = vmatprep.subr.bf16.mxu0 0
      %4791 = vmatpush2.bf16.msra.mxu0 0
      %4792 = vmatprep.subr.bf16.mxu0 0
      %4793 = vmatpush2.bf16.msra.mxu0 0
      %4794 = vmatprep.subr.bf16.mxu0 0
      %4795 = vmatpush2.bf16.msra.mxu0 0
      %4796 = vmatprep.mubr.bf16.mxu0 0
      %4797 = vmatmul.mubr.bf16.gmra.mxu0 %v4762
      %v4798 = vpop.f32.mrf.mxu0
      %v4799 = vadd.f32 0.0, %v4798
      %v4800 = vpop.f32.mrf.mxu0
      %v4801 = vpop.f32.mrf.mxu0
      %v4802 = vpop.f32.mrf.mxu0
      %4803 = vdwg.mxu0
      %v4804 = vpack.c.bf16 %v4799, %v4799
      %v4806 = vsel %vm1901, %v4804, 0
      %4808 = vmatprep.subr.bf16.mxu0 0
      %4809 = vmatpush1.bf16.msra.mxu0 0
      %4810 = vmatprep.subr.bf16.mxu0 0
      %4811 = vmatpush1.bf16.msra.mxu0 0
      %4812 = vmatprep.subr.bf16.mxu0 0
      %4813 = vmatpush1.bf16.msra.mxu0 0
      %4814 = vmatprep.subr.bf16.mxu0 0
      %4815 = vmatpush1.bf16.msra.mxu0 0
      %4816 = vmatprep.subr.bf16.mxu0 %v4758
      %4817 = vmatpush1.bf16.msra.mxu0 %v4757
      %4818 = vmatprep.subr.bf16.mxu0 %v4756
      %4819 = vmatpush1.bf16.msra.mxu0 %v4755
      %4820 = vmatprep.subr.bf16.mxu0 %v4754
      %4821 = vmatpush1.bf16.msra.mxu0 %v4753
      %4822 = vmatprep.subr.bf16.mxu0 %v4752
      %4823 = vmatpush1.bf16.msra.mxu0 %v4751
      %4824 = vmatprep.subr.bf16.mxu0 0
      %4825 = vmatpush2.bf16.msra.mxu0 0
      %4826 = vmatprep.subr.bf16.mxu0 0
      %4827 = vmatpush2.bf16.msra.mxu0 0
      %4828 = vmatprep.subr.bf16.mxu0 0
      %4829 = vmatpush2.bf16.msra.mxu0 0
      %4830 = vmatprep.subr.bf16.mxu0 0
      %4831 = vmatpush2.bf16.msra.mxu0 0
      %4832 = vmatprep.subr.bf16.mxu0 0
      %4833 = vmatpush2.bf16.msra.mxu0 0
      %4834 = vmatprep.subr.bf16.mxu0 0
      %4835 = vmatpush2.bf16.msra.mxu0 0
      %4836 = vmatprep.subr.bf16.mxu0 0
      %4837 = vmatpush2.bf16.msra.mxu0 0
      %4838 = vmatprep.subr.bf16.mxu0 0
      %4839 = vmatpush2.bf16.msra.mxu0 0
      %4840 = vmatprep.mubr.bf16.mxu0 0
      %4841 = vmatmul.mubr.bf16.gmra.mxu0 %v4806
      %v4842 = vpop.f32.mrf.mxu0
      %v4843 = vadd.f32 0.0, %v4842
      %v4844 = vpop.f32.mrf.mxu0
      %v4845 = vadd.f32 0.0, %v4844
      %v4846 = vpop.f32.mrf.mxu0
      %v4847 = vpop.f32.mrf.mxu0
      %4848 = vdwg.mxu0
      %v4849 = vadd.f32 %v4689, %v4843
      %v4850 = vadd.f32 %v4691, %v4845
      %v4851 = vadd.s32 %v4711, 1
      %v4852 = vadd.s32 %v4712, 1
      %v4853 = vadd.s32 %v4713, 1
      %v4854 = vadd.s32 %v4714, 1
      %v4855 = vadd.s32 %v4715, 1
      %v4856 = vadd.s32 %v4716, 1
      %v4857 = vadd.s32 %v4717, 1
      %v4858 = vadd.s32 %v4718, 1
      %vm4859 = vcmp.eq.s32.totalorder %v870, %v4851
      %vm4860 = vcmp.eq.s32.totalorder %v871, %v4851
      %vm4861 = vcmp.eq.s32.totalorder %v870, %v4852
      %vm4862 = vcmp.eq.s32.totalorder %v871, %v4852
      %vm4863 = vcmp.eq.s32.totalorder %v870, %v4853
      %vm4864 = vcmp.eq.s32.totalorder %v871, %v4853
      %vm4865 = vcmp.eq.s32.totalorder %v870, %v4854
      %vm4866 = vcmp.eq.s32.totalorder %v871, %v4854
      %vm4867 = vcmp.eq.s32.totalorder %v870, %v4855
      %vm4868 = vcmp.eq.s32.totalorder %v871, %v4855
      %vm4869 = vcmp.eq.s32.totalorder %v870, %v4856
      %vm4870 = vcmp.eq.s32.totalorder %v871, %v4856
      %vm4871 = vcmp.eq.s32.totalorder %v870, %v4857
      %vm4872 = vcmp.eq.s32.totalorder %v871, %v4857
      %vm4873 = vcmp.eq.s32.totalorder %v870, %v4858
      %vm4874 = vcmp.eq.s32.totalorder %v871, %v4858
      %v4875 = vsel %vm4859, 1.0, 0.0
      %v4876 = vsel %vm4860, 1.0, 0.0
      %v4877 = vsel %vm4861, 1.0, 0.0
      %v4878 = vsel %vm4862, 1.0, 0.0
      %v4879 = vsel %vm4863, 1.0, 0.0
      %v4880 = vsel %vm4864, 1.0, 0.0
      %v4881 = vsel %vm4865, 1.0, 0.0
      %v4882 = vsel %vm4866, 1.0, 0.0
      %v4883 = vsel %vm4867, 1.0, 0.0
      %v4884 = vsel %vm4868, 1.0, 0.0
      %v4885 = vsel %vm4869, 1.0, 0.0
      %v4886 = vsel %vm4870, 1.0, 0.0
      %v4887 = vsel %vm4871, 1.0, 0.0
      %v4888 = vsel %vm4872, 1.0, 0.0
      %v4889 = vsel %vm4873, 1.0, 0.0
      %v4890 = vsel %vm4874, 1.0, 0.0
      %v4891 = vpack.c.bf16 %v4877, %v4875
      %v4892 = vpack.c.bf16 %v4878, %v4876
      %v4893 = vpack.c.bf16 %v4881, %v4879
      %v4894 = vpack.c.bf16 %v4882, %v4880
      %v4895 = vpack.c.bf16 %v4885, %v4883
      %v4896 = vpack.c.bf16 %v4886, %v4884
      %v4897 = vpack.c.bf16 %v4889, %v4887
      %v4898 = vpack.c.bf16 %v4890, %v4888
      %s4899 = scalar_lea.vmem %s20, 12
      %v4900 = vld [vmem:[%s4899] sm:$0xf]
      %v4902 = vsel %vm946, %v4900, 0
      %4904 = vmatprep.subr.bf16.mxu0 0
      %4905 = vmatpush1.bf16.msra.mxu0 0
      %4906 = vmatprep.subr.bf16.mxu0 0
      %4907 = vmatpush1.bf16.msra.mxu0 0
      %4908 = vmatprep.subr.bf16.mxu0 0
      %4909 = vmatpush1.bf16.msra.mxu0 0
      %4910 = vmatprep.subr.bf16.mxu0 0
      %4911 = vmatpush1.bf16.msra.mxu0 0
      %4912 = vmatprep.subr.bf16.mxu0 0
      %4913 = vmatpush1.bf16.msra.mxu0 0
      %4914 = vmatprep.subr.bf16.mxu0 0
      %4915 = vmatpush1.bf16.msra.mxu0 0
      %4916 = vmatprep.subr.bf16.mxu0 0
      %4917 = vmatpush1.bf16.msra.mxu0 0
      %4918 = vmatprep.subr.bf16.mxu0 0
      %4919 = vmatpush1.bf16.msra.mxu0 %v4328
      %4920 = vmatprep.subr.bf16.mxu0 0
      %4921 = vmatpush2.bf16.msra.mxu0 0
      %4922 = vmatprep.subr.bf16.mxu0 0
      %4923 = vmatpush2.bf16.msra.mxu0 0
      %4924 = vmatprep.subr.bf16.mxu0 0
      %4925 = vmatpush2.bf16.msra.mxu0 0
      %4926 = vmatprep.subr.bf16.mxu0 0
      %4927 = vmatpush2.bf16.msra.mxu0 0
      %4928 = vmatprep.subr.bf16.mxu0 0
      %4929 = vmatpush2.bf16.msra.mxu0 0
      %4930 = vmatprep.subr.bf16.mxu0 0
      %4931 = vmatpush2.bf16.msra.mxu0 0
      %4932 = vmatprep.subr.bf16.mxu0 0
      %4933 = vmatpush2.bf16.msra.mxu0 0
      %4934 = vmatprep.subr.bf16.mxu0 0
      %4935 = vmatpush2.bf16.msra.mxu0 0
      %4936 = vmatprep.mubr.bf16.mxu0 0
      %4937 = vmatmul.mubr.bf16.gmra.mxu0 %v4902
      %v4938 = vpop.f32.mrf.mxu0
      %v4939 = vadd.f32 0.0, %v4938
      %v4940 = vpop.f32.mrf.mxu0
      %v4941 = vpop.f32.mrf.mxu0
      %v4942 = vpop.f32.mrf.mxu0
      %4943 = vdwg.mxu0
      %v4944 = vpack.c.bf16 %v4939, %v4939
      %v4946 = vsel %vm1901, %v4944, 0
      %4948 = vmatprep.subr.bf16.mxu0 0
      %4949 = vmatpush1.bf16.msra.mxu0 0
      %4950 = vmatprep.subr.bf16.mxu0 0
      %4951 = vmatpush1.bf16.msra.mxu0 0
      %4952 = vmatprep.subr.bf16.mxu0 0
      %4953 = vmatpush1.bf16.msra.mxu0 0
      %4954 = vmatprep.subr.bf16.mxu0 0
      %4955 = vmatpush1.bf16.msra.mxu0 0
      %4956 = vmatprep.subr.bf16.mxu0 %v4898
      %4957 = vmatpush1.bf16.msra.mxu0 %v4897
      %4958 = vmatprep.subr.bf16.mxu0 %v4896
      %4959 = vmatpush1.bf16.msra.mxu0 %v4895
      %4960 = vmatprep.subr.bf16.mxu0 %v4894
      %4961 = vmatpush1.bf16.msra.mxu0 %v4893
      %4962 = vmatprep.subr.bf16.mxu0 %v4892
      %4963 = vmatpush1.bf16.msra.mxu0 %v4891
      %4964 = vmatprep.subr.bf16.mxu0 0
      %4965 = vmatpush2.bf16.msra.mxu0 0
      %4966 = vmatprep.subr.bf16.mxu0 0
      %4967 = vmatpush2.bf16.msra.mxu0 0
      %4968 = vmatprep.subr.bf16.mxu0 0
      %4969 = vmatpush2.bf16.msra.mxu0 0
      %4970 = vmatprep.subr.bf16.mxu0 0
      %4971 = vmatpush2.bf16.msra.mxu0 0
      %4972 = vmatprep.subr.bf16.mxu0 0
      %4973 = vmatpush2.bf16.msra.mxu0 0
      %4974 = vmatprep.subr.bf16.mxu0 0
      %4975 = vmatpush2.bf16.msra.mxu0 0
      %4976 = vmatprep.subr.bf16.mxu0 0
      %4977 = vmatpush2.bf16.msra.mxu0 0
      %4978 = vmatprep.subr.bf16.mxu0 0
      %4979 = vmatpush2.bf16.msra.mxu0 0
      %4980 = vmatprep.mubr.bf16.mxu0 0
      %4981 = vmatmul.mubr.bf16.gmra.mxu0 %v4946
      %v4982 = vpop.f32.mrf.mxu0
      %v4983 = vadd.f32 0.0, %v4982
      %v4984 = vpop.f32.mrf.mxu0
      %v4985 = vadd.f32 0.0, %v4984
      %v4986 = vpop.f32.mrf.mxu0
      %v4987 = vpop.f32.mrf.mxu0
      %4988 = vdwg.mxu0
      %v4989 = vadd.f32 %v4849, %v4983
      %v4990 = vadd.f32 %v4850, %v4985
      %4991 = vst [vmem:[#allocation2 + $0x8] sm:$0xff] %v4989
      %4992 = vst [vmem:[#allocation2 + $0x10] sm:$0xff] %v4990
      %v4993 = vld [vmem:[#allocation2] sm:$0xff]
      %v4994 = vld [vmem:[#allocation2 + $0x8] sm:$0xff]
      %v4995 = vld [vmem:[#allocation2 + $0x10] sm:$0xff]
      %4999 = vrot.lane.b32.xlu0 %v4993, 17
      %v5000 = vpop.permute.xlu0 %4999
      %5001 = vrot.lane.b32.xlu0 %v4994, 17
      %v5002 = vpop.permute.xlu0 %5001
      %5003 = vrot.lane.b32.xlu0 %v4995, 17
      %v5004 = vpop.permute.xlu0 %5003
      %v5005 = vsel %vm921, %v5000, %v5002
      %v5006 = vsel %vm921, %v5002, %v5004
      %v5009 = vsel %vm910, %v5005, 0.0
      %v5010 = vsel %vm911, %v5006, 0.0
      %5011 = vst [vmem:[#allocation3] sm:$0xff] %v5009
      %5012 = vst [vmem:[#allocation3 + $0x8] sm:$0xff] %v5010
      %v5013 = vld [vmem:[#allocation2] sm:$0xff]
      %v5014 = vld [vmem:[#allocation2 + $0x8] sm:$0xff]
      %v5015 = vld [vmem:[#allocation2 + $0x10] sm:$0xff]
      %5019 = vrot.lane.b32.xlu0 %v5013, 16
      %v5020 = vpop.permute.xlu0 %5019
      %5021 = vrot.lane.b32.xlu0 %v5014, 16
      %v5022 = vpop.permute.xlu0 %5021
      %5023 = vrot.lane.b32.xlu0 %v5015, 16
      %v5024 = vpop.permute.xlu0 %5023
      %v5025 = vsel %vm946, %v5020, %v5022
      %v5026 = vsel %vm946, %v5022, %v5024
      %v5029 = vsel %vm935, %v5025, 0.0
      %v5030 = vsel %vm936, %v5026, 0.0
      %5031 = vst [vmem:[#allocation3 + $0x20] sm:$0xff] %v5029
      %5032 = vst [vmem:[#allocation3 + $0x28] sm:$0xff] %v5030
      %v5033 = vld [vmem:[#allocation2] sm:$0xff]
      %v5034 = vld [vmem:[#allocation2 + $0x8] sm:$0xff]
      %v5035 = vld [vmem:[#allocation2 + $0x10] sm:$0xff]
      %5039 = vrot.lane.b32.xlu0 %v5033, 15
      %v5040 = vpop.permute.xlu0 %5039
      %5041 = vrot.lane.b32.xlu0 %v5034, 15
      %v5042 = vpop.permute.xlu0 %5041
      %5043 = vrot.lane.b32.xlu0 %v5035, 15
      %v5044 = vpop.permute.xlu0 %5043
      %v5045 = vsel %vm975, %v5040, %v5042
      %v5046 = vsel %vm975, %v5042, %v5044
      %v5049 = vsel %vm964, %v5045, 0.0
      %v5050 = vsel %vm965, %v5046, 0.0
      %5051 = vst [vmem:[#allocation3 + $0x40] sm:$0xff] %v5049
      %5052 = vst [vmem:[#allocation3 + $0x48] sm:$0xff] %v5050
      %v5053 = vld [vmem:[#allocation2] sm:$0xff]
      %v5054 = vld [vmem:[#allocation2 + $0x8] sm:$0xff]
      %v5055 = vld [vmem:[#allocation2 + $0x10] sm:$0xff]
      %5059 = vrot.lane.b32.xlu0 %v5053, 1
      %v5060 = vpop.permute.xlu0 %5059
      %5061 = vrot.lane.b32.xlu0 %v5054, 1
      %v5062 = vpop.permute.xlu0 %5061
      %5063 = vrot.lane.b32.xlu0 %v5055, 1
      %v5064 = vpop.permute.xlu0 %5063
      %v5065 = vsel %vm1000, %v5060, %v5062
      %v5066 = vsel %vm1000, %v5062, %v5064
      %v5069 = vsel %vm989, %v5065, 0.0
      %v5070 = vsel %vm990, %v5066, 0.0
      %5071 = vst [vmem:[#allocation3 + $0x60] sm:$0xff] %v5069
      %5072 = vst [vmem:[#allocation3 + $0x68] sm:$0xff] %v5070
      %v5073 = vld [vmem:[#allocation2 + $0x8] sm:$0xff]
      %v5074 = vld [vmem:[#allocation2 + $0x10] sm:$0xff]
      %5075 = vst [vmem:[#allocation3 + $0x80] sm:$0xff] %v5073
      %5076 = vst [vmem:[#allocation3 + $0x88] sm:$0xff] %v5074
      %v5077 = vld [vmem:[#allocation2 + $0x8] sm:$0xff]
      %v5078 = vld [vmem:[#allocation2 + $0x10] sm:$0xff]
      %v5079 = vld [vmem:[#allocation2 + $0x18] sm:$0xff]
      %5083 = vrot.lane.b32.xlu0 %v5077, 127
      %v5084 = vpop.permute.xlu0 %5083
      %5085 = vrot.lane.b32.xlu0 %v5078, 127
      %v5086 = vpop.permute.xlu0 %5085
      %5087 = vrot.lane.b32.xlu0 %v5079, 127
      %v5088 = vpop.permute.xlu0 %5087
      %v5089 = vsel %vm1029, %v5084, %v5086
      %v5090 = vsel %vm1029, %v5086, %v5088
      %v5093 = vsel %vm1018, %v5089, 0.0
      %v5094 = vsel %vm1019, %v5090, 0.0
      %5095 = vst [vmem:[#allocation3 + $0xa0] sm:$0xff] %v5093
      %5096 = vst [vmem:[#allocation3 + $0xa8] sm:$0xff] %v5094
      %v5097 = vld [vmem:[#allocation2 + $0x8] sm:$0xff]
      %v5098 = vld [vmem:[#allocation2 + $0x10] sm:$0xff]
      %v5099 = vld [vmem:[#allocation2 + $0x18] sm:$0xff]
      %5103 = vrot.lane.b32.xlu0 %v5097, 113
      %v5104 = vpop.permute.xlu0 %5103
      %5105 = vrot.lane.b32.xlu0 %v5098, 113
      %v5106 = vpop.permute.xlu0 %5105
      %5107 = vrot.lane.b32.xlu0 %v5099, 113
      %v5108 = vpop.permute.xlu0 %5107
      %v5109 = vsel %vm1058, %v5104, %v5106
      %v5110 = vsel %vm1058, %v5106, %v5108
      %v5113 = vsel %vm1047, %v5109, 0.0
      %v5114 = vsel %vm1048, %v5110, 0.0
      %5115 = vst [vmem:[#allocation3 + $0xc0] sm:$0xff] %v5113
      %5116 = vst [vmem:[#allocation3 + $0xc8] sm:$0xff] %v5114
      %v5117 = vld [vmem:[#allocation2 + $0x8] sm:$0xff]
      %v5118 = vld [vmem:[#allocation2 + $0x10] sm:$0xff]
      %v5119 = vld [vmem:[#allocation2 + $0x18] sm:$0xff]
      %5123 = vrot.lane.b32.xlu0 %v5117, 112
      %v5124 = vpop.permute.xlu0 %5123
      %5125 = vrot.lane.b32.xlu0 %v5118, 112
      %v5126 = vpop.permute.xlu0 %5125
      %5127 = vrot.lane.b32.xlu0 %v5119, 112
      %v5128 = vpop.permute.xlu0 %5127
      %v5129 = vsel %vm1083, %v5124, %v5126
      %v5130 = vsel %vm1083, %v5126, %v5128
      %v5133 = vsel %vm1072, %v5129, 0.0
      %v5134 = vsel %vm1073, %v5130, 0.0
      %5135 = vst [vmem:[#allocation3 + $0xe0] sm:$0xff] %v5133
      %5136 = vst [vmem:[#allocation3 + $0xe8] sm:$0xff] %v5134
      %v5137 = vld [vmem:[#allocation2 + $0x8] sm:$0xff]
      %v5138 = vld [vmem:[#allocation2 + $0x10] sm:$0xff]
      %v5139 = vld [vmem:[#allocation2 + $0x18] sm:$0xff]
      %5143 = vrot.lane.b32.xlu0 %v5137, 111
      %v5144 = vpop.permute.xlu0 %5143
      %5145 = vrot.lane.b32.xlu0 %v5138, 111
      %v5146 = vpop.permute.xlu0 %5145
      %5147 = vrot.lane.b32.xlu0 %v5139, 111
      %v5148 = vpop.permute.xlu0 %5147
      %v5149 = vsel %vm1110, %v5144, %v5146
      %v5150 = vsel %vm1110, %v5146, %v5148
      %v5153 = vsel %vm1099, %v5149, 0.0
      %v5154 = vsel %vm1100, %v5150, 0.0
      %5155 = vst [vmem:[#allocation3 + $0x100] sm:$0xff] %v5153
      %5156 = vst [vmem:[#allocation3 + $0x108] sm:$0xff] %v5154
      %5157 = vst [vmem:[#allocation2 + $0x8] sm:$0xff] %v1467
      %5158 = vst [vmem:[#allocation2 + $0x10] sm:$0xff] %v1468
      %v5159 = vld [vmem:[#allocation2] sm:$0xff]
      %v5160 = vld [vmem:[#allocation2 + $0x8] sm:$0xff]
      %v5161 = vld [vmem:[#allocation2 + $0x10] sm:$0xff]
      %5165 = vrot.lane.b32.xlu0 %v5159, 17
      %v5166 = vpop.permute.xlu0 %5165
      %5167 = vrot.lane.b32.xlu0 %v5160, 17
      %v5168 = vpop.permute.xlu0 %5167
      %5169 = vrot.lane.b32.xlu0 %v5161, 17
      %v5170 = vpop.permute.xlu0 %5169
      %v5171 = vsel %vm921, %v5166, %v5168
      %v5172 = vsel %vm921, %v5168, %v5170
      %v5175 = vsel %vm910, %v5171, 0.0
      %v5176 = vsel %vm911, %v5172, 0.0
      %5177 = vst [vmem:[#allocation3 + $0x10] sm:$0xff] %v5175
      %5178 = vst [vmem:[#allocation3 + $0x18] sm:$0xff] %v5176
      %v5179 = vld [vmem:[#allocation2] sm:$0xff]
      %v5180 = vld [vmem:[#allocation2 + $0x8] sm:$0xff]
      %v5181 = vld [vmem:[#allocation2 + $0x10] sm:$0xff]
      %5185 = vrot.lane.b32.xlu0 %v5179, 16
      %v5186 = vpop.permute.xlu0 %5185
      %5187 = vrot.lane.b32.xlu0 %v5180, 16
      %v5188 = vpop.permute.xlu0 %5187
      %5189 = vrot.lane.b32.xlu0 %v5181, 16
      %v5190 = vpop.permute.xlu0 %5189
      %v5191 = vsel %vm946, %v5186, %v5188
      %v5192 = vsel %vm946, %v5188, %v5190
      %v5195 = vsel %vm935, %v5191, 0.0
      %v5196 = vsel %vm936, %v5192, 0.0
      %5197 = vst [vmem:[#allocation3 + $0x30] sm:$0xff] %v5195
      %5198 = vst [vmem:[#allocation3 + $0x38] sm:$0xff] %v5196
      %v5199 = vld [vmem:[#allocation2] sm:$0xff]
      %v5200 = vld [vmem:[#allocation2 + $0x8] sm:$0xff]
      %v5201 = vld [vmem:[#allocation2 + $0x10] sm:$0xff]
      %5205 = vrot.lane.b32.xlu0 %v5199, 15
      %v5206 = vpop.permute.xlu0 %5205
      %5207 = vrot.lane.b32.xlu0 %v5200, 15
      %v5208 = vpop.permute.xlu0 %5207
      %5209 = vrot.lane.b32.xlu0 %v5201, 15
      %v5210 = vpop.permute.xlu0 %5209
      %v5211 = vsel %vm975, %v5206, %v5208
      %v5212 = vsel %vm975, %v5208, %v5210
      %v5215 = vsel %vm964, %v5211, 0.0
      %v5216 = vsel %vm965, %v5212, 0.0
      %5217 = vst [vmem:[#allocation3 + $0x50] sm:$0xff] %v5215
      %5218 = vst [vmem:[#allocation3 + $0x58] sm:$0xff] %v5216
      %v5219 = vld [vmem:[#allocation2] sm:$0xff]
      %v5220 = vld [vmem:[#allocation2 + $0x8] sm:$0xff]
      %v5221 = vld [vmem:[#allocation2 + $0x10] sm:$0xff]
      %5225 = vrot.lane.b32.xlu0 %v5219, 1
      %v5226 = vpop.permute.xlu0 %5225
      %5227 = vrot.lane.b32.xlu0 %v5220, 1
      %v5228 = vpop.permute.xlu0 %5227
      %5229 = vrot.lane.b32.xlu0 %v5221, 1
      %v5230 = vpop.permute.xlu0 %5229
      %v5231 = vsel %vm1000, %v5226, %v5228
      %v5232 = vsel %vm1000, %v5228, %v5230
      %v5235 = vsel %vm989, %v5231, 0.0
      %v5236 = vsel %vm990, %v5232, 0.0
      %5237 = vst [vmem:[#allocation3 + $0x70] sm:$0xff] %v5235
      %5238 = vst [vmem:[#allocation3 + $0x78] sm:$0xff] %v5236
      %v5239 = vld [vmem:[#allocation2 + $0x8] sm:$0xff]
      %v5240 = vld [vmem:[#allocation2 + $0x10] sm:$0xff]
      %5241 = vst [vmem:[#allocation3 + $0x90] sm:$0xff] %v5239
      %5242 = vst [vmem:[#allocation3 + $0x98] sm:$0xff] %v5240
      %v5243 = vld [vmem:[#allocation2 + $0x8] sm:$0xff]
      %v5244 = vld [vmem:[#allocation2 + $0x10] sm:$0xff]
      %v5245 = vld [vmem:[#allocation2 + $0x18] sm:$0xff]
      %5249 = vrot.lane.b32.xlu0 %v5243, 127
      %v5250 = vpop.permute.xlu0 %5249
      %5251 = vrot.lane.b32.xlu0 %v5244, 127
      %v5252 = vpop.permute.xlu0 %5251
      %5253 = vrot.lane.b32.xlu0 %v5245, 127
      %v5254 = vpop.permute.xlu0 %5253
      %v5255 = vsel %vm1029, %v5250, %v5252
      %v5256 = vsel %vm1029, %v5252, %v5254
      %v5259 = vsel %vm1018, %v5255, 0.0
      %v5260 = vsel %vm1019, %v5256, 0.0
      %5261 = vst [vmem:[#allocation3 + $0xb0] sm:$0xff] %v5259
      %5262 = vst [vmem:[#allocation3 + $0xb8] sm:$0xff] %v5260
      %v5263 = vld [vmem:[#allocation2 + $0x8] sm:$0xff]
      %v5264 = vld [vmem:[#allocation2 + $0x10] sm:$0xff]
      %v5265 = vld [vmem:[#allocation2 + $0x18] sm:$0xff]
      %5269 = vrot.lane.b32.xlu0 %v5263, 113
      %v5270 = vpop.permute.xlu0 %5269
      %5271 = vrot.lane.b32.xlu0 %v5264, 113
      %v5272 = vpop.permute.xlu0 %5271
      %5273 = vrot.lane.b32.xlu0 %v5265, 113
      %v5274 = vpop.permute.xlu0 %5273
      %v5275 = vsel %vm1058, %v5270, %v5272
      %v5276 = vsel %vm1058, %v5272, %v5274
      %v5279 = vsel %vm1047, %v5275, 0.0
      %v5280 = vsel %vm1048, %v5276, 0.0
      %5281 = vst [vmem:[#allocation3 + $0xd0] sm:$0xff] %v5279
      %5282 = vst [vmem:[#allocation3 + $0xd8] sm:$0xff] %v5280
      %v5283 = vld [vmem:[#allocation2 + $0x8] sm:$0xff]
      %v5284 = vld [vmem:[#allocation2 + $0x10] sm:$0xff]
      %v5285 = vld [vmem:[#allocation2 + $0x18] sm:$0xff]
      %5289 = vrot.lane.b32.xlu0 %v5283, 112
      %v5290 = vpop.permute.xlu0 %5289
      %5291 = vrot.lane.b32.xlu0 %v5284, 112
      %v5292 = vpop.permute.xlu0 %5291
      %5293 = vrot.lane.b32.xlu0 %v5285, 112
      %v5294 = vpop.permute.xlu0 %5293
      %v5295 = vsel %vm1083, %v5290, %v5292
      %v5296 = vsel %vm1083, %v5292, %v5294
      %v5299 = vsel %vm1072, %v5295, 0.0
      %v5300 = vsel %vm1073, %v5296, 0.0
      %5301 = vst [vmem:[#allocation3 + $0xf0] sm:$0xff] %v5299
      %5302 = vst [vmem:[#allocation3 + $0xf8] sm:$0xff] %v5300
      %v5303 = vld [vmem:[#allocation2 + $0x8] sm:$0xff]
      %v5304 = vld [vmem:[#allocation2 + $0x10] sm:$0xff]
      %v5305 = vld [vmem:[#allocation2 + $0x18] sm:$0xff]
      %5309 = vrot.lane.b32.xlu0 %v5303, 111
      %v5310 = vpop.permute.xlu0 %5309
      %5311 = vrot.lane.b32.xlu0 %v5304, 111
      %v5312 = vpop.permute.xlu0 %5311
      %5313 = vrot.lane.b32.xlu0 %v5305, 111
      %v5314 = vpop.permute.xlu0 %5313
      %v5315 = vsel %vm1110, %v5310, %v5312
      %v5316 = vsel %vm1110, %v5312, %v5314
      %v5319 = vsel %vm1099, %v5315, 0.0
      %v5320 = vsel %vm1100, %v5316, 0.0
      %5321 = vst [vmem:[#allocation3 + $0x110] sm:$0xff] %v5319
      %5322 = vst [vmem:[#allocation3 + $0x118] sm:$0xff] %v5320
      %v5323 = vld [vmem:[%s21] sm:$0xff]
      %v5324 = vld [vmem:[#allocation3] sm:$0xff]
      %v5325 = vld [vmem:[#allocation3 + $0x8] sm:$0xff]
      %v5326 = vld [vmem:[#allocation3 + $0x10] sm:$0xff]
      %v5327 = vld [vmem:[#allocation3 + $0x18] sm:$0xff]
      %v5328 = vld [vmem:[#allocation3 + $0x20] sm:$0xff]
      %v5329 = vld [vmem:[#allocation3 + $0x28] sm:$0xff]
      %v5330 = vld [vmem:[#allocation3 + $0x30] sm:$0xff]
      %v5331 = vld [vmem:[#allocation3 + $0x38] sm:$0xff]
      %v5332 = vld [vmem:[#allocation3 + $0x40] sm:$0xff]
      %v5333 = vld [vmem:[#allocation3 + $0x48] sm:$0xff]
      %v5334 = vld [vmem:[#allocation3 + $0x50] sm:$0xff]
      %v5335 = vld [vmem:[#allocation3 + $0x58] sm:$0xff]
      %v5336 = vld [vmem:[#allocation3 + $0x60] sm:$0xff]
      %v5337 = vld [vmem:[#allocation3 + $0x68] sm:$0xff]
      %v5338 = vld [vmem:[#allocation3 + $0x70] sm:$0xff]
      %v5339 = vld [vmem:[#allocation3 + $0x78] sm:$0xff]
      %v5340 = vld [vmem:[#allocation3 + $0x80] sm:$0xff]
      %v5341 = vld [vmem:[#allocation3 + $0x88] sm:$0xff]
      %v5342 = vld [vmem:[#allocation3 + $0x90] sm:$0xff]
      %v5343 = vld [vmem:[#allocation3 + $0x98] sm:$0xff]
      %v5344 = vld [vmem:[#allocation3 + $0xa0] sm:$0xff]
      %v5345 = vld [vmem:[#allocation3 + $0xa8] sm:$0xff]
      %v5346 = vld [vmem:[#allocation3 + $0xb0] sm:$0xff]
      %v5347 = vld [vmem:[#allocation3 + $0xb8] sm:$0xff]
      %v5348 = vld [vmem:[#allocation3 + $0xc0] sm:$0xff]
      %v5349 = vld [vmem:[#allocation3 + $0xc8] sm:$0xff]
      %v5350 = vld [vmem:[#allocation3 + $0xd0] sm:$0xff]
      %v5351 = vld [vmem:[#allocation3 + $0xd8] sm:$0xff]
      %v5352 = vld [vmem:[#allocation3 + $0xe0] sm:$0xff]
      %v5353 = vld [vmem:[#allocation3 + $0xe8] sm:$0xff]
      %v5354 = vld [vmem:[#allocation3 + $0xf0] sm:$0xff]
      %v5355 = vld [vmem:[#allocation3 + $0xf8] sm:$0xff]
      %v5356 = vld [vmem:[#allocation3 + $0x100] sm:$0xff]
      %v5357 = vld [vmem:[#allocation3 + $0x108] sm:$0xff]
      %v5358 = vld [vmem:[#allocation3 + $0x110] sm:$0xff]
      %v5359 = vld [vmem:[#allocation3 + $0x118] sm:$0xff]
      %v5360 = vpack.c.bf16 %v5326, %v5324
      %v5361 = vpack.c.bf16 %v5327, %v5325
      %v5362 = vpack.c.bf16 %v5330, %v5328
      %v5363 = vpack.c.bf16 %v5331, %v5329
      %v5364 = vpack.c.bf16 %v5334, %v5332
      %v5365 = vpack.c.bf16 %v5335, %v5333
      %v5366 = vpack.c.bf16 %v5338, %v5336
      %v5367 = vpack.c.bf16 %v5339, %v5337
      %v5368 = vpack.c.bf16 %v5342, %v5340
      %v5369 = vpack.c.bf16 %v5343, %v5341
      %v5370 = vpack.c.bf16 %v5346, %v5344
      %v5371 = vpack.c.bf16 %v5347, %v5345
      %v5372 = vpack.c.bf16 %v5350, %v5348
      %v5373 = vpack.c.bf16 %v5351, %v5349
      %v5374 = vpack.c.bf16 %v5354, %v5352
      %v5375 = vpack.c.bf16 %v5355, %v5353
      %v5376 = vpack.c.bf16 %v5358, %v5356
      %v5377 = vpack.c.bf16 %v5359, %v5357
      %v5378 = vld [vmem:[%s22] sm:$0xff]
      %5380 = vset.pattern.permute.xlu0 0
      %5381 = vperm.xlu0 %5380, %v5378
      %v5382 = vpop.permute.xlu0 %5381
      %v5385 = vunpack.c.l.b16 %v5323
      %v5386 = vunpack.c.h.b16 %v5323
      %v5387 = vpack.c.b16 %v5385, %v5385
      %v5388 = vpack.c.b16 %v5386, %v5386
      %v5391 = vsel %vm946, %v5388, 0
      %5393 = vmatprep.subr.bf16.mxu0 %v5375
      %5394 = vmatpush1.bf16.msra.mxu0 %v5374
      %5395 = vmatprep.subr.bf16.mxu0 %v5373
      %5396 = vmatpush1.bf16.msra.mxu0 %v5372
      %5397 = vmatprep.subr.bf16.mxu0 %v5371
      %5398 = vmatpush1.bf16.msra.mxu0 %v5370
      %5399 = vmatprep.subr.bf16.mxu0 %v5369
      %5400 = vmatpush1.bf16.msra.mxu0 %v5368
      %5401 = vmatprep.subr.bf16.mxu0 %v5367
      %5402 = vmatpush1.bf16.msra.mxu0 %v5366
      %5403 = vmatprep.subr.bf16.mxu0 %v5365
      %5404 = vmatpush1.bf16.msra.mxu0 %v5364
      %5405 = vmatprep.subr.bf16.mxu0 %v5363
      %5406 = vmatpush1.bf16.msra.mxu0 %v5362
      %5407 = vmatprep.subr.bf16.mxu0 %v5361
      %5408 = vmatpush1.bf16.msra.mxu0 %v5360
      %5409 = vmatprep.subr.bf16.mxu0 0
      %5410 = vmatpush2.bf16.msra.mxu0 0
      %5411 = vmatprep.subr.bf16.mxu0 0
      %5412 = vmatpush2.bf16.msra.mxu0 0
      %5413 = vmatprep.subr.bf16.mxu0 0
      %5414 = vmatpush2.bf16.msra.mxu0 0
      %5415 = vmatprep.subr.bf16.mxu0 0
      %5416 = vmatpush2.bf16.msra.mxu0 0
      %5417 = vmatprep.subr.bf16.mxu0 0
      %5418 = vmatpush2.bf16.msra.mxu0 0
      %5419 = vmatprep.subr.bf16.mxu0 0
      %5420 = vmatpush2.bf16.msra.mxu0 0
      %5421 = vmatprep.subr.bf16.mxu0 0
      %5422 = vmatpush2.bf16.msra.mxu0 0
      %5423 = vmatprep.subr.bf16.mxu0 %v5377
      %5424 = vmatpush2.bf16.msra.mxu0 %v5376
      %5425 = vmatprep.mubr.bf16.mxu0 %v5391
      %5426 = vmatmul.mubr.bf16.gmra.mxu0 %v5387
      %v5427 = vpop.f32.mrf.mxu0
      %v5428 = vadd.f32 %v5382, %v5427
      %v5429 = vpop.f32.mrf.mxu0
      %v5430 = vadd.f32 %v5382, %v5429
      %v5431 = vpop.f32.mrf.mxu0
      %v5432 = vpop.f32.mrf.mxu0
      %5433 = vdwg.mxu0
      %vm5434 = vcmp.ge.f32.partialorder %v5428, 0.0
      %vm5435 = vcmp.ge.f32.partialorder %v5430, 0.0
      %v5436 = vmul.f32 %v5428, 0.01
      %v5437 = vmul.f32 %v5430, 0.01
      %v5438 = vsel %vm5434, %v5428, %v5436
      %v5439 = vsel %vm5435, %v5430, %v5437
      %5440 = vst [vmem:[#allocation2 + $0x8] sm:$0xff] %v5438
      %5441 = vst [vmem:[#allocation2 + $0x10] sm:$0xff] %v5439
      %v5442 = vld [vmem:[#allocation2] sm:$0xff]
      %v5443 = vld [vmem:[#allocation2 + $0x8] sm:$0xff]
      %v5444 = vld [vmem:[#allocation2 + $0x10] sm:$0xff]
      %5448 = vrot.lane.b32.xlu0 %v5442, 17
      %v5449 = vpop.permute.xlu0 %5448
      %5450 = vrot.lane.b32.xlu0 %v5443, 17
      %v5451 = vpop.permute.xlu0 %5450
      %5452 = vrot.lane.b32.xlu0 %v5444, 17
      %v5453 = vpop.permute.xlu0 %5452
      %v5454 = vsel %vm921, %v5449, %v5451
      %v5455 = vsel %vm921, %v5451, %v5453
      %v5458 = vsel %vm910, %v5454, 0.0
      %v5459 = vsel %vm911, %v5455, 0.0
      %5460 = vst [vmem:[#allocation3] sm:$0xff] %v5458
      %5461 = vst [vmem:[#allocation3 + $0x8] sm:$0xff] %v5459
      %v5462 = vld [vmem:[#allocation2] sm:$0xff]
      %v5463 = vld [vmem:[#allocation2 + $0x8] sm:$0xff]
      %v5464 = vld [vmem:[#allocation2 + $0x10] sm:$0xff]
      %5468 = vrot.lane.b32.xlu0 %v5462, 16
      %v5469 = vpop.permute.xlu0 %5468
      %5470 = vrot.lane.b32.xlu0 %v5463, 16
      %v5471 = vpop.permute.xlu0 %5470
      %5472 = vrot.lane.b32.xlu0 %v5464, 16
      %v5473 = vpop.permute.xlu0 %5472
      %v5474 = vsel %vm946, %v5469, %v5471
      %v5475 = vsel %vm946, %v5471, %v5473
      %v5478 = vsel %vm935, %v5474, 0.0
      %v5479 = vsel %vm936, %v5475, 0.0
      %5480 = vst [vmem:[#allocation3 + $0x10] sm:$0xff] %v5478
      %5481 = vst [vmem:[#allocation3 + $0x18] sm:$0xff] %v5479
      %v5482 = vld [vmem:[#allocation2] sm:$0xff]
      %v5483 = vld [vmem:[#allocation2 + $0x8] sm:$0xff]
      %v5484 = vld [vmem:[#allocation2 + $0x10] sm:$0xff]
      %5488 = vrot.lane.b32.xlu0 %v5482, 15
      %v5489 = vpop.permute.xlu0 %5488
      %5490 = vrot.lane.b32.xlu0 %v5483, 15
      %v5491 = vpop.permute.xlu0 %5490
      %5492 = vrot.lane.b32.xlu0 %v5484, 15
      %v5493 = vpop.permute.xlu0 %5492
      %v5494 = vsel %vm975, %v5489, %v5491
      %v5495 = vsel %vm975, %v5491, %v5493
      %v5498 = vsel %vm964, %v5494, 0.0
      %v5499 = vsel %vm965, %v5495, 0.0
      %5500 = vst [vmem:[#allocation3 + $0x20] sm:$0xff] %v5498
      %5501 = vst [vmem:[#allocation3 + $0x28] sm:$0xff] %v5499
      %v5502 = vld [vmem:[#allocation2] sm:$0xff]
      %v5503 = vld [vmem:[#allocation2 + $0x8] sm:$0xff]
      %v5504 = vld [vmem:[#allocation2 + $0x10] sm:$0xff]
      %5508 = vrot.lane.b32.xlu0 %v5502, 1
      %v5509 = vpop.permute.xlu0 %5508
      %5510 = vrot.lane.b32.xlu0 %v5503, 1
      %v5511 = vpop.permute.xlu0 %5510
      %5512 = vrot.lane.b32.xlu0 %v5504, 1
      %v5513 = vpop.permute.xlu0 %5512
      %v5514 = vsel %vm1000, %v5509, %v5511
      %v5515 = vsel %vm1000, %v5511, %v5513
      %v5518 = vsel %vm989, %v5514, 0.0
      %v5519 = vsel %vm990, %v5515, 0.0
      %5520 = vst [vmem:[#allocation3 + $0x30] sm:$0xff] %v5518
      %5521 = vst [vmem:[#allocation3 + $0x38] sm:$0xff] %v5519
      %v5522 = vld [vmem:[#allocation2 + $0x8] sm:$0xff]
      %v5523 = vld [vmem:[#allocation2 + $0x10] sm:$0xff]
      %5524 = vst [vmem:[#allocation3 + $0x40] sm:$0xff] %v5522
      %5525 = vst [vmem:[#allocation3 + $0x48] sm:$0xff] %v5523
      %v5526 = vld [vmem:[#allocation2 + $0x8] sm:$0xff]
      %v5527 = vld [vmem:[#allocation2 + $0x10] sm:$0xff]
      %v5528 = vld [vmem:[#allocation2 + $0x18] sm:$0xff]
      %5532 = vrot.lane.b32.xlu0 %v5526, 127
      %v5533 = vpop.permute.xlu0 %5532
      %5534 = vrot.lane.b32.xlu0 %v5527, 127
      %v5535 = vpop.permute.xlu0 %5534
      %5536 = vrot.lane.b32.xlu0 %v5528, 127
      %v5537 = vpop.permute.xlu0 %5536
      %v5538 = vsel %vm1029, %v5533, %v5535
      %v5539 = vsel %vm1029, %v5535, %v5537
      %v5542 = vsel %vm1018, %v5538, 0.0
      %v5543 = vsel %vm1019, %v5539, 0.0
      %5544 = vst [vmem:[#allocation3 + $0x50] sm:$0xff] %v5542
      %5545 = vst [vmem:[#allocation3 + $0x58] sm:$0xff] %v5543
      %v5546 = vld [vmem:[#allocation2 + $0x8] sm:$0xff]
      %v5547 = vld [vmem:[#allocation2 + $0x10] sm:$0xff]
      %v5548 = vld [vmem:[#allocation2 + $0x18] sm:$0xff]
      %5552 = vrot.lane.b32.xlu0 %v5546, 113
      %v5553 = vpop.permute.xlu0 %5552
      %5554 = vrot.lane.b32.xlu0 %v5547, 113
      %v5555 = vpop.permute.xlu0 %5554
      %5556 = vrot.lane.b32.xlu0 %v5548, 113
      %v5557 = vpop.permute.xlu0 %5556
      %v5558 = vsel %vm1058, %v5553, %v5555
      %v5559 = vsel %vm1058, %v5555, %v5557
      %v5562 = vsel %vm1047, %v5558, 0.0
      %v5563 = vsel %vm1048, %v5559, 0.0
      %5564 = vst [vmem:[#allocation3 + $0x60] sm:$0xff] %v5562
      %5565 = vst [vmem:[#allocation3 + $0x68] sm:$0xff] %v5563
      %v5566 = vld [vmem:[#allocation2 + $0x8] sm:$0xff]
      %v5567 = vld [vmem:[#allocation2 + $0x10] sm:$0xff]
      %v5568 = vld [vmem:[#allocation2 + $0x18] sm:$0xff]
      %5572 = vrot.lane.b32.xlu0 %v5566, 112
      %v5573 = vpop.permute.xlu0 %5572
      %5574 = vrot.lane.b32.xlu0 %v5567, 112
      %v5575 = vpop.permute.xlu0 %5574
      %5576 = vrot.lane.b32.xlu0 %v5568, 112
      %v5577 = vpop.permute.xlu0 %5576
      %v5578 = vsel %vm1083, %v5573, %v5575
      %v5579 = vsel %vm1083, %v5575, %v5577
      %v5582 = vsel %vm1072, %v5578, 0.0
      %v5583 = vsel %vm1073, %v5579, 0.0
      %5584 = vst [vmem:[#allocation3 + $0x70] sm:$0xff] %v5582
      %5585 = vst [vmem:[#allocation3 + $0x78] sm:$0xff] %v5583
      %v5586 = vld [vmem:[#allocation2 + $0x8] sm:$0xff]
      %v5587 = vld [vmem:[#allocation2 + $0x10] sm:$0xff]
      %v5588 = vld [vmem:[#allocation2 + $0x18] sm:$0xff]
      %5592 = vrot.lane.b32.xlu0 %v5586, 111
      %v5593 = vpop.permute.xlu0 %5592
      %5594 = vrot.lane.b32.xlu0 %v5587, 111
      %v5595 = vpop.permute.xlu0 %5594
      %5596 = vrot.lane.b32.xlu0 %v5588, 111
      %v5597 = vpop.permute.xlu0 %5596
      %v5598 = vsel %vm1110, %v5593, %v5595
      %v5599 = vsel %vm1110, %v5595, %v5597
      %v5602 = vsel %vm1099, %v5598, 0.0
      %v5603 = vsel %vm1100, %v5599, 0.0
      %5604 = vst [vmem:[#allocation3 + $0x80] sm:$0xff] %v5602
      %5605 = vst [vmem:[#allocation3 + $0x88] sm:$0xff] %v5603
      %v5606 = vld [vmem:[%s23] sm:$0xf]
      %v5607 = vld [vmem:[#allocation3] sm:$0xff]
      %v5608 = vld [vmem:[#allocation3 + $0x8] sm:$0xff]
      %v5609 = vld [vmem:[#allocation3 + $0x10] sm:$0xff]
      %v5610 = vld [vmem:[#allocation3 + $0x18] sm:$0xff]
      %v5611 = vld [vmem:[#allocation3 + $0x20] sm:$0xff]
      %v5612 = vld [vmem:[#allocation3 + $0x28] sm:$0xff]
      %v5613 = vld [vmem:[#allocation3 + $0x30] sm:$0xff]
      %v5614 = vld [vmem:[#allocation3 + $0x38] sm:$0xff]
      %v5615 = vld [vmem:[#allocation3 + $0x40] sm:$0xff]
      %v5616 = vld [vmem:[#allocation3 + $0x48] sm:$0xff]
      %v5617 = vld [vmem:[#allocation3 + $0x50] sm:$0xff]
      %v5618 = vld [vmem:[#allocation3 + $0x58] sm:$0xff]
      %v5619 = vld [vmem:[#allocation3 + $0x60] sm:$0xff]
      %v5620 = vld [vmem:[#allocation3 + $0x68] sm:$0xff]
      %v5621 = vld [vmem:[#allocation3 + $0x70] sm:$0xff]
      %v5622 = vld [vmem:[#allocation3 + $0x78] sm:$0xff]
      %v5623 = vld [vmem:[#allocation3 + $0x80] sm:$0xff]
      %v5624 = vld [vmem:[#allocation3 + $0x88] sm:$0xff]
      %v5625 = vpack.c.bf16 %v5609, %v5607
      %v5626 = vpack.c.bf16 %v5610, %v5608
      %v5627 = vpack.c.bf16 %v5613, %v5611
      %v5628 = vpack.c.bf16 %v5614, %v5612
      %v5629 = vpack.c.bf16 %v5617, %v5615
      %v5630 = vpack.c.bf16 %v5618, %v5616
      %v5631 = vpack.c.bf16 %v5621, %v5619
      %v5632 = vpack.c.bf16 %v5622, %v5620
      %v5633 = vpack.c.bf16 %v5623, %v5623
      %v5634 = vpack.c.bf16 %v5624, %v5624
      %v5635 = vld [vmem:[%s24] sm:$0xff]
      %5637 = vset.pattern.permute.xlu0 0
      %5638 = vperm.xlu0 %5637, %v5635
      %v5639 = vpop.permute.xlu0 %5638
      %v5642 = vsel %vm1154, %v5606, 0
      %v5645 = vsel %vm1158, %v5633, 0
      %v5648 = vsel %vm1158, %v5634, 0
      %5650 = vmatprep.subr.bf16.mxu0 0
      %5651 = vmatpush1.bf16.msra.mxu0 0
      %5652 = vmatprep.subr.bf16.mxu0 0
      %5653 = vmatpush1.bf16.msra.mxu0 0
      %5654 = vmatprep.subr.bf16.mxu0 0
      %5655 = vmatpush1.bf16.msra.mxu0 0
      %5656 = vmatprep.subr.bf16.mxu0 %v5648
      %5657 = vmatpush1.bf16.msra.mxu0 %v5645
      %5658 = vmatprep.subr.bf16.mxu0 %v5632
      %5659 = vmatpush1.bf16.msra.mxu0 %v5631
      %5660 = vmatprep.subr.bf16.mxu0 %v5630
      %5661 = vmatpush1.bf16.msra.mxu0 %v5629
      %5662 = vmatprep.subr.bf16.mxu0 %v5628
      %5663 = vmatpush1.bf16.msra.mxu0 %v5627
      %5664 = vmatprep.subr.bf16.mxu0 %v5626
      %5665 = vmatpush1.bf16.msra.mxu0 %v5625
      %5666 = vmatprep.subr.bf16.mxu0 0
      %5667 = vmatpush2.bf16.msra.mxu0 0
      %5668 = vmatprep.subr.bf16.mxu0 0
      %5669 = vmatpush2.bf16.msra.mxu0 0
      %5670 = vmatprep.subr.bf16.mxu0 0
      %5671 = vmatpush2.bf16.msra.mxu0 0
      %5672 = vmatprep.subr.bf16.mxu0 0
      %5673 = vmatpush2.bf16.msra.mxu0 0
      %5674 = vmatprep.subr.bf16.mxu0 0
      %5675 = vmatpush2.bf16.msra.mxu0 0
      %5676 = vmatprep.subr.bf16.mxu0 0
      %5677 = vmatpush2.bf16.msra.mxu0 0
      %5678 = vmatprep.subr.bf16.mxu0 0
      %5679 = vmatpush2.bf16.msra.mxu0 0
      %5680 = vmatprep.subr.bf16.mxu0 0
      %5681 = vmatpush2.bf16.msra.mxu0 0
      %5682 = vmatprep.mubr.bf16.mxu0 0
      %5683 = vmatmul.mubr.bf16.gmra.mxu0 %v5642
      %v5684 = vpop.f32.mrf.mxu0
      %v5685 = vadd.f32 %v5639, %v5684
      %v5686 = vpop.f32.mrf.mxu0
      %v5687 = vadd.f32 %v5639, %v5686
      %v5688 = vpop.f32.mrf.mxu0
      %v5689 = vpop.f32.mrf.mxu0
      %5690 = vdwg.mxu0
      %vm5691 = vcmp.ge.f32.partialorder %v5685, 0.0
      %vm5692 = vcmp.ge.f32.partialorder %v5687, 0.0
      %v5693 = vmul.f32 %v5685, 0.01
      %v5694 = vmul.f32 %v5687, 0.01
      %v5695 = vsel %vm5691, %v5685, %v5693
      %v5696 = vsel %vm5692, %v5687, %v5694
      %v5697 = vld [vmem:[%s25] sm:$0x3]
      %v5698 = vpack.c.bf16 %v5695, %v5695
      %v5699 = vpack.c.bf16 %v5696, %v5696
      %v5700 = vld [vmem:[%s26] sm:$0x7]
      %5702 = vset.pattern.permute.xlu0 0
      %5703 = vperm.xlu0 %5702, %v5700
      %v5704 = vpop.permute.xlu0 %5703
      %v5707 = vsel %vm1952, %v5697, 0
      %v5710 = vsel %vm1158, %v5698, 0
      %v5713 = vsel %vm1158, %v5699, 0
      %5715 = vmatprep.subr.bf16.mxu0 0
      %5716 = vmatpush1.bf16.msra.mxu0 0
      %5717 = vmatprep.subr.bf16.mxu0 0
      %5718 = vmatpush1.bf16.msra.mxu0 0
      %5719 = vmatprep.subr.bf16.mxu0 0
      %5720 = vmatpush1.bf16.msra.mxu0 0
      %5721 = vmatprep.subr.bf16.mxu0 0
      %5722 = vmatpush1.bf16.msra.mxu0 0
      %5723 = vmatprep.subr.bf16.mxu0 0
      %5724 = vmatpush1.bf16.msra.mxu0 0
      %5725 = vmatprep.subr.bf16.mxu0 0
      %5726 = vmatpush1.bf16.msra.mxu0 0
      %5727 = vmatprep.subr.bf16.mxu0 0
      %5728 = vmatpush1.bf16.msra.mxu0 0
      %5729 = vmatprep.subr.bf16.mxu0 %v5713
      %5730 = vmatpush1.bf16.msra.mxu0 %v5710
      %5731 = vmatprep.subr.bf16.mxu0 0
      %5732 = vmatpush2.bf16.msra.mxu0 0
      %5733 = vmatprep.subr.bf16.mxu0 0
      %5734 = vmatpush2.bf16.msra.mxu0 0
      %5735 = vmatprep.subr.bf16.mxu0 0
      %5736 = vmatpush2.bf16.msra.mxu0 0
      %5737 = vmatprep.subr.bf16.mxu0 0
      %5738 = vmatpush2.bf16.msra.mxu0 0
      %5739 = vmatprep.subr.bf16.mxu0 0
      %5740 = vmatpush2.bf16.msra.mxu0 0
      %5741 = vmatprep.subr.bf16.mxu0 0
      %5742 = vmatpush2.bf16.msra.mxu0 0
      %5743 = vmatprep.subr.bf16.mxu0 0
      %5744 = vmatpush2.bf16.msra.mxu0 0
      %5745 = vmatprep.subr.bf16.mxu0 0
      %5746 = vmatpush2.bf16.msra.mxu0 0
      %5747 = vmatprep.mubr.bf16.mxu0 0
      %5748 = vmatmul.mubr.bf16.gmra.mxu0 %v5707
      %v5749 = vpop.f32.mrf.mxu0
      %v5750 = vadd.f32 %v5704, %v5749
      %v5751 = vpop.f32.mrf.mxu0
      %v5752 = vadd.f32 %v5704, %v5751
      %v5753 = vpop.f32.mrf.mxu0
      %v5754 = vpop.f32.mrf.mxu0
      %5755 = vdwg.mxu0
      %v5758 = vcombine.low %v5750, %v5752
      %5760 = vst [vmem:[%s852] sm:$0x77] %v5758
      %p5761 = scmp.lt.s32.totalorder %s40, 1
      %s5762 = scalar_select %p5761, %s40, 1
      %s5763 = smul.addr %s5762, 2
      %s5764 = smul.addr %s5763, 4
      %s5765 = scalar_lea.vmem %s27, %s5764
      %p5766 = scmp.lt.s32.totalorder %s40, 1
      %s5767 = scalar_select %p5766, %s40, 1
      %s5768 = smul.addr %s5767, 4
      %s5769 = scalar_lea.vmem %s28, %s5768
      // Predicated region
      $region129: #{nas_unet_forward.1} parent=127 // pred_check
        %p5770 = pneg %p630
      $region130: #{nas_unet_forward.1} parent=127 // pred_check_branch
        %5772 = sbr.rel (%p5770) target = $region132
      $region131: #{nas_unet_forward.1} parent=127 // pred_region
        _
      $region132: #{nas_unet_forward.1} parent=127 // pred_fallthru
        _
      // Predicated region
      $region133: #{nas_unet_forward.1} parent=127 // pred_check
        %p5773 = pneg %p656
      $region134: #{nas_unet_forward.1} parent=127 // pred_check_branch
        %5775 = sbr.rel (%p5773) target = $region136
      $region135: #{nas_unet_forward.1} parent=127 // pred_region
        _
      $region136: #{nas_unet_forward.1} parent=127 // pred_fallthru
        _
    $region128: #{nas_unet_forward.1} parent=5 // pred_fallthru
      _
    %p5776 = scmp.le.s32.totalorder 2, %s35
    // Predicated region
    $region137: #{nas_unet_forward.1} parent=5 // pred_check
      %p5777 = pneg %p5776
    $region138: #{nas_unet_forward.1} parent=5 // pred_check_branch
      %5779 = sbr.rel (%p5777) target = $region140
    $region139: #{nas_unet_forward.1} parent=5 // pred_region
      %s5780 = ssub.s32 %s35, 2
      // Predicated region
      $region141: #{nas_unet_forward.1} parent=139 // pred_check
        %p5781 = pneg %p636
      $region142: #{nas_unet_forward.1} parent=139 // pred_check_branch
        %5783 = sbr.rel (%p5781) target = $region144
      $region143: #{nas_unet_forward.1} parent=139 // pred_region
        %p5784 = scmp.lt.s32.totalorder %s41, 1
        %s5785 = scalar_select %p5784, %s41, 1
        %s5786 = smul.addr %s5785, 2
        %s5787 = smul.addr %s5786, 4
        %s5788 = scalar_lea.vmem %s27, %s5787
      $region144: #{nas_unet_forward.1} parent=139 // pred_fallthru
        _
      // Predicated region
      $region145: #{nas_unet_forward.1} parent=139 // pred_check
        %p5789 = pneg %p662
      $region146: #{nas_unet_forward.1} parent=139 // pred_check_branch
        %5791 = sbr.rel (%p5789) target = $region148
      $region147: #{nas_unet_forward.1} parent=139 // pred_region
        %p5792 = scmp.lt.s32.totalorder %s41, 1
        %s5793 = scalar_select %p5792, %s41, 1
        %s5794 = smul.addr %s5793, 4
        %s5795 = scalar_lea.vmem %s28, %s5794
      $region148: #{nas_unet_forward.1} parent=139 // pred_fallthru
        _
    $region140: #{nas_unet_forward.1} parent=5 // pred_fallthru
      _
  $region6: #{nas_unet_forward.1} parent=0 // loop_footer
    %s39 = sadd.s32 1, %s35
  $region7: #{nas_unet_forward.1} parent=0 // loop_footer_branch
    %34 = sbr.rel target = $region3
  $region8: #{nas_unet_forward.1} parent=0 // loop_exit
    _

</llo_original>
